<compile_context>
chip_gen: v5e
topology: v5e:2x2
jax: 0.10.0
libtpu: 0.0.40
codegen_flags: <defaults>
</compile_context>

<pallas_src>
import jax
import jax.numpy as jnp
import numpy as np
from jax.experimental import pallas as pl
from jax.experimental.pallas import tpu as pltpu

# ----------------------------- synthetic config -----------------------------
CLIP_IMAGE, CLIP_PATCH, CLIP_DIM, CLIP_HEADS, CLIP_LAYERS, CLIP_MLP = 16, 4, 32, 4, 3, 64
SAM_IMAGE, SAM_PATCH, SAM_DIM, SAM_HEADS, SAM_LAYERS, SAM_MLP = 32, 4, 32, 4, 2, 64
SAM_NECK, SAM_OUT = 16, 32
SELECT_LAYER = -2
SELECT_FEATURE = "patch"

CLIP_GRID = CLIP_IMAGE // CLIP_PATCH                 # 4
NUM_PATCHES = CLIP_GRID * CLIP_GRID                  # 16
CLIP_TOKENS = NUM_PATCHES + 1                        # 17 (patches + CLS)
CLIP_S_PAD = 32                                      # pad 17 -> 32 (sublane aligned)
CLIP_PATCH_DIM = 3 * CLIP_PATCH * CLIP_PATCH         # 48
SAM_GRID = SAM_IMAGE // SAM_PATCH                    # 8
SAM_TOKENS = SAM_GRID * SAM_GRID                     # 64
SAM_PATCH_DIM = 3 * SAM_PATCH * SAM_PATCH            # 48
SAM_OUT_TOKENS = (SAM_GRID // 2) ** 2                # 16
OUT_DIM = CLIP_DIM + SAM_OUT                         # 64

assert SELECT_FEATURE == "patch"  # 'cls_patch' would need the CLS row in the output
# hidden_states[i] is produced after i encoder layers; layers beyond the selected
# hidden state cannot influence the output, so they are skipped (dead compute).
_HS_INDEX = SELECT_LAYER if SELECT_LAYER >= 0 else CLIP_LAYERS + 1 + SELECT_LAYER
CLIP_LAYERS_RUN = _HS_INDEX                          # = 2 for select_layer=-2


# --------------------------- in-kernel math helpers --------------------------
def _mm(x, w):
    """MXU matmul: bf16 inputs, f32 accumulation (w is already bf16)."""
    return jnp.dot(x.astype(jnp.bfloat16), w, preferred_element_type=jnp.float32)


def _layernorm(x, g, b, eps):
    mu = jnp.mean(x, axis=-1, keepdims=True)
    var = jnp.mean(jnp.square(x - mu), axis=-1, keepdims=True)
    return (x - mu) * jax.lax.rsqrt(var + eps) * g + b


def _softmax_rows(s):
    s = s - jnp.max(s, axis=-1, keepdims=True)
    p = jnp.exp(s)
    return p * pl.reciprocal(jnp.sum(p, axis=-1, keepdims=True), approx=True)


def _attention(x, wqkv, bqkv, wo, bo, n_heads, n_valid):
    """Fused multi-head self-attention on one (S, D) token block (all heads in-kernel)."""
    S, D = x.shape
    Dh = D // n_heads
    scale = 1.0 / float(Dh) ** 0.5
    qkv = _mm(x, wqkv) + bqkv                        # (S, 3D) f32
    q, k, v = qkv[:, :D], qkv[:, D:2 * D], qkv[:, 2 * D:]
    kt = k.T                                         # (D, S): one transpose for all heads
    if n_valid is not None and n_valid < S:          # mask padded key columns
        mask = jax.lax.broadcasted_iota(jnp.int32, (S, S), 1) < n_valid
    else:
        mask = None
    heads = []
    for hh in range(n_heads):                        # unrolled: heads never leave VMEM
        qh = q[:, hh * Dh:(hh + 1) * Dh]
        kth = kt[hh * Dh:(hh + 1) * Dh, :]
        vh = v[:, hh * Dh:(hh + 1) * Dh]
        s = jnp.dot(qh, kth, preferred_element_type=jnp.float32) * scale
        if mask is not None:
            s = jnp.where(mask, s, -1e30)
        p = _softmax_rows(s)
        heads.append(jnp.dot(p, vh, preferred_element_type=jnp.float32))
    attn = jnp.concatenate(heads, axis=-1)           # (S, D)
    return _mm(attn, wo) + bo


def _mlp(x, w1, b1, w2, b2, act):
    h = _mm(x, w1) + b1
    if act == "quick_gelu":                          # CLIP activation
        h = h * jax.nn.sigmoid(1.702 * h)
    else:
        # TODO(synk): PyTorch SAM uses exact erf GELU; tanh approximation used
        # here (erf has no guaranteed Mosaic lowering).
        h = jax.nn.gelu(h, approximate=True)
    return _mm(h, w2) + b2


# ------------------------------- fused kernel --------------------------------
def _make_kernel(treedef):
    def clip_sam_kernel(*refs):
        cp_ref, sp_ref = refs[0], refs[1]            # per-image patch blocks
        o_ref = refs[-1]
        w = jax.tree_util.tree_unflatten(treedef, refs[2:-1])
        cw, sw = w["clip"], w["sam"]

        # ---------------- CLIP tower -> hidden_states[SELECT_LAYER][:, 1:] ----------
        # rows 0..15 = patch tokens, row 16 = CLS, rows 17..31 = padding (masked keys)
        h = _mm(cp_ref[0], cw["patch_w"][...]) + cw["base"][...]           # (32, 32)
        h = _layernorm(h, cw["preln_g"][...], cw["preln_b"][...], 1e-5)    # pre_layrnorm
        for l in range(CLIP_LAYERS_RUN):
            r = h
            x = _layernorm(h, cw["ln1_g"][l], cw["ln1_b"][l], 1e-5)
            h = r + _attention(x, cw["wqkv"][l], cw["bqkv"][l],
                               cw["wo"][l], cw["bo"][l], CLIP_HEADS, CLIP_TOKENS)
            r = h
            x = _layernorm(h, cw["ln2_g"][l], cw["ln2_b"][l], 1e-5)
            h = r + _mlp(x, cw["w1"][l], cw["b1"][l], cw["w2"][l], cw["b2"][l],
                         "quick_gelu")
        clip_feat = h[:NUM_PATCHES]                  # 'patch' feature select (CLS dropped)

        # ---------------- SAM tower --------------------------------------------------
        # TODO(synk): real SAM ViT-B uses windowed attention + relative position bias;
        # this synthetic tower uses plain global attention blocks.
        h = _mm(sp_ref[0], sw["patch_w"][...]) + sw["base"][...]           # (64, 32)
        for l in range(SAM_LAYERS):
            r = h
            x = _layernorm(h, sw["ln1_g"][l], sw["ln1_b"][l], 1e-6)
            h = r + _attention(x, sw["wqkv"][l], sw["bqkv"][l],
                               sw["wo"][l], sw["bo"][l], SAM_HEADS, None)
            r = h
            x = _layernorm(h, sw["ln2_g"][l], sw["ln2_b"][l], 1e-6)
            h = r + _mlp(x, sw["w1"][l], sw["b1"][l], sw["w2"][l], sw["b2"][l], "gelu")
        # neck: 1x1 conv (bias=False) + LayerNorm2d (channel LN in token layout)
        h = _mm(h, sw["neck1_w"][...])                                     # (64, 16)
        h = _layernorm(h, sw["neck_ln1_g"][...], sw["neck_ln1_b"][...], 1e-6)
        # k=2 s=2 downsample conv as 4 tap matmuls: down_sel[q] is a constant 0/1
        # row-gather matrix (gather-as-matmul), down_w[q] the per-tap weight.
        # TODO(synk): real Vary/SAM neck uses 3x3 pad-1 convs; replaced with k=2 s=2 here.
        sam_feat = jnp.zeros((SAM_OUT_TOKENS, SAM_OUT), jnp.float32)
        for t in range(4):
            tap = jnp.dot(sw["down_sel"][t], h, preferred_element_type=jnp.float32)
            sam_feat = sam_feat + _mm(tap, sw["down_w"][t])
        sam_feat = _layernorm(sam_feat, sw["neck_ln2_g"][...], sw["neck_ln2_b"][...], 1e-6)

        # cat([clip_feat, sam_feat], dim=-1) for this image: single (16, 64) store
        o_ref[0] = jnp.concatenate([clip_feat, sam_feat], axis=-1).astype(o_ref.dtype)

    return clip_sam_kernel


# ------------------------------ host-side glue --------------------------------
def _extract_patches(x, patch):
    """NCHW (B,C,H,W) -> (B, gh*gw, C*patch*patch) im2col for a stride==kernel conv."""
    B, C, H, W = x.shape
    gh, gw = H // patch, W // patch
    p = x.reshape(B, C, gh, patch, gw, patch)
    return p.transpose(0, 2, 4, 1, 3, 5).reshape(B, gh * gw, C * patch * patch)


def clip_sam_forward_batched(params, images_low, images_high):
    """images_low: (B,3,16,16), images_high: (B,3,32,32) -> (B, 16, 64)."""
    B = images_low.shape[0]
    clip_patches = _extract_patches(images_low, CLIP_PATCH)               # (B, 16, 48)
    clip_patches = jnp.pad(clip_patches,
                           ((0, 0), (0, CLIP_S_PAD - NUM_PATCHES), (0, 0)))  # (B, 32, 48)
    sam_patches = _extract_patches(images_high, SAM_PATCH)                # (B, 64, 48)

    w_leaves, treedef = jax.tree_util.tree_flatten(params)
    kernel = _make_kernel(treedef)

    def _zero_map(ndim):
        return lambda b: (0,) * ndim

    w_specs = [pl.BlockSpec(x.shape, _zero_map(x.ndim)) for x in w_leaves]

    return pl.pallas_call(
        kernel,
        out_shape=jax.ShapeDtypeStruct((B, NUM_PATCHES, OUT_DIM), jnp.float32),
        grid=(B,),
        in_specs=[pl.BlockSpec((1, CLIP_S_PAD, CLIP_PATCH_DIM), lambda b: (b, 0, 0)),
                  pl.BlockSpec((1, SAM_TOKENS, SAM_PATCH_DIM), lambda b: (b, 0, 0))]
                 + w_specs,
        out_specs=pl.BlockSpec((1, NUM_PATCHES, OUT_DIM), lambda b: (b, 0, 0)),
        compiler_params=pltpu.CompilerParams(dimension_semantics=("parallel",)),
    )(clip_patches, sam_patches, *w_leaves)


_jit_forward = jax.jit(clip_sam_forward_batched)


def clip_sam_vision_tower_forward(params, images):
    """images: list of (low_res (3,16,16), high_res (3,32,32)) pairs, as in torch."""
    low = jnp.stack([im[0] for im in images])
    high = jnp.stack([im[1] for im in images])
    return _jit_forward(params, low, high)


# ------------------------------ parameter init --------------------------------
def _w(key, shape):
    # weight matrices stored bf16 (MXU-native on v5e/v6e/v7x, halves HBM/VMEM traffic)
    return (jax.random.normal(key, shape, jnp.float32) * 0.02).astype(jnp.bfloat16)


def _init_layer_stack(layer_keys, n_layers, dim, mlp):
    return {
        "ln1_g": jnp.ones((n_layers, 1, dim), jnp.float32),
        "ln1_b": jnp.zeros((n_layers, 1, dim), jnp.float32),
        "wqkv": jnp.stack([_w(layer_keys[l][0], (dim, 3 * dim)) for l in range(n_layers)]),
        "bqkv": jnp.zeros((n_layers, 1, 3 * dim), jnp.float32),
        "wo": jnp.stack([_w(layer_keys[l][1], (dim, dim)) for l in range(n_layers)]),
        "bo": jnp.zeros((n_layers, 1, dim), jnp.float32),
        "ln2_g": jnp.ones((n_layers, 1, dim), jnp.float32),
        "ln2_b": jnp.zeros((n_layers, 1, dim), jnp.float32),
        "w1": jnp.stack([_w(layer_keys[l][2], (dim, mlp)) for l in range(n_layers)]),
        "b1": jnp.zeros((n_layers, 1, mlp), jnp.float32),
        "w2": jnp.stack([_w(layer_keys[l][3], (mlp, dim)) for l in range(n_layers)]),
        "b2": jnp.zeros((n_layers, 1, dim), jnp.float32),
    }


def _downsample_selectors():
    """sel[q, t, i] = 1 iff input grid position i feeds kernel tap q of output token t."""
    g, go = SAM_GRID, SAM_GRID // 2
    sel = np.zeros((4, go * go, g * g), np.float32)
    for r in range(go):
        for c in range(go):
            for ki in range(2):
                for kj in range(2):
                    sel[ki * 2 + kj, r * go + c, (2 * r + ki) * g + (2 * c + kj)] = 1.0
    return jnp.asarray(sel)


def init_params(key):
    kc, ks = jax.random.split(key)

    # ----- CLIP -----
    ck = jax.random.split(kc, 3 + CLIP_LAYERS)
    cls = jax.random.normal(ck[0], (CLIP_DIM,), jnp.float32) * 0.02
    pos = jax.random.normal(ck[1], (CLIP_TOKENS, CLIP_DIM), jnp.float32) * 0.02
    # base tokens padded to CLIP_S_PAD: rows 0..15 = pos of patch tokens,
    # row 16 = CLS embedding + its pos, rows 17..31 = zero padding.
    clip_base = jnp.concatenate(
        [pos[1:], (cls + pos[0])[None, :],
         jnp.zeros((CLIP_S_PAD - CLIP_TOKENS, CLIP_DIM), jnp.float32)], axis=0)
    clip = {
        "patch_w": _w(ck[2], (CLIP_PATCH_DIM, CLIP_DIM)),     # patch conv (bias=False)
        "base": clip_base,
        "preln_g": jnp.ones((1, CLIP_DIM), jnp.float32),
        "preln_b": jnp.zeros((1, CLIP_DIM), jnp.float32),
    }
    clip.update(_init_layer_stack(
        [jax.random.split(ck[3 + l], 4) for l in range(CLIP_LAYERS)],
        CLIP_LAYERS, CLIP_DIM, CLIP_MLP))

    # ----- SAM -----
    sk = jax.random.split(ks, 4 + SAM_LAYERS)
    pos = jax.random.normal(sk[0], (SAM_TOKENS, SAM_DIM), jnp.float32) * 0.02
    patch_b = jnp.zeros((SAM_DIM,), jnp.float32)
    sam = {
        "patch_w": _w(sk[1], (SAM_PATCH_DIM, SAM_DIM)),
        "base": pos + patch_b[None, :],                       # patch-embed bias folded in
        "neck1_w": _w(sk[2], (SAM_DIM, SAM_NECK)),            # 1x1 conv, bias=False
        "neck_ln1_g": jnp.ones((1, SAM_NECK), jnp.float32),
        "neck_ln1_b": jnp.zeros((1, SAM_NECK), jnp.float32),
        "down_w": _w(sk[3], (4, SAM_NECK, SAM_OUT)),          # k=2 s=2 conv, per-tap weights
        "down_sel": _downsample_selectors(),                  # constant 0/1 gather matrices
        "neck_ln2_g": jnp.ones((1, SAM_OUT), jnp.float32),
        "neck_ln2_b": jnp.zeros((1, SAM_OUT), jnp.float32),
    }
    sam.update(_init_layer_stack(
        [jax.random.split(sk[4 + l], 4) for l in range(SAM_LAYERS)],
        SAM_LAYERS, SAM_DIM, SAM_MLP))

    return {"clip": clip, "sam": sam}


# ------------------------------------ main -------------------------------------
if __name__ == "__main__":
    key = jax.random.PRNGKey(0)
    kp, k1, k2, k3, k4 = jax.random.split(key, 5)
    params = init_params(kp)

    images = [
        (jax.random.normal(k1, (3, CLIP_IMAGE, CLIP_IMAGE), jnp.float32),
         jax.random.normal(k2, (3, SAM_IMAGE, SAM_IMAGE), jnp.float32)),
        (jax.random.normal(k3, (3, CLIP_IMAGE, CLIP_IMAGE), jnp.float32),
         jax.random.normal(k4, (3, SAM_IMAGE, SAM_IMAGE), jnp.float32)),
    ]

    out = clip_sam_vision_tower_forward(params, images)
    out = jax.block_until_ready(out)

    expected = (2, NUM_PATCHES, OUT_DIM)
    assert out.shape == expected, (out.shape, expected)
    assert out.dtype == jnp.float32
    assert bool(jnp.all(jnp.isfinite(out)))
    print("KERNEL_OK")
</pallas_src>

<mosaic_0001>
module attributes {stable_mosaic.version = 11 : i64} {
  func.func @clip_sam_kernel(%arg0: i32, %arg1: memref<1x32x48xf32, #tpu.memory_space<vmem>>, %arg2: memref<1x64x48xf32, #tpu.memory_space<vmem>>, %arg3: memref<3x1x64xf32, #tpu.memory_space<vmem>>, %arg4: memref<3x1x32xf32, #tpu.memory_space<vmem>>, %arg5: memref<32x32xf32, #tpu.memory_space<vmem>>, %arg6: memref<3x1x32xf32, #tpu.memory_space<vmem>>, %arg7: memref<3x1x96xf32, #tpu.memory_space<vmem>>, %arg8: memref<3x1x32xf32, #tpu.memory_space<vmem>>, %arg9: memref<3x1x32xf32, #tpu.memory_space<vmem>>, %arg10: memref<3x1x32xf32, #tpu.memory_space<vmem>>, %arg11: memref<3x1x32xf32, #tpu.memory_space<vmem>>, %arg12: memref<48x32xbf16, #tpu.memory_space<vmem>>, %arg13: memref<1x32xf32, #tpu.memory_space<vmem>>, %arg14: memref<1x32xf32, #tpu.memory_space<vmem>>, %arg15: memref<3x32x64xbf16, #tpu.memory_space<vmem>>, %arg16: memref<3x64x32xbf16, #tpu.memory_space<vmem>>, %arg17: memref<3x32x32xbf16, #tpu.memory_space<vmem>>, %arg18: memref<3x32x96xbf16, #tpu.memory_space<vmem>>, %arg19: memref<2x1x64xf32, #tpu.memory_space<vmem>>, %arg20: memref<2x1x32xf32, #tpu.memory_space<vmem>>, %arg21: memref<64x32xf32, #tpu.memory_space<vmem>>, %arg22: memref<2x1x32xf32, #tpu.memory_space<vmem>>, %arg23: memref<2x1x96xf32, #tpu.memory_space<vmem>>, %arg24: memref<4x16x64xf32, #tpu.memory_space<vmem>>, %arg25: memref<4x16x32xbf16, #tpu.memory_space<vmem>>, %arg26: memref<2x1x32xf32, #tpu.memory_space<vmem>>, %arg27: memref<2x1x32xf32, #tpu.memory_space<vmem>>, %arg28: memref<2x1x32xf32, #tpu.memory_space<vmem>>, %arg29: memref<2x1x32xf32, #tpu.memory_space<vmem>>, %arg30: memref<32x16xbf16, #tpu.memory_space<vmem>>, %arg31: memref<1x16xf32, #tpu.memory_space<vmem>>, %arg32: memref<1x16xf32, #tpu.memory_space<vmem>>, %arg33: memref<1x32xf32, #tpu.memory_space<vmem>>, %arg34: memref<1x32xf32, #tpu.memory_space<vmem>>, %arg35: memref<48x32xbf16, #tpu.memory_space<vmem>>, %arg36: memref<2x32x64xbf16, #tpu.memory_space<vmem>>, %arg37: memref<2x64x32xbf16, #tpu.memory_space<vmem>>, %arg38: memref<2x32x32xbf16, #tpu.memory_space<vmem>>, %arg39: memref<2x32x96xbf16, #tpu.memory_space<vmem>>, %arg40: memref<1x16x64xf32, #tpu.memory_space<vmem>>) attributes {dimension_semantics = [#tpu.dimension_semantics<parallel>], iteration_bounds = array<i64: 2>, scalar_prefetch = 0 : i64, scratch_operands = 0 : i64, tpu.core_type = #tpu.core_type<tc>, window_params = [{transform_indices = @transform_0, window_bounds = array<i64: 1, 32, 48>}, {transform_indices = @transform_1, window_bounds = array<i64: 1, 64, 48>}, {pipeline_mode = #tpu.pipeline_mode<synchronous>, transform_indices = @transform_2, window_bounds = array<i64: 3, 1, 64>}, {pipeline_mode = #tpu.pipeline_mode<synchronous>, transform_indices = @transform_3, window_bounds = array<i64: 3, 1, 32>}, {pipeline_mode = #tpu.pipeline_mode<synchronous>, transform_indices = @transform_4, window_bounds = array<i64: 32, 32>}, {pipeline_mode = #tpu.pipeline_mode<synchronous>, transform_indices = @transform_5, window_bounds = array<i64: 3, 1, 32>}, {pipeline_mode = #tpu.pipeline_mode<synchronous>, transform_indices = @transform_6, window_bounds = array<i64: 3, 1, 96>}, {pipeline_mode = #tpu.pipeline_mode<synchronous>, transform_indices = @transform_7, window_bounds = array<i64: 3, 1, 32>}, {pipeline_mode = #tpu.pipeline_mode<synchronous>, transform_indices = @transform_8, window_bounds = array<i64: 3, 1, 32>}, {pipeline_mode = #tpu.pipeline_mode<synchronous>, transform_indices = @transform_9, window_bounds = array<i64: 3, 1, 32>}, {pipeline_mode = #tpu.pipeline_mode<synchronous>, transform_indices = @transform_10, window_bounds = array<i64: 3, 1, 32>}, {pipeline_mode = #tpu.pipeline_mode<synchronous>, transform_indices = @transform_11, window_bounds = array<i64: 48, 32>}, {pipeline_mode = #tpu.pipeline_mode<synchronous>, transform_indices = @transform_12, window_bounds = array<i64: 1, 32>}, {pipeline_mode = #tpu.pipeline_mode<synchronous>, transform_indices = @transform_13, window_bounds = array<i64: 1, 32>}, {pipeline_mode = #tpu.pipeline_mode<synchronous>, transform_indices = @transform_14, window_bounds = array<i64: 3, 32, 64>}, {pipeline_mode = #tpu.pipeline_mode<synchronous>, transform_indices = @transform_15, window_bounds = array<i64: 3, 64, 32>}, {pipeline_mode = #tpu.pipeline_mode<synchronous>, transform_indices = @transform_16, window_bounds = array<i64: 3, 32, 32>}, {pipeline_mode = #tpu.pipeline_mode<synchronous>, transform_indices = @transform_17, window_bounds = array<i64: 3, 32, 96>}, {pipeline_mode = #tpu.pipeline_mode<synchronous>, transform_indices = @transform_18, window_bounds = array<i64: 2, 1, 64>}, {pipeline_mode = #tpu.pipeline_mode<synchronous>, transform_indices = @transform_19, window_bounds = array<i64: 2, 1, 32>}, {pipeline_mode = #tpu.pipeline_mode<synchronous>, transform_indices = @transform_20, window_bounds = array<i64: 64, 32>}, {pipeline_mode = #tpu.pipeline_mode<synchronous>, transform_indices = @transform_21, window_bounds = array<i64: 2, 1, 32>}, {pipeline_mode = #tpu.pipeline_mode<synchronous>, transform_indices = @transform_22, window_bounds = array<i64: 2, 1, 96>}, {pipeline_mode = #tpu.pipeline_mode<synchronous>, transform_indices = @transform_23, window_bounds = array<i64: 4, 16, 64>}, {pipeline_mode = #tpu.pipeline_mode<synchronous>, transform_indices = @transform_24, window_bounds = array<i64: 4, 16, 32>}, {pipeline_mode = #tpu.pipeline_mode<synchronous>, transform_indices = @transform_25, window_bounds = array<i64: 2, 1, 32>}, {pipeline_mode = #tpu.pipeline_mode<synchronous>, transform_indices = @transform_26, window_bounds = array<i64: 2, 1, 32>}, {pipeline_mode = #tpu.pipeline_mode<synchronous>, transform_indices = @transform_27, window_bounds = array<i64: 2, 1, 32>}, {pipeline_mode = #tpu.pipeline_mode<synchronous>, transform_indices = @transform_28, window_bounds = array<i64: 2, 1, 32>}, {pipeline_mode = #tpu.pipeline_mode<synchronous>, transform_indices = @transform_29, window_bounds = array<i64: 32, 16>}, {pipeline_mode = #tpu.pipeline_mode<synchronous>, transform_indices = @transform_30, window_bounds = array<i64: 1, 16>}, {pipeline_mode = #tpu.pipeline_mode<synchronous>, transform_indices = @transform_31, window_bounds = array<i64: 1, 16>}, {pipeline_mode = #tpu.pipeline_mode<synchronous>, transform_indices = @transform_32, window_bounds = array<i64: 1, 32>}, {pipeline_mode = #tpu.pipeline_mode<synchronous>, transform_indices = @transform_33, window_bounds = array<i64: 1, 32>}, {pipeline_mode = #tpu.pipeline_mode<synchronous>, transform_indices = @transform_34, window_bounds = array<i64: 48, 32>}, {pipeline_mode = #tpu.pipeline_mode<synchronous>, transform_indices = @transform_35, window_bounds = array<i64: 2, 32, 64>}, {pipeline_mode = #tpu.pipeline_mode<synchronous>, transform_indices = @transform_36, window_bounds = array<i64: 2, 64, 32>}, {pipeline_mode = #tpu.pipeline_mode<synchronous>, transform_indices = @transform_37, window_bounds = array<i64: 2, 32, 32>}, {pipeline_mode = #tpu.pipeline_mode<synchronous>, transform_indices = @transform_38, window_bounds = array<i64: 2, 32, 96>}, {transform_indices = @transform_39, window_bounds = array<i64: 1, 16, 64>}]} {
    %c0 = arith.constant 0 : index
    %c0_0 = arith.constant 0 : index
    %c0_1 = arith.constant 0 : index
    %0 = vector.load %arg1[%c0, %c0_0, %c0_1] : memref<1x32x48xf32, #tpu.memory_space<vmem>>, vector<1x32x48xf32>
    %1 = vector.shape_cast %0 : vector<1x32x48xf32> to vector<32x48xf32>
    %c0_2 = arith.constant 0 : index
    %c0_3 = arith.constant 0 : index
    %2 = vector.load %arg12[%c0_2, %c0_3] : memref<48x32xbf16, #tpu.memory_space<vmem>>, vector<48x32xbf16>
    %3 = arith.truncf %1 : vector<32x48xf32> to vector<32x48xbf16>
    %cst = arith.constant dense<0.000000e+00> : vector<32x32xf32>
    %4 = tpu.matmul %3, %2, %cst {dimension_numbers = #tpu.dot_dimension_numbers<[1], [0], [0], [1], [0, 0, 1, 1], [], []>} : vector<32x48xbf16>, vector<48x32xbf16>, vector<32x32xf32> -> vector<32x32xf32>
    %c0_4 = arith.constant 0 : index
    %c0_5 = arith.constant 0 : index
    %5 = vector.load %arg5[%c0_4, %c0_5] : memref<32x32xf32, #tpu.memory_space<vmem>>, vector<32x32xf32>
    %6 = arith.addf %4, %5 : vector<32x32xf32>
    %c0_6 = arith.constant 0 : index
    %c0_7 = arith.constant 0 : index
    %7 = vector.load %arg14[%c0_6, %c0_7] : memref<1x32xf32, #tpu.memory_space<vmem>>, vector<1x32xf32>
    %c0_8 = arith.constant 0 : index
    %c0_9 = arith.constant 0 : index
    %8 = vector.load %arg13[%c0_8, %c0_9] : memref<1x32xf32, #tpu.memory_space<vmem>>, vector<1x32xf32>
    %cst_10 = arith.constant dense<0.000000e+00> : vector<32xf32>
    %9 = vector.multi_reduction <add>, %6, %cst_10 [1] : vector<32x32xf32> to vector<32xf32>
    %10 = vector.shape_cast %9 : vector<32xf32> to vector<32x1xf32>
    %cst_11 = arith.constant 3.200000e+01 : f32
    %11 = vector.broadcast %cst_11 : f32 to vector<32x1xf32>
    %12 = arith.divf %10, %11 : vector<32x1xf32>
    %13 = vector.broadcast %12 : vector<32x1xf32> to vector<32x32xf32>
    %14 = arith.subf %6, %13 : vector<32x32xf32>
    %15 = arith.mulf %14, %14 : vector<32x32xf32>
    %cst_12 = arith.constant dense<0.000000e+00> : vector<32xf32>
    %16 = vector.multi_reduction <add>, %15, %cst_12 [1] : vector<32x32xf32> to vector<32xf32>
    %17 = vector.shape_cast %16 : vector<32xf32> to vector<32x1xf32>
    %cst_13 = arith.constant 3.200000e+01 : f32
    %18 = vector.broadcast %cst_13 : f32 to vector<32x1xf32>
    %19 = arith.divf %17, %18 : vector<32x1xf32>
    %20 = vector.broadcast %12 : vector<32x1xf32> to vector<32x32xf32>
    %21 = arith.subf %6, %20 : vector<32x32xf32>
    %cst_14 = arith.constant 9.99999974E-6 : f32
    %22 = vector.broadcast %cst_14 : f32 to vector<32x1xf32>
    %23 = arith.addf %19, %22 : vector<32x1xf32>
    %24 = math.rsqrt %23 : vector<32x1xf32>
    %25 = vector.broadcast %24 : vector<32x1xf32> to vector<32x32xf32>
    %26 = arith.mulf %21, %25 : vector<32x32xf32>
    %27 = vector.broadcast %7 : vector<1x32xf32> to vector<32x32xf32>
    %28 = arith.mulf %26, %27 : vector<32x32xf32>
    %29 = vector.broadcast %8 : vector<1x32xf32> to vector<32x32xf32>
    %30 = arith.addf %28, %29 : vector<32x32xf32>
    %c0_15 = arith.constant 0 : index
    %c0_16 = arith.constant 0 : index
    %c0_17 = arith.constant 0 : index
    %31 = vector.load %arg9[%c0_15, %c0_16, %c0_17] : memref<3x1x32xf32, #tpu.memory_space<vmem>>, vector<1x1x32xf32>
    %32 = vector.shape_cast %31 : vector<1x1x32xf32> to vector<1x32xf32>
    %c0_18 = arith.constant 0 : index
    %c0_19 = arith.constant 0 : index
    %c0_20 = arith.constant 0 : index
    %33 = vector.load %arg8[%c0_18, %c0_19, %c0_20] : memref<3x1x32xf32, #tpu.memory_space<vmem>>, vector<1x1x32xf32>
    %34 = vector.shape_cast %33 : vector<1x1x32xf32> to vector<1x32xf32>
    %cst_21 = arith.constant dense<0.000000e+00> : vector<32xf32>
    %35 = vector.multi_reduction <add>, %30, %cst_21 [1] : vector<32x32xf32> to vector<32xf32>
    %36 = vector.shape_cast %35 : vector<32xf32> to vector<32x1xf32>
    %cst_22 = arith.constant 3.200000e+01 : f32
    %37 = vector.broadcast %cst_22 : f32 to vector<32x1xf32>
    %38 = arith.divf %36, %37 : vector<32x1xf32>
    %39 = vector.broadcast %38 : vector<32x1xf32> to vector<32x32xf32>
    %40 = arith.subf %30, %39 : vector<32x32xf32>
    %41 = arith.mulf %40, %40 : vector<32x32xf32>
    %cst_23 = arith.constant dense<0.000000e+00> : vector<32xf32>
    %42 = vector.multi_reduction <add>, %41, %cst_23 [1] : vector<32x32xf32> to vector<32xf32>
    %43 = vector.shape_cast %42 : vector<32xf32> to vector<32x1xf32>
    %cst_24 = arith.constant 3.200000e+01 : f32
    %44 = vector.broadcast %cst_24 : f32 to vector<32x1xf32>
    %45 = arith.divf %43, %44 : vector<32x1xf32>
    %46 = vector.broadcast %38 : vector<32x1xf32> to vector<32x32xf32>
    %47 = arith.subf %30, %46 : vector<32x32xf32>
    %cst_25 = arith.constant 9.99999974E-6 : f32
    %48 = vector.broadcast %cst_25 : f32 to vector<32x1xf32>
    %49 = arith.addf %45, %48 : vector<32x1xf32>
    %50 = math.rsqrt %49 : vector<32x1xf32>
    %51 = vector.broadcast %50 : vector<32x1xf32> to vector<32x32xf32>
    %52 = arith.mulf %47, %51 : vector<32x32xf32>
    %53 = vector.broadcast %32 : vector<1x32xf32> to vector<32x32xf32>
    %54 = arith.mulf %52, %53 : vector<32x32xf32>
    %55 = vector.broadcast %34 : vector<1x32xf32> to vector<32x32xf32>
    %56 = arith.addf %54, %55 : vector<32x32xf32>
    %c0_26 = arith.constant 0 : index
    %c0_27 = arith.constant 0 : index
    %c0_28 = arith.constant 0 : index
    %57 = vector.load %arg18[%c0_26, %c0_27, %c0_28] : memref<3x32x96xbf16, #tpu.memory_space<vmem>>, vector<1x32x96xbf16>
    %58 = vector.shape_cast %57 : vector<1x32x96xbf16> to vector<32x96xbf16>
    %c0_29 = arith.constant 0 : index
    %c0_30 = arith.constant 0 : index
    %c0_31 = arith.constant 0 : index
    %59 = vector.load %arg7[%c0_29, %c0_30, %c0_31] : memref<3x1x96xf32, #tpu.memory_space<vmem>>, vector<1x1x96xf32>
    %60 = vector.shape_cast %59 : vector<1x1x96xf32> to vector<1x96xf32>
    %c0_32 = arith.constant 0 : index
    %c0_33 = arith.constant 0 : index
    %c0_34 = arith.constant 0 : index
    %61 = vector.load %arg17[%c0_32, %c0_33, %c0_34] : memref<3x32x32xbf16, #tpu.memory_space<vmem>>, vector<1x32x32xbf16>
    %62 = vector.shape_cast %61 : vector<1x32x32xbf16> to vector<32x32xbf16>
    %c0_35 = arith.constant 0 : index
    %c0_36 = arith.constant 0 : index
    %c0_37 = arith.constant 0 : index
    %63 = vector.load %arg6[%c0_35, %c0_36, %c0_37] : memref<3x1x32xf32, #tpu.memory_space<vmem>>, vector<1x1x32xf32>
    %64 = vector.shape_cast %63 : vector<1x1x32xf32> to vector<1x32xf32>
    %65 = arith.truncf %56 : vector<32x32xf32> to vector<32x32xbf16>
    %cst_38 = arith.constant dense<0.000000e+00> : vector<32x96xf32>
    %66 = tpu.matmul %65, %58, %cst_38 {dimension_numbers = #tpu.dot_dimension_numbers<[1], [0], [0], [1], [0, 0, 1, 1], [], []>} : vector<32x32xbf16>, vector<32x96xbf16>, vector<32x96xf32> -> vector<32x96xf32>
    %67 = vector.broadcast %60 : vector<1x96xf32> to vector<32x96xf32>
    %68 = arith.addf %66, %67 : vector<32x96xf32>
    %69 = vector.extract_strided_slice %68 {offsets = [0, 0], sizes = [32, 32], strides = [1, 1]} : vector<32x96xf32> to vector<32x32xf32>
    %70 = vector.extract_strided_slice %68 {offsets = [0, 32], sizes = [32, 32], strides = [1, 1]} : vector<32x96xf32> to vector<32x32xf32>
    %71 = vector.extract_strided_slice %68 {offsets = [0, 64], sizes = [32, 32], strides = [1, 1]} : vector<32x96xf32> to vector<32x32xf32>
    %72 = tpu.transpose %70, [1, 0] : vector<32x32xf32> -> vector<32x32xf32>
    %73 = tpu.iota {dimensions = array<i32: 1>} : vector<32x32xi32>
    %c17_i32 = arith.constant 17 : i32
    %74 = vector.broadcast %c17_i32 : i32 to vector<32x32xi32>
    %75 = arith.cmpi slt, %73, %74 : vector<32x32xi32>
    %76 = vector.extract_strided_slice %69 {offsets = [0, 0], sizes = [32, 8], strides = [1, 1]} : vector<32x32xf32> to vector<32x8xf32>
    %77 = vector.extract_strided_slice %72 {offsets = [0, 0], sizes = [8, 32], strides = [1, 1]} : vector<32x32xf32> to vector<8x32xf32>
    %78 = vector.extract_strided_slice %71 {offsets = [0, 0], sizes = [32, 8], strides = [1, 1]} : vector<32x32xf32> to vector<32x8xf32>
    %cst_39 = arith.constant dense<0.000000e+00> : vector<32x32xf32>
    %79 = tpu.matmul %76, %77, %cst_39 {dimension_numbers = #tpu.dot_dimension_numbers<[1], [0], [0], [1], [0, 0, 1, 1], [], []>} : vector<32x8xf32>, vector<8x32xf32>, vector<32x32xf32> -> vector<32x32xf32>
    %cst_40 = arith.constant 0.353553385 : f32
    %80 = vector.broadcast %cst_40 : f32 to vector<32x32xf32>
    %81 = arith.mulf %79, %80 : vector<32x32xf32>
    %cst_41 = arith.constant -1.000000e+30 : f32
    %82 = vector.broadcast %cst_41 : f32 to vector<32x32xf32>
    %83 = arith.select %75, %81, %82 : vector<32x32xi1>, vector<32x32xf32>
    %cst_42 = arith.constant dense<0xFF800000> : vector<32xf32>
    %84 = vector.multi_reduction <maximumf>, %83, %cst_42 [1] : vector<32x32xf32> to vector<32xf32>
    %85 = vector.shape_cast %84 : vector<32xf32> to vector<32x1xf32>
    %86 = vector.broadcast %85 : vector<32x1xf32> to vector<32x32xf32>
    %87 = arith.subf %83, %86 : vector<32x32xf32>
    %88 = math.exp %87 : vector<32x32xf32>
    %cst_43 = arith.constant dense<0.000000e+00> : vector<32xf32>
    %89 = vector.multi_reduction <add>, %88, %cst_43 [1] : vector<32x32xf32> to vector<32xf32>
    %90 = vector.shape_cast %89 : vector<32xf32> to vector<32x1xf32>
    %91 = tpu.reciprocal %90 {approx = true} : vector<32x1xf32> -> vector<32x1xf32>
    %92 = vector.broadcast %91 : vector<32x1xf32> to vector<32x32xf32>
    %93 = arith.mulf %88, %92 : vector<32x32xf32>
    %cst_44 = arith.constant dense<0.000000e+00> : vector<32x8xf32>
    %94 = tpu.matmul %93, %78, %cst_44 {dimension_numbers = #tpu.dot_dimension_numbers<[1], [0], [0], [1], [0, 0, 1, 1], [], []>} : vector<32x32xf32>, vector<32x8xf32>, vector<32x8xf32> -> vector<32x8xf32>
    %95 = vector.extract_strided_slice %69 {offsets = [0, 8], sizes = [32, 8], strides = [1, 1]} : vector<32x32xf32> to vector<32x8xf32>
    %96 = vector.extract_strided_slice %72 {offsets = [8, 0], sizes = [8, 32], strides = [1, 1]} : vector<32x32xf32> to vector<8x32xf32>
    %97 = vector.extract_strided_slice %71 {offsets = [0, 8], sizes = [32, 8], strides = [1, 1]} : vector<32x32xf32> to vector<32x8xf32>
    %cst_45 = arith.constant dense<0.000000e+00> : vector<32x32xf32>
    %98 = tpu.matmul %95, %96, %cst_45 {dimension_numbers = #tpu.dot_dimension_numbers<[1], [0], [0], [1], [0, 0, 1, 1], [], []>} : vector<32x8xf32>, vector<8x32xf32>, vector<32x32xf32> -> vector<32x32xf32>
    %cst_46 = arith.constant 0.353553385 : f32
    %99 = vector.broadcast %cst_46 : f32 to vector<32x32xf32>
    %100 = arith.mulf %98, %99 : vector<32x32xf32>
    %cst_47 = arith.constant -1.000000e+30 : f32
    %101 = vector.broadcast %cst_47 : f32 to vector<32x32xf32>
    %102 = arith.select %75, %100, %101 : vector<32x32xi1>, vector<32x32xf32>
    %cst_48 = arith.constant dense<0xFF800000> : vector<32xf32>
    %103 = vector.multi_reduction <maximumf>, %102, %cst_48 [1] : vector<32x32xf32> to vector<32xf32>
    %104 = vector.shape_cast %103 : vector<32xf32> to vector<32x1xf32>
    %105 = vector.broadcast %104 : vector<32x1xf32> to vector<32x32xf32>
    %106 = arith.subf %102, %105 : vector<32x32xf32>
    %107 = math.exp %106 : vector<32x32xf32>
    %cst_49 = arith.constant dense<0.000000e+00> : vector<32xf32>
    %108 = vector.multi_reduction <add>, %107, %cst_49 [1] : vector<32x32xf32> to vector<32xf32>
    %109 = vector.shape_cast %108 : vector<32xf32> to vector<32x1xf32>
    %110 = tpu.reciprocal %109 {approx = true} : vector<32x1xf32> -> vector<32x1xf32>
    %111 = vector.broadcast %110 : vector<32x1xf32> to vector<32x32xf32>
    %112 = arith.mulf %107, %111 : vector<32x32xf32>
    %cst_50 = arith.constant dense<0.000000e+00> : vector<32x8xf32>
    %113 = tpu.matmul %112, %97, %cst_50 {dimension_numbers = #tpu.dot_dimension_numbers<[1], [0], [0], [1], [0, 0, 1, 1], [], []>} : vector<32x32xf32>, vector<32x8xf32>, vector<32x8xf32> -> vector<32x8xf32>
    %114 = vector.extract_strided_slice %69 {offsets = [0, 16], sizes = [32, 8], strides = [1, 1]} : vector<32x32xf32> to vector<32x8xf32>
    %115 = vector.extract_strided_slice %72 {offsets = [16, 0], sizes = [8, 32], strides = [1, 1]} : vector<32x32xf32> to vector<8x32xf32>
    %116 = vector.extract_strided_slice %71 {offsets = [0, 16], sizes = [32, 8], strides = [1, 1]} : vector<32x32xf32> to vector<32x8xf32>
    %cst_51 = arith.constant dense<0.000000e+00> : vector<32x32xf32>
    %117 = tpu.matmul %114, %115, %cst_51 {dimension_numbers = #tpu.dot_dimension_numbers<[1], [0], [0], [1], [0, 0, 1, 1], [], []>} : vector<32x8xf32>, vector<8x32xf32>, vector<32x32xf32> -> vector<32x32xf32>
    %cst_52 = arith.constant 0.353553385 : f32
    %118 = vector.broadcast %cst_52 : f32 to vector<32x32xf32>
    %119 = arith.mulf %117, %118 : vector<32x32xf32>
    %cst_53 = arith.constant -1.000000e+30 : f32
    %120 = vector.broadcast %cst_53 : f32 to vector<32x32xf32>
    %121 = arith.select %75, %119, %120 : vector<32x32xi1>, vector<32x32xf32>
    %cst_54 = arith.constant dense<0xFF800000> : vector<32xf32>
    %122 = vector.multi_reduction <maximumf>, %121, %cst_54 [1] : vector<32x32xf32> to vector<32xf32>
    %123 = vector.shape_cast %122 : vector<32xf32> to vector<32x1xf32>
    %124 = vector.broadcast %123 : vector<32x1xf32> to vector<32x32xf32>
    %125 = arith.subf %121, %124 : vector<32x32xf32>
    %126 = math.exp %125 : vector<32x32xf32>
    %cst_55 = arith.constant dense<0.000000e+00> : vector<32xf32>
    %127 = vector.multi_reduction <add>, %126, %cst_55 [1] : vector<32x32xf32> to vector<32xf32>
    %128 = vector.shape_cast %127 : vector<32xf32> to vector<32x1xf32>
    %129 = tpu.reciprocal %128 {approx = true} : vector<32x1xf32> -> vector<32x1xf32>
    %130 = vector.broadcast %129 : vector<32x1xf32> to vector<32x32xf32>
    %131 = arith.mulf %126, %130 : vector<32x32xf32>
    %cst_56 = arith.constant dense<0.000000e+00> : vector<32x8xf32>
    %132 = tpu.matmul %131, %116, %cst_56 {dimension_numbers = #tpu.dot_dimension_numbers<[1], [0], [0], [1], [0, 0, 1, 1], [], []>} : vector<32x32xf32>, vector<32x8xf32>, vector<32x8xf32> -> vector<32x8xf32>
    %133 = vector.extract_strided_slice %69 {offsets = [0, 24], sizes = [32, 8], strides = [1, 1]} : vector<32x32xf32> to vector<32x8xf32>
    %134 = vector.extract_strided_slice %72 {offsets = [24, 0], sizes = [8, 32], strides = [1, 1]} : vector<32x32xf32> to vector<8x32xf32>
    %135 = vector.extract_strided_slice %71 {offsets = [0, 24], sizes = [32, 8], strides = [1, 1]} : vector<32x32xf32> to vector<32x8xf32>
    %cst_57 = arith.constant dense<0.000000e+00> : vector<32x32xf32>
    %136 = tpu.matmul %133, %134, %cst_57 {dimension_numbers = #tpu.dot_dimension_numbers<[1], [0], [0], [1], [0, 0, 1, 1], [], []>} : vector<32x8xf32>, vector<8x32xf32>, vector<32x32xf32> -> vector<32x32xf32>
    %cst_58 = arith.constant 0.353553385 : f32
    %137 = vector.broadcast %cst_58 : f32 to vector<32x32xf32>
    %138 = arith.mulf %136, %137 : vector<32x32xf32>
    %cst_59 = arith.constant -1.000000e+30 : f32
    %139 = vector.broadcast %cst_59 : f32 to vector<32x32xf32>
    %140 = arith.select %75, %138, %139 : vector<32x32xi1>, vector<32x32xf32>
    %cst_60 = arith.constant dense<0xFF800000> : vector<32xf32>
    %141 = vector.multi_reduction <maximumf>, %140, %cst_60 [1] : vector<32x32xf32> to vector<32xf32>
    %142 = vector.shape_cast %141 : vector<32xf32> to vector<32x1xf32>
    %143 = vector.broadcast %142 : vector<32x1xf32> to vector<32x32xf32>
    %144 = arith.subf %140, %143 : vector<32x32xf32>
    %145 = math.exp %144 : vector<32x32xf32>
    %cst_61 = arith.constant dense<0.000000e+00> : vector<32xf32>
    %146 = vector.multi_reduction <add>, %145, %cst_61 [1] : vector<32x32xf32> to vector<32xf32>
    %147 = vector.shape_cast %146 : vector<32xf32> to vector<32x1xf32>
    %148 = tpu.reciprocal %147 {approx = true} : vector<32x1xf32> -> vector<32x1xf32>
    %149 = vector.broadcast %148 : vector<32x1xf32> to vector<32x32xf32>
    %150 = arith.mulf %145, %149 : vector<32x32xf32>
    %cst_62 = arith.constant dense<0.000000e+00> : vector<32x8xf32>
    %151 = tpu.matmul %150, %135, %cst_62 {dimension_numbers = #tpu.dot_dimension_numbers<[1], [0], [0], [1], [0, 0, 1, 1], [], []>} : vector<32x32xf32>, vector<32x8xf32>, vector<32x8xf32> -> vector<32x8xf32>
    %152 = tpu.concatenate %94, %113, %132, %151 in 1 : vector<32x8xf32>, vector<32x8xf32>, vector<32x8xf32>, vector<32x8xf32> -> vector<32x32xf32>
    %153 = arith.truncf %152 : vector<32x32xf32> to vector<32x32xbf16>
    %cst_63 = arith.constant dense<0.000000e+00> : vector<32x32xf32>
    %154 = tpu.matmul %153, %62, %cst_63 {dimension_numbers = #tpu.dot_dimension_numbers<[1], [0], [0], [1], [0, 0, 1, 1], [], []>} : vector<32x32xbf16>, vector<32x32xbf16>, vector<32x32xf32> -> vector<32x32xf32>
    %155 = vector.broadcast %64 : vector<1x32xf32> to vector<32x32xf32>
    %156 = arith.addf %154, %155 : vector<32x32xf32>
    %157 = arith.addf %30, %156 : vector<32x32xf32>
    %c0_64 = arith.constant 0 : index
    %c0_65 = arith.constant 0 : index
    %c0_66 = arith.constant 0 : index
    %158 = vector.load %arg11[%c0_64, %c0_65, %c0_66] : memref<3x1x32xf32, #tpu.memory_space<vmem>>, vector<1x1x32xf32>
    %159 = vector.shape_cast %158 : vector<1x1x32xf32> to vector<1x32xf32>
    %c0_67 = arith.constant 0 : index
    %c0_68 = arith.constant 0 : index
    %c0_69 = arith.constant 0 : index
    %160 = vector.load %arg10[%c0_67, %c0_68, %c0_69] : memref<3x1x32xf32, #tpu.memory_space<vmem>>, vector<1x1x32xf32>
    %161 = vector.shape_cast %160 : vector<1x1x32xf32> to vector<1x32xf32>
    %cst_70 = arith.constant dense<0.000000e+00> : vector<32xf32>
    %162 = vector.multi_reduction <add>, %157, %cst_70 [1] : vector<32x32xf32> to vector<32xf32>
    %163 = vector.shape_cast %162 : vector<32xf32> to vector<32x1xf32>
    %cst_71 = arith.constant 3.200000e+01 : f32
    %164 = vector.broadcast %cst_71 : f32 to vector<32x1xf32>
    %165 = arith.divf %163, %164 : vector<32x1xf32>
    %166 = vector.broadcast %165 : vector<32x1xf32> to vector<32x32xf32>
    %167 = arith.subf %157, %166 : vector<32x32xf32>
    %168 = arith.mulf %167, %167 : vector<32x32xf32>
    %cst_72 = arith.constant dense<0.000000e+00> : vector<32xf32>
    %169 = vector.multi_reduction <add>, %168, %cst_72 [1] : vector<32x32xf32> to vector<32xf32>
    %170 = vector.shape_cast %169 : vector<32xf32> to vector<32x1xf32>
    %cst_73 = arith.constant 3.200000e+01 : f32
    %171 = vector.broadcast %cst_73 : f32 to vector<32x1xf32>
    %172 = arith.divf %170, %171 : vector<32x1xf32>
    %173 = vector.broadcast %165 : vector<32x1xf32> to vector<32x32xf32>
    %174 = arith.subf %157, %173 : vector<32x32xf32>
    %cst_74 = arith.constant 9.99999974E-6 : f32
    %175 = vector.broadcast %cst_74 : f32 to vector<32x1xf32>
    %176 = arith.addf %172, %175 : vector<32x1xf32>
    %177 = math.rsqrt %176 : vector<32x1xf32>
    %178 = vector.broadcast %177 : vector<32x1xf32> to vector<32x32xf32>
    %179 = arith.mulf %174, %178 : vector<32x32xf32>
    %180 = vector.broadcast %159 : vector<1x32xf32> to vector<32x32xf32>
    %181 = arith.mulf %179, %180 : vector<32x32xf32>
    %182 = vector.broadcast %161 : vector<1x32xf32> to vector<32x32xf32>
    %183 = arith.addf %181, %182 : vector<32x32xf32>
    %c0_75 = arith.constant 0 : index
    %c0_76 = arith.constant 0 : index
    %c0_77 = arith.constant 0 : index
    %184 = vector.load %arg15[%c0_75, %c0_76, %c0_77] : memref<3x32x64xbf16, #tpu.memory_space<vmem>>, vector<1x32x64xbf16>
    %185 = vector.shape_cast %184 : vector<1x32x64xbf16> to vector<32x64xbf16>
    %c0_78 = arith.constant 0 : index
    %c0_79 = arith.constant 0 : index
    %c0_80 = arith.constant 0 : index
    %186 = vector.load %arg3[%c0_78, %c0_79, %c0_80] : memref<3x1x64xf32, #tpu.memory_space<vmem>>, vector<1x1x64xf32>
    %187 = vector.shape_cast %186 : vector<1x1x64xf32> to vector<1x64xf32>
    %c0_81 = arith.constant 0 : index
    %c0_82 = arith.constant 0 : index
    %c0_83 = arith.constant 0 : index
    %188 = vector.load %arg16[%c0_81, %c0_82, %c0_83] : memref<3x64x32xbf16, #tpu.memory_space<vmem>>, vector<1x64x32xbf16>
    %189 = vector.shape_cast %188 : vector<1x64x32xbf16> to vector<64x32xbf16>
    %c0_84 = arith.constant 0 : index
    %c0_85 = arith.constant 0 : index
    %c0_86 = arith.constant 0 : index
    %190 = vector.load %arg4[%c0_84, %c0_85, %c0_86] : memref<3x1x32xf32, #tpu.memory_space<vmem>>, vector<1x1x32xf32>
    %191 = vector.shape_cast %190 : vector<1x1x32xf32> to vector<1x32xf32>
    %192 = arith.truncf %183 : vector<32x32xf32> to vector<32x32xbf16>
    %cst_87 = arith.constant dense<0.000000e+00> : vector<32x64xf32>
    %193 = tpu.matmul %192, %185, %cst_87 {dimension_numbers = #tpu.dot_dimension_numbers<[1], [0], [0], [1], [0, 0, 1, 1], [], []>} : vector<32x32xbf16>, vector<32x64xbf16>, vector<32x64xf32> -> vector<32x64xf32>
    %194 = vector.broadcast %187 : vector<1x64xf32> to vector<32x64xf32>
    %195 = arith.addf %193, %194 : vector<32x64xf32>
    %cst_88 = arith.constant 1.702000e+00 : f32
    %196 = vector.broadcast %cst_88 : f32 to vector<32x64xf32>
    %197 = arith.mulf %196, %195 : vector<32x64xf32>
    %198 = arith.negf %197 : vector<32x64xf32>
    %199 = math.exp %198 : vector<32x64xf32>
    %cst_89 = arith.constant 1.000000e+00 : f32
    %200 = vector.broadcast %cst_89 : f32 to vector<32x64xf32>
    %201 = arith.addf %200, %199 : vector<32x64xf32>
    %202 = arith.divf %200, %201 : vector<32x64xf32>
    %203 = arith.mulf %195, %202 : vector<32x64xf32>
    %204 = arith.truncf %203 : vector<32x64xf32> to vector<32x64xbf16>
    %cst_90 = arith.constant dense<0.000000e+00> : vector<32x32xf32>
    %205 = tpu.matmul %204, %189, %cst_90 {dimension_numbers = #tpu.dot_dimension_numbers<[1], [0], [0], [1], [0, 0, 1, 1], [], []>} : vector<32x64xbf16>, vector<64x32xbf16>, vector<32x32xf32> -> vector<32x32xf32>
    %206 = vector.broadcast %191 : vector<1x32xf32> to vector<32x32xf32>
    %207 = arith.addf %205, %206 : vector<32x32xf32>
    %208 = arith.addf %157, %207 : vector<32x32xf32>
    %c1 = arith.constant 1 : index
    %c0_91 = arith.constant 0 : index
    %c0_92 = arith.constant 0 : index
    %209 = vector.load %arg9[%c1, %c0_91, %c0_92] : memref<3x1x32xf32, #tpu.memory_space<vmem>>, vector<1x1x32xf32>
    %210 = vector.shape_cast %209 : vector<1x1x32xf32> to vector<1x32xf32>
    %c1_93 = arith.constant 1 : index
    %c0_94 = arith.constant 0 : index
    %c0_95 = arith.constant 0 : index
    %211 = vector.load %arg8[%c1_93, %c0_94, %c0_95] : memref<3x1x32xf32, #tpu.memory_space<vmem>>, vector<1x1x32xf32>
    %212 = vector.shape_cast %211 : vector<1x1x32xf32> to vector<1x32xf32>
    %cst_96 = arith.constant dense<0.000000e+00> : vector<32xf32>
    %213 = vector.multi_reduction <add>, %208, %cst_96 [1] : vector<32x32xf32> to vector<32xf32>
    %214 = vector.shape_cast %213 : vector<32xf32> to vector<32x1xf32>
    %cst_97 = arith.constant 3.200000e+01 : f32
    %215 = vector.broadcast %cst_97 : f32 to vector<32x1xf32>
    %216 = arith.divf %214, %215 : vector<32x1xf32>
    %217 = vector.broadcast %216 : vector<32x1xf32> to vector<32x32xf32>
    %218 = arith.subf %208, %217 : vector<32x32xf32>
    %219 = arith.mulf %218, %218 : vector<32x32xf32>
    %cst_98 = arith.constant dense<0.000000e+00> : vector<32xf32>
    %220 = vector.multi_reduction <add>, %219, %cst_98 [1] : vector<32x32xf32> to vector<32xf32>
    %221 = vector.shape_cast %220 : vector<32xf32> to vector<32x1xf32>
    %cst_99 = arith.constant 3.200000e+01 : f32
    %222 = vector.broadcast %cst_99 : f32 to vector<32x1xf32>
    %223 = arith.divf %221, %222 : vector<32x1xf32>
    %224 = vector.broadcast %216 : vector<32x1xf32> to vector<32x32xf32>
    %225 = arith.subf %208, %224 : vector<32x32xf32>
    %cst_100 = arith.constant 9.99999974E-6 : f32
    %226 = vector.broadcast %cst_100 : f32 to vector<32x1xf32>
    %227 = arith.addf %223, %226 : vector<32x1xf32>
    %228 = math.rsqrt %227 : vector<32x1xf32>
    %229 = vector.broadcast %228 : vector<32x1xf32> to vector<32x32xf32>
    %230 = arith.mulf %225, %229 : vector<32x32xf32>
    %231 = vector.broadcast %210 : vector<1x32xf32> to vector<32x32xf32>
    %232 = arith.mulf %230, %231 : vector<32x32xf32>
    %233 = vector.broadcast %212 : vector<1x32xf32> to vector<32x32xf32>
    %234 = arith.addf %232, %233 : vector<32x32xf32>
    %c1_101 = arith.constant 1 : index
    %c0_102 = arith.constant 0 : index
    %c0_103 = arith.constant 0 : index
    %235 = vector.load %arg18[%c1_101, %c0_102, %c0_103] : memref<3x32x96xbf16, #tpu.memory_space<vmem>>, vector<1x32x96xbf16>
    %236 = vector.shape_cast %235 : vector<1x32x96xbf16> to vector<32x96xbf16>
    %c1_104 = arith.constant 1 : index
    %c0_105 = arith.constant 0 : index
    %c0_106 = arith.constant 0 : index
    %237 = vector.load %arg7[%c1_104, %c0_105, %c0_106] : memref<3x1x96xf32, #tpu.memory_space<vmem>>, vector<1x1x96xf32>
    %238 = vector.shape_cast %237 : vector<1x1x96xf32> to vector<1x96xf32>
    %c1_107 = arith.constant 1 : index
    %c0_108 = arith.constant 0 : index
    %c0_109 = arith.constant 0 : index
    %239 = vector.load %arg17[%c1_107, %c0_108, %c0_109] : memref<3x32x32xbf16, #tpu.memory_space<vmem>>, vector<1x32x32xbf16>
    %240 = vector.shape_cast %239 : vector<1x32x32xbf16> to vector<32x32xbf16>
    %c1_110 = arith.constant 1 : index
    %c0_111 = arith.constant 0 : index
    %c0_112 = arith.constant 0 : index
    %241 = vector.load %arg6[%c1_110, %c0_111, %c0_112] : memref<3x1x32xf32, #tpu.memory_space<vmem>>, vector<1x1x32xf32>
    %242 = vector.shape_cast %241 : vector<1x1x32xf32> to vector<1x32xf32>
    %243 = arith.truncf %234 : vector<32x32xf32> to vector<32x32xbf16>
    %cst_113 = arith.constant dense<0.000000e+00> : vector<32x96xf32>
    %244 = tpu.matmul %243, %236, %cst_113 {dimension_numbers = #tpu.dot_dimension_numbers<[1], [0], [0], [1], [0, 0, 1, 1], [], []>} : vector<32x32xbf16>, vector<32x96xbf16>, vector<32x96xf32> -> vector<32x96xf32>
    %245 = vector.broadcast %238 : vector<1x96xf32> to vector<32x96xf32>
    %246 = arith.addf %244, %245 : vector<32x96xf32>
    %247 = vector.extract_strided_slice %246 {offsets = [0, 0], sizes = [32, 32], strides = [1, 1]} : vector<32x96xf32> to vector<32x32xf32>
    %248 = vector.extract_strided_slice %246 {offsets = [0, 32], sizes = [32, 32], strides = [1, 1]} : vector<32x96xf32> to vector<32x32xf32>
    %249 = vector.extract_strided_slice %246 {offsets = [0, 64], sizes = [32, 32], strides = [1, 1]} : vector<32x96xf32> to vector<32x32xf32>
    %250 = tpu.transpose %248, [1, 0] : vector<32x32xf32> -> vector<32x32xf32>
    %251 = tpu.iota {dimensions = array<i32: 1>} : vector<32x32xi32>
    %c17_i32_114 = arith.constant 17 : i32
    %252 = vector.broadcast %c17_i32_114 : i32 to vector<32x32xi32>
    %253 = arith.cmpi slt, %251, %252 : vector<32x32xi32>
    %254 = vector.extract_strided_slice %247 {offsets = [0, 0], sizes = [32, 8], strides = [1, 1]} : vector<32x32xf32> to vector<32x8xf32>
    %255 = vector.extract_strided_slice %250 {offsets = [0, 0], sizes = [8, 32], strides = [1, 1]} : vector<32x32xf32> to vector<8x32xf32>
    %256 = vector.extract_strided_slice %249 {offsets = [0, 0], sizes = [32, 8], strides = [1, 1]} : vector<32x32xf32> to vector<32x8xf32>
    %cst_115 = arith.constant dense<0.000000e+00> : vector<32x32xf32>
    %257 = tpu.matmul %254, %255, %cst_115 {dimension_numbers = #tpu.dot_dimension_numbers<[1], [0], [0], [1], [0, 0, 1, 1], [], []>} : vector<32x8xf32>, vector<8x32xf32>, vector<32x32xf32> -> vector<32x32xf32>
    %cst_116 = arith.constant 0.353553385 : f32
    %258 = vector.broadcast %cst_116 : f32 to vector<32x32xf32>
    %259 = arith.mulf %257, %258 : vector<32x32xf32>
    %cst_117 = arith.constant -1.000000e+30 : f32
    %260 = vector.broadcast %cst_117 : f32 to vector<32x32xf32>
    %261 = arith.select %253, %259, %260 : vector<32x32xi1>, vector<32x32xf32>
    %cst_118 = arith.constant dense<0xFF800000> : vector<32xf32>
    %262 = vector.multi_reduction <maximumf>, %261, %cst_118 [1] : vector<32x32xf32> to vector<32xf32>
    %263 = vector.shape_cast %262 : vector<32xf32> to vector<32x1xf32>
    %264 = vector.broadcast %263 : vector<32x1xf32> to vector<32x32xf32>
    %265 = arith.subf %261, %264 : vector<32x32xf32>
    %266 = math.exp %265 : vector<32x32xf32>
    %cst_119 = arith.constant dense<0.000000e+00> : vector<32xf32>
    %267 = vector.multi_reduction <add>, %266, %cst_119 [1] : vector<32x32xf32> to vector<32xf32>
    %268 = vector.shape_cast %267 : vector<32xf32> to vector<32x1xf32>
    %269 = tpu.reciprocal %268 {approx = true} : vector<32x1xf32> -> vector<32x1xf32>
    %270 = vector.broadcast %269 : vector<32x1xf32> to vector<32x32xf32>
    %271 = arith.mulf %266, %270 : vector<32x32xf32>
    %cst_120 = arith.constant dense<0.000000e+00> : vector<32x8xf32>
    %272 = tpu.matmul %271, %256, %cst_120 {dimension_numbers = #tpu.dot_dimension_numbers<[1], [0], [0], [1], [0, 0, 1, 1], [], []>} : vector<32x32xf32>, vector<32x8xf32>, vector<32x8xf32> -> vector<32x8xf32>
    %273 = vector.extract_strided_slice %247 {offsets = [0, 8], sizes = [32, 8], strides = [1, 1]} : vector<32x32xf32> to vector<32x8xf32>
    %274 = vector.extract_strided_slice %250 {offsets = [8, 0], sizes = [8, 32], strides = [1, 1]} : vector<32x32xf32> to vector<8x32xf32>
    %275 = vector.extract_strided_slice %249 {offsets = [0, 8], sizes = [32, 8], strides = [1, 1]} : vector<32x32xf32> to vector<32x8xf32>
    %cst_121 = arith.constant dense<0.000000e+00> : vector<32x32xf32>
    %276 = tpu.matmul %273, %274, %cst_121 {dimension_numbers = #tpu.dot_dimension_numbers<[1], [0], [0], [1], [0, 0, 1, 1], [], []>} : vector<32x8xf32>, vector<8x32xf32>, vector<32x32xf32> -> vector<32x32xf32>
    %cst_122 = arith.constant 0.353553385 : f32
    %277 = vector.broadcast %cst_122 : f32 to vector<32x32xf32>
    %278 = arith.mulf %276, %277 : vector<32x32xf32>
    %cst_123 = arith.constant -1.000000e+30 : f32
    %279 = vector.broadcast %cst_123 : f32 to vector<32x32xf32>
    %280 = arith.select %253, %278, %279 : vector<32x32xi1>, vector<32x32xf32>
    %cst_124 = arith.constant dense<0xFF800000> : vector<32xf32>
    %281 = vector.multi_reduction <maximumf>, %280, %cst_124 [1] : vector<32x32xf32> to vector<32xf32>
    %282 = vector.shape_cast %281 : vector<32xf32> to vector<32x1xf32>
    %283 = vector.broadcast %282 : vector<32x1xf32> to vector<32x32xf32>
    %284 = arith.subf %280, %283 : vector<32x32xf32>
    %285 = math.exp %284 : vector<32x32xf32>
    %cst_125 = arith.constant dense<0.000000e+00> : vector<32xf32>
    %286 = vector.multi_reduction <add>, %285, %cst_125 [1] : vector<32x32xf32> to vector<32xf32>
    %287 = vector.shape_cast %286 : vector<32xf32> to vector<32x1xf32>
    %288 = tpu.reciprocal %287 {approx = true} : vector<32x1xf32> -> vector<32x1xf32>
    %289 = vector.broadcast %288 : vector<32x1xf32> to vector<32x32xf32>
    %290 = arith.mulf %285, %289 : vector<32x32xf32>
    %cst_126 = arith.constant dense<0.000000e+00> : vector<32x8xf32>
    %291 = tpu.matmul %290, %275, %cst_126 {dimension_numbers = #tpu.dot_dimension_numbers<[1], [0], [0], [1], [0, 0, 1, 1], [], []>} : vector<32x32xf32>, vector<32x8xf32>, vector<32x8xf32> -> vector<32x8xf32>
    %292 = vector.extract_strided_slice %247 {offsets = [0, 16], sizes = [32, 8], strides = [1, 1]} : vector<32x32xf32> to vector<32x8xf32>
    %293 = vector.extract_strided_slice %250 {offsets = [16, 0], sizes = [8, 32], strides = [1, 1]} : vector<32x32xf32> to vector<8x32xf32>
    %294 = vector.extract_strided_slice %249 {offsets = [0, 16], sizes = [32, 8], strides = [1, 1]} : vector<32x32xf32> to vector<32x8xf32>
    %cst_127 = arith.constant dense<0.000000e+00> : vector<32x32xf32>
    %295 = tpu.matmul %292, %293, %cst_127 {dimension_numbers = #tpu.dot_dimension_numbers<[1], [0], [0], [1], [0, 0, 1, 1], [], []>} : vector<32x8xf32>, vector<8x32xf32>, vector<32x32xf32> -> vector<32x32xf32>
    %cst_128 = arith.constant 0.353553385 : f32
    %296 = vector.broadcast %cst_128 : f32 to vector<32x32xf32>
    %297 = arith.mulf %295, %296 : vector<32x32xf32>
    %cst_129 = arith.constant -1.000000e+30 : f32
    %298 = vector.broadcast %cst_129 : f32 to vector<32x32xf32>
    %299 = arith.select %253, %297, %298 : vector<32x32xi1>, vector<32x32xf32>
    %cst_130 = arith.constant dense<0xFF800000> : vector<32xf32>
    %300 = vector.multi_reduction <maximumf>, %299, %cst_130 [1] : vector<32x32xf32> to vector<32xf32>
    %301 = vector.shape_cast %300 : vector<32xf32> to vector<32x1xf32>
    %302 = vector.broadcast %301 : vector<32x1xf32> to vector<32x32xf32>
    %303 = arith.subf %299, %302 : vector<32x32xf32>
    %304 = math.exp %303 : vector<32x32xf32>
    %cst_131 = arith.constant dense<0.000000e+00> : vector<32xf32>
    %305 = vector.multi_reduction <add>, %304, %cst_131 [1] : vector<32x32xf32> to vector<32xf32>
    %306 = vector.shape_cast %305 : vector<32xf32> to vector<32x1xf32>
    %307 = tpu.reciprocal %306 {approx = true} : vector<32x1xf32> -> vector<32x1xf32>
    %308 = vector.broadcast %307 : vector<32x1xf32> to vector<32x32xf32>
    %309 = arith.mulf %304, %308 : vector<32x32xf32>
    %cst_132 = arith.constant dense<0.000000e+00> : vector<32x8xf32>
    %310 = tpu.matmul %309, %294, %cst_132 {dimension_numbers = #tpu.dot_dimension_numbers<[1], [0], [0], [1], [0, 0, 1, 1], [], []>} : vector<32x32xf32>, vector<32x8xf32>, vector<32x8xf32> -> vector<32x8xf32>
    %311 = vector.extract_strided_slice %247 {offsets = [0, 24], sizes = [32, 8], strides = [1, 1]} : vector<32x32xf32> to vector<32x8xf32>
    %312 = vector.extract_strided_slice %250 {offsets = [24, 0], sizes = [8, 32], strides = [1, 1]} : vector<32x32xf32> to vector<8x32xf32>
    %313 = vector.extract_strided_slice %249 {offsets = [0, 24], sizes = [32, 8], strides = [1, 1]} : vector<32x32xf32> to vector<32x8xf32>
    %cst_133 = arith.constant dense<0.000000e+00> : vector<32x32xf32>
    %314 = tpu.matmul %311, %312, %cst_133 {dimension_numbers = #tpu.dot_dimension_numbers<[1], [0], [0], [1], [0, 0, 1, 1], [], []>} : vector<32x8xf32>, vector<8x32xf32>, vector<32x32xf32> -> vector<32x32xf32>
    %cst_134 = arith.constant 0.353553385 : f32
    %315 = vector.broadcast %cst_134 : f32 to vector<32x32xf32>
    %316 = arith.mulf %314, %315 : vector<32x32xf32>
    %cst_135 = arith.constant -1.000000e+30 : f32
    %317 = vector.broadcast %cst_135 : f32 to vector<32x32xf32>
    %318 = arith.select %253, %316, %317 : vector<32x32xi1>, vector<32x32xf32>
    %cst_136 = arith.constant dense<0xFF800000> : vector<32xf32>
    %319 = vector.multi_reduction <maximumf>, %318, %cst_136 [1] : vector<32x32xf32> to vector<32xf32>
    %320 = vector.shape_cast %319 : vector<32xf32> to vector<32x1xf32>
    %321 = vector.broadcast %320 : vector<32x1xf32> to vector<32x32xf32>
    %322 = arith.subf %318, %321 : vector<32x32xf32>
    %323 = math.exp %322 : vector<32x32xf32>
    %cst_137 = arith.constant dense<0.000000e+00> : vector<32xf32>
    %324 = vector.multi_reduction <add>, %323, %cst_137 [1] : vector<32x32xf32> to vector<32xf32>
    %325 = vector.shape_cast %324 : vector<32xf32> to vector<32x1xf32>
    %326 = tpu.reciprocal %325 {approx = true} : vector<32x1xf32> -> vector<32x1xf32>
    %327 = vector.broadcast %326 : vector<32x1xf32> to vector<32x32xf32>
    %328 = arith.mulf %323, %327 : vector<32x32xf32>
    %cst_138 = arith.constant dense<0.000000e+00> : vector<32x8xf32>
    %329 = tpu.matmul %328, %313, %cst_138 {dimension_numbers = #tpu.dot_dimension_numbers<[1], [0], [0], [1], [0, 0, 1, 1], [], []>} : vector<32x32xf32>, vector<32x8xf32>, vector<32x8xf32> -> vector<32x8xf32>
    %330 = tpu.concatenate %272, %291, %310, %329 in 1 : vector<32x8xf32>, vector<32x8xf32>, vector<32x8xf32>, vector<32x8xf32> -> vector<32x32xf32>
    %331 = arith.truncf %330 : vector<32x32xf32> to vector<32x32xbf16>
    %cst_139 = arith.constant dense<0.000000e+00> : vector<32x32xf32>
    %332 = tpu.matmul %331, %240, %cst_139 {dimension_numbers = #tpu.dot_dimension_numbers<[1], [0], [0], [1], [0, 0, 1, 1], [], []>} : vector<32x32xbf16>, vector<32x32xbf16>, vector<32x32xf32> -> vector<32x32xf32>
    %333 = vector.broadcast %242 : vector<1x32xf32> to vector<32x32xf32>
    %334 = arith.addf %332, %333 : vector<32x32xf32>
    %335 = arith.addf %208, %334 : vector<32x32xf32>
    %c1_140 = arith.constant 1 : index
    %c0_141 = arith.constant 0 : index
    %c0_142 = arith.constant 0 : index
    %336 = vector.load %arg11[%c1_140, %c0_141, %c0_142] : memref<3x1x32xf32, #tpu.memory_space<vmem>>, vector<1x1x32xf32>
    %337 = vector.shape_cast %336 : vector<1x1x32xf32> to vector<1x32xf32>
    %c1_143 = arith.constant 1 : index
    %c0_144 = arith.constant 0 : index
    %c0_145 = arith.constant 0 : index
    %338 = vector.load %arg10[%c1_143, %c0_144, %c0_145] : memref<3x1x32xf32, #tpu.memory_space<vmem>>, vector<1x1x32xf32>
    %339 = vector.shape_cast %338 : vector<1x1x32xf32> to vector<1x32xf32>
    %cst_146 = arith.constant dense<0.000000e+00> : vector<32xf32>
    %340 = vector.multi_reduction <add>, %335, %cst_146 [1] : vector<32x32xf32> to vector<32xf32>
    %341 = vector.shape_cast %340 : vector<32xf32> to vector<32x1xf32>
    %cst_147 = arith.constant 3.200000e+01 : f32
    %342 = vector.broadcast %cst_147 : f32 to vector<32x1xf32>
    %343 = arith.divf %341, %342 : vector<32x1xf32>
    %344 = vector.broadcast %343 : vector<32x1xf32> to vector<32x32xf32>
    %345 = arith.subf %335, %344 : vector<32x32xf32>
    %346 = arith.mulf %345, %345 : vector<32x32xf32>
    %cst_148 = arith.constant dense<0.000000e+00> : vector<32xf32>
    %347 = vector.multi_reduction <add>, %346, %cst_148 [1] : vector<32x32xf32> to vector<32xf32>
    %348 = vector.shape_cast %347 : vector<32xf32> to vector<32x1xf32>
    %cst_149 = arith.constant 3.200000e+01 : f32
    %349 = vector.broadcast %cst_149 : f32 to vector<32x1xf32>
    %350 = arith.divf %348, %349 : vector<32x1xf32>
    %351 = vector.broadcast %343 : vector<32x1xf32> to vector<32x32xf32>
    %352 = arith.subf %335, %351 : vector<32x32xf32>
    %cst_150 = arith.constant 9.99999974E-6 : f32
    %353 = vector.broadcast %cst_150 : f32 to vector<32x1xf32>
    %354 = arith.addf %350, %353 : vector<32x1xf32>
    %355 = math.rsqrt %354 : vector<32x1xf32>
    %356 = vector.broadcast %355 : vector<32x1xf32> to vector<32x32xf32>
    %357 = arith.mulf %352, %356 : vector<32x32xf32>
    %358 = vector.broadcast %337 : vector<1x32xf32> to vector<32x32xf32>
    %359 = arith.mulf %357, %358 : vector<32x32xf32>
    %360 = vector.broadcast %339 : vector<1x32xf32> to vector<32x32xf32>
    %361 = arith.addf %359, %360 : vector<32x32xf32>
    %c1_151 = arith.constant 1 : index
    %c0_152 = arith.constant 0 : index
    %c0_153 = arith.constant 0 : index
    %362 = vector.load %arg15[%c1_151, %c0_152, %c0_153] : memref<3x32x64xbf16, #tpu.memory_space<vmem>>, vector<1x32x64xbf16>
    %363 = vector.shape_cast %362 : vector<1x32x64xbf16> to vector<32x64xbf16>
    %c1_154 = arith.constant 1 : index
    %c0_155 = arith.constant 0 : index
    %c0_156 = arith.constant 0 : index
    %364 = vector.load %arg3[%c1_154, %c0_155, %c0_156] : memref<3x1x64xf32, #tpu.memory_space<vmem>>, vector<1x1x64xf32>
    %365 = vector.shape_cast %364 : vector<1x1x64xf32> to vector<1x64xf32>
    %c1_157 = arith.constant 1 : index
    %c0_158 = arith.constant 0 : index
    %c0_159 = arith.constant 0 : index
    %366 = vector.load %arg16[%c1_157, %c0_158, %c0_159] : memref<3x64x32xbf16, #tpu.memory_space<vmem>>, vector<1x64x32xbf16>
    %367 = vector.shape_cast %366 : vector<1x64x32xbf16> to vector<64x32xbf16>
    %c1_160 = arith.constant 1 : index
    %c0_161 = arith.constant 0 : index
    %c0_162 = arith.constant 0 : index
    %368 = vector.load %arg4[%c1_160, %c0_161, %c0_162] : memref<3x1x32xf32, #tpu.memory_space<vmem>>, vector<1x1x32xf32>
    %369 = vector.shape_cast %368 : vector<1x1x32xf32> to vector<1x32xf32>
    %370 = arith.truncf %361 : vector<32x32xf32> to vector<32x32xbf16>
    %cst_163 = arith.constant dense<0.000000e+00> : vector<32x64xf32>
    %371 = tpu.matmul %370, %363, %cst_163 {dimension_numbers = #tpu.dot_dimension_numbers<[1], [0], [0], [1], [0, 0, 1, 1], [], []>} : vector<32x32xbf16>, vector<32x64xbf16>, vector<32x64xf32> -> vector<32x64xf32>
    %372 = vector.broadcast %365 : vector<1x64xf32> to vector<32x64xf32>
    %373 = arith.addf %371, %372 : vector<32x64xf32>
    %cst_164 = arith.constant 1.702000e+00 : f32
    %374 = vector.broadcast %cst_164 : f32 to vector<32x64xf32>
    %375 = arith.mulf %374, %373 : vector<32x64xf32>
    %376 = arith.negf %375 : vector<32x64xf32>
    %377 = math.exp %376 : vector<32x64xf32>
    %cst_165 = arith.constant 1.000000e+00 : f32
    %378 = vector.broadcast %cst_165 : f32 to vector<32x64xf32>
    %379 = arith.addf %378, %377 : vector<32x64xf32>
    %380 = arith.divf %378, %379 : vector<32x64xf32>
    %381 = arith.mulf %373, %380 : vector<32x64xf32>
    %382 = arith.truncf %381 : vector<32x64xf32> to vector<32x64xbf16>
    %cst_166 = arith.constant dense<0.000000e+00> : vector<32x32xf32>
    %383 = tpu.matmul %382, %367, %cst_166 {dimension_numbers = #tpu.dot_dimension_numbers<[1], [0], [0], [1], [0, 0, 1, 1], [], []>} : vector<32x64xbf16>, vector<64x32xbf16>, vector<32x32xf32> -> vector<32x32xf32>
    %384 = vector.broadcast %369 : vector<1x32xf32> to vector<32x32xf32>
    %385 = arith.addf %383, %384 : vector<32x32xf32>
    %386 = arith.addf %335, %385 : vector<32x32xf32>
    %387 = vector.extract_strided_slice %386 {offsets = [0, 0], sizes = [16, 32], strides = [1, 1]} : vector<32x32xf32> to vector<16x32xf32>
    %c0_167 = arith.constant 0 : index
    %c0_168 = arith.constant 0 : index
    %c0_169 = arith.constant 0 : index
    %388 = vector.load %arg2[%c0_167, %c0_168, %c0_169] : memref<1x64x48xf32, #tpu.memory_space<vmem>>, vector<1x64x48xf32>
    %389 = vector.shape_cast %388 : vector<1x64x48xf32> to vector<64x48xf32>
    %c0_170 = arith.constant 0 : index
    %c0_171 = arith.constant 0 : index
    %390 = vector.load %arg35[%c0_170, %c0_171] : memref<48x32xbf16, #tpu.memory_space<vmem>>, vector<48x32xbf16>
    %391 = arith.truncf %389 : vector<64x48xf32> to vector<64x48xbf16>
    %cst_172 = arith.constant dense<0.000000e+00> : vector<64x32xf32>
    %392 = tpu.matmul %391, %390, %cst_172 {dimension_numbers = #tpu.dot_dimension_numbers<[1], [0], [0], [1], [0, 0, 1, 1], [], []>} : vector<64x48xbf16>, vector<48x32xbf16>, vector<64x32xf32> -> vector<64x32xf32>
    %c0_173 = arith.constant 0 : index
    %c0_174 = arith.constant 0 : index
    %393 = vector.load %arg21[%c0_173, %c0_174] : memref<64x32xf32, #tpu.memory_space<vmem>>, vector<64x32xf32>
    %394 = arith.addf %392, %393 : vector<64x32xf32>
    %c0_175 = arith.constant 0 : index
    %c0_176 = arith.constant 0 : index
    %c0_177 = arith.constant 0 : index
    %395 = vector.load %arg27[%c0_175, %c0_176, %c0_177] : memref<2x1x32xf32, #tpu.memory_space<vmem>>, vector<1x1x32xf32>
    %396 = vector.shape_cast %395 : vector<1x1x32xf32> to vector<1x32xf32>
    %c0_178 = arith.constant 0 : index
    %c0_179 = arith.constant 0 : index
    %c0_180 = arith.constant 0 : index
    %397 = vector.load %arg26[%c0_178, %c0_179, %c0_180] : memref<2x1x32xf32, #tpu.memory_space<vmem>>, vector<1x1x32xf32>
    %398 = vector.shape_cast %397 : vector<1x1x32xf32> to vector<1x32xf32>
    %cst_181 = arith.constant dense<0.000000e+00> : vector<64xf32>
    %399 = vector.multi_reduction <add>, %394, %cst_181 [1] : vector<64x32xf32> to vector<64xf32>
    %400 = vector.shape_cast %399 : vector<64xf32> to vector<64x1xf32>
    %cst_182 = arith.constant 3.200000e+01 : f32
    %401 = vector.broadcast %cst_182 : f32 to vector<64x1xf32>
    %402 = arith.divf %400, %401 : vector<64x1xf32>
    %403 = vector.broadcast %402 : vector<64x1xf32> to vector<64x32xf32>
    %404 = arith.subf %394, %403 : vector<64x32xf32>
    %405 = arith.mulf %404, %404 : vector<64x32xf32>
    %cst_183 = arith.constant dense<0.000000e+00> : vector<64xf32>
    %406 = vector.multi_reduction <add>, %405, %cst_183 [1] : vector<64x32xf32> to vector<64xf32>
    %407 = vector.shape_cast %406 : vector<64xf32> to vector<64x1xf32>
    %cst_184 = arith.constant 3.200000e+01 : f32
    %408 = vector.broadcast %cst_184 : f32 to vector<64x1xf32>
    %409 = arith.divf %407, %408 : vector<64x1xf32>
    %410 = vector.broadcast %402 : vector<64x1xf32> to vector<64x32xf32>
    %411 = arith.subf %394, %410 : vector<64x32xf32>
    %cst_185 = arith.constant 9.99999997E-7 : f32
    %412 = vector.broadcast %cst_185 : f32 to vector<64x1xf32>
    %413 = arith.addf %409, %412 : vector<64x1xf32>
    %414 = math.rsqrt %413 : vector<64x1xf32>
    %415 = vector.broadcast %414 : vector<64x1xf32> to vector<64x32xf32>
    %416 = arith.mulf %411, %415 : vector<64x32xf32>
    %417 = vector.broadcast %396 : vector<1x32xf32> to vector<64x32xf32>
    %418 = arith.mulf %416, %417 : vector<64x32xf32>
    %419 = vector.broadcast %398 : vector<1x32xf32> to vector<64x32xf32>
    %420 = arith.addf %418, %419 : vector<64x32xf32>
    %c0_186 = arith.constant 0 : index
    %c0_187 = arith.constant 0 : index
    %c0_188 = arith.constant 0 : index
    %421 = vector.load %arg39[%c0_186, %c0_187, %c0_188] : memref<2x32x96xbf16, #tpu.memory_space<vmem>>, vector<1x32x96xbf16>
    %422 = vector.shape_cast %421 : vector<1x32x96xbf16> to vector<32x96xbf16>
    %c0_189 = arith.constant 0 : index
    %c0_190 = arith.constant 0 : index
    %c0_191 = arith.constant 0 : index
    %423 = vector.load %arg23[%c0_189, %c0_190, %c0_191] : memref<2x1x96xf32, #tpu.memory_space<vmem>>, vector<1x1x96xf32>
    %424 = vector.shape_cast %423 : vector<1x1x96xf32> to vector<1x96xf32>
    %c0_192 = arith.constant 0 : index
    %c0_193 = arith.constant 0 : index
    %c0_194 = arith.constant 0 : index
    %425 = vector.load %arg38[%c0_192, %c0_193, %c0_194] : memref<2x32x32xbf16, #tpu.memory_space<vmem>>, vector<1x32x32xbf16>
    %426 = vector.shape_cast %425 : vector<1x32x32xbf16> to vector<32x32xbf16>
    %c0_195 = arith.constant 0 : index
    %c0_196 = arith.constant 0 : index
    %c0_197 = arith.constant 0 : index
    %427 = vector.load %arg22[%c0_195, %c0_196, %c0_197] : memref<2x1x32xf32, #tpu.memory_space<vmem>>, vector<1x1x32xf32>
    %428 = vector.shape_cast %427 : vector<1x1x32xf32> to vector<1x32xf32>
    %429 = arith.truncf %420 : vector<64x32xf32> to vector<64x32xbf16>
    %cst_198 = arith.constant dense<0.000000e+00> : vector<64x96xf32>
    %430 = tpu.matmul %429, %422, %cst_198 {dimension_numbers = #tpu.dot_dimension_numbers<[1], [0], [0], [1], [0, 0, 1, 1], [], []>} : vector<64x32xbf16>, vector<32x96xbf16>, vector<64x96xf32> -> vector<64x96xf32>
    %431 = vector.broadcast %424 : vector<1x96xf32> to vector<64x96xf32>
    %432 = arith.addf %430, %431 : vector<64x96xf32>
    %433 = vector.extract_strided_slice %432 {offsets = [0, 0], sizes = [64, 32], strides = [1, 1]} : vector<64x96xf32> to vector<64x32xf32>
    %434 = vector.extract_strided_slice %432 {offsets = [0, 32], sizes = [64, 32], strides = [1, 1]} : vector<64x96xf32> to vector<64x32xf32>
    %435 = vector.extract_strided_slice %432 {offsets = [0, 64], sizes = [64, 32], strides = [1, 1]} : vector<64x96xf32> to vector<64x32xf32>
    %436 = tpu.transpose %434, [1, 0] : vector<64x32xf32> -> vector<32x64xf32>
    %437 = vector.extract_strided_slice %433 {offsets = [0, 0], sizes = [64, 8], strides = [1, 1]} : vector<64x32xf32> to vector<64x8xf32>
    %438 = vector.extract_strided_slice %436 {offsets = [0, 0], sizes = [8, 64], strides = [1, 1]} : vector<32x64xf32> to vector<8x64xf32>
    %439 = vector.extract_strided_slice %435 {offsets = [0, 0], sizes = [64, 8], strides = [1, 1]} : vector<64x32xf32> to vector<64x8xf32>
    %cst_199 = arith.constant dense<0.000000e+00> : vector<64x64xf32>
    %440 = tpu.matmul %437, %438, %cst_199 {dimension_numbers = #tpu.dot_dimension_numbers<[1], [0], [0], [1], [0, 0, 1, 1], [], []>} : vector<64x8xf32>, vector<8x64xf32>, vector<64x64xf32> -> vector<64x64xf32>
    %cst_200 = arith.constant 0.353553385 : f32
    %441 = vector.broadcast %cst_200 : f32 to vector<64x64xf32>
    %442 = arith.mulf %440, %441 : vector<64x64xf32>
    %cst_201 = arith.constant dense<0xFF800000> : vector<64xf32>
    %443 = vector.multi_reduction <maximumf>, %442, %cst_201 [1] : vector<64x64xf32> to vector<64xf32>
    %444 = vector.shape_cast %443 : vector<64xf32> to vector<64x1xf32>
    %445 = vector.broadcast %444 : vector<64x1xf32> to vector<64x64xf32>
    %446 = arith.subf %442, %445 : vector<64x64xf32>
    %447 = math.exp %446 : vector<64x64xf32>
    %cst_202 = arith.constant dense<0.000000e+00> : vector<64xf32>
    %448 = vector.multi_reduction <add>, %447, %cst_202 [1] : vector<64x64xf32> to vector<64xf32>
    %449 = vector.shape_cast %448 : vector<64xf32> to vector<64x1xf32>
    %450 = tpu.reciprocal %449 {approx = true} : vector<64x1xf32> -> vector<64x1xf32>
    %451 = vector.broadcast %450 : vector<64x1xf32> to vector<64x64xf32>
    %452 = arith.mulf %447, %451 : vector<64x64xf32>
    %cst_203 = arith.constant dense<0.000000e+00> : vector<64x8xf32>
    %453 = tpu.matmul %452, %439, %cst_203 {dimension_numbers = #tpu.dot_dimension_numbers<[1], [0], [0], [1], [0, 0, 1, 1], [], []>} : vector<64x64xf32>, vector<64x8xf32>, vector<64x8xf32> -> vector<64x8xf32>
    %454 = vector.extract_strided_slice %433 {offsets = [0, 8], sizes = [64, 8], strides = [1, 1]} : vector<64x32xf32> to vector<64x8xf32>
    %455 = vector.extract_strided_slice %436 {offsets = [8, 0], sizes = [8, 64], strides = [1, 1]} : vector<32x64xf32> to vector<8x64xf32>
    %456 = vector.extract_strided_slice %435 {offsets = [0, 8], sizes = [64, 8], strides = [1, 1]} : vector<64x32xf32> to vector<64x8xf32>
    %cst_204 = arith.constant dense<0.000000e+00> : vector<64x64xf32>
    %457 = tpu.matmul %454, %455, %cst_204 {dimension_numbers = #tpu.dot_dimension_numbers<[1], [0], [0], [1], [0, 0, 1, 1], [], []>} : vector<64x8xf32>, vector<8x64xf32>, vector<64x64xf32> -> vector<64x64xf32>
    %cst_205 = arith.constant 0.353553385 : f32
    %458 = vector.broadcast %cst_205 : f32 to vector<64x64xf32>
    %459 = arith.mulf %457, %458 : vector<64x64xf32>
    %cst_206 = arith.constant dense<0xFF800000> : vector<64xf32>
    %460 = vector.multi_reduction <maximumf>, %459, %cst_206 [1] : vector<64x64xf32> to vector<64xf32>
    %461 = vector.shape_cast %460 : vector<64xf32> to vector<64x1xf32>
    %462 = vector.broadcast %461 : vector<64x1xf32> to vector<64x64xf32>
    %463 = arith.subf %459, %462 : vector<64x64xf32>
    %464 = math.exp %463 : vector<64x64xf32>
    %cst_207 = arith.constant dense<0.000000e+00> : vector<64xf32>
    %465 = vector.multi_reduction <add>, %464, %cst_207 [1] : vector<64x64xf32> to vector<64xf32>
    %466 = vector.shape_cast %465 : vector<64xf32> to vector<64x1xf32>
    %467 = tpu.reciprocal %466 {approx = true} : vector<64x1xf32> -> vector<64x1xf32>
    %468 = vector.broadcast %467 : vector<64x1xf32> to vector<64x64xf32>
    %469 = arith.mulf %464, %468 : vector<64x64xf32>
    %cst_208 = arith.constant dense<0.000000e+00> : vector<64x8xf32>
    %470 = tpu.matmul %469, %456, %cst_208 {dimension_numbers = #tpu.dot_dimension_numbers<[1], [0], [0], [1], [0, 0, 1, 1], [], []>} : vector<64x64xf32>, vector<64x8xf32>, vector<64x8xf32> -> vector<64x8xf32>
    %471 = vector.extract_strided_slice %433 {offsets = [0, 16], sizes = [64, 8], strides = [1, 1]} : vector<64x32xf32> to vector<64x8xf32>
    %472 = vector.extract_strided_slice %436 {offsets = [16, 0], sizes = [8, 64], strides = [1, 1]} : vector<32x64xf32> to vector<8x64xf32>
    %473 = vector.extract_strided_slice %435 {offsets = [0, 16], sizes = [64, 8], strides = [1, 1]} : vector<64x32xf32> to vector<64x8xf32>
    %cst_209 = arith.constant dense<0.000000e+00> : vector<64x64xf32>
    %474 = tpu.matmul %471, %472, %cst_209 {dimension_numbers = #tpu.dot_dimension_numbers<[1], [0], [0], [1], [0, 0, 1, 1], [], []>} : vector<64x8xf32>, vector<8x64xf32>, vector<64x64xf32> -> vector<64x64xf32>
    %cst_210 = arith.constant 0.353553385 : f32
    %475 = vector.broadcast %cst_210 : f32 to vector<64x64xf32>
    %476 = arith.mulf %474, %475 : vector<64x64xf32>
    %cst_211 = arith.constant dense<0xFF800000> : vector<64xf32>
    %477 = vector.multi_reduction <maximumf>, %476, %cst_211 [1] : vector<64x64xf32> to vector<64xf32>
    %478 = vector.shape_cast %477 : vector<64xf32> to vector<64x1xf32>
    %479 = vector.broadcast %478 : vector<64x1xf32> to vector<64x64xf32>
    %480 = arith.subf %476, %479 : vector<64x64xf32>
    %481 = math.exp %480 : vector<64x64xf32>
    %cst_212 = arith.constant dense<0.000000e+00> : vector<64xf32>
    %482 = vector.multi_reduction <add>, %481, %cst_212 [1] : vector<64x64xf32> to vector<64xf32>
    %483 = vector.shape_cast %482 : vector<64xf32> to vector<64x1xf32>
    %484 = tpu.reciprocal %483 {approx = true} : vector<64x1xf32> -> vector<64x1xf32>
    %485 = vector.broadcast %484 : vector<64x1xf32> to vector<64x64xf32>
    %486 = arith.mulf %481, %485 : vector<64x64xf32>
    %cst_213 = arith.constant dense<0.000000e+00> : vector<64x8xf32>
    %487 = tpu.matmul %486, %473, %cst_213 {dimension_numbers = #tpu.dot_dimension_numbers<[1], [0], [0], [1], [0, 0, 1, 1], [], []>} : vector<64x64xf32>, vector<64x8xf32>, vector<64x8xf32> -> vector<64x8xf32>
    %488 = vector.extract_strided_slice %433 {offsets = [0, 24], sizes = [64, 8], strides = [1, 1]} : vector<64x32xf32> to vector<64x8xf32>
    %489 = vector.extract_strided_slice %436 {offsets = [24, 0], sizes = [8, 64], strides = [1, 1]} : vector<32x64xf32> to vector<8x64xf32>
    %490 = vector.extract_strided_slice %435 {offsets = [0, 24], sizes = [64, 8], strides = [1, 1]} : vector<64x32xf32> to vector<64x8xf32>
    %cst_214 = arith.constant dense<0.000000e+00> : vector<64x64xf32>
    %491 = tpu.matmul %488, %489, %cst_214 {dimension_numbers = #tpu.dot_dimension_numbers<[1], [0], [0], [1], [0, 0, 1, 1], [], []>} : vector<64x8xf32>, vector<8x64xf32>, vector<64x64xf32> -> vector<64x64xf32>
    %cst_215 = arith.constant 0.353553385 : f32
    %492 = vector.broadcast %cst_215 : f32 to vector<64x64xf32>
    %493 = arith.mulf %491, %492 : vector<64x64xf32>
    %cst_216 = arith.constant dense<0xFF800000> : vector<64xf32>
    %494 = vector.multi_reduction <maximumf>, %493, %cst_216 [1] : vector<64x64xf32> to vector<64xf32>
    %495 = vector.shape_cast %494 : vector<64xf32> to vector<64x1xf32>
    %496 = vector.broadcast %495 : vector<64x1xf32> to vector<64x64xf32>
    %497 = arith.subf %493, %496 : vector<64x64xf32>
    %498 = math.exp %497 : vector<64x64xf32>
    %cst_217 = arith.constant dense<0.000000e+00> : vector<64xf32>
    %499 = vector.multi_reduction <add>, %498, %cst_217 [1] : vector<64x64xf32> to vector<64xf32>
    %500 = vector.shape_cast %499 : vector<64xf32> to vector<64x1xf32>
    %501 = tpu.reciprocal %500 {approx = true} : vector<64x1xf32> -> vector<64x1xf32>
    %502 = vector.broadcast %501 : vector<64x1xf32> to vector<64x64xf32>
    %503 = arith.mulf %498, %502 : vector<64x64xf32>
    %cst_218 = arith.constant dense<0.000000e+00> : vector<64x8xf32>
    %504 = tpu.matmul %503, %490, %cst_218 {dimension_numbers = #tpu.dot_dimension_numbers<[1], [0], [0], [1], [0, 0, 1, 1], [], []>} : vector<64x64xf32>, vector<64x8xf32>, vector<64x8xf32> -> vector<64x8xf32>
    %505 = tpu.concatenate %453, %470, %487, %504 in 1 : vector<64x8xf32>, vector<64x8xf32>, vector<64x8xf32>, vector<64x8xf32> -> vector<64x32xf32>
    %506 = arith.truncf %505 : vector<64x32xf32> to vector<64x32xbf16>
    %cst_219 = arith.constant dense<0.000000e+00> : vector<64x32xf32>
    %507 = tpu.matmul %506, %426, %cst_219 {dimension_numbers = #tpu.dot_dimension_numbers<[1], [0], [0], [1], [0, 0, 1, 1], [], []>} : vector<64x32xbf16>, vector<32x32xbf16>, vector<64x32xf32> -> vector<64x32xf32>
    %508 = vector.broadcast %428 : vector<1x32xf32> to vector<64x32xf32>
    %509 = arith.addf %507, %508 : vector<64x32xf32>
    %510 = arith.addf %394, %509 : vector<64x32xf32>
    %c0_220 = arith.constant 0 : index
    %c0_221 = arith.constant 0 : index
    %c0_222 = arith.constant 0 : index
    %511 = vector.load %arg29[%c0_220, %c0_221, %c0_222] : memref<2x1x32xf32, #tpu.memory_space<vmem>>, vector<1x1x32xf32>
    %512 = vector.shape_cast %511 : vector<1x1x32xf32> to vector<1x32xf32>
    %c0_223 = arith.constant 0 : index
    %c0_224 = arith.constant 0 : index
    %c0_225 = arith.constant 0 : index
    %513 = vector.load %arg28[%c0_223, %c0_224, %c0_225] : memref<2x1x32xf32, #tpu.memory_space<vmem>>, vector<1x1x32xf32>
    %514 = vector.shape_cast %513 : vector<1x1x32xf32> to vector<1x32xf32>
    %cst_226 = arith.constant dense<0.000000e+00> : vector<64xf32>
    %515 = vector.multi_reduction <add>, %510, %cst_226 [1] : vector<64x32xf32> to vector<64xf32>
    %516 = vector.shape_cast %515 : vector<64xf32> to vector<64x1xf32>
    %cst_227 = arith.constant 3.200000e+01 : f32
    %517 = vector.broadcast %cst_227 : f32 to vector<64x1xf32>
    %518 = arith.divf %516, %517 : vector<64x1xf32>
    %519 = vector.broadcast %518 : vector<64x1xf32> to vector<64x32xf32>
    %520 = arith.subf %510, %519 : vector<64x32xf32>
    %521 = arith.mulf %520, %520 : vector<64x32xf32>
    %cst_228 = arith.constant dense<0.000000e+00> : vector<64xf32>
    %522 = vector.multi_reduction <add>, %521, %cst_228 [1] : vector<64x32xf32> to vector<64xf32>
    %523 = vector.shape_cast %522 : vector<64xf32> to vector<64x1xf32>
    %cst_229 = arith.constant 3.200000e+01 : f32
    %524 = vector.broadcast %cst_229 : f32 to vector<64x1xf32>
    %525 = arith.divf %523, %524 : vector<64x1xf32>
    %526 = vector.broadcast %518 : vector<64x1xf32> to vector<64x32xf32>
    %527 = arith.subf %510, %526 : vector<64x32xf32>
    %cst_230 = arith.constant 9.99999997E-7 : f32
    %528 = vector.broadcast %cst_230 : f32 to vector<64x1xf32>
    %529 = arith.addf %525, %528 : vector<64x1xf32>
    %530 = math.rsqrt %529 : vector<64x1xf32>
    %531 = vector.broadcast %530 : vector<64x1xf32> to vector<64x32xf32>
    %532 = arith.mulf %527, %531 : vector<64x32xf32>
    %533 = vector.broadcast %512 : vector<1x32xf32> to vector<64x32xf32>
    %534 = arith.mulf %532, %533 : vector<64x32xf32>
    %535 = vector.broadcast %514 : vector<1x32xf32> to vector<64x32xf32>
    %536 = arith.addf %534, %535 : vector<64x32xf32>
    %c0_231 = arith.constant 0 : index
    %c0_232 = arith.constant 0 : index
    %c0_233 = arith.constant 0 : index
    %537 = vector.load %arg36[%c0_231, %c0_232, %c0_233] : memref<2x32x64xbf16, #tpu.memory_space<vmem>>, vector<1x32x64xbf16>
    %538 = vector.shape_cast %537 : vector<1x32x64xbf16> to vector<32x64xbf16>
    %c0_234 = arith.constant 0 : index
    %c0_235 = arith.constant 0 : index
    %c0_236 = arith.constant 0 : index
    %539 = vector.load %arg19[%c0_234, %c0_235, %c0_236] : memref<2x1x64xf32, #tpu.memory_space<vmem>>, vector<1x1x64xf32>
    %540 = vector.shape_cast %539 : vector<1x1x64xf32> to vector<1x64xf32>
    %c0_237 = arith.constant 0 : index
    %c0_238 = arith.constant 0 : index
    %c0_239 = arith.constant 0 : index
    %541 = vector.load %arg37[%c0_237, %c0_238, %c0_239] : memref<2x64x32xbf16, #tpu.memory_space<vmem>>, vector<1x64x32xbf16>
    %542 = vector.shape_cast %541 : vector<1x64x32xbf16> to vector<64x32xbf16>
    %c0_240 = arith.constant 0 : index
    %c0_241 = arith.constant 0 : index
    %c0_242 = arith.constant 0 : index
    %543 = vector.load %arg20[%c0_240, %c0_241, %c0_242] : memref<2x1x32xf32, #tpu.memory_space<vmem>>, vector<1x1x32xf32>
    %544 = vector.shape_cast %543 : vector<1x1x32xf32> to vector<1x32xf32>
    %545 = arith.truncf %536 : vector<64x32xf32> to vector<64x32xbf16>
    %cst_243 = arith.constant dense<0.000000e+00> : vector<64x64xf32>
    %546 = tpu.matmul %545, %538, %cst_243 {dimension_numbers = #tpu.dot_dimension_numbers<[1], [0], [0], [1], [0, 0, 1, 1], [], []>} : vector<64x32xbf16>, vector<32x64xbf16>, vector<64x64xf32> -> vector<64x64xf32>
    %547 = vector.broadcast %540 : vector<1x64xf32> to vector<64x64xf32>
    %548 = arith.addf %546, %547 : vector<64x64xf32>
    %549 = arith.mulf %548, %548 : vector<64x64xf32>
    %550 = arith.mulf %548, %549 : vector<64x64xf32>
    %cst_244 = arith.constant 4.471500e-02 : f32
    %551 = vector.broadcast %cst_244 : f32 to vector<64x64xf32>
    %552 = arith.mulf %551, %550 : vector<64x64xf32>
    %553 = arith.addf %548, %552 : vector<64x64xf32>
    %cst_245 = arith.constant 0.797884583 : f32
    %554 = vector.broadcast %cst_245 : f32 to vector<64x64xf32>
    %555 = arith.mulf %554, %553 : vector<64x64xf32>
    %556 = math.tanh %555 : vector<64x64xf32>
    %cst_246 = arith.constant 1.000000e+00 : f32
    %557 = vector.broadcast %cst_246 : f32 to vector<64x64xf32>
    %558 = arith.addf %557, %556 : vector<64x64xf32>
    %cst_247 = arith.constant 5.000000e-01 : f32
    %559 = vector.broadcast %cst_247 : f32 to vector<64x64xf32>
    %560 = arith.mulf %559, %558 : vector<64x64xf32>
    %561 = arith.mulf %548, %560 : vector<64x64xf32>
    %562 = arith.truncf %561 : vector<64x64xf32> to vector<64x64xbf16>
    %cst_248 = arith.constant dense<0.000000e+00> : vector<64x32xf32>
    %563 = tpu.matmul %562, %542, %cst_248 {dimension_numbers = #tpu.dot_dimension_numbers<[1], [0], [0], [1], [0, 0, 1, 1], [], []>} : vector<64x64xbf16>, vector<64x32xbf16>, vector<64x32xf32> -> vector<64x32xf32>
    %564 = vector.broadcast %544 : vector<1x32xf32> to vector<64x32xf32>
    %565 = arith.addf %563, %564 : vector<64x32xf32>
    %566 = arith.addf %510, %565 : vector<64x32xf32>
    %c1_249 = arith.constant 1 : index
    %c0_250 = arith.constant 0 : index
    %c0_251 = arith.constant 0 : index
    %567 = vector.load %arg27[%c1_249, %c0_250, %c0_251] : memref<2x1x32xf32, #tpu.memory_space<vmem>>, vector<1x1x32xf32>
    %568 = vector.shape_cast %567 : vector<1x1x32xf32> to vector<1x32xf32>
    %c1_252 = arith.constant 1 : index
    %c0_253 = arith.constant 0 : index
    %c0_254 = arith.constant 0 : index
    %569 = vector.load %arg26[%c1_252, %c0_253, %c0_254] : memref<2x1x32xf32, #tpu.memory_space<vmem>>, vector<1x1x32xf32>
    %570 = vector.shape_cast %569 : vector<1x1x32xf32> to vector<1x32xf32>
    %cst_255 = arith.constant dense<0.000000e+00> : vector<64xf32>
    %571 = vector.multi_reduction <add>, %566, %cst_255 [1] : vector<64x32xf32> to vector<64xf32>
    %572 = vector.shape_cast %571 : vector<64xf32> to vector<64x1xf32>
    %cst_256 = arith.constant 3.200000e+01 : f32
    %573 = vector.broadcast %cst_256 : f32 to vector<64x1xf32>
    %574 = arith.divf %572, %573 : vector<64x1xf32>
    %575 = vector.broadcast %574 : vector<64x1xf32> to vector<64x32xf32>
    %576 = arith.subf %566, %575 : vector<64x32xf32>
    %577 = arith.mulf %576, %576 : vector<64x32xf32>
    %cst_257 = arith.constant dense<0.000000e+00> : vector<64xf32>
    %578 = vector.multi_reduction <add>, %577, %cst_257 [1] : vector<64x32xf32> to vector<64xf32>
    %579 = vector.shape_cast %578 : vector<64xf32> to vector<64x1xf32>
    %cst_258 = arith.constant 3.200000e+01 : f32
    %580 = vector.broadcast %cst_258 : f32 to vector<64x1xf32>
    %581 = arith.divf %579, %580 : vector<64x1xf32>
    %582 = vector.broadcast %574 : vector<64x1xf32> to vector<64x32xf32>
    %583 = arith.subf %566, %582 : vector<64x32xf32>
    %cst_259 = arith.constant 9.99999997E-7 : f32
    %584 = vector.broadcast %cst_259 : f32 to vector<64x1xf32>
    %585 = arith.addf %581, %584 : vector<64x1xf32>
    %586 = math.rsqrt %585 : vector<64x1xf32>
    %587 = vector.broadcast %586 : vector<64x1xf32> to vector<64x32xf32>
    %588 = arith.mulf %583, %587 : vector<64x32xf32>
    %589 = vector.broadcast %568 : vector<1x32xf32> to vector<64x32xf32>
    %590 = arith.mulf %588, %589 : vector<64x32xf32>
    %591 = vector.broadcast %570 : vector<1x32xf32> to vector<64x32xf32>
    %592 = arith.addf %590, %591 : vector<64x32xf32>
    %c1_260 = arith.constant 1 : index
    %c0_261 = arith.constant 0 : index
    %c0_262 = arith.constant 0 : index
    %593 = vector.load %arg39[%c1_260, %c0_261, %c0_262] : memref<2x32x96xbf16, #tpu.memory_space<vmem>>, vector<1x32x96xbf16>
    %594 = vector.shape_cast %593 : vector<1x32x96xbf16> to vector<32x96xbf16>
    %c1_263 = arith.constant 1 : index
    %c0_264 = arith.constant 0 : index
    %c0_265 = arith.constant 0 : index
    %595 = vector.load %arg23[%c1_263, %c0_264, %c0_265] : memref<2x1x96xf32, #tpu.memory_space<vmem>>, vector<1x1x96xf32>
    %596 = vector.shape_cast %595 : vector<1x1x96xf32> to vector<1x96xf32>
    %c1_266 = arith.constant 1 : index
    %c0_267 = arith.constant 0 : index
    %c0_268 = arith.constant 0 : index
    %597 = vector.load %arg38[%c1_266, %c0_267, %c0_268] : memref<2x32x32xbf16, #tpu.memory_space<vmem>>, vector<1x32x32xbf16>
    %598 = vector.shape_cast %597 : vector<1x32x32xbf16> to vector<32x32xbf16>
    %c1_269 = arith.constant 1 : index
    %c0_270 = arith.constant 0 : index
    %c0_271 = arith.constant 0 : index
    %599 = vector.load %arg22[%c1_269, %c0_270, %c0_271] : memref<2x1x32xf32, #tpu.memory_space<vmem>>, vector<1x1x32xf32>
    %600 = vector.shape_cast %599 : vector<1x1x32xf32> to vector<1x32xf32>
    %601 = arith.truncf %592 : vector<64x32xf32> to vector<64x32xbf16>
    %cst_272 = arith.constant dense<0.000000e+00> : vector<64x96xf32>
    %602 = tpu.matmul %601, %594, %cst_272 {dimension_numbers = #tpu.dot_dimension_numbers<[1], [0], [0], [1], [0, 0, 1, 1], [], []>} : vector<64x32xbf16>, vector<32x96xbf16>, vector<64x96xf32> -> vector<64x96xf32>
    %603 = vector.broadcast %596 : vector<1x96xf32> to vector<64x96xf32>
    %604 = arith.addf %602, %603 : vector<64x96xf32>
    %605 = vector.extract_strided_slice %604 {offsets = [0, 0], sizes = [64, 32], strides = [1, 1]} : vector<64x96xf32> to vector<64x32xf32>
    %606 = vector.extract_strided_slice %604 {offsets = [0, 32], sizes = [64, 32], strides = [1, 1]} : vector<64x96xf32> to vector<64x32xf32>
    %607 = vector.extract_strided_slice %604 {offsets = [0, 64], sizes = [64, 32], strides = [1, 1]} : vector<64x96xf32> to vector<64x32xf32>
    %608 = tpu.transpose %606, [1, 0] : vector<64x32xf32> -> vector<32x64xf32>
    %609 = vector.extract_strided_slice %605 {offsets = [0, 0], sizes = [64, 8], strides = [1, 1]} : vector<64x32xf32> to vector<64x8xf32>
    %610 = vector.extract_strided_slice %608 {offsets = [0, 0], sizes = [8, 64], strides = [1, 1]} : vector<32x64xf32> to vector<8x64xf32>
    %611 = vector.extract_strided_slice %607 {offsets = [0, 0], sizes = [64, 8], strides = [1, 1]} : vector<64x32xf32> to vector<64x8xf32>
    %cst_273 = arith.constant dense<0.000000e+00> : vector<64x64xf32>
    %612 = tpu.matmul %609, %610, %cst_273 {dimension_numbers = #tpu.dot_dimension_numbers<[1], [0], [0], [1], [0, 0, 1, 1], [], []>} : vector<64x8xf32>, vector<8x64xf32>, vector<64x64xf32> -> vector<64x64xf32>
    %cst_274 = arith.constant 0.353553385 : f32
    %613 = vector.broadcast %cst_274 : f32 to vector<64x64xf32>
    %614 = arith.mulf %612, %613 : vector<64x64xf32>
    %cst_275 = arith.constant dense<0xFF800000> : vector<64xf32>
    %615 = vector.multi_reduction <maximumf>, %614, %cst_275 [1] : vector<64x64xf32> to vector<64xf32>
    %616 = vector.shape_cast %615 : vector<64xf32> to vector<64x1xf32>
    %617 = vector.broadcast %616 : vector<64x1xf32> to vector<64x64xf32>
    %618 = arith.subf %614, %617 : vector<64x64xf32>
    %619 = math.exp %618 : vector<64x64xf32>
    %cst_276 = arith.constant dense<0.000000e+00> : vector<64xf32>
    %620 = vector.multi_reduction <add>, %619, %cst_276 [1] : vector<64x64xf32> to vector<64xf32>
    %621 = vector.shape_cast %620 : vector<64xf32> to vector<64x1xf32>
    %622 = tpu.reciprocal %621 {approx = true} : vector<64x1xf32> -> vector<64x1xf32>
    %623 = vector.broadcast %622 : vector<64x1xf32> to vector<64x64xf32>
    %624 = arith.mulf %619, %623 : vector<64x64xf32>
    %cst_277 = arith.constant dense<0.000000e+00> : vector<64x8xf32>
    %625 = tpu.matmul %624, %611, %cst_277 {dimension_numbers = #tpu.dot_dimension_numbers<[1], [0], [0], [1], [0, 0, 1, 1], [], []>} : vector<64x64xf32>, vector<64x8xf32>, vector<64x8xf32> -> vector<64x8xf32>
    %626 = vector.extract_strided_slice %605 {offsets = [0, 8], sizes = [64, 8], strides = [1, 1]} : vector<64x32xf32> to vector<64x8xf32>
    %627 = vector.extract_strided_slice %608 {offsets = [8, 0], sizes = [8, 64], strides = [1, 1]} : vector<32x64xf32> to vector<8x64xf32>
    %628 = vector.extract_strided_slice %607 {offsets = [0, 8], sizes = [64, 8], strides = [1, 1]} : vector<64x32xf32> to vector<64x8xf32>
    %cst_278 = arith.constant dense<0.000000e+00> : vector<64x64xf32>
    %629 = tpu.matmul %626, %627, %cst_278 {dimension_numbers = #tpu.dot_dimension_numbers<[1], [0], [0], [1], [0, 0, 1, 1], [], []>} : vector<64x8xf32>, vector<8x64xf32>, vector<64x64xf32> -> vector<64x64xf32>
    %cst_279 = arith.constant 0.353553385 : f32
    %630 = vector.broadcast %cst_279 : f32 to vector<64x64xf32>
    %631 = arith.mulf %629, %630 : vector<64x64xf32>
    %cst_280 = arith.constant dense<0xFF800000> : vector<64xf32>
    %632 = vector.multi_reduction <maximumf>, %631, %cst_280 [1] : vector<64x64xf32> to vector<64xf32>
    %633 = vector.shape_cast %632 : vector<64xf32> to vector<64x1xf32>
    %634 = vector.broadcast %633 : vector<64x1xf32> to vector<64x64xf32>
    %635 = arith.subf %631, %634 : vector<64x64xf32>
    %636 = math.exp %635 : vector<64x64xf32>
    %cst_281 = arith.constant dense<0.000000e+00> : vector<64xf32>
    %637 = vector.multi_reduction <add>, %636, %cst_281 [1] : vector<64x64xf32> to vector<64xf32>
    %638 = vector.shape_cast %637 : vector<64xf32> to vector<64x1xf32>
    %639 = tpu.reciprocal %638 {approx = true} : vector<64x1xf32> -> vector<64x1xf32>
    %640 = vector.broadcast %639 : vector<64x1xf32> to vector<64x64xf32>
    %641 = arith.mulf %636, %640 : vector<64x64xf32>
    %cst_282 = arith.constant dense<0.000000e+00> : vector<64x8xf32>
    %642 = tpu.matmul %641, %628, %cst_282 {dimension_numbers = #tpu.dot_dimension_numbers<[1], [0], [0], [1], [0, 0, 1, 1], [], []>} : vector<64x64xf32>, vector<64x8xf32>, vector<64x8xf32> -> vector<64x8xf32>
    %643 = vector.extract_strided_slice %605 {offsets = [0, 16], sizes = [64, 8], strides = [1, 1]} : vector<64x32xf32> to vector<64x8xf32>
    %644 = vector.extract_strided_slice %608 {offsets = [16, 0], sizes = [8, 64], strides = [1, 1]} : vector<32x64xf32> to vector<8x64xf32>
    %645 = vector.extract_strided_slice %607 {offsets = [0, 16], sizes = [64, 8], strides = [1, 1]} : vector<64x32xf32> to vector<64x8xf32>
    %cst_283 = arith.constant dense<0.000000e+00> : vector<64x64xf32>
    %646 = tpu.matmul %643, %644, %cst_283 {dimension_numbers = #tpu.dot_dimension_numbers<[1], [0], [0], [1], [0, 0, 1, 1], [], []>} : vector<64x8xf32>, vector<8x64xf32>, vector<64x64xf32> -> vector<64x64xf32>
    %cst_284 = arith.constant 0.353553385 : f32
    %647 = vector.broadcast %cst_284 : f32 to vector<64x64xf32>
    %648 = arith.mulf %646, %647 : vector<64x64xf32>
    %cst_285 = arith.constant dense<0xFF800000> : vector<64xf32>
    %649 = vector.multi_reduction <maximumf>, %648, %cst_285 [1] : vector<64x64xf32> to vector<64xf32>
    %650 = vector.shape_cast %649 : vector<64xf32> to vector<64x1xf32>
    %651 = vector.broadcast %650 : vector<64x1xf32> to vector<64x64xf32>
    %652 = arith.subf %648, %651 : vector<64x64xf32>
    %653 = math.exp %652 : vector<64x64xf32>
    %cst_286 = arith.constant dense<0.000000e+00> : vector<64xf32>
    %654 = vector.multi_reduction <add>, %653, %cst_286 [1] : vector<64x64xf32> to vector<64xf32>
    %655 = vector.shape_cast %654 : vector<64xf32> to vector<64x1xf32>
    %656 = tpu.reciprocal %655 {approx = true} : vector<64x1xf32> -> vector<64x1xf32>
    %657 = vector.broadcast %656 : vector<64x1xf32> to vector<64x64xf32>
    %658 = arith.mulf %653, %657 : vector<64x64xf32>
    %cst_287 = arith.constant dense<0.000000e+00> : vector<64x8xf32>
    %659 = tpu.matmul %658, %645, %cst_287 {dimension_numbers = #tpu.dot_dimension_numbers<[1], [0], [0], [1], [0, 0, 1, 1], [], []>} : vector<64x64xf32>, vector<64x8xf32>, vector<64x8xf32> -> vector<64x8xf32>
    %660 = vector.extract_strided_slice %605 {offsets = [0, 24], sizes = [64, 8], strides = [1, 1]} : vector<64x32xf32> to vector<64x8xf32>
    %661 = vector.extract_strided_slice %608 {offsets = [24, 0], sizes = [8, 64], strides = [1, 1]} : vector<32x64xf32> to vector<8x64xf32>
    %662 = vector.extract_strided_slice %607 {offsets = [0, 24], sizes = [64, 8], strides = [1, 1]} : vector<64x32xf32> to vector<64x8xf32>
    %cst_288 = arith.constant dense<0.000000e+00> : vector<64x64xf32>
    %663 = tpu.matmul %660, %661, %cst_288 {dimension_numbers = #tpu.dot_dimension_numbers<[1], [0], [0], [1], [0, 0, 1, 1], [], []>} : vector<64x8xf32>, vector<8x64xf32>, vector<64x64xf32> -> vector<64x64xf32>
    %cst_289 = arith.constant 0.353553385 : f32
    %664 = vector.broadcast %cst_289 : f32 to vector<64x64xf32>
    %665 = arith.mulf %663, %664 : vector<64x64xf32>
    %cst_290 = arith.constant dense<0xFF800000> : vector<64xf32>
    %666 = vector.multi_reduction <maximumf>, %665, %cst_290 [1] : vector<64x64xf32> to vector<64xf32>
    %667 = vector.shape_cast %666 : vector<64xf32> to vector<64x1xf32>
    %668 = vector.broadcast %667 : vector<64x1xf32> to vector<64x64xf32>
    %669 = arith.subf %665, %668 : vector<64x64xf32>
    %670 = math.exp %669 : vector<64x64xf32>
    %cst_291 = arith.constant dense<0.000000e+00> : vector<64xf32>
    %671 = vector.multi_reduction <add>, %670, %cst_291 [1] : vector<64x64xf32> to vector<64xf32>
    %672 = vector.shape_cast %671 : vector<64xf32> to vector<64x1xf32>
    %673 = tpu.reciprocal %672 {approx = true} : vector<64x1xf32> -> vector<64x1xf32>
    %674 = vector.broadcast %673 : vector<64x1xf32> to vector<64x64xf32>
    %675 = arith.mulf %670, %674 : vector<64x64xf32>
    %cst_292 = arith.constant dense<0.000000e+00> : vector<64x8xf32>
    %676 = tpu.matmul %675, %662, %cst_292 {dimension_numbers = #tpu.dot_dimension_numbers<[1], [0], [0], [1], [0, 0, 1, 1], [], []>} : vector<64x64xf32>, vector<64x8xf32>, vector<64x8xf32> -> vector<64x8xf32>
    %677 = tpu.concatenate %625, %642, %659, %676 in 1 : vector<64x8xf32>, vector<64x8xf32>, vector<64x8xf32>, vector<64x8xf32> -> vector<64x32xf32>
    %678 = arith.truncf %677 : vector<64x32xf32> to vector<64x32xbf16>
    %cst_293 = arith.constant dense<0.000000e+00> : vector<64x32xf32>
    %679 = tpu.matmul %678, %598, %cst_293 {dimension_numbers = #tpu.dot_dimension_numbers<[1], [0], [0], [1], [0, 0, 1, 1], [], []>} : vector<64x32xbf16>, vector<32x32xbf16>, vector<64x32xf32> -> vector<64x32xf32>
    %680 = vector.broadcast %600 : vector<1x32xf32> to vector<64x32xf32>
    %681 = arith.addf %679, %680 : vector<64x32xf32>
    %682 = arith.addf %566, %681 : vector<64x32xf32>
    %c1_294 = arith.constant 1 : index
    %c0_295 = arith.constant 0 : index
    %c0_296 = arith.constant 0 : index
    %683 = vector.load %arg29[%c1_294, %c0_295, %c0_296] : memref<2x1x32xf32, #tpu.memory_space<vmem>>, vector<1x1x32xf32>
    %684 = vector.shape_cast %683 : vector<1x1x32xf32> to vector<1x32xf32>
    %c1_297 = arith.constant 1 : index
    %c0_298 = arith.constant 0 : index
    %c0_299 = arith.constant 0 : index
    %685 = vector.load %arg28[%c1_297, %c0_298, %c0_299] : memref<2x1x32xf32, #tpu.memory_space<vmem>>, vector<1x1x32xf32>
    %686 = vector.shape_cast %685 : vector<1x1x32xf32> to vector<1x32xf32>
    %cst_300 = arith.constant dense<0.000000e+00> : vector<64xf32>
    %687 = vector.multi_reduction <add>, %682, %cst_300 [1] : vector<64x32xf32> to vector<64xf32>
    %688 = vector.shape_cast %687 : vector<64xf32> to vector<64x1xf32>
    %cst_301 = arith.constant 3.200000e+01 : f32
    %689 = vector.broadcast %cst_301 : f32 to vector<64x1xf32>
    %690 = arith.divf %688, %689 : vector<64x1xf32>
    %691 = vector.broadcast %690 : vector<64x1xf32> to vector<64x32xf32>
    %692 = arith.subf %682, %691 : vector<64x32xf32>
    %693 = arith.mulf %692, %692 : vector<64x32xf32>
    %cst_302 = arith.constant dense<0.000000e+00> : vector<64xf32>
    %694 = vector.multi_reduction <add>, %693, %cst_302 [1] : vector<64x32xf32> to vector<64xf32>
    %695 = vector.shape_cast %694 : vector<64xf32> to vector<64x1xf32>
    %cst_303 = arith.constant 3.200000e+01 : f32
    %696 = vector.broadcast %cst_303 : f32 to vector<64x1xf32>
    %697 = arith.divf %695, %696 : vector<64x1xf32>
    %698 = vector.broadcast %690 : vector<64x1xf32> to vector<64x32xf32>
    %699 = arith.subf %682, %698 : vector<64x32xf32>
    %cst_304 = arith.constant 9.99999997E-7 : f32
    %700 = vector.broadcast %cst_304 : f32 to vector<64x1xf32>
    %701 = arith.addf %697, %700 : vector<64x1xf32>
    %702 = math.rsqrt %701 : vector<64x1xf32>
    %703 = vector.broadcast %702 : vector<64x1xf32> to vector<64x32xf32>
    %704 = arith.mulf %699, %703 : vector<64x32xf32>
    %705 = vector.broadcast %684 : vector<1x32xf32> to vector<64x32xf32>
    %706 = arith.mulf %704, %705 : vector<64x32xf32>
    %707 = vector.broadcast %686 : vector<1x32xf32> to vector<64x32xf32>
    %708 = arith.addf %706, %707 : vector<64x32xf32>
    %c1_305 = arith.constant 1 : index
    %c0_306 = arith.constant 0 : index
    %c0_307 = arith.constant 0 : index
    %709 = vector.load %arg36[%c1_305, %c0_306, %c0_307] : memref<2x32x64xbf16, #tpu.memory_space<vmem>>, vector<1x32x64xbf16>
    %710 = vector.shape_cast %709 : vector<1x32x64xbf16> to vector<32x64xbf16>
    %c1_308 = arith.constant 1 : index
    %c0_309 = arith.constant 0 : index
    %c0_310 = arith.constant 0 : index
    %711 = vector.load %arg19[%c1_308, %c0_309, %c0_310] : memref<2x1x64xf32, #tpu.memory_space<vmem>>, vector<1x1x64xf32>
    %712 = vector.shape_cast %711 : vector<1x1x64xf32> to vector<1x64xf32>
    %c1_311 = arith.constant 1 : index
    %c0_312 = arith.constant 0 : index
    %c0_313 = arith.constant 0 : index
    %713 = vector.load %arg37[%c1_311, %c0_312, %c0_313] : memref<2x64x32xbf16, #tpu.memory_space<vmem>>, vector<1x64x32xbf16>
    %714 = vector.shape_cast %713 : vector<1x64x32xbf16> to vector<64x32xbf16>
    %c1_314 = arith.constant 1 : index
    %c0_315 = arith.constant 0 : index
    %c0_316 = arith.constant 0 : index
    %715 = vector.load %arg20[%c1_314, %c0_315, %c0_316] : memref<2x1x32xf32, #tpu.memory_space<vmem>>, vector<1x1x32xf32>
    %716 = vector.shape_cast %715 : vector<1x1x32xf32> to vector<1x32xf32>
    %717 = arith.truncf %708 : vector<64x32xf32> to vector<64x32xbf16>
    %cst_317 = arith.constant dense<0.000000e+00> : vector<64x64xf32>
    %718 = tpu.matmul %717, %710, %cst_317 {dimension_numbers = #tpu.dot_dimension_numbers<[1], [0], [0], [1], [0, 0, 1, 1], [], []>} : vector<64x32xbf16>, vector<32x64xbf16>, vector<64x64xf32> -> vector<64x64xf32>
    %719 = vector.broadcast %712 : vector<1x64xf32> to vector<64x64xf32>
    %720 = arith.addf %718, %719 : vector<64x64xf32>
    %721 = arith.mulf %720, %720 : vector<64x64xf32>
    %722 = arith.mulf %720, %721 : vector<64x64xf32>
    %cst_318 = arith.constant 4.471500e-02 : f32
    %723 = vector.broadcast %cst_318 : f32 to vector<64x64xf32>
    %724 = arith.mulf %723, %722 : vector<64x64xf32>
    %725 = arith.addf %720, %724 : vector<64x64xf32>
    %cst_319 = arith.constant 0.797884583 : f32
    %726 = vector.broadcast %cst_319 : f32 to vector<64x64xf32>
    %727 = arith.mulf %726, %725 : vector<64x64xf32>
    %728 = math.tanh %727 : vector<64x64xf32>
    %cst_320 = arith.constant 1.000000e+00 : f32
    %729 = vector.broadcast %cst_320 : f32 to vector<64x64xf32>
    %730 = arith.addf %729, %728 : vector<64x64xf32>
    %cst_321 = arith.constant 5.000000e-01 : f32
    %731 = vector.broadcast %cst_321 : f32 to vector<64x64xf32>
    %732 = arith.mulf %731, %730 : vector<64x64xf32>
    %733 = arith.mulf %720, %732 : vector<64x64xf32>
    %734 = arith.truncf %733 : vector<64x64xf32> to vector<64x64xbf16>
    %cst_322 = arith.constant dense<0.000000e+00> : vector<64x32xf32>
    %735 = tpu.matmul %734, %714, %cst_322 {dimension_numbers = #tpu.dot_dimension_numbers<[1], [0], [0], [1], [0, 0, 1, 1], [], []>} : vector<64x64xbf16>, vector<64x32xbf16>, vector<64x32xf32> -> vector<64x32xf32>
    %736 = vector.broadcast %716 : vector<1x32xf32> to vector<64x32xf32>
    %737 = arith.addf %735, %736 : vector<64x32xf32>
    %738 = arith.addf %682, %737 : vector<64x32xf32>
    %c0_323 = arith.constant 0 : index
    %c0_324 = arith.constant 0 : index
    %739 = vector.load %arg30[%c0_323, %c0_324] : memref<32x16xbf16, #tpu.memory_space<vmem>>, vector<32x16xbf16>
    %740 = arith.truncf %738 : vector<64x32xf32> to vector<64x32xbf16>
    %cst_325 = arith.constant dense<0.000000e+00> : vector<64x16xf32>
    %741 = tpu.matmul %740, %739, %cst_325 {dimension_numbers = #tpu.dot_dimension_numbers<[1], [0], [0], [1], [0, 0, 1, 1], [], []>} : vector<64x32xbf16>, vector<32x16xbf16>, vector<64x16xf32> -> vector<64x16xf32>
    %c0_326 = arith.constant 0 : index
    %c0_327 = arith.constant 0 : index
    %742 = vector.load %arg32[%c0_326, %c0_327] : memref<1x16xf32, #tpu.memory_space<vmem>>, vector<1x16xf32>
    %c0_328 = arith.constant 0 : index
    %c0_329 = arith.constant 0 : index
    %743 = vector.load %arg31[%c0_328, %c0_329] : memref<1x16xf32, #tpu.memory_space<vmem>>, vector<1x16xf32>
    %cst_330 = arith.constant dense<0.000000e+00> : vector<64xf32>
    %744 = vector.multi_reduction <add>, %741, %cst_330 [1] : vector<64x16xf32> to vector<64xf32>
    %745 = vector.shape_cast %744 : vector<64xf32> to vector<64x1xf32>
    %cst_331 = arith.constant 1.600000e+01 : f32
    %746 = vector.broadcast %cst_331 : f32 to vector<64x1xf32>
    %747 = arith.divf %745, %746 : vector<64x1xf32>
    %748 = vector.broadcast %747 : vector<64x1xf32> to vector<64x16xf32>
    %749 = arith.subf %741, %748 : vector<64x16xf32>
    %750 = arith.mulf %749, %749 : vector<64x16xf32>
    %cst_332 = arith.constant dense<0.000000e+00> : vector<64xf32>
    %751 = vector.multi_reduction <add>, %750, %cst_332 [1] : vector<64x16xf32> to vector<64xf32>
    %752 = vector.shape_cast %751 : vector<64xf32> to vector<64x1xf32>
    %cst_333 = arith.constant 1.600000e+01 : f32
    %753 = vector.broadcast %cst_333 : f32 to vector<64x1xf32>
    %754 = arith.divf %752, %753 : vector<64x1xf32>
    %755 = vector.broadcast %747 : vector<64x1xf32> to vector<64x16xf32>
    %756 = arith.subf %741, %755 : vector<64x16xf32>
    %cst_334 = arith.constant 9.99999997E-7 : f32
    %757 = vector.broadcast %cst_334 : f32 to vector<64x1xf32>
    %758 = arith.addf %754, %757 : vector<64x1xf32>
    %759 = math.rsqrt %758 : vector<64x1xf32>
    %760 = vector.broadcast %759 : vector<64x1xf32> to vector<64x16xf32>
    %761 = arith.mulf %756, %760 : vector<64x16xf32>
    %762 = vector.broadcast %742 : vector<1x16xf32> to vector<64x16xf32>
    %763 = arith.mulf %761, %762 : vector<64x16xf32>
    %764 = vector.broadcast %743 : vector<1x16xf32> to vector<64x16xf32>
    %765 = arith.addf %763, %764 : vector<64x16xf32>
    %cst_335 = arith.constant 0.000000e+00 : f32
    %766 = vector.broadcast %cst_335 : f32 to vector<16x32xf32>
    %c0_336 = arith.constant 0 : index
    %c0_337 = arith.constant 0 : index
    %c0_338 = arith.constant 0 : index
    %767 = vector.load %arg24[%c0_336, %c0_337, %c0_338] : memref<4x16x64xf32, #tpu.memory_space<vmem>>, vector<1x16x64xf32>
    %768 = vector.shape_cast %767 : vector<1x16x64xf32> to vector<16x64xf32>
    %cst_339 = arith.constant dense<0.000000e+00> : vector<16x16xf32>
    %769 = tpu.matmul %768, %765, %cst_339 {dimension_numbers = #tpu.dot_dimension_numbers<[1], [0], [0], [1], [0, 0, 1, 1], [], []>} : vector<16x64xf32>, vector<64x16xf32>, vector<16x16xf32> -> vector<16x16xf32>
    %c0_340 = arith.constant 0 : index
    %c0_341 = arith.constant 0 : index
    %c0_342 = arith.constant 0 : index
    %770 = vector.load %arg25[%c0_340, %c0_341, %c0_342] : memref<4x16x32xbf16, #tpu.memory_space<vmem>>, vector<1x16x32xbf16>
    %771 = vector.shape_cast %770 : vector<1x16x32xbf16> to vector<16x32xbf16>
    %772 = arith.truncf %769 : vector<16x16xf32> to vector<16x16xbf16>
    %cst_343 = arith.constant dense<0.000000e+00> : vector<16x32xf32>
    %773 = tpu.matmul %772, %771, %cst_343 {dimension_numbers = #tpu.dot_dimension_numbers<[1], [0], [0], [1], [0, 0, 1, 1], [], []>} : vector<16x16xbf16>, vector<16x32xbf16>, vector<16x32xf32> -> vector<16x32xf32>
    %774 = arith.addf %766, %773 : vector<16x32xf32>
    %c1_344 = arith.constant 1 : index
    %c0_345 = arith.constant 0 : index
    %c0_346 = arith.constant 0 : index
    %775 = vector.load %arg24[%c1_344, %c0_345, %c0_346] : memref<4x16x64xf32, #tpu.memory_space<vmem>>, vector<1x16x64xf32>
    %776 = vector.shape_cast %775 : vector<1x16x64xf32> to vector<16x64xf32>
    %cst_347 = arith.constant dense<0.000000e+00> : vector<16x16xf32>
    %777 = tpu.matmul %776, %765, %cst_347 {dimension_numbers = #tpu.dot_dimension_numbers<[1], [0], [0], [1], [0, 0, 1, 1], [], []>} : vector<16x64xf32>, vector<64x16xf32>, vector<16x16xf32> -> vector<16x16xf32>
    %c1_348 = arith.constant 1 : index
    %c0_349 = arith.constant 0 : index
    %c0_350 = arith.constant 0 : index
    %778 = vector.load %arg25[%c1_348, %c0_349, %c0_350] : memref<4x16x32xbf16, #tpu.memory_space<vmem>>, vector<1x16x32xbf16>
    %779 = vector.shape_cast %778 : vector<1x16x32xbf16> to vector<16x32xbf16>
    %780 = arith.truncf %777 : vector<16x16xf32> to vector<16x16xbf16>
    %cst_351 = arith.constant dense<0.000000e+00> : vector<16x32xf32>
    %781 = tpu.matmul %780, %779, %cst_351 {dimension_numbers = #tpu.dot_dimension_numbers<[1], [0], [0], [1], [0, 0, 1, 1], [], []>} : vector<16x16xbf16>, vector<16x32xbf16>, vector<16x32xf32> -> vector<16x32xf32>
    %782 = arith.addf %774, %781 : vector<16x32xf32>
    %c2 = arith.constant 2 : index
    %c0_352 = arith.constant 0 : index
    %c0_353 = arith.constant 0 : index
    %783 = vector.load %arg24[%c2, %c0_352, %c0_353] : memref<4x16x64xf32, #tpu.memory_space<vmem>>, vector<1x16x64xf32>
    %784 = vector.shape_cast %783 : vector<1x16x64xf32> to vector<16x64xf32>
    %cst_354 = arith.constant dense<0.000000e+00> : vector<16x16xf32>
    %785 = tpu.matmul %784, %765, %cst_354 {dimension_numbers = #tpu.dot_dimension_numbers<[1], [0], [0], [1], [0, 0, 1, 1], [], []>} : vector<16x64xf32>, vector<64x16xf32>, vector<16x16xf32> -> vector<16x16xf32>
    %c2_355 = arith.constant 2 : index
    %c0_356 = arith.constant 0 : index
    %c0_357 = arith.constant 0 : index
    %786 = vector.load %arg25[%c2_355, %c0_356, %c0_357] : memref<4x16x32xbf16, #tpu.memory_space<vmem>>, vector<1x16x32xbf16>
    %787 = vector.shape_cast %786 : vector<1x16x32xbf16> to vector<16x32xbf16>
    %788 = arith.truncf %785 : vector<16x16xf32> to vector<16x16xbf16>
    %cst_358 = arith.constant dense<0.000000e+00> : vector<16x32xf32>
    %789 = tpu.matmul %788, %787, %cst_358 {dimension_numbers = #tpu.dot_dimension_numbers<[1], [0], [0], [1], [0, 0, 1, 1], [], []>} : vector<16x16xbf16>, vector<16x32xbf16>, vector<16x32xf32> -> vector<16x32xf32>
    %790 = arith.addf %782, %789 : vector<16x32xf32>
    %c3 = arith.constant 3 : index
    %c0_359 = arith.constant 0 : index
    %c0_360 = arith.constant 0 : index
    %791 = vector.load %arg24[%c3, %c0_359, %c0_360] : memref<4x16x64xf32, #tpu.memory_space<vmem>>, vector<1x16x64xf32>
    %792 = vector.shape_cast %791 : vector<1x16x64xf32> to vector<16x64xf32>
    %cst_361 = arith.constant dense<0.000000e+00> : vector<16x16xf32>
    %793 = tpu.matmul %792, %765, %cst_361 {dimension_numbers = #tpu.dot_dimension_numbers<[1], [0], [0], [1], [0, 0, 1, 1], [], []>} : vector<16x64xf32>, vector<64x16xf32>, vector<16x16xf32> -> vector<16x16xf32>
    %c3_362 = arith.constant 3 : index
    %c0_363 = arith.constant 0 : index
    %c0_364 = arith.constant 0 : index
    %794 = vector.load %arg25[%c3_362, %c0_363, %c0_364] : memref<4x16x32xbf16, #tpu.memory_space<vmem>>, vector<1x16x32xbf16>
    %795 = vector.shape_cast %794 : vector<1x16x32xbf16> to vector<16x32xbf16>
    %796 = arith.truncf %793 : vector<16x16xf32> to vector<16x16xbf16>
    %cst_365 = arith.constant dense<0.000000e+00> : vector<16x32xf32>
    %797 = tpu.matmul %796, %795, %cst_365 {dimension_numbers = #tpu.dot_dimension_numbers<[1], [0], [0], [1], [0, 0, 1, 1], [], []>} : vector<16x16xbf16>, vector<16x32xbf16>, vector<16x32xf32> -> vector<16x32xf32>
    %798 = arith.addf %790, %797 : vector<16x32xf32>
    %c0_366 = arith.constant 0 : index
    %c0_367 = arith.constant 0 : index
    %799 = vector.load %arg34[%c0_366, %c0_367] : memref<1x32xf32, #tpu.memory_space<vmem>>, vector<1x32xf32>
    %c0_368 = arith.constant 0 : index
    %c0_369 = arith.constant 0 : index
    %800 = vector.load %arg33[%c0_368, %c0_369] : memref<1x32xf32, #tpu.memory_space<vmem>>, vector<1x32xf32>
    %cst_370 = arith.constant dense<0.000000e+00> : vector<16xf32>
    %801 = vector.multi_reduction <add>, %798, %cst_370 [1] : vector<16x32xf32> to vector<16xf32>
    %802 = vector.shape_cast %801 : vector<16xf32> to vector<16x1xf32>
    %cst_371 = arith.constant 3.200000e+01 : f32
    %803 = vector.broadcast %cst_371 : f32 to vector<16x1xf32>
    %804 = arith.divf %802, %803 : vector<16x1xf32>
    %805 = vector.broadcast %804 : vector<16x1xf32> to vector<16x32xf32>
    %806 = arith.subf %798, %805 : vector<16x32xf32>
    %807 = arith.mulf %806, %806 : vector<16x32xf32>
    %cst_372 = arith.constant dense<0.000000e+00> : vector<16xf32>
    %808 = vector.multi_reduction <add>, %807, %cst_372 [1] : vector<16x32xf32> to vector<16xf32>
    %809 = vector.shape_cast %808 : vector<16xf32> to vector<16x1xf32>
    %cst_373 = arith.constant 3.200000e+01 : f32
    %810 = vector.broadcast %cst_373 : f32 to vector<16x1xf32>
    %811 = arith.divf %809, %810 : vector<16x1xf32>
    %812 = vector.broadcast %804 : vector<16x1xf32> to vector<16x32xf32>
    %813 = arith.subf %798, %812 : vector<16x32xf32>
    %cst_374 = arith.constant 9.99999997E-7 : f32
    %814 = vector.broadcast %cst_374 : f32 to vector<16x1xf32>
    %815 = arith.addf %811, %814 : vector<16x1xf32>
    %816 = math.rsqrt %815 : vector<16x1xf32>
    %817 = vector.broadcast %816 : vector<16x1xf32> to vector<16x32xf32>
    %818 = arith.mulf %813, %817 : vector<16x32xf32>
    %819 = vector.broadcast %799 : vector<1x32xf32> to vector<16x32xf32>
    %820 = arith.mulf %818, %819 : vector<16x32xf32>
    %821 = vector.broadcast %800 : vector<1x32xf32> to vector<16x32xf32>
    %822 = arith.addf %820, %821 : vector<16x32xf32>
    %823 = tpu.concatenate %387, %822 in 1 : vector<16x32xf32>, vector<16x32xf32> -> vector<16x64xf32>
    %c0_375 = arith.constant 0 : index
    %c0_376 = arith.constant 0 : index
    %c0_377 = arith.constant 0 : index
    %824 = vector.load %arg40[%c0_375, %c0_376, %c0_377] : memref<1x16x64xf32, #tpu.memory_space<vmem>>, vector<1x16x64xf32>
    %825 = vector.shape_cast %824 : vector<1x16x64xf32> to vector<16x64xf32>
    %826 = vector.shape_cast %823 : vector<16x64xf32> to vector<1x16x64xf32>
    tpu.vector_store %arg40[%c0_375, %c0_376, %c0_377], %826 {strides = array<i32>} : memref<1x16x64xf32, #tpu.memory_space<vmem>>, vector<1x16x64xf32>,
    return
  }
  func.func @transform_0(%arg0: i32) -> (i32, i32, i32) {
    %c0_i32 = arith.constant 0 : i32
    %c0_i32_0 = arith.constant 0 : i32
    %c0_i32_1 = arith.constant 0 : i32
    return %arg0, %c0_i32, %c0_i32_0 : i32, i32, i32
  }
  func.func @transform_1(%arg0: i32) -> (i32, i32, i32) {
    %c0_i32 = arith.constant 0 : i32
    %c0_i32_0 = arith.constant 0 : i32
    %c0_i32_1 = arith.constant 0 : i32
    return %arg0, %c0_i32, %c0_i32_0 : i32, i32, i32
  }
  func.func @transform_2(%arg0: i32) -> (i32, i32, i32) {
    %c0_i32 = arith.constant 0 : i32
    %c0_i32_0 = arith.constant 0 : i32
    %c0_i32_1 = arith.constant 0 : i32
    %c0_i32_2 = arith.constant 0 : i32
    return %c0_i32, %c0_i32_0, %c0_i32_1 : i32, i32, i32
  }
  func.func @transform_3(%arg0: i32) -> (i32, i32, i32) {
    %c0_i32 = arith.constant 0 : i32
    %c0_i32_0 = arith.constant 0 : i32
    %c0_i32_1 = arith.constant 0 : i32
    %c0_i32_2 = arith.constant 0 : i32
    return %c0_i32, %c0_i32_0, %c0_i32_1 : i32, i32, i32
  }
  func.func @transform_4(%arg0: i32) -> (i32, i32) {
    %c0_i32 = arith.constant 0 : i32
    %c0_i32_0 = arith.constant 0 : i32
    %c0_i32_1 = arith.constant 0 : i32
    return %c0_i32, %c0_i32_0 : i32, i32
  }
  func.func @transform_5(%arg0: i32) -> (i32, i32, i32) {
    %c0_i32 = arith.constant 0 : i32
    %c0_i32_0 = arith.constant 0 : i32
    %c0_i32_1 = arith.constant 0 : i32
    %c0_i32_2 = arith.constant 0 : i32
    return %c0_i32, %c0_i32_0, %c0_i32_1 : i32, i32, i32
  }
  func.func @transform_6(%arg0: i32) -> (i32, i32, i32) {
    %c0_i32 = arith.constant 0 : i32
    %c0_i32_0 = arith.constant 0 : i32
    %c0_i32_1 = arith.constant 0 : i32
    %c0_i32_2 = arith.constant 0 : i32
    return %c0_i32, %c0_i32_0, %c0_i32_1 : i32, i32, i32
  }
  func.func @transform_7(%arg0: i32) -> (i32, i32, i32) {
    %c0_i32 = arith.constant 0 : i32
    %c0_i32_0 = arith.constant 0 : i32
    %c0_i32_1 = arith.constant 0 : i32
    %c0_i32_2 = arith.constant 0 : i32
    return %c0_i32, %c0_i32_0, %c0_i32_1 : i32, i32, i32
  }
  func.func @transform_8(%arg0: i32) -> (i32, i32, i32) {
    %c0_i32 = arith.constant 0 : i32
    %c0_i32_0 = arith.constant 0 : i32
    %c0_i32_1 = arith.constant 0 : i32
    %c0_i32_2 = arith.constant 0 : i32
    return %c0_i32, %c0_i32_0, %c0_i32_1 : i32, i32, i32
  }
  func.func @transform_9(%arg0: i32) -> (i32, i32, i32) {
    %c0_i32 = arith.constant 0 : i32
    %c0_i32_0 = arith.constant 0 : i32
    %c0_i32_1 = arith.constant 0 : i32
    %c0_i32_2 = arith.constant 0 : i32
    return %c0_i32, %c0_i32_0, %c0_i32_1 : i32, i32, i32
  }
  func.func @transform_10(%arg0: i32) -> (i32, i32, i32) {
    %c0_i32 = arith.constant 0 : i32
    %c0_i32_0 = arith.constant 0 : i32
    %c0_i32_1 = arith.constant 0 : i32
    %c0_i32_2 = arith.constant 0 : i32
    return %c0_i32, %c0_i32_0, %c0_i32_1 : i32, i32, i32
  }
  func.func @transform_11(%arg0: i32) -> (i32, i32) {
    %c0_i32 = arith.constant 0 : i32
    %c0_i32_0 = arith.constant 0 : i32
    %c0_i32_1 = arith.constant 0 : i32
    return %c0_i32, %c0_i32_0 : i32, i32
  }
  func.func @transform_12(%arg0: i32) -> (i32, i32) {
    %c0_i32 = arith.constant 0 : i32
    %c0_i32_0 = arith.constant 0 : i32
    %c0_i32_1 = arith.constant 0 : i32
    return %c0_i32, %c0_i32_0 : i32, i32
  }
  func.func @transform_13(%arg0: i32) -> (i32, i32) {
    %c0_i32 = arith.constant 0 : i32
    %c0_i32_0 = arith.constant 0 : i32
    %c0_i32_1 = arith.constant 0 : i32
    return %c0_i32, %c0_i32_0 : i32, i32
  }
  func.func @transform_14(%arg0: i32) -> (i32, i32, i32) {
    %c0_i32 = arith.constant 0 : i32
    %c0_i32_0 = arith.constant 0 : i32
    %c0_i32_1 = arith.constant 0 : i32
    %c0_i32_2 = arith.constant 0 : i32
    return %c0_i32, %c0_i32_0, %c0_i32_1 : i32, i32, i32
  }
  func.func @transform_15(%arg0: i32) -> (i32, i32, i32) {
    %c0_i32 = arith.constant 0 : i32
    %c0_i32_0 = arith.constant 0 : i32
    %c0_i32_1 = arith.constant 0 : i32
    %c0_i32_2 = arith.constant 0 : i32
    return %c0_i32, %c0_i32_0, %c0_i32_1 : i32, i32, i32
  }
  func.func @transform_16(%arg0: i32) -> (i32, i32, i32) {
    %c0_i32 = arith.constant 0 : i32
    %c0_i32_0 = arith.constant 0 : i32
    %c0_i32_1 = arith.constant 0 : i32
    %c0_i32_2 = arith.constant 0 : i32
    return %c0_i32, %c0_i32_0, %c0_i32_1 : i32, i32, i32
  }
  func.func @transform_17(%arg0: i32) -> (i32, i32, i32) {
    %c0_i32 = arith.constant 0 : i32
    %c0_i32_0 = arith.constant 0 : i32
    %c0_i32_1 = arith.constant 0 : i32
    %c0_i32_2 = arith.constant 0 : i32
    return %c0_i32, %c0_i32_0, %c0_i32_1 : i32, i32, i32
  }
  func.func @transform_18(%arg0: i32) -> (i32, i32, i32) {
    %c0_i32 = arith.constant 0 : i32
    %c0_i32_0 = arith.constant 0 : i32
    %c0_i32_1 = arith.constant 0 : i32
    %c0_i32_2 = arith.constant 0 : i32
    return %c0_i32, %c0_i32_0, %c0_i32_1 : i32, i32, i32
  }
  func.func @transform_19(%arg0: i32) -> (i32, i32, i32) {
    %c0_i32 = arith.constant 0 : i32
    %c0_i32_0 = arith.constant 0 : i32
    %c0_i32_1 = arith.constant 0 : i32
    %c0_i32_2 = arith.constant 0 : i32
    return %c0_i32, %c0_i32_0, %c0_i32_1 : i32, i32, i32
  }
  func.func @transform_20(%arg0: i32) -> (i32, i32) {
    %c0_i32 = arith.constant 0 : i32
    %c0_i32_0 = arith.constant 0 : i32
    %c0_i32_1 = arith.constant 0 : i32
    return %c0_i32, %c0_i32_0 : i32, i32
  }
  func.func @transform_21(%arg0: i32) -> (i32, i32, i32) {
    %c0_i32 = arith.constant 0 : i32
    %c0_i32_0 = arith.constant 0 : i32
    %c0_i32_1 = arith.constant 0 : i32
    %c0_i32_2 = arith.constant 0 : i32
    return %c0_i32, %c0_i32_0, %c0_i32_1 : i32, i32, i32
  }
  func.func @transform_22(%arg0: i32) -> (i32, i32, i32) {
    %c0_i32 = arith.constant 0 : i32
    %c0_i32_0 = arith.constant 0 : i32
    %c0_i32_1 = arith.constant 0 : i32
    %c0_i32_2 = arith.constant 0 : i32
    return %c0_i32, %c0_i32_0, %c0_i32_1 : i32, i32, i32
  }
  func.func @transform_23(%arg0: i32) -> (i32, i32, i32) {
    %c0_i32 = arith.constant 0 : i32
    %c0_i32_0 = arith.constant 0 : i32
    %c0_i32_1 = arith.constant 0 : i32
    %c0_i32_2 = arith.constant 0 : i32
    return %c0_i32, %c0_i32_0, %c0_i32_1 : i32, i32, i32
  }
  func.func @transform_24(%arg0: i32) -> (i32, i32, i32) {
    %c0_i32 = arith.constant 0 : i32
    %c0_i32_0 = arith.constant 0 : i32
    %c0_i32_1 = arith.constant 0 : i32
    %c0_i32_2 = arith.constant 0 : i32
    return %c0_i32, %c0_i32_0, %c0_i32_1 : i32, i32, i32
  }
  func.func @transform_25(%arg0: i32) -> (i32, i32, i32) {
    %c0_i32 = arith.constant 0 : i32
    %c0_i32_0 = arith.constant 0 : i32
    %c0_i32_1 = arith.constant 0 : i32
    %c0_i32_2 = arith.constant 0 : i32
    return %c0_i32, %c0_i32_0, %c0_i32_1 : i32, i32, i32
  }
  func.func @transform_26(%arg0: i32) -> (i32, i32, i32) {
    %c0_i32 = arith.constant 0 : i32
    %c0_i32_0 = arith.constant 0 : i32
    %c0_i32_1 = arith.constant 0 : i32
    %c0_i32_2 = arith.constant 0 : i32
    return %c0_i32, %c0_i32_0, %c0_i32_1 : i32, i32, i32
  }
  func.func @transform_27(%arg0: i32) -> (i32, i32, i32) {
    %c0_i32 = arith.constant 0 : i32
    %c0_i32_0 = arith.constant 0 : i32
    %c0_i32_1 = arith.constant 0 : i32
    %c0_i32_2 = arith.constant 0 : i32
    return %c0_i32, %c0_i32_0, %c0_i32_1 : i32, i32, i32
  }
  func.func @transform_28(%arg0: i32) -> (i32, i32, i32) {
    %c0_i32 = arith.constant 0 : i32
    %c0_i32_0 = arith.constant 0 : i32
    %c0_i32_1 = arith.constant 0 : i32
    %c0_i32_2 = arith.constant 0 : i32
    return %c0_i32, %c0_i32_0, %c0_i32_1 : i32, i32, i32
  }
  func.func @transform_29(%arg0: i32) -> (i32, i32) {
    %c0_i32 = arith.constant 0 : i32
    %c0_i32_0 = arith.constant 0 : i32
    %c0_i32_1 = arith.constant 0 : i32
    return %c0_i32, %c0_i32_0 : i32, i32
  }
  func.func @transform_30(%arg0: i32) -> (i32, i32) {
    %c0_i32 = arith.constant 0 : i32
    %c0_i32_0 = arith.constant 0 : i32
    %c0_i32_1 = arith.constant 0 : i32
    return %c0_i32, %c0_i32_0 : i32, i32
  }
  func.func @transform_31(%arg0: i32) -> (i32, i32) {
    %c0_i32 = arith.constant 0 : i32
    %c0_i32_0 = arith.constant 0 : i32
    %c0_i32_1 = arith.constant 0 : i32
    return %c0_i32, %c0_i32_0 : i32, i32
  }
  func.func @transform_32(%arg0: i32) -> (i32, i32) {
    %c0_i32 = arith.constant 0 : i32
    %c0_i32_0 = arith.constant 0 : i32
    %c0_i32_1 = arith.constant 0 : i32
    return %c0_i32, %c0_i32_0 : i32, i32
  }
  func.func @transform_33(%arg0: i32) -> (i32, i32) {
    %c0_i32 = arith.constant 0 : i32
    %c0_i32_0 = arith.constant 0 : i32
    %c0_i32_1 = arith.constant 0 : i32
    return %c0_i32, %c0_i32_0 : i32, i32
  }
  func.func @transform_34(%arg0: i32) -> (i32, i32) {
    %c0_i32 = arith.constant 0 : i32
    %c0_i32_0 = arith.constant 0 : i32
    %c0_i32_1 = arith.constant 0 : i32
    return %c0_i32, %c0_i32_0 : i32, i32
  }
  func.func @transform_35(%arg0: i32) -> (i32, i32, i32) {
    %c0_i32 = arith.constant 0 : i32
    %c0_i32_0 = arith.constant 0 : i32
    %c0_i32_1 = arith.constant 0 : i32
    %c0_i32_2 = arith.constant 0 : i32
    return %c0_i32, %c0_i32_0, %c0_i32_1 : i32, i32, i32
  }
  func.func @transform_36(%arg0: i32) -> (i32, i32, i32) {
    %c0_i32 = arith.constant 0 : i32
    %c0_i32_0 = arith.constant 0 : i32
    %c0_i32_1 = arith.constant 0 : i32
    %c0_i32_2 = arith.constant 0 : i32
    return %c0_i32, %c0_i32_0, %c0_i32_1 : i32, i32, i32
  }
  func.func @transform_37(%arg0: i32) -> (i32, i32, i32) {
    %c0_i32 = arith.constant 0 : i32
    %c0_i32_0 = arith.constant 0 : i32
    %c0_i32_1 = arith.constant 0 : i32
    %c0_i32_2 = arith.constant 0 : i32
    return %c0_i32, %c0_i32_0, %c0_i32_1 : i32, i32, i32
  }
  func.func @transform_38(%arg0: i32) -> (i32, i32, i32) {
    %c0_i32 = arith.constant 0 : i32
    %c0_i32_0 = arith.constant 0 : i32
    %c0_i32_1 = arith.constant 0 : i32
    %c0_i32_2 = arith.constant 0 : i32
    return %c0_i32, %c0_i32_0, %c0_i32_1 : i32, i32, i32
  }
  func.func @transform_39(%arg0: i32) -> (i32, i32, i32) {
    %c0_i32 = arith.constant 0 : i32
    %c0_i32_0 = arith.constant 0 : i32
    %c0_i32_1 = arith.constant 0 : i32
    return %arg0, %c0_i32, %c0_i32_0 : i32, i32, i32
  }
}

</mosaic_0001>

<llo_original>
// kernel: clip_sam_forward_batched.1
$region0: #{clip_sam_forward_batched.1}
  #allocation0 [shape = 'u32[]', space=smem, size = 0x4, offset = 0x4, fixed_abs, tag = 'smem constant byte address 0x4 - core index']
  #allocation1 [shape = 'u32[72,128]{1,0:T(1,128)}', space=vmem, size = 0x9000, scoped, tag = 'internal scratch']
  %s0 = inlined_call_operand.smem [shape: u32[40], index: -1, kind: input, shape index: {}]
  %s1 = sld [smem:[%s0]]
  %s2 = scalar_lea.smem %s0, 1
  %s3 = sld [smem:[%s2]]
  %s4 = scalar_lea.smem %s0, 2
  %s5 = sld [smem:[%s4]]
  %s6 = scalar_lea.smem %s0, 3
  %s7 = sld [smem:[%s6]]
  %s8 = scalar_lea.smem %s0, 4
  %s9 = sld [smem:[%s8]]
  %s10 = scalar_lea.smem %s0, 5
  %s11 = sld [smem:[%s10]]
  %s12 = scalar_lea.smem %s0, 6
  %s13 = sld [smem:[%s12]]
  %s14 = scalar_lea.smem %s0, 7
  %s15 = sld [smem:[%s14]]
  %s16 = scalar_lea.smem %s0, 8
  %s17 = sld [smem:[%s16]]
  %s18 = scalar_lea.smem %s0, 9
  %s19 = sld [smem:[%s18]]
  %s20 = scalar_lea.smem %s0, 10
  %s21 = sld [smem:[%s20]]
  %s22 = scalar_lea.smem %s0, 11
  %s23 = sld [smem:[%s22]]
  %s24 = scalar_lea.smem %s0, 12
  %s25 = sld [smem:[%s24]]
  %s26 = scalar_lea.smem %s0, 13
  %s27 = sld [smem:[%s26]]
  %s28 = scalar_lea.smem %s0, 14
  %s29 = sld [smem:[%s28]]
  %s30 = scalar_lea.smem %s0, 15
  %s31 = sld [smem:[%s30]]
  %s32 = scalar_lea.smem %s0, 16
  %s33 = sld [smem:[%s32]]
  %s34 = scalar_lea.smem %s0, 17
  %s35 = sld [smem:[%s34]]
  %s36 = scalar_lea.smem %s0, 18
  %s37 = sld [smem:[%s36]]
  %s38 = scalar_lea.smem %s0, 19
  %s39 = sld [smem:[%s38]]
  %s40 = scalar_lea.smem %s0, 20
  %s41 = sld [smem:[%s40]]
  %s42 = scalar_lea.smem %s0, 21
  %s43 = sld [smem:[%s42]]
  %s44 = scalar_lea.smem %s0, 22
  %s45 = sld [smem:[%s44]]
  %s46 = scalar_lea.smem %s0, 23
  %s47 = sld [smem:[%s46]]
  %s48 = scalar_lea.smem %s0, 24
  %s49 = sld [smem:[%s48]]
  %s50 = scalar_lea.smem %s0, 25
  %s51 = sld [smem:[%s50]]
  %s52 = scalar_lea.smem %s0, 26
  %s53 = sld [smem:[%s52]]
  %s54 = scalar_lea.smem %s0, 27
  %s55 = sld [smem:[%s54]]
  %s56 = scalar_lea.smem %s0, 28
  %s57 = sld [smem:[%s56]]
  %s58 = scalar_lea.smem %s0, 29
  %s59 = sld [smem:[%s58]]
  %s60 = scalar_lea.smem %s0, 30
  %s61 = sld [smem:[%s60]]
  %s62 = scalar_lea.smem %s0, 31
  %s63 = sld [smem:[%s62]]
  %s64 = scalar_lea.smem %s0, 32
  %s65 = sld [smem:[%s64]]
  %s66 = scalar_lea.smem %s0, 33
  %s67 = sld [smem:[%s66]]
  %s68 = scalar_lea.smem %s0, 34
  %s69 = sld [smem:[%s68]]
  %s70 = scalar_lea.smem %s0, 35
  %s71 = sld [smem:[%s70]]
  %s72 = scalar_lea.smem %s0, 36
  %s73 = sld [smem:[%s72]]
  %s74 = scalar_lea.smem %s0, 37
  %s75 = sld [smem:[%s74]]
  %s76 = scalar_lea.smem %s0, 38
  %s77 = sld [smem:[%s76]]
  %s78 = scalar_lea.smem %s0, 39
  %s79 = sld [smem:[%s78]]
  %s80 = sld [smem:[#allocation0]]
  $region189: #{clip_sam_forward_batched.1} parent=0
    _
  %s82 = ssub.s32 1, %s80
  %s83 = scalar_select 0, %s82, %s80
  $region1: #{clip_sam_forward_batched.1} parent=0
    #allocation2 [shape = 'u8[16384]{0}', space=vmem, size = 0x4000, scoped, tag = 'output window, operand 0']
    #allocation3 [shape = 's32[2]{0}', space=sflag, size = 0x8, scoped, tag = 'scoped memory for clip_sam_forward_batched.1']
    %84 = vsyncpa [#allocation3], 0
    %s85 = scalar_lea.sflag [#allocation3], 1
    %86 = vsyncpa %s85, 0
    loop: start=0, step=1, limit=4
    $region2: #{clip_sam_forward_batched.1} parent=1 // loop_pre_header
      _
    $region3: #{clip_sam_forward_batched.1} parent=1 // loop_header
      %s88 = sphi 0, %s92
      %p89 = scmp.ge.s32.totalorder %s88, 4
      %s98 = sphi 0, %s100
      %s101 = sphi 0, %s98
      %s102 = sphi 0, %s101
      %s118 = sphi 0, %s102
      %s124 = sphi 0, %s126
      %s127 = sphi 0, %s124
      %s128 = sphi 0, %s127
      %s144 = sphi 0, %s128
      %s148 = sphi 0, %s148
      %s150 = sphi 0, %s148
      %s151 = sphi 0, %s150
      %s165 = sphi 0, %s151
      %s169 = sphi 0, %s169
      %s171 = sphi 0, %s169
      %s172 = sphi 0, %s171
      %s186 = sphi 0, %s172
      %s190 = sphi 0, %s190
      %s192 = sphi 0, %s190
      %s193 = sphi 0, %s192
      %s207 = sphi 0, %s193
      %s211 = sphi 0, %s211
      %s213 = sphi 0, %s211
      %s214 = sphi 0, %s213
      %s228 = sphi 0, %s214
      %s232 = sphi 0, %s232
      %s234 = sphi 0, %s232
      %s235 = sphi 0, %s234
      %s249 = sphi 0, %s235
      %s253 = sphi 0, %s253
      %s255 = sphi 0, %s253
      %s256 = sphi 0, %s255
      %s270 = sphi 0, %s256
      %s274 = sphi 0, %s274
      %s276 = sphi 0, %s274
      %s277 = sphi 0, %s276
      %s291 = sphi 0, %s277
      %s295 = sphi 0, %s295
      %s297 = sphi 0, %s295
      %s298 = sphi 0, %s297
      %s312 = sphi 0, %s298
      %s316 = sphi 0, %s316
      %s318 = sphi 0, %s316
      %s319 = sphi 0, %s318
      %s333 = sphi 0, %s319
      %s337 = sphi 0, %s337
      %s339 = sphi 0, %s337
      %s340 = sphi 0, %s339
      %s354 = sphi 0, %s340
      %s358 = sphi 0, %s358
      %s360 = sphi 0, %s358
      %s361 = sphi 0, %s360
      %s375 = sphi 0, %s361
      %s379 = sphi 0, %s379
      %s381 = sphi 0, %s379
      %s382 = sphi 0, %s381
      %s396 = sphi 0, %s382
      %s400 = sphi 0, %s400
      %s402 = sphi 0, %s400
      %s403 = sphi 0, %s402
      %s417 = sphi 0, %s403
      %s421 = sphi 0, %s421
      %s423 = sphi 0, %s421
      %s424 = sphi 0, %s423
      %s438 = sphi 0, %s424
      %s442 = sphi 0, %s442
      %s444 = sphi 0, %s442
      %s445 = sphi 0, %s444
      %s459 = sphi 0, %s445
      %s463 = sphi 0, %s463
      %s465 = sphi 0, %s463
      %s466 = sphi 0, %s465
      %s480 = sphi 0, %s466
      %s484 = sphi 0, %s484
      %s486 = sphi 0, %s484
      %s487 = sphi 0, %s486
      %s501 = sphi 0, %s487
      %s505 = sphi 0, %s505
      %s507 = sphi 0, %s505
      %s508 = sphi 0, %s507
      %s522 = sphi 0, %s508
      %s526 = sphi 0, %s526
      %s528 = sphi 0, %s526
      %s529 = sphi 0, %s528
      %s543 = sphi 0, %s529
      %s547 = sphi 0, %s547
      %s549 = sphi 0, %s547
      %s550 = sphi 0, %s549
      %s564 = sphi 0, %s550
      %s568 = sphi 0, %s568
      %s570 = sphi 0, %s568
      %s571 = sphi 0, %s570
      %s585 = sphi 0, %s571
      %s589 = sphi 0, %s589
      %s591 = sphi 0, %s589
      %s592 = sphi 0, %s591
      %s606 = sphi 0, %s592
      %s610 = sphi 0, %s610
      %s612 = sphi 0, %s610
      %s613 = sphi 0, %s612
      %s627 = sphi 0, %s613
      %s631 = sphi 0, %s631
      %s633 = sphi 0, %s631
      %s634 = sphi 0, %s633
      %s648 = sphi 0, %s634
      %s652 = sphi 0, %s652
      %s654 = sphi 0, %s652
      %s655 = sphi 0, %s654
      %s669 = sphi 0, %s655
      %s673 = sphi 0, %s673
      %s675 = sphi 0, %s673
      %s676 = sphi 0, %s675
      %s690 = sphi 0, %s676
      %s694 = sphi 0, %s694
      %s696 = sphi 0, %s694
      %s697 = sphi 0, %s696
      %s711 = sphi 0, %s697
      %s715 = sphi 0, %s715
      %s717 = sphi 0, %s715
      %s718 = sphi 0, %s717
      %s732 = sphi 0, %s718
      %s736 = sphi 0, %s736
      %s738 = sphi 0, %s736
      %s739 = sphi 0, %s738
      %s753 = sphi 0, %s739
      %s757 = sphi 0, %s757
      %s759 = sphi 0, %s757
      %s760 = sphi 0, %s759
      %s774 = sphi 0, %s760
      %s778 = sphi 0, %s778
      %s780 = sphi 0, %s778
      %s781 = sphi 0, %s780
      %s795 = sphi 0, %s781
      %s799 = sphi 0, %s799
      %s801 = sphi 0, %s799
      %s802 = sphi 0, %s801
      %s816 = sphi 0, %s802
      %s820 = sphi 0, %s820
      %s822 = sphi 0, %s820
      %s823 = sphi 0, %s822
      %s837 = sphi 0, %s823
      %s841 = sphi 0, %s841
      %s843 = sphi 0, %s841
      %s844 = sphi 0, %s843
      %s858 = sphi 0, %s844
      %s862 = sphi 0, %s862
      %s864 = sphi 0, %s862
      %s865 = sphi 0, %s864
      %s879 = sphi 0, %s865
      %s883 = sphi 0, %s883
      %s885 = sphi 0, %s883
      %s886 = sphi 0, %s885
      %s900 = sphi 0, %s886
      %s904 = sphi 0, %s904
      %s906 = sphi 0, %s904
      %s907 = sphi 0, %s906
      %s921 = sphi 0, %s907
      %s927 = sphi 0, %s929
      %s930 = sphi 0, %s927
      %s931 = sphi 0, %s930
      %s947 = sphi 0, %s931
    $region4: #{clip_sam_forward_batched.1} parent=1 // loop_header_branch
      %91 = sbr.rel (%p89) target = $region8
    $region5: #{clip_sam_forward_batched.1} parent=1 // loop_body
      %s93 = ssub.s32 %s88, 1
      %s94 = ssub.s32 %s88, 2
      %s95 = sadd.s32 %s88, 1
      %s96 = ssub.s32 %s88, %s95
      %p97 = scmp.eq.s32.totalorder %s96, 0
      %s99 = sadd.s32 %s98, 1
      %s100 = scalar_select %p97, %s98, %s99
      %p103 = pneg %p97
      %p104 = scmp.eq.s32.totalorder %s88, 1
      %p105 = por %p103, %p104
      %p106 = scmp.ne.s32.totalorder %s98, %s101
      %p107 = scmp.eq.s32.totalorder %s88, 0
      %p108 = por %p106, %p107
      %p109 = scmp.ne.s32.totalorder %s98, %s101
      %p110 = scmp.eq.s32.totalorder %s93, 1
      %p111 = por %p109, %p110
      %p112 = scmp.ne.s32.totalorder %s101, %s102
      %p113 = scmp.eq.s32.totalorder %s93, 0
      %p114 = por %p112, %p113
      %p115 = scmp.ne.s32.totalorder %s101, %s102
      %p116 = scmp.eq.s32.totalorder %s94, 1
      %p117 = por %p115, %p116
      %p119 = scmp.ne.s32.totalorder %s102, %s118
      %p120 = scmp.eq.s32.totalorder %s94, 0
      %p121 = por %p119, %p120
      %s122 = ssub.s32 %s88, %s95
      %p123 = scmp.eq.s32.totalorder %s122, 0
      %s125 = sadd.s32 %s124, 1
      %s126 = scalar_select %p123, %s124, %s125
      %p129 = pneg %p123
      %p130 = scmp.eq.s32.totalorder %s88, 1
      %p131 = por %p129, %p130
      %p132 = scmp.ne.s32.totalorder %s124, %s127
      %p133 = scmp.eq.s32.totalorder %s88, 0
      %p134 = por %p132, %p133
      %p135 = scmp.ne.s32.totalorder %s124, %s127
      %p136 = scmp.eq.s32.totalorder %s93, 1
      %p137 = por %p135, %p136
      %p138 = scmp.ne.s32.totalorder %s127, %s128
      %p139 = scmp.eq.s32.totalorder %s93, 0
      %p140 = por %p138, %p139
      %p141 = scmp.ne.s32.totalorder %s127, %s128
      %p142 = scmp.eq.s32.totalorder %s94, 1
      %p143 = por %p141, %p142
      %p145 = scmp.ne.s32.totalorder %s128, %s144
      %p146 = scmp.eq.s32.totalorder %s94, 0
      %p147 = por %p145, %p146
      %s149 = sadd.s32 %s148, 1
      %p152 = scmp.eq.s32.totalorder %s88, 1
      %p153 = scmp.ne.s32.totalorder %s148, %s150
      %p154 = scmp.eq.s32.totalorder %s88, 0
      %p155 = por %p153, %p154
      %p156 = scmp.ne.s32.totalorder %s148, %s150
      %p157 = scmp.eq.s32.totalorder %s93, 1
      %p158 = por %p156, %p157
      %p159 = scmp.ne.s32.totalorder %s150, %s151
      %p160 = scmp.eq.s32.totalorder %s93, 0
      %p161 = por %p159, %p160
      %p162 = scmp.ne.s32.totalorder %s150, %s151
      %p163 = scmp.eq.s32.totalorder %s94, 1
      %p164 = por %p162, %p163
      %p166 = scmp.ne.s32.totalorder %s151, %s165
      %p167 = scmp.eq.s32.totalorder %s94, 0
      %p168 = por %p166, %p167
      %s170 = sadd.s32 %s169, 1
      %p173 = scmp.eq.s32.totalorder %s88, 1
      %p174 = scmp.ne.s32.totalorder %s169, %s171
      %p175 = scmp.eq.s32.totalorder %s88, 0
      %p176 = por %p174, %p175
      %p177 = scmp.ne.s32.totalorder %s169, %s171
      %p178 = scmp.eq.s32.totalorder %s93, 1
      %p179 = por %p177, %p178
      %p180 = scmp.ne.s32.totalorder %s171, %s172
      %p181 = scmp.eq.s32.totalorder %s93, 0
      %p182 = por %p180, %p181
      %p183 = scmp.ne.s32.totalorder %s171, %s172
      %p184 = scmp.eq.s32.totalorder %s94, 1
      %p185 = por %p183, %p184
      %p187 = scmp.ne.s32.totalorder %s172, %s186
      %p188 = scmp.eq.s32.totalorder %s94, 0
      %p189 = por %p187, %p188
      %s191 = sadd.s32 %s190, 1
      %p194 = scmp.eq.s32.totalorder %s88, 1
      %p195 = scmp.ne.s32.totalorder %s190, %s192
      %p196 = scmp.eq.s32.totalorder %s88, 0
      %p197 = por %p195, %p196
      %p198 = scmp.ne.s32.totalorder %s190, %s192
      %p199 = scmp.eq.s32.totalorder %s93, 1
      %p200 = por %p198, %p199
      %p201 = scmp.ne.s32.totalorder %s192, %s193
      %p202 = scmp.eq.s32.totalorder %s93, 0
      %p203 = por %p201, %p202
      %p204 = scmp.ne.s32.totalorder %s192, %s193
      %p205 = scmp.eq.s32.totalorder %s94, 1
      %p206 = por %p204, %p205
      %p208 = scmp.ne.s32.totalorder %s193, %s207
      %p209 = scmp.eq.s32.totalorder %s94, 0
      %p210 = por %p208, %p209
      %s212 = sadd.s32 %s211, 1
      %p215 = scmp.eq.s32.totalorder %s88, 1
      %p216 = scmp.ne.s32.totalorder %s211, %s213
      %p217 = scmp.eq.s32.totalorder %s88, 0
      %p218 = por %p216, %p217
      %p219 = scmp.ne.s32.totalorder %s211, %s213
      %p220 = scmp.eq.s32.totalorder %s93, 1
      %p221 = por %p219, %p220
      %p222 = scmp.ne.s32.totalorder %s213, %s214
      %p223 = scmp.eq.s32.totalorder %s93, 0
      %p224 = por %p222, %p223
      %p225 = scmp.ne.s32.totalorder %s213, %s214
      %p226 = scmp.eq.s32.totalorder %s94, 1
      %p227 = por %p225, %p226
      %p229 = scmp.ne.s32.totalorder %s214, %s228
      %p230 = scmp.eq.s32.totalorder %s94, 0
      %p231 = por %p229, %p230
      %s233 = sadd.s32 %s232, 1
      %p236 = scmp.eq.s32.totalorder %s88, 1
      %p237 = scmp.ne.s32.totalorder %s232, %s234
      %p238 = scmp.eq.s32.totalorder %s88, 0
      %p239 = por %p237, %p238
      %p240 = scmp.ne.s32.totalorder %s232, %s234
      %p241 = scmp.eq.s32.totalorder %s93, 1
      %p242 = por %p240, %p241
      %p243 = scmp.ne.s32.totalorder %s234, %s235
      %p244 = scmp.eq.s32.totalorder %s93, 0
      %p245 = por %p243, %p244
      %p246 = scmp.ne.s32.totalorder %s234, %s235
      %p247 = scmp.eq.s32.totalorder %s94, 1
      %p248 = por %p246, %p247
      %p250 = scmp.ne.s32.totalorder %s235, %s249
      %p251 = scmp.eq.s32.totalorder %s94, 0
      %p252 = por %p250, %p251
      %s254 = sadd.s32 %s253, 1
      %p257 = scmp.eq.s32.totalorder %s88, 1
      %p258 = scmp.ne.s32.totalorder %s253, %s255
      %p259 = scmp.eq.s32.totalorder %s88, 0
      %p260 = por %p258, %p259
      %p261 = scmp.ne.s32.totalorder %s253, %s255
      %p262 = scmp.eq.s32.totalorder %s93, 1
      %p263 = por %p261, %p262
      %p264 = scmp.ne.s32.totalorder %s255, %s256
      %p265 = scmp.eq.s32.totalorder %s93, 0
      %p266 = por %p264, %p265
      %p267 = scmp.ne.s32.totalorder %s255, %s256
      %p268 = scmp.eq.s32.totalorder %s94, 1
      %p269 = por %p267, %p268
      %p271 = scmp.ne.s32.totalorder %s256, %s270
      %p272 = scmp.eq.s32.totalorder %s94, 0
      %p273 = por %p271, %p272
      %s275 = sadd.s32 %s274, 1
      %p278 = scmp.eq.s32.totalorder %s88, 1
      %p279 = scmp.ne.s32.totalorder %s274, %s276
      %p280 = scmp.eq.s32.totalorder %s88, 0
      %p281 = por %p279, %p280
      %p282 = scmp.ne.s32.totalorder %s274, %s276
      %p283 = scmp.eq.s32.totalorder %s93, 1
      %p284 = por %p282, %p283
      %p285 = scmp.ne.s32.totalorder %s276, %s277
      %p286 = scmp.eq.s32.totalorder %s93, 0
      %p287 = por %p285, %p286
      %p288 = scmp.ne.s32.totalorder %s276, %s277
      %p289 = scmp.eq.s32.totalorder %s94, 1
      %p290 = por %p288, %p289
      %p292 = scmp.ne.s32.totalorder %s277, %s291
      %p293 = scmp.eq.s32.totalorder %s94, 0
      %p294 = por %p292, %p293
      %s296 = sadd.s32 %s295, 1
      %p299 = scmp.eq.s32.totalorder %s88, 1
      %p300 = scmp.ne.s32.totalorder %s295, %s297
      %p301 = scmp.eq.s32.totalorder %s88, 0
      %p302 = por %p300, %p301
      %p303 = scmp.ne.s32.totalorder %s295, %s297
      %p304 = scmp.eq.s32.totalorder %s93, 1
      %p305 = por %p303, %p304
      %p306 = scmp.ne.s32.totalorder %s297, %s298
      %p307 = scmp.eq.s32.totalorder %s93, 0
      %p308 = por %p306, %p307
      %p309 = scmp.ne.s32.totalorder %s297, %s298
      %p310 = scmp.eq.s32.totalorder %s94, 1
      %p311 = por %p309, %p310
      %p313 = scmp.ne.s32.totalorder %s298, %s312
      %p314 = scmp.eq.s32.totalorder %s94, 0
      %p315 = por %p313, %p314
      %s317 = sadd.s32 %s316, 1
      %p320 = scmp.eq.s32.totalorder %s88, 1
      %p321 = scmp.ne.s32.totalorder %s316, %s318
      %p322 = scmp.eq.s32.totalorder %s88, 0
      %p323 = por %p321, %p322
      %p324 = scmp.ne.s32.totalorder %s316, %s318
      %p325 = scmp.eq.s32.totalorder %s93, 1
      %p326 = por %p324, %p325
      %p327 = scmp.ne.s32.totalorder %s318, %s319
      %p328 = scmp.eq.s32.totalorder %s93, 0
      %p329 = por %p327, %p328
      %p330 = scmp.ne.s32.totalorder %s318, %s319
      %p331 = scmp.eq.s32.totalorder %s94, 1
      %p332 = por %p330, %p331
      %p334 = scmp.ne.s32.totalorder %s319, %s333
      %p335 = scmp.eq.s32.totalorder %s94, 0
      %p336 = por %p334, %p335
      %s338 = sadd.s32 %s337, 1
      %p341 = scmp.eq.s32.totalorder %s88, 1
      %p342 = scmp.ne.s32.totalorder %s337, %s339
      %p343 = scmp.eq.s32.totalorder %s88, 0
      %p344 = por %p342, %p343
      %p345 = scmp.ne.s32.totalorder %s337, %s339
      %p346 = scmp.eq.s32.totalorder %s93, 1
      %p347 = por %p345, %p346
      %p348 = scmp.ne.s32.totalorder %s339, %s340
      %p349 = scmp.eq.s32.totalorder %s93, 0
      %p350 = por %p348, %p349
      %p351 = scmp.ne.s32.totalorder %s339, %s340
      %p352 = scmp.eq.s32.totalorder %s94, 1
      %p353 = por %p351, %p352
      %p355 = scmp.ne.s32.totalorder %s340, %s354
      %p356 = scmp.eq.s32.totalorder %s94, 0
      %p357 = por %p355, %p356
      %s359 = sadd.s32 %s358, 1
      %p362 = scmp.eq.s32.totalorder %s88, 1
      %p363 = scmp.ne.s32.totalorder %s358, %s360
      %p364 = scmp.eq.s32.totalorder %s88, 0
      %p365 = por %p363, %p364
      %p366 = scmp.ne.s32.totalorder %s358, %s360
      %p367 = scmp.eq.s32.totalorder %s93, 1
      %p368 = por %p366, %p367
      %p369 = scmp.ne.s32.totalorder %s360, %s361
      %p370 = scmp.eq.s32.totalorder %s93, 0
      %p371 = por %p369, %p370
      %p372 = scmp.ne.s32.totalorder %s360, %s361
      %p373 = scmp.eq.s32.totalorder %s94, 1
      %p374 = por %p372, %p373
      %p376 = scmp.ne.s32.totalorder %s361, %s375
      %p377 = scmp.eq.s32.totalorder %s94, 0
      %p378 = por %p376, %p377
      %s380 = sadd.s32 %s379, 1
      %p383 = scmp.eq.s32.totalorder %s88, 1
      %p384 = scmp.ne.s32.totalorder %s379, %s381
      %p385 = scmp.eq.s32.totalorder %s88, 0
      %p386 = por %p384, %p385
      %p387 = scmp.ne.s32.totalorder %s379, %s381
      %p388 = scmp.eq.s32.totalorder %s93, 1
      %p389 = por %p387, %p388
      %p390 = scmp.ne.s32.totalorder %s381, %s382
      %p391 = scmp.eq.s32.totalorder %s93, 0
      %p392 = por %p390, %p391
      %p393 = scmp.ne.s32.totalorder %s381, %s382
      %p394 = scmp.eq.s32.totalorder %s94, 1
      %p395 = por %p393, %p394
      %p397 = scmp.ne.s32.totalorder %s382, %s396
      %p398 = scmp.eq.s32.totalorder %s94, 0
      %p399 = por %p397, %p398
      %s401 = sadd.s32 %s400, 1
      %p404 = scmp.eq.s32.totalorder %s88, 1
      %p405 = scmp.ne.s32.totalorder %s400, %s402
      %p406 = scmp.eq.s32.totalorder %s88, 0
      %p407 = por %p405, %p406
      %p408 = scmp.ne.s32.totalorder %s400, %s402
      %p409 = scmp.eq.s32.totalorder %s93, 1
      %p410 = por %p408, %p409
      %p411 = scmp.ne.s32.totalorder %s402, %s403
      %p412 = scmp.eq.s32.totalorder %s93, 0
      %p413 = por %p411, %p412
      %p414 = scmp.ne.s32.totalorder %s402, %s403
      %p415 = scmp.eq.s32.totalorder %s94, 1
      %p416 = por %p414, %p415
      %p418 = scmp.ne.s32.totalorder %s403, %s417
      %p419 = scmp.eq.s32.totalorder %s94, 0
      %p420 = por %p418, %p419
      %s422 = sadd.s32 %s421, 1
      %p425 = scmp.eq.s32.totalorder %s88, 1
      %p426 = scmp.ne.s32.totalorder %s421, %s423
      %p427 = scmp.eq.s32.totalorder %s88, 0
      %p428 = por %p426, %p427
      %p429 = scmp.ne.s32.totalorder %s421, %s423
      %p430 = scmp.eq.s32.totalorder %s93, 1
      %p431 = por %p429, %p430
      %p432 = scmp.ne.s32.totalorder %s423, %s424
      %p433 = scmp.eq.s32.totalorder %s93, 0
      %p434 = por %p432, %p433
      %p435 = scmp.ne.s32.totalorder %s423, %s424
      %p436 = scmp.eq.s32.totalorder %s94, 1
      %p437 = por %p435, %p436
      %p439 = scmp.ne.s32.totalorder %s424, %s438
      %p440 = scmp.eq.s32.totalorder %s94, 0
      %p441 = por %p439, %p440
      %s443 = sadd.s32 %s442, 1
      %p446 = scmp.eq.s32.totalorder %s88, 1
      %p447 = scmp.ne.s32.totalorder %s442, %s444
      %p448 = scmp.eq.s32.totalorder %s88, 0
      %p449 = por %p447, %p448
      %p450 = scmp.ne.s32.totalorder %s442, %s444
      %p451 = scmp.eq.s32.totalorder %s93, 1
      %p452 = por %p450, %p451
      %p453 = scmp.ne.s32.totalorder %s444, %s445
      %p454 = scmp.eq.s32.totalorder %s93, 0
      %p455 = por %p453, %p454
      %p456 = scmp.ne.s32.totalorder %s444, %s445
      %p457 = scmp.eq.s32.totalorder %s94, 1
      %p458 = por %p456, %p457
      %p460 = scmp.ne.s32.totalorder %s445, %s459
      %p461 = scmp.eq.s32.totalorder %s94, 0
      %p462 = por %p460, %p461
      %s464 = sadd.s32 %s463, 1
      %p467 = scmp.eq.s32.totalorder %s88, 1
      %p468 = scmp.ne.s32.totalorder %s463, %s465
      %p469 = scmp.eq.s32.totalorder %s88, 0
      %p470 = por %p468, %p469
      %p471 = scmp.ne.s32.totalorder %s463, %s465
      %p472 = scmp.eq.s32.totalorder %s93, 1
      %p473 = por %p471, %p472
      %p474 = scmp.ne.s32.totalorder %s465, %s466
      %p475 = scmp.eq.s32.totalorder %s93, 0
      %p476 = por %p474, %p475
      %p477 = scmp.ne.s32.totalorder %s465, %s466
      %p478 = scmp.eq.s32.totalorder %s94, 1
      %p479 = por %p477, %p478
      %p481 = scmp.ne.s32.totalorder %s466, %s480
      %p482 = scmp.eq.s32.totalorder %s94, 0
      %p483 = por %p481, %p482
      %s485 = sadd.s32 %s484, 1
      %p488 = scmp.eq.s32.totalorder %s88, 1
      %p489 = scmp.ne.s32.totalorder %s484, %s486
      %p490 = scmp.eq.s32.totalorder %s88, 0
      %p491 = por %p489, %p490
      %p492 = scmp.ne.s32.totalorder %s484, %s486
      %p493 = scmp.eq.s32.totalorder %s93, 1
      %p494 = por %p492, %p493
      %p495 = scmp.ne.s32.totalorder %s486, %s487
      %p496 = scmp.eq.s32.totalorder %s93, 0
      %p497 = por %p495, %p496
      %p498 = scmp.ne.s32.totalorder %s486, %s487
      %p499 = scmp.eq.s32.totalorder %s94, 1
      %p500 = por %p498, %p499
      %p502 = scmp.ne.s32.totalorder %s487, %s501
      %p503 = scmp.eq.s32.totalorder %s94, 0
      %p504 = por %p502, %p503
      %s506 = sadd.s32 %s505, 1
      %p509 = scmp.eq.s32.totalorder %s88, 1
      %p510 = scmp.ne.s32.totalorder %s505, %s507
      %p511 = scmp.eq.s32.totalorder %s88, 0
      %p512 = por %p510, %p511
      %p513 = scmp.ne.s32.totalorder %s505, %s507
      %p514 = scmp.eq.s32.totalorder %s93, 1
      %p515 = por %p513, %p514
      %p516 = scmp.ne.s32.totalorder %s507, %s508
      %p517 = scmp.eq.s32.totalorder %s93, 0
      %p518 = por %p516, %p517
      %p519 = scmp.ne.s32.totalorder %s507, %s508
      %p520 = scmp.eq.s32.totalorder %s94, 1
      %p521 = por %p519, %p520
      %p523 = scmp.ne.s32.totalorder %s508, %s522
      %p524 = scmp.eq.s32.totalorder %s94, 0
      %p525 = por %p523, %p524
      %s527 = sadd.s32 %s526, 1
      %p530 = scmp.eq.s32.totalorder %s88, 1
      %p531 = scmp.ne.s32.totalorder %s526, %s528
      %p532 = scmp.eq.s32.totalorder %s88, 0
      %p533 = por %p531, %p532
      %p534 = scmp.ne.s32.totalorder %s526, %s528
      %p535 = scmp.eq.s32.totalorder %s93, 1
      %p536 = por %p534, %p535
      %p537 = scmp.ne.s32.totalorder %s528, %s529
      %p538 = scmp.eq.s32.totalorder %s93, 0
      %p539 = por %p537, %p538
      %p540 = scmp.ne.s32.totalorder %s528, %s529
      %p541 = scmp.eq.s32.totalorder %s94, 1
      %p542 = por %p540, %p541
      %p544 = scmp.ne.s32.totalorder %s529, %s543
      %p545 = scmp.eq.s32.totalorder %s94, 0
      %p546 = por %p544, %p545
      %s548 = sadd.s32 %s547, 1
      %p551 = scmp.eq.s32.totalorder %s88, 1
      %p552 = scmp.ne.s32.totalorder %s547, %s549
      %p553 = scmp.eq.s32.totalorder %s88, 0
      %p554 = por %p552, %p553
      %p555 = scmp.ne.s32.totalorder %s547, %s549
      %p556 = scmp.eq.s32.totalorder %s93, 1
      %p557 = por %p555, %p556
      %p558 = scmp.ne.s32.totalorder %s549, %s550
      %p559 = scmp.eq.s32.totalorder %s93, 0
      %p560 = por %p558, %p559
      %p561 = scmp.ne.s32.totalorder %s549, %s550
      %p562 = scmp.eq.s32.totalorder %s94, 1
      %p563 = por %p561, %p562
      %p565 = scmp.ne.s32.totalorder %s550, %s564
      %p566 = scmp.eq.s32.totalorder %s94, 0
      %p567 = por %p565, %p566
      %s569 = sadd.s32 %s568, 1
      %p572 = scmp.eq.s32.totalorder %s88, 1
      %p573 = scmp.ne.s32.totalorder %s568, %s570
      %p574 = scmp.eq.s32.totalorder %s88, 0
      %p575 = por %p573, %p574
      %p576 = scmp.ne.s32.totalorder %s568, %s570
      %p577 = scmp.eq.s32.totalorder %s93, 1
      %p578 = por %p576, %p577
      %p579 = scmp.ne.s32.totalorder %s570, %s571
      %p580 = scmp.eq.s32.totalorder %s93, 0
      %p581 = por %p579, %p580
      %p582 = scmp.ne.s32.totalorder %s570, %s571
      %p583 = scmp.eq.s32.totalorder %s94, 1
      %p584 = por %p582, %p583
      %p586 = scmp.ne.s32.totalorder %s571, %s585
      %p587 = scmp.eq.s32.totalorder %s94, 0
      %p588 = por %p586, %p587
      %s590 = sadd.s32 %s589, 1
      %p593 = scmp.eq.s32.totalorder %s88, 1
      %p594 = scmp.ne.s32.totalorder %s589, %s591
      %p595 = scmp.eq.s32.totalorder %s88, 0
      %p596 = por %p594, %p595
      %p597 = scmp.ne.s32.totalorder %s589, %s591
      %p598 = scmp.eq.s32.totalorder %s93, 1
      %p599 = por %p597, %p598
      %p600 = scmp.ne.s32.totalorder %s591, %s592
      %p601 = scmp.eq.s32.totalorder %s93, 0
      %p602 = por %p600, %p601
      %p603 = scmp.ne.s32.totalorder %s591, %s592
      %p604 = scmp.eq.s32.totalorder %s94, 1
      %p605 = por %p603, %p604
      %p607 = scmp.ne.s32.totalorder %s592, %s606
      %p608 = scmp.eq.s32.totalorder %s94, 0
      %p609 = por %p607, %p608
      %s611 = sadd.s32 %s610, 1
      %p614 = scmp.eq.s32.totalorder %s88, 1
      %p615 = scmp.ne.s32.totalorder %s610, %s612
      %p616 = scmp.eq.s32.totalorder %s88, 0
      %p617 = por %p615, %p616
      %p618 = scmp.ne.s32.totalorder %s610, %s612
      %p619 = scmp.eq.s32.totalorder %s93, 1
      %p620 = por %p618, %p619
      %p621 = scmp.ne.s32.totalorder %s612, %s613
      %p622 = scmp.eq.s32.totalorder %s93, 0
      %p623 = por %p621, %p622
      %p624 = scmp.ne.s32.totalorder %s612, %s613
      %p625 = scmp.eq.s32.totalorder %s94, 1
      %p626 = por %p624, %p625
      %p628 = scmp.ne.s32.totalorder %s613, %s627
      %p629 = scmp.eq.s32.totalorder %s94, 0
      %p630 = por %p628, %p629
      %s632 = sadd.s32 %s631, 1
      %p635 = scmp.eq.s32.totalorder %s88, 1
      %p636 = scmp.ne.s32.totalorder %s631, %s633
      %p637 = scmp.eq.s32.totalorder %s88, 0
      %p638 = por %p636, %p637
      %p639 = scmp.ne.s32.totalorder %s631, %s633
      %p640 = scmp.eq.s32.totalorder %s93, 1
      %p641 = por %p639, %p640
      %p642 = scmp.ne.s32.totalorder %s633, %s634
      %p643 = scmp.eq.s32.totalorder %s93, 0
      %p644 = por %p642, %p643
      %p645 = scmp.ne.s32.totalorder %s633, %s634
      %p646 = scmp.eq.s32.totalorder %s94, 1
      %p647 = por %p645, %p646
      %p649 = scmp.ne.s32.totalorder %s634, %s648
      %p650 = scmp.eq.s32.totalorder %s94, 0
      %p651 = por %p649, %p650
      %s653 = sadd.s32 %s652, 1
      %p656 = scmp.eq.s32.totalorder %s88, 1
      %p657 = scmp.ne.s32.totalorder %s652, %s654
      %p658 = scmp.eq.s32.totalorder %s88, 0
      %p659 = por %p657, %p658
      %p660 = scmp.ne.s32.totalorder %s652, %s654
      %p661 = scmp.eq.s32.totalorder %s93, 1
      %p662 = por %p660, %p661
      %p663 = scmp.ne.s32.totalorder %s654, %s655
      %p664 = scmp.eq.s32.totalorder %s93, 0
      %p665 = por %p663, %p664
      %p666 = scmp.ne.s32.totalorder %s654, %s655
      %p667 = scmp.eq.s32.totalorder %s94, 1
      %p668 = por %p666, %p667
      %p670 = scmp.ne.s32.totalorder %s655, %s669
      %p671 = scmp.eq.s32.totalorder %s94, 0
      %p672 = por %p670, %p671
      %s674 = sadd.s32 %s673, 1
      %p677 = scmp.eq.s32.totalorder %s88, 1
      %p678 = scmp.ne.s32.totalorder %s673, %s675
      %p679 = scmp.eq.s32.totalorder %s88, 0
      %p680 = por %p678, %p679
      %p681 = scmp.ne.s32.totalorder %s673, %s675
      %p682 = scmp.eq.s32.totalorder %s93, 1
      %p683 = por %p681, %p682
      %p684 = scmp.ne.s32.totalorder %s675, %s676
      %p685 = scmp.eq.s32.totalorder %s93, 0
      %p686 = por %p684, %p685
      %p687 = scmp.ne.s32.totalorder %s675, %s676
      %p688 = scmp.eq.s32.totalorder %s94, 1
      %p689 = por %p687, %p688
      %p691 = scmp.ne.s32.totalorder %s676, %s690
      %p692 = scmp.eq.s32.totalorder %s94, 0
      %p693 = por %p691, %p692
      %s695 = sadd.s32 %s694, 1
      %p698 = scmp.eq.s32.totalorder %s88, 1
      %p699 = scmp.ne.s32.totalorder %s694, %s696
      %p700 = scmp.eq.s32.totalorder %s88, 0
      %p701 = por %p699, %p700
      %p702 = scmp.ne.s32.totalorder %s694, %s696
      %p703 = scmp.eq.s32.totalorder %s93, 1
      %p704 = por %p702, %p703
      %p705 = scmp.ne.s32.totalorder %s696, %s697
      %p706 = scmp.eq.s32.totalorder %s93, 0
      %p707 = por %p705, %p706
      %p708 = scmp.ne.s32.totalorder %s696, %s697
      %p709 = scmp.eq.s32.totalorder %s94, 1
      %p710 = por %p708, %p709
      %p712 = scmp.ne.s32.totalorder %s697, %s711
      %p713 = scmp.eq.s32.totalorder %s94, 0
      %p714 = por %p712, %p713
      %s716 = sadd.s32 %s715, 1
      %p719 = scmp.eq.s32.totalorder %s88, 1
      %p720 = scmp.ne.s32.totalorder %s715, %s717
      %p721 = scmp.eq.s32.totalorder %s88, 0
      %p722 = por %p720, %p721
      %p723 = scmp.ne.s32.totalorder %s715, %s717
      %p724 = scmp.eq.s32.totalorder %s93, 1
      %p725 = por %p723, %p724
      %p726 = scmp.ne.s32.totalorder %s717, %s718
      %p727 = scmp.eq.s32.totalorder %s93, 0
      %p728 = por %p726, %p727
      %p729 = scmp.ne.s32.totalorder %s717, %s718
      %p730 = scmp.eq.s32.totalorder %s94, 1
      %p731 = por %p729, %p730
      %p733 = scmp.ne.s32.totalorder %s718, %s732
      %p734 = scmp.eq.s32.totalorder %s94, 0
      %p735 = por %p733, %p734
      %s737 = sadd.s32 %s736, 1
      %p740 = scmp.eq.s32.totalorder %s88, 1
      %p741 = scmp.ne.s32.totalorder %s736, %s738
      %p742 = scmp.eq.s32.totalorder %s88, 0
      %p743 = por %p741, %p742
      %p744 = scmp.ne.s32.totalorder %s736, %s738
      %p745 = scmp.eq.s32.totalorder %s93, 1
      %p746 = por %p744, %p745
      %p747 = scmp.ne.s32.totalorder %s738, %s739
      %p748 = scmp.eq.s32.totalorder %s93, 0
      %p749 = por %p747, %p748
      %p750 = scmp.ne.s32.totalorder %s738, %s739
      %p751 = scmp.eq.s32.totalorder %s94, 1
      %p752 = por %p750, %p751
      %p754 = scmp.ne.s32.totalorder %s739, %s753
      %p755 = scmp.eq.s32.totalorder %s94, 0
      %p756 = por %p754, %p755
      %s758 = sadd.s32 %s757, 1
      %p761 = scmp.eq.s32.totalorder %s88, 1
      %p762 = scmp.ne.s32.totalorder %s757, %s759
      %p763 = scmp.eq.s32.totalorder %s88, 0
      %p764 = por %p762, %p763
      %p765 = scmp.ne.s32.totalorder %s757, %s759
      %p766 = scmp.eq.s32.totalorder %s93, 1
      %p767 = por %p765, %p766
      %p768 = scmp.ne.s32.totalorder %s759, %s760
      %p769 = scmp.eq.s32.totalorder %s93, 0
      %p770 = por %p768, %p769
      %p771 = scmp.ne.s32.totalorder %s759, %s760
      %p772 = scmp.eq.s32.totalorder %s94, 1
      %p773 = por %p771, %p772
      %p775 = scmp.ne.s32.totalorder %s760, %s774
      %p776 = scmp.eq.s32.totalorder %s94, 0
      %p777 = por %p775, %p776
      %s779 = sadd.s32 %s778, 1
      %p782 = scmp.eq.s32.totalorder %s88, 1
      %p783 = scmp.ne.s32.totalorder %s778, %s780
      %p784 = scmp.eq.s32.totalorder %s88, 0
      %p785 = por %p783, %p784
      %p786 = scmp.ne.s32.totalorder %s778, %s780
      %p787 = scmp.eq.s32.totalorder %s93, 1
      %p788 = por %p786, %p787
      %p789 = scmp.ne.s32.totalorder %s780, %s781
      %p790 = scmp.eq.s32.totalorder %s93, 0
      %p791 = por %p789, %p790
      %p792 = scmp.ne.s32.totalorder %s780, %s781
      %p793 = scmp.eq.s32.totalorder %s94, 1
      %p794 = por %p792, %p793
      %p796 = scmp.ne.s32.totalorder %s781, %s795
      %p797 = scmp.eq.s32.totalorder %s94, 0
      %p798 = por %p796, %p797
      %s800 = sadd.s32 %s799, 1
      %p803 = scmp.eq.s32.totalorder %s88, 1
      %p804 = scmp.ne.s32.totalorder %s799, %s801
      %p805 = scmp.eq.s32.totalorder %s88, 0
      %p806 = por %p804, %p805
      %p807 = scmp.ne.s32.totalorder %s799, %s801
      %p808 = scmp.eq.s32.totalorder %s93, 1
      %p809 = por %p807, %p808
      %p810 = scmp.ne.s32.totalorder %s801, %s802
      %p811 = scmp.eq.s32.totalorder %s93, 0
      %p812 = por %p810, %p811
      %p813 = scmp.ne.s32.totalorder %s801, %s802
      %p814 = scmp.eq.s32.totalorder %s94, 1
      %p815 = por %p813, %p814
      %p817 = scmp.ne.s32.totalorder %s802, %s816
      %p818 = scmp.eq.s32.totalorder %s94, 0
      %p819 = por %p817, %p818
      %s821 = sadd.s32 %s820, 1
      %p824 = scmp.eq.s32.totalorder %s88, 1
      %p825 = scmp.ne.s32.totalorder %s820, %s822
      %p826 = scmp.eq.s32.totalorder %s88, 0
      %p827 = por %p825, %p826
      %p828 = scmp.ne.s32.totalorder %s820, %s822
      %p829 = scmp.eq.s32.totalorder %s93, 1
      %p830 = por %p828, %p829
      %p831 = scmp.ne.s32.totalorder %s822, %s823
      %p832 = scmp.eq.s32.totalorder %s93, 0
      %p833 = por %p831, %p832
      %p834 = scmp.ne.s32.totalorder %s822, %s823
      %p835 = scmp.eq.s32.totalorder %s94, 1
      %p836 = por %p834, %p835
      %p838 = scmp.ne.s32.totalorder %s823, %s837
      %p839 = scmp.eq.s32.totalorder %s94, 0
      %p840 = por %p838, %p839
      %s842 = sadd.s32 %s841, 1
      %p845 = scmp.eq.s32.totalorder %s88, 1
      %p846 = scmp.ne.s32.totalorder %s841, %s843
      %p847 = scmp.eq.s32.totalorder %s88, 0
      %p848 = por %p846, %p847
      %p849 = scmp.ne.s32.totalorder %s841, %s843
      %p850 = scmp.eq.s32.totalorder %s93, 1
      %p851 = por %p849, %p850
      %p852 = scmp.ne.s32.totalorder %s843, %s844
      %p853 = scmp.eq.s32.totalorder %s93, 0
      %p854 = por %p852, %p853
      %p855 = scmp.ne.s32.totalorder %s843, %s844
      %p856 = scmp.eq.s32.totalorder %s94, 1
      %p857 = por %p855, %p856
      %p859 = scmp.ne.s32.totalorder %s844, %s858
      %p860 = scmp.eq.s32.totalorder %s94, 0
      %p861 = por %p859, %p860
      %s863 = sadd.s32 %s862, 1
      %p866 = scmp.eq.s32.totalorder %s88, 1
      %p867 = scmp.ne.s32.totalorder %s862, %s864
      %p868 = scmp.eq.s32.totalorder %s88, 0
      %p869 = por %p867, %p868
      %p870 = scmp.ne.s32.totalorder %s862, %s864
      %p871 = scmp.eq.s32.totalorder %s93, 1
      %p872 = por %p870, %p871
      %p873 = scmp.ne.s32.totalorder %s864, %s865
      %p874 = scmp.eq.s32.totalorder %s93, 0
      %p875 = por %p873, %p874
      %p876 = scmp.ne.s32.totalorder %s864, %s865
      %p877 = scmp.eq.s32.totalorder %s94, 1
      %p878 = por %p876, %p877
      %p880 = scmp.ne.s32.totalorder %s865, %s879
      %p881 = scmp.eq.s32.totalorder %s94, 0
      %p882 = por %p880, %p881
      %s884 = sadd.s32 %s883, 1
      %p887 = scmp.eq.s32.totalorder %s88, 1
      %p888 = scmp.ne.s32.totalorder %s883, %s885
      %p889 = scmp.eq.s32.totalorder %s88, 0
      %p890 = por %p888, %p889
      %p891 = scmp.ne.s32.totalorder %s883, %s885
      %p892 = scmp.eq.s32.totalorder %s93, 1
      %p893 = por %p891, %p892
      %p894 = scmp.ne.s32.totalorder %s885, %s886
      %p895 = scmp.eq.s32.totalorder %s93, 0
      %p896 = por %p894, %p895
      %p897 = scmp.ne.s32.totalorder %s885, %s886
      %p898 = scmp.eq.s32.totalorder %s94, 1
      %p899 = por %p897, %p898
      %p901 = scmp.ne.s32.totalorder %s886, %s900
      %p902 = scmp.eq.s32.totalorder %s94, 0
      %p903 = por %p901, %p902
      %s905 = sadd.s32 %s904, 1
      %p908 = scmp.eq.s32.totalorder %s88, 1
      %p909 = scmp.ne.s32.totalorder %s904, %s906
      %p910 = scmp.eq.s32.totalorder %s88, 0
      %p911 = por %p909, %p910
      %p912 = scmp.ne.s32.totalorder %s904, %s906
      %p913 = scmp.eq.s32.totalorder %s93, 1
      %p914 = por %p912, %p913
      %p915 = scmp.ne.s32.totalorder %s906, %s907
      %p916 = scmp.eq.s32.totalorder %s93, 0
      %p917 = por %p915, %p916
      %p918 = scmp.ne.s32.totalorder %s906, %s907
      %p919 = scmp.eq.s32.totalorder %s94, 1
      %p920 = por %p918, %p919
      %p922 = scmp.ne.s32.totalorder %s907, %s921
      %p923 = scmp.eq.s32.totalorder %s94, 0
      %p924 = por %p922, %p923
      %s925 = ssub.s32 %s88, %s95
      %p926 = scmp.eq.s32.totalorder %s925, 0
      %s928 = sadd.s32 %s927, 1
      %s929 = scalar_select %p926, %s927, %s928
      %p932 = pneg %p926
      %p933 = scmp.eq.s32.totalorder %s88, 1
      %p934 = por %p932, %p933
      %p935 = scmp.ne.s32.totalorder %s927, %s930
      %p936 = scmp.eq.s32.totalorder %s88, 0
      %p937 = por %p935, %p936
      %p938 = scmp.ne.s32.totalorder %s927, %s930
      %p939 = scmp.eq.s32.totalorder %s93, 1
      %p940 = por %p938, %p939
      %p941 = scmp.ne.s32.totalorder %s930, %s931
      %p942 = scmp.eq.s32.totalorder %s93, 0
      %p943 = por %p941, %p942
      %p944 = scmp.ne.s32.totalorder %s930, %s931
      %p945 = scmp.eq.s32.totalorder %s94, 1
      %p946 = por %p944, %p945
      %p948 = scmp.ne.s32.totalorder %s931, %s947
      %p949 = scmp.eq.s32.totalorder %s94, 0
      %p950 = por %p948, %p949
      %p951 = scmp.le.s32.totalorder 1, %s88
      %p952 = scmp.lt.s32.totalorder %s88, 3
      %p953 = pnand %p951, %p952
      %p954 = pneg %p953
      // Predicated region
      $region9: #{clip_sam_forward_batched.1} parent=5 // pred_check
        _
      $region10: #{clip_sam_forward_batched.1} parent=5 // pred_check_branch
        %956 = sbr.rel (%p953) target = $region12
      $region11: #{clip_sam_forward_batched.1} parent=5 // pred_region
        %s957 = ssub.s32 %s88, 1
        // Predicated region
        $region13: #{clip_sam_forward_batched.1} parent=11 // pred_check
          %p958 = pneg %p161
        $region14: #{clip_sam_forward_batched.1} parent=11 // pred_check_branch
          %960 = sbr.rel (%p958) target = $region16
        $region15: #{clip_sam_forward_batched.1} parent=11 // pred_region
          _
        $region16: #{clip_sam_forward_batched.1} parent=11 // pred_fallthru
          _
        // Predicated region
        $region17: #{clip_sam_forward_batched.1} parent=11 // pred_check
          %p961 = pneg %p182
        $region18: #{clip_sam_forward_batched.1} parent=11 // pred_check_branch
          %963 = sbr.rel (%p961) target = $region20
        $region19: #{clip_sam_forward_batched.1} parent=11 // pred_region
          _
        $region20: #{clip_sam_forward_batched.1} parent=11 // pred_fallthru
          _
        // Predicated region
        $region21: #{clip_sam_forward_batched.1} parent=11 // pred_check
          %p964 = pneg %p203
        $region22: #{clip_sam_forward_batched.1} parent=11 // pred_check_branch
          %966 = sbr.rel (%p964) target = $region24
        $region23: #{clip_sam_forward_batched.1} parent=11 // pred_region
          _
        $region24: #{clip_sam_forward_batched.1} parent=11 // pred_fallthru
          _
        // Predicated region
        $region25: #{clip_sam_forward_batched.1} parent=11 // pred_check
          %p967 = pneg %p224
        $region26: #{clip_sam_forward_batched.1} parent=11 // pred_check_branch
          %969 = sbr.rel (%p967) target = $region28
        $region27: #{clip_sam_forward_batched.1} parent=11 // pred_region
          _
        $region28: #{clip_sam_forward_batched.1} parent=11 // pred_fallthru
          _
        // Predicated region
        $region29: #{clip_sam_forward_batched.1} parent=11 // pred_check
          %p970 = pneg %p245
        $region30: #{clip_sam_forward_batched.1} parent=11 // pred_check_branch
          %972 = sbr.rel (%p970) target = $region32
        $region31: #{clip_sam_forward_batched.1} parent=11 // pred_region
          _
        $region32: #{clip_sam_forward_batched.1} parent=11 // pred_fallthru
          _
        // Predicated region
        $region33: #{clip_sam_forward_batched.1} parent=11 // pred_check
          %p973 = pneg %p266
        $region34: #{clip_sam_forward_batched.1} parent=11 // pred_check_branch
          %975 = sbr.rel (%p973) target = $region36
        $region35: #{clip_sam_forward_batched.1} parent=11 // pred_region
          _
        $region36: #{clip_sam_forward_batched.1} parent=11 // pred_fallthru
          _
        // Predicated region
        $region37: #{clip_sam_forward_batched.1} parent=11 // pred_check
          %p976 = pneg %p287
        $region38: #{clip_sam_forward_batched.1} parent=11 // pred_check_branch
          %978 = sbr.rel (%p976) target = $region40
        $region39: #{clip_sam_forward_batched.1} parent=11 // pred_region
          _
        $region40: #{clip_sam_forward_batched.1} parent=11 // pred_fallthru
          _
        // Predicated region
        $region41: #{clip_sam_forward_batched.1} parent=11 // pred_check
          %p979 = pneg %p308
        $region42: #{clip_sam_forward_batched.1} parent=11 // pred_check_branch
          %981 = sbr.rel (%p979) target = $region44
        $region43: #{clip_sam_forward_batched.1} parent=11 // pred_region
          _
        $region44: #{clip_sam_forward_batched.1} parent=11 // pred_fallthru
          _
        // Predicated region
        $region45: #{clip_sam_forward_batched.1} parent=11 // pred_check
          %p982 = pneg %p329
        $region46: #{clip_sam_forward_batched.1} parent=11 // pred_check_branch
          %984 = sbr.rel (%p982) target = $region48
        $region47: #{clip_sam_forward_batched.1} parent=11 // pred_region
          _
        $region48: #{clip_sam_forward_batched.1} parent=11 // pred_fallthru
          _
        // Predicated region
        $region49: #{clip_sam_forward_batched.1} parent=11 // pred_check
          %p985 = pneg %p350
        $region50: #{clip_sam_forward_batched.1} parent=11 // pred_check_branch
          %987 = sbr.rel (%p985) target = $region52
        $region51: #{clip_sam_forward_batched.1} parent=11 // pred_region
          _
        $region52: #{clip_sam_forward_batched.1} parent=11 // pred_fallthru
          _
        // Predicated region
        $region53: #{clip_sam_forward_batched.1} parent=11 // pred_check
          %p988 = pneg %p371
        $region54: #{clip_sam_forward_batched.1} parent=11 // pred_check_branch
          %990 = sbr.rel (%p988) target = $region56
        $region55: #{clip_sam_forward_batched.1} parent=11 // pred_region
          _
        $region56: #{clip_sam_forward_batched.1} parent=11 // pred_fallthru
          _
        // Predicated region
        $region57: #{clip_sam_forward_batched.1} parent=11 // pred_check
          %p991 = pneg %p392
        $region58: #{clip_sam_forward_batched.1} parent=11 // pred_check_branch
          %993 = sbr.rel (%p991) target = $region60
        $region59: #{clip_sam_forward_batched.1} parent=11 // pred_region
          _
        $region60: #{clip_sam_forward_batched.1} parent=11 // pred_fallthru
          _
        // Predicated region
        $region61: #{clip_sam_forward_batched.1} parent=11 // pred_check
          %p994 = pneg %p413
        $region62: #{clip_sam_forward_batched.1} parent=11 // pred_check_branch
          %996 = sbr.rel (%p994) target = $region64
        $region63: #{clip_sam_forward_batched.1} parent=11 // pred_region
          _
        $region64: #{clip_sam_forward_batched.1} parent=11 // pred_fallthru
          _
        // Predicated region
        $region65: #{clip_sam_forward_batched.1} parent=11 // pred_check
          %p997 = pneg %p434
        $region66: #{clip_sam_forward_batched.1} parent=11 // pred_check_branch
          %999 = sbr.rel (%p997) target = $region68
        $region67: #{clip_sam_forward_batched.1} parent=11 // pred_region
          _
        $region68: #{clip_sam_forward_batched.1} parent=11 // pred_fallthru
          _
        // Predicated region
        $region69: #{clip_sam_forward_batched.1} parent=11 // pred_check
          %p1000 = pneg %p455
        $region70: #{clip_sam_forward_batched.1} parent=11 // pred_check_branch
          %1002 = sbr.rel (%p1000) target = $region72
        $region71: #{clip_sam_forward_batched.1} parent=11 // pred_region
          _
        $region72: #{clip_sam_forward_batched.1} parent=11 // pred_fallthru
          _
        // Predicated region
        $region73: #{clip_sam_forward_batched.1} parent=11 // pred_check
          %p1003 = pneg %p476
        $region74: #{clip_sam_forward_batched.1} parent=11 // pred_check_branch
          %1005 = sbr.rel (%p1003) target = $region76
        $region75: #{clip_sam_forward_batched.1} parent=11 // pred_region
          _
        $region76: #{clip_sam_forward_batched.1} parent=11 // pred_fallthru
          _
        // Predicated region
        $region77: #{clip_sam_forward_batched.1} parent=11 // pred_check
          %p1006 = pneg %p497
        $region78: #{clip_sam_forward_batched.1} parent=11 // pred_check_branch
          %1008 = sbr.rel (%p1006) target = $region80
        $region79: #{clip_sam_forward_batched.1} parent=11 // pred_region
          _
        $region80: #{clip_sam_forward_batched.1} parent=11 // pred_fallthru
          _
        // Predicated region
        $region81: #{clip_sam_forward_batched.1} parent=11 // pred_check
          %p1009 = pneg %p518
        $region82: #{clip_sam_forward_batched.1} parent=11 // pred_check_branch
          %1011 = sbr.rel (%p1009) target = $region84
        $region83: #{clip_sam_forward_batched.1} parent=11 // pred_region
          _
        $region84: #{clip_sam_forward_batched.1} parent=11 // pred_fallthru
          _
        // Predicated region
        $region85: #{clip_sam_forward_batched.1} parent=11 // pred_check
          %p1012 = pneg %p539
        $region86: #{clip_sam_forward_batched.1} parent=11 // pred_check_branch
          %1014 = sbr.rel (%p1012) target = $region88
        $region87: #{clip_sam_forward_batched.1} parent=11 // pred_region
          _
        $region88: #{clip_sam_forward_batched.1} parent=11 // pred_fallthru
          _
        // Predicated region
        $region89: #{clip_sam_forward_batched.1} parent=11 // pred_check
          %p1015 = pneg %p560
        $region90: #{clip_sam_forward_batched.1} parent=11 // pred_check_branch
          %1017 = sbr.rel (%p1015) target = $region92
        $region91: #{clip_sam_forward_batched.1} parent=11 // pred_region
          _
        $region92: #{clip_sam_forward_batched.1} parent=11 // pred_fallthru
          _
        // Predicated region
        $region93: #{clip_sam_forward_batched.1} parent=11 // pred_check
          %p1018 = pneg %p581
        $region94: #{clip_sam_forward_batched.1} parent=11 // pred_check_branch
          %1020 = sbr.rel (%p1018) target = $region96
        $region95: #{clip_sam_forward_batched.1} parent=11 // pred_region
          _
        $region96: #{clip_sam_forward_batched.1} parent=11 // pred_fallthru
          _
        // Predicated region
        $region97: #{clip_sam_forward_batched.1} parent=11 // pred_check
          %p1021 = pneg %p602
        $region98: #{clip_sam_forward_batched.1} parent=11 // pred_check_branch
          %1023 = sbr.rel (%p1021) target = $region100
        $region99: #{clip_sam_forward_batched.1} parent=11 // pred_region
          _
        $region100: #{clip_sam_forward_batched.1} parent=11 // pred_fallthru
          _
        // Predicated region
        $region101: #{clip_sam_forward_batched.1} parent=11 // pred_check
          %p1024 = pneg %p623
        $region102: #{clip_sam_forward_batched.1} parent=11 // pred_check_branch
          %1026 = sbr.rel (%p1024) target = $region104
        $region103: #{clip_sam_forward_batched.1} parent=11 // pred_region
          _
        $region104: #{clip_sam_forward_batched.1} parent=11 // pred_fallthru
          _
        // Predicated region
        $region105: #{clip_sam_forward_batched.1} parent=11 // pred_check
          %p1027 = pneg %p644
        $region106: #{clip_sam_forward_batched.1} parent=11 // pred_check_branch
          %1029 = sbr.rel (%p1027) target = $region108
        $region107: #{clip_sam_forward_batched.1} parent=11 // pred_region
          _
        $region108: #{clip_sam_forward_batched.1} parent=11 // pred_fallthru
          _
        // Predicated region
        $region109: #{clip_sam_forward_batched.1} parent=11 // pred_check
          %p1030 = pneg %p665
        $region110: #{clip_sam_forward_batched.1} parent=11 // pred_check_branch
          %1032 = sbr.rel (%p1030) target = $region112
        $region111: #{clip_sam_forward_batched.1} parent=11 // pred_region
          _
        $region112: #{clip_sam_forward_batched.1} parent=11 // pred_fallthru
          _
        // Predicated region
        $region113: #{clip_sam_forward_batched.1} parent=11 // pred_check
          %p1033 = pneg %p686
        $region114: #{clip_sam_forward_batched.1} parent=11 // pred_check_branch
          %1035 = sbr.rel (%p1033) target = $region116
        $region115: #{clip_sam_forward_batched.1} parent=11 // pred_region
          _
        $region116: #{clip_sam_forward_batched.1} parent=11 // pred_fallthru
          _
        // Predicated region
        $region117: #{clip_sam_forward_batched.1} parent=11 // pred_check
          %p1036 = pneg %p707
        $region118: #{clip_sam_forward_batched.1} parent=11 // pred_check_branch
          %1038 = sbr.rel (%p1036) target = $region120
        $region119: #{clip_sam_forward_batched.1} parent=11 // pred_region
          _
        $region120: #{clip_sam_forward_batched.1} parent=11 // pred_fallthru
          _
        // Predicated region
        $region121: #{clip_sam_forward_batched.1} parent=11 // pred_check
          %p1039 = pneg %p728
        $region122: #{clip_sam_forward_batched.1} parent=11 // pred_check_branch
          %1041 = sbr.rel (%p1039) target = $region124
        $region123: #{clip_sam_forward_batched.1} parent=11 // pred_region
          _
        $region124: #{clip_sam_forward_batched.1} parent=11 // pred_fallthru
          _
        // Predicated region
        $region125: #{clip_sam_forward_batched.1} parent=11 // pred_check
          %p1042 = pneg %p749
        $region126: #{clip_sam_forward_batched.1} parent=11 // pred_check_branch
          %1044 = sbr.rel (%p1042) target = $region128
        $region127: #{clip_sam_forward_batched.1} parent=11 // pred_region
          _
        $region128: #{clip_sam_forward_batched.1} parent=11 // pred_fallthru
          _
        // Predicated region
        $region129: #{clip_sam_forward_batched.1} parent=11 // pred_check
          %p1045 = pneg %p770
        $region130: #{clip_sam_forward_batched.1} parent=11 // pred_check_branch
          %1047 = sbr.rel (%p1045) target = $region132
        $region131: #{clip_sam_forward_batched.1} parent=11 // pred_region
          _
        $region132: #{clip_sam_forward_batched.1} parent=11 // pred_fallthru
          _
        // Predicated region
        $region133: #{clip_sam_forward_batched.1} parent=11 // pred_check
          %p1048 = pneg %p791
        $region134: #{clip_sam_forward_batched.1} parent=11 // pred_check_branch
          %1050 = sbr.rel (%p1048) target = $region136
        $region135: #{clip_sam_forward_batched.1} parent=11 // pred_region
          _
        $region136: #{clip_sam_forward_batched.1} parent=11 // pred_fallthru
          _
        // Predicated region
        $region137: #{clip_sam_forward_batched.1} parent=11 // pred_check
          %p1051 = pneg %p812
        $region138: #{clip_sam_forward_batched.1} parent=11 // pred_check_branch
          %1053 = sbr.rel (%p1051) target = $region140
        $region139: #{clip_sam_forward_batched.1} parent=11 // pred_region
          _
        $region140: #{clip_sam_forward_batched.1} parent=11 // pred_fallthru
          _
        // Predicated region
        $region141: #{clip_sam_forward_batched.1} parent=11 // pred_check
          %p1054 = pneg %p833
        $region142: #{clip_sam_forward_batched.1} parent=11 // pred_check_branch
          %1056 = sbr.rel (%p1054) target = $region144
        $region143: #{clip_sam_forward_batched.1} parent=11 // pred_region
          _
        $region144: #{clip_sam_forward_batched.1} parent=11 // pred_fallthru
          _
        // Predicated region
        $region145: #{clip_sam_forward_batched.1} parent=11 // pred_check
          %p1057 = pneg %p854
        $region146: #{clip_sam_forward_batched.1} parent=11 // pred_check_branch
          %1059 = sbr.rel (%p1057) target = $region148
        $region147: #{clip_sam_forward_batched.1} parent=11 // pred_region
          _
        $region148: #{clip_sam_forward_batched.1} parent=11 // pred_fallthru
          _
        // Predicated region
        $region149: #{clip_sam_forward_batched.1} parent=11 // pred_check
          %p1060 = pneg %p875
        $region150: #{clip_sam_forward_batched.1} parent=11 // pred_check_branch
          %1062 = sbr.rel (%p1060) target = $region152
        $region151: #{clip_sam_forward_batched.1} parent=11 // pred_region
          _
        $region152: #{clip_sam_forward_batched.1} parent=11 // pred_fallthru
          _
        // Predicated region
        $region153: #{clip_sam_forward_batched.1} parent=11 // pred_check
          %p1063 = pneg %p896
        $region154: #{clip_sam_forward_batched.1} parent=11 // pred_check_branch
          %1065 = sbr.rel (%p1063) target = $region156
        $region155: #{clip_sam_forward_batched.1} parent=11 // pred_region
          _
        $region156: #{clip_sam_forward_batched.1} parent=11 // pred_fallthru
          _
        // Predicated region
        $region157: #{clip_sam_forward_batched.1} parent=11 // pred_check
          %p1066 = pneg %p917
        $region158: #{clip_sam_forward_batched.1} parent=11 // pred_check_branch
          %1068 = sbr.rel (%p1066) target = $region160
        $region159: #{clip_sam_forward_batched.1} parent=11 // pred_region
          _
        $region160: #{clip_sam_forward_batched.1} parent=11 // pred_fallthru
          _
      $region12: #{clip_sam_forward_batched.1} parent=5 // pred_fallthru
        _
      %p1069 = scmp.lt.s32.totalorder %s88, 2
      // Predicated region
      $region161: #{clip_sam_forward_batched.1} parent=5 // pred_check
        %p1070 = pneg %p1069
      $region162: #{clip_sam_forward_batched.1} parent=5 // pred_check_branch
        %1072 = sbr.rel (%p1070) target = $region164
      $region163: #{clip_sam_forward_batched.1} parent=5 // pred_region
        // Predicated region
        $region165: #{clip_sam_forward_batched.1} parent=163 // pred_check
          %p1073 = pneg %p108
        $region166: #{clip_sam_forward_batched.1} parent=163 // pred_check_branch
          %1075 = sbr.rel (%p1073) target = $region168
        $region167: #{clip_sam_forward_batched.1} parent=163 // pred_region
          %p1076 = scmp.lt.s32.totalorder %s88, 1
          %s1077 = scalar_select %p1076, %s88, 1
          %s1078 = smul.addr %s1077, 4
          %s1079 = smul.addr %s1078, 8
          %s1080 = scalar_lea.vmem %s1, %s1079
        $region168: #{clip_sam_forward_batched.1} parent=163 // pred_fallthru
          _
        // Predicated region
        $region169: #{clip_sam_forward_batched.1} parent=163 // pred_check
          %p1081 = pneg %p134
        $region170: #{clip_sam_forward_batched.1} parent=163 // pred_check_branch
          %1083 = sbr.rel (%p1081) target = $region172
        $region171: #{clip_sam_forward_batched.1} parent=163 // pred_region
          %p1084 = scmp.lt.s32.totalorder %s88, 1
          %s1085 = scalar_select %p1084, %s88, 1
          %s1086 = smul.addr %s1085, 8
          %s1087 = smul.addr %s1086, 8
          %s1088 = scalar_lea.vmem %s3, %s1087
        $region172: #{clip_sam_forward_batched.1} parent=163 // pred_fallthru
          _
      $region164: #{clip_sam_forward_batched.1} parent=5 // pred_fallthru
        _
      %p1089 = scmp.le.s32.totalorder 1, %s88
      %p1090 = scmp.lt.s32.totalorder %s88, 3
      %p1091 = pnand %p1089, %p1090
      %p1092 = pneg %p1091
      // Predicated region
      $region173: #{clip_sam_forward_batched.1} parent=5 // pred_check
        _
      $region174: #{clip_sam_forward_batched.1} parent=5 // pred_check_branch
        %1094 = sbr.rel (%p1091) target = $region176
      $region175: #{clip_sam_forward_batched.1} parent=5 // pred_region
        %s1095 = ssub.s32 %s88, 1
        %p1096 = scmp.lt.s32.totalorder %s93, 1
        %s1097 = scalar_select %p1096, %s93, 1
        %s1098 = smul.addr %s1097, 4
        %s1099 = smul.addr %s1098, 8
        %s1100 = scalar_lea.vmem %s1, %s1099
        %p1101 = pneg %p114
        %p1102 = pneg %p111
        %p1103 = scmp.lt.s32.totalorder %s93, 1
        %s1104 = scalar_select %p1103, %s93, 1
        %s1105 = smul.addr %s1104, 8
        %s1106 = smul.addr %s1105, 8
        %s1107 = scalar_lea.vmem %s3, %s1106
        %p1108 = pneg %p140
        %p1109 = pneg %p137
        %p1110 = pneg %p161
        %p1111 = pneg %p158
        %p1112 = pneg %p182
        %p1113 = pneg %p179
        %p1114 = pneg %p203
        %p1115 = pneg %p200
        %p1116 = pneg %p224
        %p1117 = pneg %p221
        %p1118 = pneg %p245
        %p1119 = pneg %p242
        %p1120 = pneg %p266
        %p1121 = pneg %p263
        %p1122 = pneg %p287
        %p1123 = pneg %p284
        %p1124 = pneg %p308
        %p1125 = pneg %p305
        %p1126 = pneg %p329
        %p1127 = pneg %p326
        %p1128 = pneg %p350
        %p1129 = pneg %p347
        %p1130 = pneg %p371
        %p1131 = pneg %p368
        %p1132 = pneg %p392
        %p1133 = pneg %p389
        %p1134 = pneg %p413
        %p1135 = pneg %p410
        %p1136 = pneg %p434
        %p1137 = pneg %p431
        %p1138 = pneg %p455
        %p1139 = pneg %p452
        %p1140 = pneg %p476
        %p1141 = pneg %p473
        %p1142 = pneg %p497
        %p1143 = pneg %p494
        %p1144 = pneg %p518
        %p1145 = pneg %p515
        %p1146 = pneg %p539
        %p1147 = pneg %p536
        %p1148 = pneg %p560
        %p1149 = pneg %p557
        %p1150 = pneg %p581
        %p1151 = pneg %p578
        %p1152 = pneg %p602
        %p1153 = pneg %p599
        %p1154 = pneg %p623
        %p1155 = pneg %p620
        %p1156 = pneg %p644
        %p1157 = pneg %p641
        %p1158 = pneg %p665
        %p1159 = pneg %p662
        %p1160 = pneg %p686
        %p1161 = pneg %p683
        %p1162 = pneg %p707
        %p1163 = pneg %p704
        %p1164 = pneg %p728
        %p1165 = pneg %p725
        %p1166 = pneg %p749
        %p1167 = pneg %p746
        %p1168 = pneg %p770
        %p1169 = pneg %p767
        %p1170 = pneg %p791
        %p1171 = pneg %p788
        %p1172 = pneg %p812
        %p1173 = pneg %p809
        %p1174 = pneg %p833
        %p1175 = pneg %p830
        %p1176 = pneg %p854
        %p1177 = pneg %p851
        %p1178 = pneg %p875
        %p1179 = pneg %p872
        %p1180 = pneg %p896
        %p1181 = pneg %p893
        %p1182 = pneg %p917
        %p1183 = pneg %p914
        %p1184 = pneg %p943
        %p1185 = pneg %p940
        %s1186 = sand.u32 %s930, 1
        %s1187 = scalar_lea.sflag [#allocation3], %s1186
        %s1188 = sand.u32 %s930, 1
        %s1189 = smul.addr %s1188, 16
        %s1190 = scalar_lea.vmem [#allocation2], %s1189
        %p1191 = scmp.lt.s32.totalorder %s93, 1
        %s1192 = scalar_select %p1191, %s93, 1
        %s1193 = smul.addr %s1192, 4
        %s1194 = smul.addr %s1193, 8
        %s1195 = scalar_lea.vmem %s1, %s1194
        %p1196 = scmp.lt.s32.totalorder %s93, 1
        %s1197 = scalar_select %p1196, %s93, 1
        %s1198 = smul.addr %s1197, 8
        %s1199 = smul.addr %s1198, 8
        %s1200 = scalar_lea.vmem %s3, %s1199
        %v1202 = vld [vmem:[%s1195] sm:$0xff]
        %v1203 = vld [vmem:[%s1195 + $0x8] sm:$0xff]
        %v1204 = vld [vmem:[%s1195 + $0x10] sm:$0xff]
        %v1205 = vld [vmem:[%s1195 + $0x18] sm:$0xff]
        %v1206 = vld [vmem:[%s23] sm:$0xf]
        %v1207 = vld [vmem:[%s23 + $0x4] sm:$0xf]
        %v1208 = vld [vmem:[%s23 + $0x8] sm:$0xf]
        %v1209 = vld [vmem:[%s23 + $0xc] sm:$0xf]
        %v1210 = vld [vmem:[%s23 + $0x10] sm:$0xf]
        %v1211 = vld [vmem:[%s23 + $0x14] sm:$0xf]
        %v1212 = vpack.c.bf16 %v1203, %v1202
        %v1213 = vpack.c.bf16 %v1205, %v1204
        %v1214 = vld [vmem:[%s9] sm:$0xff]
        %v1215 = vld [vmem:[%s9 + $0x8] sm:$0xff]
        %v1216 = vld [vmem:[%s9 + $0x10] sm:$0xff]
        %v1217 = vld [vmem:[%s9 + $0x18] sm:$0xff]
        %v1224 = vunpack.c.l.b16 %v1206
        %v1225 = vunpack.c.l.b16 %v1207
        %v1226 = vunpack.c.l.b16 %v1208
        %v1227 = vunpack.c.l.b16 %v1209
        %v1228 = vunpack.c.l.b16 %v1210
        %v1229 = vunpack.c.l.b16 %v1211
        %v1230 = vpack.c.b16 %v1225, %v1224
        %v1231 = vpack.c.b16 %v1227, %v1226
        %v1232 = vpack.c.b16 %v1229, %v1228
        %vm1236 = vcmask 392192
        %v1238 = vsel %vm1236, %v1212, 0
        %v1241 = vsel %vm1236, %v1213, 0
        %1243 = vmatpush.bf16.msra.mxu0 0
        %1244 = vmatpush.bf16.msra.mxu0 0
        %1245 = vmatpush.bf16.msra.mxu0 0
        %1246 = vmatpush.bf16.msra.mxu0 0
        %1247 = vmatpush.bf16.msra.mxu0 0
        %1248 = vmatpush.bf16.msra.mxu0 %v1232
        %1249 = vmatpush.bf16.msra.mxu0 %v1231
        %1250 = vmatpush.bf16.msra.mxu0 %v1230
        %1251 = vmatmul.bf16.gmra.mxu0 %v1238
        %v1252 = vpop.f32.mrf.mxu0
        %v1253 = vadd.f32 %v1214, %v1252
        %v1254 = vpop.f32.mrf.mxu0
        %v1255 = vadd.f32 %v1215, %v1254
        %1256 = vmatmul.bf16.gmra.mxu0 %v1241
        %v1257 = vpop.f32.mrf.mxu0
        %v1258 = vadd.f32 %v1216, %v1257
        %v1259 = vpop.f32.mrf.mxu0
        %v1260 = vadd.f32 %v1217, %v1259
        %1261 = vdwg.mxu0
        %v1262 = vld [vmem:[%s27] sm:$0x1]
        %v1263 = vld [vmem:[%s25] sm:$0x1]
        %vm1264 = vcmask 261120
        %v1265 = vsel %vm1264, %v1253, 0.0
        %1266 = vadd.xlane.f32.xlu0 %v1265
        %v1267 = vpop.xlane.xlu0 %1266
        %v1268 = vsel %vm1264, %v1255, 0.0
        %1269 = vadd.xlane.f32.xlu0 %v1268
        %v1270 = vpop.xlane.xlu0 %1269
        %v1271 = vsel %vm1264, %v1258, 0.0
        %1272 = vadd.xlane.f32.xlu0 %v1271
        %v1273 = vpop.xlane.xlu0 %1272
        %v1274 = vsel %vm1264, %v1260, 0.0
        %1275 = vadd.xlane.f32.xlu0 %v1274
        %v1276 = vpop.xlane.xlu0 %1275
        %v1277 = vrcp.pop 32.0
        %v1278 = vmul.f32 32.0, %v1277
        %v1279 = vsub.f32 1.0, %v1278
        %v1280 = vmul.f32 %v1277, %v1279
        %v1281 = vadd.f32 %v1277, %v1280
        %vm1282 = vweird.f32 %v1277
        %v1283 = vsel %vm1282, %v1277, %v1281
        %v1284 = vmul.f32 %v1267, %v1283
        %v1285 = vmul.f32 %v1270, %v1283
        %v1286 = vmul.f32 %v1273, %v1283
        %v1287 = vmul.f32 %v1276, %v1283
        %v1288 = vsub.f32 %v1253, %v1284
        %v1289 = vsub.f32 %v1255, %v1285
        %v1290 = vsub.f32 %v1258, %v1286
        %v1291 = vsub.f32 %v1260, %v1287
        %v1292 = vmul.f32 %v1288, %v1288
        %v1293 = vmul.f32 %v1289, %v1289
        %v1294 = vmul.f32 %v1290, %v1290
        %v1295 = vmul.f32 %v1291, %v1291
        %v1296 = vsel %vm1264, %v1292, 0.0
        %1297 = vadd.xlane.f32.xlu0 %v1296
        %v1298 = vpop.xlane.xlu0 %1297
        %v1299 = vsel %vm1264, %v1293, 0.0
        %1300 = vadd.xlane.f32.xlu0 %v1299
        %v1301 = vpop.xlane.xlu0 %1300
        %v1302 = vsel %vm1264, %v1294, 0.0
        %1303 = vadd.xlane.f32.xlu0 %v1302
        %v1304 = vpop.xlane.xlu0 %1303
        %v1305 = vsel %vm1264, %v1295, 0.0
        %1306 = vadd.xlane.f32.xlu0 %v1305
        %v1307 = vpop.xlane.xlu0 %1306
        %v1308 = vmul.f32 %v1298, %v1283
        %v1309 = vmul.f32 %v1301, %v1283
        %v1310 = vmul.f32 %v1304, %v1283
        %v1311 = vmul.f32 %v1307, %v1283
        %v1312 = vadd.f32 %v1308, 1e-05
        %v1313 = vadd.f32 %v1309, 1e-05
        %v1314 = vadd.f32 %v1310, 1e-05
        %v1315 = vadd.f32 %v1311, 1e-05
        %v1316 = vrsqrt.pop %v1312
        %v1317 = vmul.f32 %v1316, %v1312
        %v1318 = vmul.f32 %v1317, %v1316
        %v1319 = vmul.f32 0.5, %v1318
        %v1320 = vsub.f32 1.5, %v1319
        %v1321 = vmul.f32 %v1316, %v1320
        %vm1322 = vweird.f32 %v1312
        %vm1323 = vweird.f32 %v1316
        %vm1324 = vmor %vm1322, %vm1323
        %v1325 = vsel %vm1324, %v1316, %v1321
        %v1326 = vrsqrt.pop %v1313
        %v1327 = vmul.f32 %v1326, %v1313
        %v1328 = vmul.f32 %v1327, %v1326
        %v1329 = vmul.f32 0.5, %v1328
        %v1330 = vsub.f32 1.5, %v1329
        %v1331 = vmul.f32 %v1326, %v1330
        %vm1332 = vweird.f32 %v1313
        %vm1333 = vweird.f32 %v1326
        %vm1334 = vmor %vm1332, %vm1333
        %v1335 = vsel %vm1334, %v1326, %v1331
        %v1336 = vrsqrt.pop %v1314
        %v1337 = vmul.f32 %v1336, %v1314
        %v1338 = vmul.f32 %v1337, %v1336
        %v1339 = vmul.f32 0.5, %v1338
        %v1340 = vsub.f32 1.5, %v1339
        %v1341 = vmul.f32 %v1336, %v1340
        %vm1342 = vweird.f32 %v1314
        %vm1343 = vweird.f32 %v1336
        %vm1344 = vmor %vm1342, %vm1343
        %v1345 = vsel %vm1344, %v1336, %v1341
        %v1346 = vrsqrt.pop %v1315
        %v1347 = vmul.f32 %v1346, %v1315
        %v1348 = vmul.f32 %v1347, %v1346
        %v1349 = vmul.f32 0.5, %v1348
        %v1350 = vsub.f32 1.5, %v1349
        %v1351 = vmul.f32 %v1346, %v1350
        %vm1352 = vweird.f32 %v1315
        %vm1353 = vweird.f32 %v1346
        %vm1354 = vmor %vm1352, %vm1353
        %v1355 = vsel %vm1354, %v1346, %v1351
        %v1356 = vmul.f32 %v1288, %v1325
        %v1357 = vmul.f32 %v1289, %v1335
        %v1358 = vmul.f32 %v1290, %v1345
        %v1359 = vmul.f32 %v1291, %v1355
        %v1361 = vperm.slane %v1262, 0
        %v1363 = vmul.f32 %v1356, %v1361
        %v1364 = vmul.f32 %v1357, %v1361
        %v1365 = vmul.f32 %v1358, %v1361
        %v1366 = vmul.f32 %v1359, %v1361
        %v1368 = vperm.slane %v1263, 0
        %v1370 = vadd.f32 %v1363, %v1368
        %v1371 = vadd.f32 %v1364, %v1368
        %v1372 = vadd.f32 %v1365, %v1368
        %v1373 = vadd.f32 %v1366, %v1368
        %v1374 = vld [vmem:[%s17] sm:$0x1]
        %v1375 = vld [vmem:[%s15] sm:$0x1]
        %v1376 = vsel %vm1264, %v1370, 0.0
        %1377 = vadd.xlane.f32.xlu0 %v1376
        %v1378 = vpop.xlane.xlu0 %1377
        %v1379 = vsel %vm1264, %v1371, 0.0
        %1380 = vadd.xlane.f32.xlu0 %v1379
        %v1381 = vpop.xlane.xlu0 %1380
        %v1382 = vsel %vm1264, %v1372, 0.0
        %1383 = vadd.xlane.f32.xlu0 %v1382
        %v1384 = vpop.xlane.xlu0 %1383
        %v1385 = vsel %vm1264, %v1373, 0.0
        %1386 = vadd.xlane.f32.xlu0 %v1385
        %v1387 = vpop.xlane.xlu0 %1386
        %v1388 = vmul.f32 %v1378, %v1283
        %v1389 = vmul.f32 %v1381, %v1283
        %v1390 = vmul.f32 %v1384, %v1283
        %v1391 = vmul.f32 %v1387, %v1283
        %v1392 = vsub.f32 %v1370, %v1388
        %v1393 = vsub.f32 %v1371, %v1389
        %v1394 = vsub.f32 %v1372, %v1390
        %v1395 = vsub.f32 %v1373, %v1391
        %v1396 = vmul.f32 %v1392, %v1392
        %v1397 = vmul.f32 %v1393, %v1393
        %v1398 = vmul.f32 %v1394, %v1394
        %v1399 = vmul.f32 %v1395, %v1395
        %v1400 = vsel %vm1264, %v1396, 0.0
        %1401 = vadd.xlane.f32.xlu0 %v1400
        %v1402 = vpop.xlane.xlu0 %1401
        %v1403 = vsel %vm1264, %v1397, 0.0
        %1404 = vadd.xlane.f32.xlu0 %v1403
        %v1405 = vpop.xlane.xlu0 %1404
        %v1406 = vsel %vm1264, %v1398, 0.0
        %1407 = vadd.xlane.f32.xlu0 %v1406
        %v1408 = vpop.xlane.xlu0 %1407
        %v1409 = vsel %vm1264, %v1399, 0.0
        %1410 = vadd.xlane.f32.xlu0 %v1409
        %v1411 = vpop.xlane.xlu0 %1410
        %v1412 = vmul.f32 %v1402, %v1283
        %v1413 = vmul.f32 %v1405, %v1283
        %v1414 = vmul.f32 %v1408, %v1283
        %v1415 = vmul.f32 %v1411, %v1283
        %v1416 = vadd.f32 %v1412, 1e-05
        %v1417 = vadd.f32 %v1413, 1e-05
        %v1418 = vadd.f32 %v1414, 1e-05
        %v1419 = vadd.f32 %v1415, 1e-05
        %v1420 = vrsqrt.pop %v1416
        %v1421 = vmul.f32 %v1420, %v1416
        %v1422 = vmul.f32 %v1421, %v1420
        %v1423 = vmul.f32 0.5, %v1422
        %v1424 = vsub.f32 1.5, %v1423
        %v1425 = vmul.f32 %v1420, %v1424
        %vm1426 = vweird.f32 %v1416
        %vm1427 = vweird.f32 %v1420
        %vm1428 = vmor %vm1426, %vm1427
        %v1429 = vsel %vm1428, %v1420, %v1425
        %v1430 = vrsqrt.pop %v1417
        %v1431 = vmul.f32 %v1430, %v1417
        %v1432 = vmul.f32 %v1431, %v1430
        %v1433 = vmul.f32 0.5, %v1432
        %v1434 = vsub.f32 1.5, %v1433
        %v1435 = vmul.f32 %v1430, %v1434
        %vm1436 = vweird.f32 %v1417
        %vm1437 = vweird.f32 %v1430
        %vm1438 = vmor %vm1436, %vm1437
        %v1439 = vsel %vm1438, %v1430, %v1435
        %v1440 = vrsqrt.pop %v1418
        %v1441 = vmul.f32 %v1440, %v1418
        %v1442 = vmul.f32 %v1441, %v1440
        %v1443 = vmul.f32 0.5, %v1442
        %v1444 = vsub.f32 1.5, %v1443
        %v1445 = vmul.f32 %v1440, %v1444
        %vm1446 = vweird.f32 %v1418
        %vm1447 = vweird.f32 %v1440
        %vm1448 = vmor %vm1446, %vm1447
        %v1449 = vsel %vm1448, %v1440, %v1445
        %v1450 = vrsqrt.pop %v1419
        %v1451 = vmul.f32 %v1450, %v1419
        %v1452 = vmul.f32 %v1451, %v1450
        %v1453 = vmul.f32 0.5, %v1452
        %v1454 = vsub.f32 1.5, %v1453
        %v1455 = vmul.f32 %v1450, %v1454
        %vm1456 = vweird.f32 %v1419
        %vm1457 = vweird.f32 %v1450
        %vm1458 = vmor %vm1456, %vm1457
        %v1459 = vsel %vm1458, %v1450, %v1455
        %v1460 = vmul.f32 %v1392, %v1429
        %v1461 = vmul.f32 %v1393, %v1439
        %v1462 = vmul.f32 %v1394, %v1449
        %v1463 = vmul.f32 %v1395, %v1459
        %v1465 = vperm.slane %v1374, 0
        %v1467 = vmul.f32 %v1460, %v1465
        %v1468 = vmul.f32 %v1461, %v1465
        %v1469 = vmul.f32 %v1462, %v1465
        %v1470 = vmul.f32 %v1463, %v1465
        %v1472 = vperm.slane %v1375, 0
        %v1474 = vadd.f32 %v1467, %v1472
        %v1475 = vadd.f32 %v1468, %v1472
        %v1476 = vadd.f32 %v1469, %v1472
        %v1477 = vadd.f32 %v1470, %v1472
        %v1478 = vld [vmem:[%s35] sm:$0xf]
        %v1479 = vld [vmem:[%s35 + $0x4] sm:$0xf]
        %v1480 = vld [vmem:[%s35 + $0x8] sm:$0xf]
        %v1481 = vld [vmem:[%s35 + $0xc] sm:$0xf]
        %v1482 = vld [vmem:[%s13] sm:$0x1]
        %v1483 = vld [vmem:[%s33] sm:$0xf]
        %v1484 = vld [vmem:[%s33 + $0x4] sm:$0xf]
        %v1485 = vld [vmem:[%s33 + $0x8] sm:$0xf]
        %v1486 = vld [vmem:[%s33 + $0xc] sm:$0xf]
        %v1487 = vld [vmem:[%s11] sm:$0x1]
        %v1488 = vpack.c.bf16 %v1475, %v1474
        %v1489 = vpack.c.bf16 %v1477, %v1476
        %v1491 = vperm.slane %v1482, 0
        %v1497 = vunpack.c.l.b16 %v1478
        %v1498 = vunpack.c.l.b16 %v1479
        %v1499 = vunpack.c.l.b16 %v1480
        %v1500 = vunpack.c.l.b16 %v1481
        %v1501 = vpack.c.b16 %v1498, %v1497
        %v1502 = vpack.c.b16 %v1500, %v1499
        %v1506 = vsel %vm1264, %v1488, 0
        %v1509 = vsel %vm1264, %v1489, 0
        %1511 = vmatpush.bf16.msra.mxu0 0
        %1512 = vmatpush.bf16.msra.mxu0 0
        %1513 = vmatpush.bf16.msra.mxu0 0
        %1514 = vmatpush.bf16.msra.mxu0 0
        %1515 = vmatpush.bf16.msra.mxu0 0
        %1516 = vmatpush.bf16.msra.mxu0 0
        %1517 = vmatpush.bf16.msra.mxu0 %v1502
        %1518 = vmatpush.bf16.msra.mxu0 %v1501
        %1519 = vmatmul.bf16.gmra.mxu0 %v1506
        %v1520 = vpop.f32.mrf.mxu0
        %v1521 = vadd.f32 %v1491, %v1520
        %v1522 = vpop.f32.mrf.mxu0
        %v1523 = vadd.f32 %v1491, %v1522
        %1524 = vmatmul.bf16.gmra.mxu0 %v1509
        %v1525 = vpop.f32.mrf.mxu0
        %v1526 = vadd.f32 %v1491, %v1525
        %v1527 = vpop.f32.mrf.mxu0
        %v1528 = vadd.f32 %v1491, %v1527
        %1529 = vdwg.mxu0
        %v1530 = vlaneseq
        %v1531 = vand.u32 %v1530, 127
        %vm1532 = vcmp.lt.s32.totalorder %v1531, 17
        %1537 = vrot.lane.b32.xlu0 %v1521, 96
        %v1538 = vpop.permute.xlu0 %1537
        %1539 = vrot.lane.b32.xlu0 %v1523, 96
        %v1540 = vpop.permute.xlu0 %1539
        %1541 = vrot.lane.b32.xlu0 %v1526, 96
        %v1542 = vpop.permute.xlu0 %1541
        %1543 = vrot.lane.b32.xlu0 %v1528, 96
        %v1544 = vpop.permute.xlu0 %1543
        %vm1545 = vcmask 64512
        %v1546 = vsel %vm1545, %v1521, 0
        %v1548 = vsel %vm1545, %v1523, 0
        %v1550 = vsel %vm1545, %v1526, 0
        %v1552 = vsel %vm1545, %v1528, 0
        %v1554 = vsel %vm1545, %v1538, 0
        %v1556 = vsel %vm1545, %v1540, 0
        %v1558 = vsel %vm1545, %v1542, 0
        %v1560 = vsel %vm1545, %v1544, 0
        %1562 = vmatpush.xpose.msra.mxu0 0.0
        %1563 = vmatpush.xpose.msra.mxu0 0.0
        %1564 = vmatpush.xpose.msra.mxu0 0.0
        %1565 = vmatpush.xpose.msra.mxu0 0.0
        %1566 = vmatpush.xpose.msra.mxu0 0.0
        %1567 = vmatpush.xpose.msra.mxu0 0.0
        %1568 = vmatpush.xpose.msra.mxu0 0.0
        %1569 = vmatpush.xpose.msra.mxu0 0.0
        %1570 = vmatpush.xpose.msra.mxu0 0.0
        %1571 = vmatpush.xpose.msra.mxu0 0.0
        %1572 = vmatpush.xpose.msra.mxu0 0.0
        %1573 = vmatpush.xpose.msra.mxu0 0.0
        %1574 = vmatpush.xpose.msra.mxu0 %v1560
        %1575 = vmatpush.xpose.msra.mxu0 %v1558
        %1576 = vmatpush.xpose.msra.mxu0 %v1556
        %1577 = vmatpush.xpose.msra.mxu0 %v1554
        %1578 = vmatmul.f32.gmra.mxu0 %v1546
        %v1579 = vpop.f32.mrf.mxu0
        %v1580 = vadd.f32 0.0, %v1579
        %1581 = vmatmul.f32.gmra.mxu0 %v1548
        %v1582 = vpop.f32.mrf.mxu0
        %v1583 = vadd.f32 0.0, %v1582
        %1584 = vmatmul.f32.gmra.mxu0 %v1550
        %v1585 = vpop.f32.mrf.mxu0
        %v1586 = vadd.f32 0.0, %v1585
        %1587 = vmatmul.f32.gmra.mxu0 %v1552
        %v1588 = vpop.f32.mrf.mxu0
        %v1589 = vadd.f32 0.0, %v1588
        %1590 = vdwg.mxu0
        %v1591 = vmul.f32 %v1580, 0.35355338
        %v1592 = vmul.f32 %v1583, 0.35355338
        %v1593 = vmul.f32 %v1586, 0.35355338
        %v1594 = vmul.f32 %v1589, 0.35355338
        %v1595 = vsel %vm1532, %v1591, -1e+30
        %v1596 = vsel %vm1532, %v1592, -1e+30
        %v1597 = vsel %vm1532, %v1593, -1e+30
        %v1598 = vsel %vm1532, %v1594, -1e+30
        %v1599 = vsel %vm1264, %v1595, -inf
        %1600 = vmax.xlane.f32.xlu0 %v1599
        %v1601 = vpop.xlane.xlu0 %1600
        %v1602 = vsel %vm1264, %v1596, -inf
        %1603 = vmax.xlane.f32.xlu0 %v1602
        %v1604 = vpop.xlane.xlu0 %1603
        %v1605 = vsel %vm1264, %v1597, -inf
        %1606 = vmax.xlane.f32.xlu0 %v1605
        %v1607 = vpop.xlane.xlu0 %1606
        %v1608 = vsel %vm1264, %v1598, -inf
        %1609 = vmax.xlane.f32.xlu0 %v1608
        %v1610 = vpop.xlane.xlu0 %1609
        %v1611 = vsub.f32 %v1595, %v1601
        %v1612 = vsub.f32 %v1596, %v1604
        %v1613 = vsub.f32 %v1597, %v1607
        %v1614 = vsub.f32 %v1598, %v1610
        %v1615 = vmul.f32 %v1611, 1.442695
        %v1616 = vpow.pop %v1615
        %v1617 = vmul.f32 %v1612, 1.442695
        %v1618 = vpow.pop %v1617
        %v1619 = vmul.f32 %v1613, 1.442695
        %v1620 = vpow.pop %v1619
        %v1621 = vmul.f32 %v1614, 1.442695
        %v1622 = vpow.pop %v1621
        %v1623 = vsel %vm1264, %v1616, 0.0
        %1624 = vadd.xlane.f32.xlu0 %v1623
        %v1625 = vpop.xlane.xlu0 %1624
        %v1626 = vsel %vm1264, %v1618, 0.0
        %1627 = vadd.xlane.f32.xlu0 %v1626
        %v1628 = vpop.xlane.xlu0 %1627
        %v1629 = vsel %vm1264, %v1620, 0.0
        %1630 = vadd.xlane.f32.xlu0 %v1629
        %v1631 = vpop.xlane.xlu0 %1630
        %v1632 = vsel %vm1264, %v1622, 0.0
        %1633 = vadd.xlane.f32.xlu0 %v1632
        %v1634 = vpop.xlane.xlu0 %1633
        %v1635 = vrcp.pop %v1625
        %v1636 = vrcp.pop %v1628
        %v1637 = vrcp.pop %v1631
        %v1638 = vrcp.pop %v1634
        %v1639 = vmul.f32 %v1616, %v1635
        %v1640 = vmul.f32 %v1618, %v1636
        %v1641 = vmul.f32 %v1620, %v1637
        %v1642 = vmul.f32 %v1622, %v1638
        %1643 = vrot.lane.b32.xlu0 %v1521, 64
        %v1644 = vpop.permute.xlu0 %1643
        %1645 = vrot.lane.b32.xlu0 %v1523, 64
        %v1646 = vpop.permute.xlu0 %1645
        %1647 = vrot.lane.b32.xlu0 %v1526, 64
        %v1648 = vpop.permute.xlu0 %1647
        %1649 = vrot.lane.b32.xlu0 %v1528, 64
        %v1650 = vpop.permute.xlu0 %1649
        %v1656 = vsel %vm1264, %v1639, 0
        %v1659 = vsel %vm1264, %v1640, 0
        %v1662 = vsel %vm1264, %v1641, 0
        %v1665 = vsel %vm1264, %v1642, 0
        %1667 = vmatpush.msra.mxu0 0.0
        %1668 = vmatpush.msra.mxu0 0.0
        %1669 = vmatpush.msra.mxu0 0.0
        %1670 = vmatpush.msra.mxu0 0.0
        %1671 = vmatpush.msra.mxu0 0.0
        %1672 = vmatpush.msra.mxu0 0.0
        %1673 = vmatpush.msra.mxu0 0.0
        %1674 = vmatpush.msra.mxu0 0.0
        %1675 = vmatpush.msra.mxu0 0.0
        %1676 = vmatpush.msra.mxu0 0.0
        %1677 = vmatpush.msra.mxu0 0.0
        %1678 = vmatpush.msra.mxu0 0.0
        %1679 = vmatpush.msra.mxu0 %v1650
        %1680 = vmatpush.msra.mxu0 %v1648
        %1681 = vmatpush.msra.mxu0 %v1646
        %1682 = vmatpush.msra.mxu0 %v1644
        %1683 = vmatmul.f32.gmra.mxu0 %v1656
        %v1684 = vpop.f32.mrf.mxu0
        %v1685 = vadd.f32 0.0, %v1684
        %1686 = vmatmul.f32.gmra.mxu0 %v1659
        %v1687 = vpop.f32.mrf.mxu0
        %v1688 = vadd.f32 0.0, %v1687
        %1689 = vmatmul.f32.gmra.mxu0 %v1662
        %v1690 = vpop.f32.mrf.mxu0
        %v1691 = vadd.f32 0.0, %v1690
        %1692 = vmatmul.f32.gmra.mxu0 %v1665
        %v1693 = vpop.f32.mrf.mxu0
        %v1694 = vadd.f32 0.0, %v1693
        %1695 = vdwg.mxu0
        %1696 = vrot.lane.b32.xlu0 %v1521, 120
        %v1697 = vpop.permute.xlu0 %1696
        %1698 = vrot.lane.b32.xlu0 %v1523, 120
        %v1699 = vpop.permute.xlu0 %1698
        %1700 = vrot.lane.b32.xlu0 %v1526, 120
        %v1701 = vpop.permute.xlu0 %1700
        %1702 = vrot.lane.b32.xlu0 %v1528, 120
        %v1703 = vpop.permute.xlu0 %1702
        %1704 = vrot.lane.b32.xlu0 %v1521, 88
        %v1705 = vpop.permute.xlu0 %1704
        %1706 = vrot.lane.b32.xlu0 %v1523, 88
        %v1707 = vpop.permute.xlu0 %1706
        %1708 = vrot.lane.b32.xlu0 %v1526, 88
        %v1709 = vpop.permute.xlu0 %1708
        %1710 = vrot.lane.b32.xlu0 %v1528, 88
        %v1711 = vpop.permute.xlu0 %1710
        %v1712 = vsel %vm1545, %v1697, 0
        %v1714 = vsel %vm1545, %v1699, 0
        %v1716 = vsel %vm1545, %v1701, 0
        %v1718 = vsel %vm1545, %v1703, 0
        %v1720 = vsel %vm1545, %v1705, 0
        %v1722 = vsel %vm1545, %v1707, 0
        %v1724 = vsel %vm1545, %v1709, 0
        %v1726 = vsel %vm1545, %v1711, 0
        %1728 = vmatpush.xpose.msra.mxu0 0.0
        %1729 = vmatpush.xpose.msra.mxu0 0.0
        %1730 = vmatpush.xpose.msra.mxu0 0.0
        %1731 = vmatpush.xpose.msra.mxu0 0.0
        %1732 = vmatpush.xpose.msra.mxu0 0.0
        %1733 = vmatpush.xpose.msra.mxu0 0.0
        %1734 = vmatpush.xpose.msra.mxu0 0.0
        %1735 = vmatpush.xpose.msra.mxu0 0.0
        %1736 = vmatpush.xpose.msra.mxu0 0.0
        %1737 = vmatpush.xpose.msra.mxu0 0.0
        %1738 = vmatpush.xpose.msra.mxu0 0.0
        %1739 = vmatpush.xpose.msra.mxu0 0.0
        %1740 = vmatpush.xpose.msra.mxu0 %v1726
        %1741 = vmatpush.xpose.msra.mxu0 %v1724
        %1742 = vmatpush.xpose.msra.mxu0 %v1722
        %1743 = vmatpush.xpose.msra.mxu0 %v1720
        %1744 = vmatmul.f32.gmra.mxu0 %v1712
        %v1745 = vpop.f32.mrf.mxu0
        %v1746 = vadd.f32 0.0, %v1745
        %1747 = vmatmul.f32.gmra.mxu0 %v1714
        %v1748 = vpop.f32.mrf.mxu0
        %v1749 = vadd.f32 0.0, %v1748
        %1750 = vmatmul.f32.gmra.mxu0 %v1716
        %v1751 = vpop.f32.mrf.mxu0
        %v1752 = vadd.f32 0.0, %v1751
        %1753 = vmatmul.f32.gmra.mxu0 %v1718
        %v1754 = vpop.f32.mrf.mxu0
        %v1755 = vadd.f32 0.0, %v1754
        %1756 = vdwg.mxu0
        %v1757 = vmul.f32 %v1746, 0.35355338
        %v1758 = vmul.f32 %v1749, 0.35355338
        %v1759 = vmul.f32 %v1752, 0.35355338
        %v1760 = vmul.f32 %v1755, 0.35355338
        %v1761 = vsel %vm1532, %v1757, -1e+30
        %v1762 = vsel %vm1532, %v1758, -1e+30
        %v1763 = vsel %vm1532, %v1759, -1e+30
        %v1764 = vsel %vm1532, %v1760, -1e+30
        %v1765 = vsel %vm1264, %v1761, -inf
        %1766 = vmax.xlane.f32.xlu0 %v1765
        %v1767 = vpop.xlane.xlu0 %1766
        %v1768 = vsel %vm1264, %v1762, -inf
        %1769 = vmax.xlane.f32.xlu0 %v1768
        %v1770 = vpop.xlane.xlu0 %1769
        %v1771 = vsel %vm1264, %v1763, -inf
        %1772 = vmax.xlane.f32.xlu0 %v1771
        %v1773 = vpop.xlane.xlu0 %1772
        %v1774 = vsel %vm1264, %v1764, -inf
        %1775 = vmax.xlane.f32.xlu0 %v1774
        %v1776 = vpop.xlane.xlu0 %1775
        %v1777 = vsub.f32 %v1761, %v1767
        %v1778 = vsub.f32 %v1762, %v1770
        %v1779 = vsub.f32 %v1763, %v1773
        %v1780 = vsub.f32 %v1764, %v1776
        %v1781 = vmul.f32 %v1777, 1.442695
        %v1782 = vpow.pop %v1781
        %v1783 = vmul.f32 %v1778, 1.442695
        %v1784 = vpow.pop %v1783
        %v1785 = vmul.f32 %v1779, 1.442695
        %v1786 = vpow.pop %v1785
        %v1787 = vmul.f32 %v1780, 1.442695
        %v1788 = vpow.pop %v1787
        %v1789 = vsel %vm1264, %v1782, 0.0
        %1790 = vadd.xlane.f32.xlu0 %v1789
        %v1791 = vpop.xlane.xlu0 %1790
        %v1792 = vsel %vm1264, %v1784, 0.0
        %1793 = vadd.xlane.f32.xlu0 %v1792
        %v1794 = vpop.xlane.xlu0 %1793
        %v1795 = vsel %vm1264, %v1786, 0.0
        %1796 = vadd.xlane.f32.xlu0 %v1795
        %v1797 = vpop.xlane.xlu0 %1796
        %v1798 = vsel %vm1264, %v1788, 0.0
        %1799 = vadd.xlane.f32.xlu0 %v1798
        %v1800 = vpop.xlane.xlu0 %1799
        %v1801 = vrcp.pop %v1791
        %v1802 = vrcp.pop %v1794
        %v1803 = vrcp.pop %v1797
        %v1804 = vrcp.pop %v1800
        %v1805 = vmul.f32 %v1782, %v1801
        %v1806 = vmul.f32 %v1784, %v1802
        %v1807 = vmul.f32 %v1786, %v1803
        %v1808 = vmul.f32 %v1788, %v1804
        %1809 = vrot.lane.b32.xlu0 %v1521, 56
        %v1810 = vpop.permute.xlu0 %1809
        %1811 = vrot.lane.b32.xlu0 %v1523, 56
        %v1812 = vpop.permute.xlu0 %1811
        %1813 = vrot.lane.b32.xlu0 %v1526, 56
        %v1814 = vpop.permute.xlu0 %1813
        %1815 = vrot.lane.b32.xlu0 %v1528, 56
        %v1816 = vpop.permute.xlu0 %1815
        %v1822 = vsel %vm1264, %v1805, 0
        %v1825 = vsel %vm1264, %v1806, 0
        %v1828 = vsel %vm1264, %v1807, 0
        %v1831 = vsel %vm1264, %v1808, 0
        %1833 = vmatpush.msra.mxu0 0.0
        %1834 = vmatpush.msra.mxu0 0.0
        %1835 = vmatpush.msra.mxu0 0.0
        %1836 = vmatpush.msra.mxu0 0.0
        %1837 = vmatpush.msra.mxu0 0.0
        %1838 = vmatpush.msra.mxu0 0.0
        %1839 = vmatpush.msra.mxu0 0.0
        %1840 = vmatpush.msra.mxu0 0.0
        %1841 = vmatpush.msra.mxu0 0.0
        %1842 = vmatpush.msra.mxu0 0.0
        %1843 = vmatpush.msra.mxu0 0.0
        %1844 = vmatpush.msra.mxu0 0.0
        %1845 = vmatpush.msra.mxu0 %v1816
        %1846 = vmatpush.msra.mxu0 %v1814
        %1847 = vmatpush.msra.mxu0 %v1812
        %1848 = vmatpush.msra.mxu0 %v1810
        %1849 = vmatmul.f32.gmra.mxu0 %v1822
        %v1850 = vpop.f32.mrf.mxu0
        %v1851 = vadd.f32 0.0, %v1850
        %1852 = vmatmul.f32.gmra.mxu0 %v1825
        %v1853 = vpop.f32.mrf.mxu0
        %v1854 = vadd.f32 0.0, %v1853
        %1855 = vmatmul.f32.gmra.mxu0 %v1828
        %v1856 = vpop.f32.mrf.mxu0
        %v1857 = vadd.f32 0.0, %v1856
        %1858 = vmatmul.f32.gmra.mxu0 %v1831
        %v1859 = vpop.f32.mrf.mxu0
        %v1860 = vadd.f32 0.0, %v1859
        %1861 = vdwg.mxu0
        %1862 = vrot.lane.b32.xlu0 %v1521, 112
        %v1863 = vpop.permute.xlu0 %1862
        %1864 = vrot.lane.b32.xlu0 %v1523, 112
        %v1865 = vpop.permute.xlu0 %1864
        %1866 = vrot.lane.b32.xlu0 %v1526, 112
        %v1867 = vpop.permute.xlu0 %1866
        %1868 = vrot.lane.b32.xlu0 %v1528, 112
        %v1869 = vpop.permute.xlu0 %1868
        %1870 = vrot.lane.b32.xlu0 %v1521, 80
        %v1871 = vpop.permute.xlu0 %1870
        %1872 = vrot.lane.b32.xlu0 %v1523, 80
        %v1873 = vpop.permute.xlu0 %1872
        %1874 = vrot.lane.b32.xlu0 %v1526, 80
        %v1875 = vpop.permute.xlu0 %1874
        %1876 = vrot.lane.b32.xlu0 %v1528, 80
        %v1877 = vpop.permute.xlu0 %1876
        %v1878 = vsel %vm1545, %v1863, 0
        %v1880 = vsel %vm1545, %v1865, 0
        %v1882 = vsel %vm1545, %v1867, 0
        %v1884 = vsel %vm1545, %v1869, 0
        %v1886 = vsel %vm1545, %v1871, 0
        %v1888 = vsel %vm1545, %v1873, 0
        %v1890 = vsel %vm1545, %v1875, 0
        %v1892 = vsel %vm1545, %v1877, 0
        %1894 = vmatpush.xpose.msra.mxu0 0.0
        %1895 = vmatpush.xpose.msra.mxu0 0.0
        %1896 = vmatpush.xpose.msra.mxu0 0.0
        %1897 = vmatpush.xpose.msra.mxu0 0.0
        %1898 = vmatpush.xpose.msra.mxu0 0.0
        %1899 = vmatpush.xpose.msra.mxu0 0.0
        %1900 = vmatpush.xpose.msra.mxu0 0.0
        %1901 = vmatpush.xpose.msra.mxu0 0.0
        %1902 = vmatpush.xpose.msra.mxu0 0.0
        %1903 = vmatpush.xpose.msra.mxu0 0.0
        %1904 = vmatpush.xpose.msra.mxu0 0.0
        %1905 = vmatpush.xpose.msra.mxu0 0.0
        %1906 = vmatpush.xpose.msra.mxu0 %v1892
        %1907 = vmatpush.xpose.msra.mxu0 %v1890
        %1908 = vmatpush.xpose.msra.mxu0 %v1888
        %1909 = vmatpush.xpose.msra.mxu0 %v1886
        %1910 = vmatmul.f32.gmra.mxu0 %v1878
        %v1911 = vpop.f32.mrf.mxu0
        %v1912 = vadd.f32 0.0, %v1911
        %1913 = vmatmul.f32.gmra.mxu0 %v1880
        %v1914 = vpop.f32.mrf.mxu0
        %v1915 = vadd.f32 0.0, %v1914
        %1916 = vmatmul.f32.gmra.mxu0 %v1882
        %v1917 = vpop.f32.mrf.mxu0
        %v1918 = vadd.f32 0.0, %v1917
        %1919 = vmatmul.f32.gmra.mxu0 %v1884
        %v1920 = vpop.f32.mrf.mxu0
        %v1921 = vadd.f32 0.0, %v1920
        %1922 = vdwg.mxu0
        %v1923 = vmul.f32 %v1912, 0.35355338
        %v1924 = vmul.f32 %v1915, 0.35355338
        %v1925 = vmul.f32 %v1918, 0.35355338
        %v1926 = vmul.f32 %v1921, 0.35355338
        %v1927 = vsel %vm1532, %v1923, -1e+30
        %v1928 = vsel %vm1532, %v1924, -1e+30
        %v1929 = vsel %vm1532, %v1925, -1e+30
        %v1930 = vsel %vm1532, %v1926, -1e+30
        %v1931 = vsel %vm1264, %v1927, -inf
        %1932 = vmax.xlane.f32.xlu0 %v1931
        %v1933 = vpop.xlane.xlu0 %1932
        %v1934 = vsel %vm1264, %v1928, -inf
        %1935 = vmax.xlane.f32.xlu0 %v1934
        %v1936 = vpop.xlane.xlu0 %1935
        %v1937 = vsel %vm1264, %v1929, -inf
        %1938 = vmax.xlane.f32.xlu0 %v1937
        %v1939 = vpop.xlane.xlu0 %1938
        %v1940 = vsel %vm1264, %v1930, -inf
        %1941 = vmax.xlane.f32.xlu0 %v1940
        %v1942 = vpop.xlane.xlu0 %1941
        %v1943 = vsub.f32 %v1927, %v1933
        %v1944 = vsub.f32 %v1928, %v1936
        %v1945 = vsub.f32 %v1929, %v1939
        %v1946 = vsub.f32 %v1930, %v1942
        %v1947 = vmul.f32 %v1943, 1.442695
        %v1948 = vpow.pop %v1947
        %v1949 = vmul.f32 %v1944, 1.442695
        %v1950 = vpow.pop %v1949
        %v1951 = vmul.f32 %v1945, 1.442695
        %v1952 = vpow.pop %v1951
        %v1953 = vmul.f32 %v1946, 1.442695
        %v1954 = vpow.pop %v1953
        %v1955 = vsel %vm1264, %v1948, 0.0
        %1956 = vadd.xlane.f32.xlu0 %v1955
        %v1957 = vpop.xlane.xlu0 %1956
        %v1958 = vsel %vm1264, %v1950, 0.0
        %1959 = vadd.xlane.f32.xlu0 %v1958
        %v1960 = vpop.xlane.xlu0 %1959
        %v1961 = vsel %vm1264, %v1952, 0.0
        %1962 = vadd.xlane.f32.xlu0 %v1961
        %v1963 = vpop.xlane.xlu0 %1962
        %v1964 = vsel %vm1264, %v1954, 0.0
        %1965 = vadd.xlane.f32.xlu0 %v1964
        %v1966 = vpop.xlane.xlu0 %1965
        %v1967 = vrcp.pop %v1957
        %v1968 = vrcp.pop %v1960
        %v1969 = vrcp.pop %v1963
        %v1970 = vrcp.pop %v1966
        %v1971 = vmul.f32 %v1948, %v1967
        %v1972 = vmul.f32 %v1950, %v1968
        %v1973 = vmul.f32 %v1952, %v1969
        %v1974 = vmul.f32 %v1954, %v1970
        %1975 = vrot.lane.b32.xlu0 %v1521, 48
        %v1976 = vpop.permute.xlu0 %1975
        %1977 = vrot.lane.b32.xlu0 %v1523, 48
        %v1978 = vpop.permute.xlu0 %1977
        %1979 = vrot.lane.b32.xlu0 %v1526, 48
        %v1980 = vpop.permute.xlu0 %1979
        %1981 = vrot.lane.b32.xlu0 %v1528, 48
        %v1982 = vpop.permute.xlu0 %1981
        %v1988 = vsel %vm1264, %v1971, 0
        %v1991 = vsel %vm1264, %v1972, 0
        %v1994 = vsel %vm1264, %v1973, 0
        %v1997 = vsel %vm1264, %v1974, 0
        %1999 = vmatpush.msra.mxu0 0.0
        %2000 = vmatpush.msra.mxu0 0.0
        %2001 = vmatpush.msra.mxu0 0.0
        %2002 = vmatpush.msra.mxu0 0.0
        %2003 = vmatpush.msra.mxu0 0.0
        %2004 = vmatpush.msra.mxu0 0.0
        %2005 = vmatpush.msra.mxu0 0.0
        %2006 = vmatpush.msra.mxu0 0.0
        %2007 = vmatpush.msra.mxu0 0.0
        %2008 = vmatpush.msra.mxu0 0.0
        %2009 = vmatpush.msra.mxu0 0.0
        %2010 = vmatpush.msra.mxu0 0.0
        %2011 = vmatpush.msra.mxu0 %v1982
        %2012 = vmatpush.msra.mxu0 %v1980
        %2013 = vmatpush.msra.mxu0 %v1978
        %2014 = vmatpush.msra.mxu0 %v1976
        %2015 = vmatmul.f32.gmra.mxu0 %v1988
        %v2016 = vpop.f32.mrf.mxu0
        %v2017 = vadd.f32 0.0, %v2016
        %2018 = vmatmul.f32.gmra.mxu0 %v1991
        %v2019 = vpop.f32.mrf.mxu0
        %v2020 = vadd.f32 0.0, %v2019
        %2021 = vmatmul.f32.gmra.mxu0 %v1994
        %v2022 = vpop.f32.mrf.mxu0
        %v2023 = vadd.f32 0.0, %v2022
        %2024 = vmatmul.f32.gmra.mxu0 %v1997
        %v2025 = vpop.f32.mrf.mxu0
        %v2026 = vadd.f32 0.0, %v2025
        %2027 = vdwg.mxu0
        %2028 = vrot.lane.b32.xlu0 %v1521, 104
        %v2029 = vpop.permute.xlu0 %2028
        %2030 = vrot.lane.b32.xlu0 %v1523, 104
        %v2031 = vpop.permute.xlu0 %2030
        %2032 = vrot.lane.b32.xlu0 %v1526, 104
        %v2033 = vpop.permute.xlu0 %2032
        %2034 = vrot.lane.b32.xlu0 %v1528, 104
        %v2035 = vpop.permute.xlu0 %2034
        %2036 = vrot.lane.b32.xlu0 %v1521, 72
        %v2037 = vpop.permute.xlu0 %2036
        %2038 = vrot.lane.b32.xlu0 %v1523, 72
        %v2039 = vpop.permute.xlu0 %2038
        %2040 = vrot.lane.b32.xlu0 %v1526, 72
        %v2041 = vpop.permute.xlu0 %2040
        %2042 = vrot.lane.b32.xlu0 %v1528, 72
        %v2043 = vpop.permute.xlu0 %2042
        %v2044 = vsel %vm1545, %v2029, 0
        %v2046 = vsel %vm1545, %v2031, 0
        %v2048 = vsel %vm1545, %v2033, 0
        %v2050 = vsel %vm1545, %v2035, 0
        %v2052 = vsel %vm1545, %v2037, 0
        %v2054 = vsel %vm1545, %v2039, 0
        %v2056 = vsel %vm1545, %v2041, 0
        %v2058 = vsel %vm1545, %v2043, 0
        %2060 = vmatpush.xpose.msra.mxu0 0.0
        %2061 = vmatpush.xpose.msra.mxu0 0.0
        %2062 = vmatpush.xpose.msra.mxu0 0.0
        %2063 = vmatpush.xpose.msra.mxu0 0.0
        %2064 = vmatpush.xpose.msra.mxu0 0.0
        %2065 = vmatpush.xpose.msra.mxu0 0.0
        %2066 = vmatpush.xpose.msra.mxu0 0.0
        %2067 = vmatpush.xpose.msra.mxu0 0.0
        %2068 = vmatpush.xpose.msra.mxu0 0.0
        %2069 = vmatpush.xpose.msra.mxu0 0.0
        %2070 = vmatpush.xpose.msra.mxu0 0.0
        %2071 = vmatpush.xpose.msra.mxu0 0.0
        %2072 = vmatpush.xpose.msra.mxu0 %v2058
        %2073 = vmatpush.xpose.msra.mxu0 %v2056
        %2074 = vmatpush.xpose.msra.mxu0 %v2054
        %2075 = vmatpush.xpose.msra.mxu0 %v2052
        %2076 = vmatmul.f32.gmra.mxu0 %v2044
        %v2077 = vpop.f32.mrf.mxu0
        %v2078 = vadd.f32 0.0, %v2077
        %2079 = vmatmul.f32.gmra.mxu0 %v2046
        %v2080 = vpop.f32.mrf.mxu0
        %v2081 = vadd.f32 0.0, %v2080
        %2082 = vmatmul.f32.gmra.mxu0 %v2048
        %v2083 = vpop.f32.mrf.mxu0
        %v2084 = vadd.f32 0.0, %v2083
        %2085 = vmatmul.f32.gmra.mxu0 %v2050
        %v2086 = vpop.f32.mrf.mxu0
        %v2087 = vadd.f32 0.0, %v2086
        %2088 = vdwg.mxu0
        %v2089 = vmul.f32 %v2078, 0.35355338
        %v2090 = vmul.f32 %v2081, 0.35355338
        %v2091 = vmul.f32 %v2084, 0.35355338
        %v2092 = vmul.f32 %v2087, 0.35355338
        %v2093 = vsel %vm1532, %v2089, -1e+30
        %v2094 = vsel %vm1532, %v2090, -1e+30
        %v2095 = vsel %vm1532, %v2091, -1e+30
        %v2096 = vsel %vm1532, %v2092, -1e+30
        %v2097 = vsel %vm1264, %v2093, -inf
        %2098 = vmax.xlane.f32.xlu0 %v2097
        %v2099 = vpop.xlane.xlu0 %2098
        %v2100 = vsel %vm1264, %v2094, -inf
        %2101 = vmax.xlane.f32.xlu0 %v2100
        %v2102 = vpop.xlane.xlu0 %2101
        %v2103 = vsel %vm1264, %v2095, -inf
        %2104 = vmax.xlane.f32.xlu0 %v2103
        %v2105 = vpop.xlane.xlu0 %2104
        %v2106 = vsel %vm1264, %v2096, -inf
        %2107 = vmax.xlane.f32.xlu0 %v2106
        %v2108 = vpop.xlane.xlu0 %2107
        %v2109 = vsub.f32 %v2093, %v2099
        %v2110 = vsub.f32 %v2094, %v2102
        %v2111 = vsub.f32 %v2095, %v2105
        %v2112 = vsub.f32 %v2096, %v2108
        %v2113 = vmul.f32 %v2109, 1.442695
        %v2114 = vpow.pop %v2113
        %v2115 = vmul.f32 %v2110, 1.442695
        %v2116 = vpow.pop %v2115
        %v2117 = vmul.f32 %v2111, 1.442695
        %v2118 = vpow.pop %v2117
        %v2119 = vmul.f32 %v2112, 1.442695
        %v2120 = vpow.pop %v2119
        %v2121 = vsel %vm1264, %v2114, 0.0
        %2122 = vadd.xlane.f32.xlu0 %v2121
        %v2123 = vpop.xlane.xlu0 %2122
        %v2124 = vsel %vm1264, %v2116, 0.0
        %2125 = vadd.xlane.f32.xlu0 %v2124
        %v2126 = vpop.xlane.xlu0 %2125
        %v2127 = vsel %vm1264, %v2118, 0.0
        %2128 = vadd.xlane.f32.xlu0 %v2127
        %v2129 = vpop.xlane.xlu0 %2128
        %v2130 = vsel %vm1264, %v2120, 0.0
        %2131 = vadd.xlane.f32.xlu0 %v2130
        %v2132 = vpop.xlane.xlu0 %2131
        %v2133 = vrcp.pop %v2123
        %v2134 = vrcp.pop %v2126
        %v2135 = vrcp.pop %v2129
        %v2136 = vrcp.pop %v2132
        %v2137 = vmul.f32 %v2114, %v2133
        %v2138 = vmul.f32 %v2116, %v2134
        %v2139 = vmul.f32 %v2118, %v2135
        %v2140 = vmul.f32 %v2120, %v2136
        %2141 = vrot.lane.b32.xlu0 %v1521, 40
        %v2142 = vpop.permute.xlu0 %2141
        %2143 = vrot.lane.b32.xlu0 %v1523, 40
        %v2144 = vpop.permute.xlu0 %2143
        %2145 = vrot.lane.b32.xlu0 %v1526, 40
        %v2146 = vpop.permute.xlu0 %2145
        %2147 = vrot.lane.b32.xlu0 %v1528, 40
        %v2148 = vpop.permute.xlu0 %2147
        %v2154 = vsel %vm1264, %v2137, 0
        %v2157 = vsel %vm1264, %v2138, 0
        %v2160 = vsel %vm1264, %v2139, 0
        %v2163 = vsel %vm1264, %v2140, 0
        %2165 = vmatpush.msra.mxu0 0.0
        %2166 = vmatpush.msra.mxu0 0.0
        %2167 = vmatpush.msra.mxu0 0.0
        %2168 = vmatpush.msra.mxu0 0.0
        %2169 = vmatpush.msra.mxu0 0.0
        %2170 = vmatpush.msra.mxu0 0.0
        %2171 = vmatpush.msra.mxu0 0.0
        %2172 = vmatpush.msra.mxu0 0.0
        %2173 = vmatpush.msra.mxu0 0.0
        %2174 = vmatpush.msra.mxu0 0.0
        %2175 = vmatpush.msra.mxu0 0.0
        %2176 = vmatpush.msra.mxu0 0.0
        %2177 = vmatpush.msra.mxu0 %v2148
        %2178 = vmatpush.msra.mxu0 %v2146
        %2179 = vmatpush.msra.mxu0 %v2144
        %2180 = vmatpush.msra.mxu0 %v2142
        %2181 = vmatmul.f32.gmra.mxu0 %v2154
        %v2182 = vpop.f32.mrf.mxu0
        %v2183 = vadd.f32 0.0, %v2182
        %2184 = vmatmul.f32.gmra.mxu0 %v2157
        %v2185 = vpop.f32.mrf.mxu0
        %v2186 = vadd.f32 0.0, %v2185
        %2187 = vmatmul.f32.gmra.mxu0 %v2160
        %v2188 = vpop.f32.mrf.mxu0
        %v2189 = vadd.f32 0.0, %v2188
        %2190 = vmatmul.f32.gmra.mxu0 %v2163
        %v2191 = vpop.f32.mrf.mxu0
        %v2192 = vadd.f32 0.0, %v2191
        %2193 = vdwg.mxu0
        %2198 = vrot.lane.b32.xlu0 %v1851, 8
        %v2199 = vpop.permute.xlu0 %2198
        %2200 = vrot.lane.b32.xlu0 %v1854, 8
        %v2201 = vpop.permute.xlu0 %2200
        %2202 = vrot.lane.b32.xlu0 %v1857, 8
        %v2203 = vpop.permute.xlu0 %2202
        %2204 = vrot.lane.b32.xlu0 %v1860, 8
        %v2205 = vpop.permute.xlu0 %2204
        %2214 = vrot.lane.b32.xlu0 %v2017, 16
        %v2215 = vpop.permute.xlu0 %2214
        %2216 = vrot.lane.b32.xlu0 %v2020, 16
        %v2217 = vpop.permute.xlu0 %2216
        %2218 = vrot.lane.b32.xlu0 %v2023, 16
        %v2219 = vpop.permute.xlu0 %2218
        %2220 = vrot.lane.b32.xlu0 %v2026, 16
        %v2221 = vpop.permute.xlu0 %2220
        %2230 = vrot.lane.b32.xlu0 %v2183, 24
        %v2231 = vpop.permute.xlu0 %2230
        %2232 = vrot.lane.b32.xlu0 %v2186, 24
        %v2233 = vpop.permute.xlu0 %2232
        %2234 = vrot.lane.b32.xlu0 %v2189, 24
        %v2235 = vpop.permute.xlu0 %2234
        %2236 = vrot.lane.b32.xlu0 %v2192, 24
        %v2237 = vpop.permute.xlu0 %2236
        %v2242 = vsel %vm1545, %v1685, %v2199
        %v2243 = vsel %vm1545, %v1688, %v2201
        %v2244 = vsel %vm1545, %v1691, %v2203
        %v2245 = vsel %vm1545, %v1694, %v2205
        %vm2246 = vcmask 130048
        %v2247 = vsel %vm2246, %v2242, %v2215
        %v2248 = vsel %vm2246, %v2243, %v2217
        %v2249 = vsel %vm2246, %v2244, %v2219
        %v2250 = vsel %vm2246, %v2245, %v2221
        %vm2251 = vcmask 195584
        %v2252 = vsel %vm2251, %v2247, %v2231
        %v2253 = vsel %vm2251, %v2248, %v2233
        %v2254 = vsel %vm2251, %v2249, %v2235
        %v2255 = vsel %vm2251, %v2250, %v2237
        %v2256 = vpack.c.bf16 %v2253, %v2252
        %v2257 = vpack.c.bf16 %v2255, %v2254
        %v2259 = vperm.slane %v1487, 0
        %v2265 = vunpack.c.l.b16 %v1483
        %v2266 = vunpack.c.l.b16 %v1484
        %v2267 = vunpack.c.l.b16 %v1485
        %v2268 = vunpack.c.l.b16 %v1486
        %v2269 = vpack.c.b16 %v2266, %v2265
        %v2270 = vpack.c.b16 %v2268, %v2267
        %v2274 = vsel %vm1264, %v2256, 0
        %v2277 = vsel %vm1264, %v2257, 0
        %2279 = vmatpush.bf16.msra.mxu0 0
        %2280 = vmatpush.bf16.msra.mxu0 0
        %2281 = vmatpush.bf16.msra.mxu0 0
        %2282 = vmatpush.bf16.msra.mxu0 0
        %2283 = vmatpush.bf16.msra.mxu0 0
        %2284 = vmatpush.bf16.msra.mxu0 0
        %2285 = vmatpush.bf16.msra.mxu0 %v2270
        %2286 = vmatpush.bf16.msra.mxu0 %v2269
        %2287 = vmatmul.bf16.gmra.mxu0 %v2274
        %v2288 = vpop.f32.mrf.mxu0
        %v2289 = vadd.f32 %v2259, %v2288
        %v2290 = vpop.f32.mrf.mxu0
        %v2291 = vadd.f32 %v2259, %v2290
        %2292 = vmatmul.bf16.gmra.mxu0 %v2277
        %v2293 = vpop.f32.mrf.mxu0
        %v2294 = vadd.f32 %v2259, %v2293
        %v2295 = vpop.f32.mrf.mxu0
        %v2296 = vadd.f32 %v2259, %v2295
        %2297 = vdwg.mxu0
        %v2298 = vadd.f32 %v1370, %v2289
        %v2299 = vadd.f32 %v1371, %v2291
        %v2300 = vadd.f32 %v1372, %v2294
        %v2301 = vadd.f32 %v1373, %v2296
        %v2302 = vld [vmem:[%s21] sm:$0x1]
        %v2303 = vld [vmem:[%s19] sm:$0x1]
        %v2304 = vsel %vm1264, %v2298, 0.0
        %2305 = vadd.xlane.f32.xlu0 %v2304
        %v2306 = vpop.xlane.xlu0 %2305
        %v2307 = vsel %vm1264, %v2299, 0.0
        %2308 = vadd.xlane.f32.xlu0 %v2307
        %v2309 = vpop.xlane.xlu0 %2308
        %v2310 = vsel %vm1264, %v2300, 0.0
        %2311 = vadd.xlane.f32.xlu0 %v2310
        %v2312 = vpop.xlane.xlu0 %2311
        %v2313 = vsel %vm1264, %v2301, 0.0
        %2314 = vadd.xlane.f32.xlu0 %v2313
        %v2315 = vpop.xlane.xlu0 %2314
        %v2316 = vmul.f32 %v2306, %v1283
        %v2317 = vmul.f32 %v2309, %v1283
        %v2318 = vmul.f32 %v2312, %v1283
        %v2319 = vmul.f32 %v2315, %v1283
        %v2320 = vsub.f32 %v2298, %v2316
        %v2321 = vsub.f32 %v2299, %v2317
        %v2322 = vsub.f32 %v2300, %v2318
        %v2323 = vsub.f32 %v2301, %v2319
        %v2324 = vmul.f32 %v2320, %v2320
        %v2325 = vmul.f32 %v2321, %v2321
        %v2326 = vmul.f32 %v2322, %v2322
        %v2327 = vmul.f32 %v2323, %v2323
        %v2328 = vsel %vm1264, %v2324, 0.0
        %2329 = vadd.xlane.f32.xlu0 %v2328
        %v2330 = vpop.xlane.xlu0 %2329
        %v2331 = vsel %vm1264, %v2325, 0.0
        %2332 = vadd.xlane.f32.xlu0 %v2331
        %v2333 = vpop.xlane.xlu0 %2332
        %v2334 = vsel %vm1264, %v2326, 0.0
        %2335 = vadd.xlane.f32.xlu0 %v2334
        %v2336 = vpop.xlane.xlu0 %2335
        %v2337 = vsel %vm1264, %v2327, 0.0
        %2338 = vadd.xlane.f32.xlu0 %v2337
        %v2339 = vpop.xlane.xlu0 %2338
        %v2340 = vmul.f32 %v2330, %v1283
        %v2341 = vmul.f32 %v2333, %v1283
        %v2342 = vmul.f32 %v2336, %v1283
        %v2343 = vmul.f32 %v2339, %v1283
        %v2344 = vadd.f32 %v2340, 1e-05
        %v2345 = vadd.f32 %v2341, 1e-05
        %v2346 = vadd.f32 %v2342, 1e-05
        %v2347 = vadd.f32 %v2343, 1e-05
        %v2348 = vrsqrt.pop %v2344
        %v2349 = vmul.f32 %v2348, %v2344
        %v2350 = vmul.f32 %v2349, %v2348
        %v2351 = vmul.f32 0.5, %v2350
        %v2352 = vsub.f32 1.5, %v2351
        %v2353 = vmul.f32 %v2348, %v2352
        %vm2354 = vweird.f32 %v2344
        %vm2355 = vweird.f32 %v2348
        %vm2356 = vmor %vm2354, %vm2355
        %v2357 = vsel %vm2356, %v2348, %v2353
        %v2358 = vrsqrt.pop %v2345
        %v2359 = vmul.f32 %v2358, %v2345
        %v2360 = vmul.f32 %v2359, %v2358
        %v2361 = vmul.f32 0.5, %v2360
        %v2362 = vsub.f32 1.5, %v2361
        %v2363 = vmul.f32 %v2358, %v2362
        %vm2364 = vweird.f32 %v2345
        %vm2365 = vweird.f32 %v2358
        %vm2366 = vmor %vm2364, %vm2365
        %v2367 = vsel %vm2366, %v2358, %v2363
        %v2368 = vrsqrt.pop %v2346
        %v2369 = vmul.f32 %v2368, %v2346
        %v2370 = vmul.f32 %v2369, %v2368
        %v2371 = vmul.f32 0.5, %v2370
        %v2372 = vsub.f32 1.5, %v2371
        %v2373 = vmul.f32 %v2368, %v2372
        %vm2374 = vweird.f32 %v2346
        %vm2375 = vweird.f32 %v2368
        %vm2376 = vmor %vm2374, %vm2375
        %v2377 = vsel %vm2376, %v2368, %v2373
        %v2378 = vrsqrt.pop %v2347
        %v2379 = vmul.f32 %v2378, %v2347
        %v2380 = vmul.f32 %v2379, %v2378
        %v2381 = vmul.f32 0.5, %v2380
        %v2382 = vsub.f32 1.5, %v2381
        %v2383 = vmul.f32 %v2378, %v2382
        %vm2384 = vweird.f32 %v2347
        %vm2385 = vweird.f32 %v2378
        %vm2386 = vmor %vm2384, %vm2385
        %v2387 = vsel %vm2386, %v2378, %v2383
        %v2388 = vmul.f32 %v2320, %v2357
        %v2389 = vmul.f32 %v2321, %v2367
        %v2390 = vmul.f32 %v2322, %v2377
        %v2391 = vmul.f32 %v2323, %v2387
        %v2393 = vperm.slane %v2302, 0
        %v2395 = vmul.f32 %v2388, %v2393
        %v2396 = vmul.f32 %v2389, %v2393
        %v2397 = vmul.f32 %v2390, %v2393
        %v2398 = vmul.f32 %v2391, %v2393
        %v2400 = vperm.slane %v2303, 0
        %v2402 = vadd.f32 %v2395, %v2400
        %v2403 = vadd.f32 %v2396, %v2400
        %v2404 = vadd.f32 %v2397, %v2400
        %v2405 = vadd.f32 %v2398, %v2400
        %v2406 = vld [vmem:[%s29] sm:$0xf]
        %v2407 = vld [vmem:[%s29 + $0x4] sm:$0xf]
        %v2408 = vld [vmem:[%s29 + $0x8] sm:$0xf]
        %v2409 = vld [vmem:[%s29 + $0xc] sm:$0xf]
        %v2410 = vld [vmem:[%s5] sm:$0x1]
        %v2411 = vld [vmem:[%s31] sm:$0xf]
        %v2412 = vld [vmem:[%s31 + $0x4] sm:$0xf]
        %v2413 = vld [vmem:[%s31 + $0x8] sm:$0xf]
        %v2414 = vld [vmem:[%s31 + $0xc] sm:$0xf]
        %v2415 = vld [vmem:[%s31 + $0x10] sm:$0xf]
        %v2416 = vld [vmem:[%s31 + $0x14] sm:$0xf]
        %v2417 = vld [vmem:[%s31 + $0x18] sm:$0xf]
        %v2418 = vld [vmem:[%s31 + $0x1c] sm:$0xf]
        %v2419 = vld [vmem:[%s7] sm:$0x1]
        %v2420 = vpack.c.bf16 %v2403, %v2402
        %v2421 = vpack.c.bf16 %v2405, %v2404
        %v2423 = vperm.slane %v2410, 0
        %v2429 = vunpack.c.l.b16 %v2406
        %v2430 = vunpack.c.l.b16 %v2407
        %v2431 = vunpack.c.l.b16 %v2408
        %v2432 = vunpack.c.l.b16 %v2409
        %v2433 = vpack.c.b16 %v2430, %v2429
        %v2434 = vpack.c.b16 %v2432, %v2431
        %v2438 = vsel %vm1264, %v2420, 0
        %v2441 = vsel %vm1264, %v2421, 0
        %2443 = vmatpush.bf16.msra.mxu0 0
        %2444 = vmatpush.bf16.msra.mxu0 0
        %2445 = vmatpush.bf16.msra.mxu0 0
        %2446 = vmatpush.bf16.msra.mxu0 0
        %2447 = vmatpush.bf16.msra.mxu0 0
        %2448 = vmatpush.bf16.msra.mxu0 0
        %2449 = vmatpush.bf16.msra.mxu0 %v2434
        %2450 = vmatpush.bf16.msra.mxu0 %v2433
        %2451 = vmatmul.bf16.gmra.mxu0 %v2438
        %v2452 = vpop.f32.mrf.mxu0
        %v2453 = vadd.f32 %v2423, %v2452
        %v2454 = vpop.f32.mrf.mxu0
        %v2455 = vadd.f32 %v2423, %v2454
        %2456 = vmatmul.bf16.gmra.mxu0 %v2441
        %v2457 = vpop.f32.mrf.mxu0
        %v2458 = vadd.f32 %v2423, %v2457
        %v2459 = vpop.f32.mrf.mxu0
        %v2460 = vadd.f32 %v2423, %v2459
        %2461 = vdwg.mxu0
        %v2462 = vmul.f32 %v2453, 1.702
        %v2463 = vmul.f32 %v2455, 1.702
        %v2464 = vmul.f32 %v2458, 1.702
        %v2465 = vmul.f32 %v2460, 1.702
        %v2466 = vxor.u32 %v2462, 2147483648
        %v2467 = vxor.u32 %v2463, 2147483648
        %v2468 = vxor.u32 %v2464, 2147483648
        %v2469 = vxor.u32 %v2465, 2147483648
        %v2470 = vmul.f32 %v2466, 1.442695
        %v2471 = vpow.pop %v2470
        %v2472 = vmul.f32 %v2467, 1.442695
        %v2473 = vpow.pop %v2472
        %v2474 = vmul.f32 %v2468, 1.442695
        %v2475 = vpow.pop %v2474
        %v2476 = vmul.f32 %v2469, 1.442695
        %v2477 = vpow.pop %v2476
        %v2478 = vadd.f32 %v2471, 1.0
        %v2479 = vadd.f32 %v2473, 1.0
        %v2480 = vadd.f32 %v2475, 1.0
        %v2481 = vadd.f32 %v2477, 1.0
        %v2482 = vrcp.pop %v2478
        %v2483 = vmul.f32 %v2478, %v2482
        %v2484 = vsub.f32 1.0, %v2483
        %v2485 = vmul.f32 %v2482, %v2484
        %v2486 = vadd.f32 %v2482, %v2485
        %vm2487 = vweird.f32 %v2478
        %vm2488 = vweird.f32 %v2482
        %vm2489 = vmor %vm2487, %vm2488
        %v2490 = vsel %vm2489, %v2482, %v2486
        %v2491 = vand.u32 2147483647, %v2478
        %vm2492 = vcmp.eq.f32.partialorder %v2491, 8.507059e+37
        %v2493 = vand.u32 %v2478, 2147483648
        %v2494 = vor.u32 1.1754944e-38, %v2493
        %v2495 = vsel %vm2492, %v2494, %v2490
        %v2496 = vmul.f32 1.0, %v2495
        %v2497 = vrcp.pop %v2479
        %v2498 = vmul.f32 %v2479, %v2497
        %v2499 = vsub.f32 1.0, %v2498
        %v2500 = vmul.f32 %v2497, %v2499
        %v2501 = vadd.f32 %v2497, %v2500
        %vm2502 = vweird.f32 %v2479
        %vm2503 = vweird.f32 %v2497
        %vm2504 = vmor %vm2502, %vm2503
        %v2505 = vsel %vm2504, %v2497, %v2501
        %v2506 = vand.u32 2147483647, %v2479
        %vm2507 = vcmp.eq.f32.partialorder %v2506, 8.507059e+37
        %v2508 = vand.u32 %v2479, 2147483648
        %v2509 = vor.u32 1.1754944e-38, %v2508
        %v2510 = vsel %vm2507, %v2509, %v2505
        %v2511 = vmul.f32 1.0, %v2510
        %v2512 = vrcp.pop %v2480
        %v2513 = vmul.f32 %v2480, %v2512
        %v2514 = vsub.f32 1.0, %v2513
        %v2515 = vmul.f32 %v2512, %v2514
        %v2516 = vadd.f32 %v2512, %v2515
        %vm2517 = vweird.f32 %v2480
        %vm2518 = vweird.f32 %v2512
        %vm2519 = vmor %vm2517, %vm2518
        %v2520 = vsel %vm2519, %v2512, %v2516
        %v2521 = vand.u32 2147483647, %v2480
        %vm2522 = vcmp.eq.f32.partialorder %v2521, 8.507059e+37
        %v2523 = vand.u32 %v2480, 2147483648
        %v2524 = vor.u32 1.1754944e-38, %v2523
        %v2525 = vsel %vm2522, %v2524, %v2520
        %v2526 = vmul.f32 1.0, %v2525
        %v2527 = vrcp.pop %v2481
        %v2528 = vmul.f32 %v2481, %v2527
        %v2529 = vsub.f32 1.0, %v2528
        %v2530 = vmul.f32 %v2527, %v2529
        %v2531 = vadd.f32 %v2527, %v2530
        %vm2532 = vweird.f32 %v2481
        %vm2533 = vweird.f32 %v2527
        %vm2534 = vmor %vm2532, %vm2533
        %v2535 = vsel %vm2534, %v2527, %v2531
        %v2536 = vand.u32 2147483647, %v2481
        %vm2537 = vcmp.eq.f32.partialorder %v2536, 8.507059e+37
        %v2538 = vand.u32 %v2481, 2147483648
        %v2539 = vor.u32 1.1754944e-38, %v2538
        %v2540 = vsel %vm2537, %v2539, %v2535
        %v2541 = vmul.f32 1.0, %v2540
        %v2542 = vmul.f32 %v2453, %v2496
        %v2543 = vmul.f32 %v2455, %v2511
        %v2544 = vmul.f32 %v2458, %v2526
        %v2545 = vmul.f32 %v2460, %v2541
        %v2546 = vpack.c.bf16 %v2543, %v2542
        %v2547 = vpack.c.bf16 %v2545, %v2544
        %v2549 = vperm.slane %v2419, 0
        %v2559 = vunpack.c.l.b16 %v2411
        %v2560 = vunpack.c.l.b16 %v2412
        %v2561 = vunpack.c.l.b16 %v2413
        %v2562 = vunpack.c.l.b16 %v2414
        %v2563 = vunpack.c.l.b16 %v2415
        %v2564 = vunpack.c.l.b16 %v2416
        %v2565 = vunpack.c.l.b16 %v2417
        %v2566 = vunpack.c.l.b16 %v2418
        %v2567 = vpack.c.b16 %v2560, %v2559
        %v2568 = vpack.c.b16 %v2562, %v2561
        %v2569 = vpack.c.b16 %v2564, %v2563
        %v2570 = vpack.c.b16 %v2566, %v2565
        %vm2575 = vcmask 523264
        %v2577 = vsel %vm2575, %v2546, 0
        %v2580 = vsel %vm2575, %v2547, 0
        %2582 = vmatpush.bf16.msra.mxu0 0
        %2583 = vmatpush.bf16.msra.mxu0 0
        %2584 = vmatpush.bf16.msra.mxu0 0
        %2585 = vmatpush.bf16.msra.mxu0 0
        %2586 = vmatpush.bf16.msra.mxu0 %v2570
        %2587 = vmatpush.bf16.msra.mxu0 %v2569
        %2588 = vmatpush.bf16.msra.mxu0 %v2568
        %2589 = vmatpush.bf16.msra.mxu0 %v2567
        %2590 = vmatmul.bf16.gmra.mxu0 %v2577
        %v2591 = vpop.f32.mrf.mxu0
        %v2592 = vadd.f32 %v2549, %v2591
        %v2593 = vpop.f32.mrf.mxu0
        %v2594 = vadd.f32 %v2549, %v2593
        %2595 = vmatmul.bf16.gmra.mxu0 %v2580
        %v2596 = vpop.f32.mrf.mxu0
        %v2597 = vadd.f32 %v2549, %v2596
        %v2598 = vpop.f32.mrf.mxu0
        %v2599 = vadd.f32 %v2549, %v2598
        %2600 = vdwg.mxu0
        %v2601 = vadd.f32 %v2298, %v2592
        %v2602 = vadd.f32 %v2299, %v2594
        %v2603 = vadd.f32 %v2300, %v2597
        %v2604 = vadd.f32 %v2301, %v2599
        %s2605 = scalar_lea.vmem %s17, 1
        %v2606 = vld [vmem:[%s2605] sm:$0x1]
        %s2607 = scalar_lea.vmem %s15, 1
        %v2608 = vld [vmem:[%s2607] sm:$0x1]
        %v2609 = vsel %vm1264, %v2601, 0.0
        %2610 = vadd.xlane.f32.xlu0 %v2609
        %v2611 = vpop.xlane.xlu0 %2610
        %v2612 = vsel %vm1264, %v2602, 0.0
        %2613 = vadd.xlane.f32.xlu0 %v2612
        %v2614 = vpop.xlane.xlu0 %2613
        %v2615 = vsel %vm1264, %v2603, 0.0
        %2616 = vadd.xlane.f32.xlu0 %v2615
        %v2617 = vpop.xlane.xlu0 %2616
        %v2618 = vsel %vm1264, %v2604, 0.0
        %2619 = vadd.xlane.f32.xlu0 %v2618
        %v2620 = vpop.xlane.xlu0 %2619
        %v2621 = vmul.f32 %v2611, %v1283
        %v2622 = vmul.f32 %v2614, %v1283
        %v2623 = vmul.f32 %v2617, %v1283
        %v2624 = vmul.f32 %v2620, %v1283
        %v2625 = vsub.f32 %v2601, %v2621
        %v2626 = vsub.f32 %v2602, %v2622
        %v2627 = vsub.f32 %v2603, %v2623
        %v2628 = vsub.f32 %v2604, %v2624
        %v2629 = vmul.f32 %v2625, %v2625
        %v2630 = vmul.f32 %v2626, %v2626
        %v2631 = vmul.f32 %v2627, %v2627
        %v2632 = vmul.f32 %v2628, %v2628
        %v2633 = vsel %vm1264, %v2629, 0.0
        %2634 = vadd.xlane.f32.xlu0 %v2633
        %v2635 = vpop.xlane.xlu0 %2634
        %v2636 = vsel %vm1264, %v2630, 0.0
        %2637 = vadd.xlane.f32.xlu0 %v2636
        %v2638 = vpop.xlane.xlu0 %2637
        %v2639 = vsel %vm1264, %v2631, 0.0
        %2640 = vadd.xlane.f32.xlu0 %v2639
        %v2641 = vpop.xlane.xlu0 %2640
        %v2642 = vsel %vm1264, %v2632, 0.0
        %2643 = vadd.xlane.f32.xlu0 %v2642
        %v2644 = vpop.xlane.xlu0 %2643
        %v2645 = vmul.f32 %v2635, %v1283
        %v2646 = vmul.f32 %v2638, %v1283
        %v2647 = vmul.f32 %v2641, %v1283
        %v2648 = vmul.f32 %v2644, %v1283
        %v2649 = vadd.f32 %v2645, 1e-05
        %v2650 = vadd.f32 %v2646, 1e-05
        %v2651 = vadd.f32 %v2647, 1e-05
        %v2652 = vadd.f32 %v2648, 1e-05
        %v2653 = vrsqrt.pop %v2649
        %v2654 = vmul.f32 %v2653, %v2649
        %v2655 = vmul.f32 %v2654, %v2653
        %v2656 = vmul.f32 0.5, %v2655
        %v2657 = vsub.f32 1.5, %v2656
        %v2658 = vmul.f32 %v2653, %v2657
        %vm2659 = vweird.f32 %v2649
        %vm2660 = vweird.f32 %v2653
        %vm2661 = vmor %vm2659, %vm2660
        %v2662 = vsel %vm2661, %v2653, %v2658
        %v2663 = vrsqrt.pop %v2650
        %v2664 = vmul.f32 %v2663, %v2650
        %v2665 = vmul.f32 %v2664, %v2663
        %v2666 = vmul.f32 0.5, %v2665
        %v2667 = vsub.f32 1.5, %v2666
        %v2668 = vmul.f32 %v2663, %v2667
        %vm2669 = vweird.f32 %v2650
        %vm2670 = vweird.f32 %v2663
        %vm2671 = vmor %vm2669, %vm2670
        %v2672 = vsel %vm2671, %v2663, %v2668
        %v2673 = vrsqrt.pop %v2651
        %v2674 = vmul.f32 %v2673, %v2651
        %v2675 = vmul.f32 %v2674, %v2673
        %v2676 = vmul.f32 0.5, %v2675
        %v2677 = vsub.f32 1.5, %v2676
        %v2678 = vmul.f32 %v2673, %v2677
        %vm2679 = vweird.f32 %v2651
        %vm2680 = vweird.f32 %v2673
        %vm2681 = vmor %vm2679, %vm2680
        %v2682 = vsel %vm2681, %v2673, %v2678
        %v2683 = vrsqrt.pop %v2652
        %v2684 = vmul.f32 %v2683, %v2652
        %v2685 = vmul.f32 %v2684, %v2683
        %v2686 = vmul.f32 0.5, %v2685
        %v2687 = vsub.f32 1.5, %v2686
        %v2688 = vmul.f32 %v2683, %v2687
        %vm2689 = vweird.f32 %v2652
        %vm2690 = vweird.f32 %v2683
        %vm2691 = vmor %vm2689, %vm2690
        %v2692 = vsel %vm2691, %v2683, %v2688
        %v2693 = vmul.f32 %v2625, %v2662
        %v2694 = vmul.f32 %v2626, %v2672
        %v2695 = vmul.f32 %v2627, %v2682
        %v2696 = vmul.f32 %v2628, %v2692
        %v2698 = vperm.slane %v2606, 0
        %v2700 = vmul.f32 %v2693, %v2698
        %v2701 = vmul.f32 %v2694, %v2698
        %v2702 = vmul.f32 %v2695, %v2698
        %v2703 = vmul.f32 %v2696, %v2698
        %v2705 = vperm.slane %v2608, 0
        %v2707 = vadd.f32 %v2700, %v2705
        %v2708 = vadd.f32 %v2701, %v2705
        %v2709 = vadd.f32 %v2702, %v2705
        %v2710 = vadd.f32 %v2703, %v2705
        %s2711 = scalar_lea.vmem %s35, 16
        %v2712 = vld [vmem:[%s2711] sm:$0xf]
        %v2713 = vld [vmem:[%s2711 + $0x4] sm:$0xf]
        %v2714 = vld [vmem:[%s2711 + $0x8] sm:$0xf]
        %v2715 = vld [vmem:[%s2711 + $0xc] sm:$0xf]
        %s2716 = scalar_lea.vmem %s13, 1
        %v2717 = vld [vmem:[%s2716] sm:$0x1]
        %s2718 = scalar_lea.vmem %s33, 16
        %v2719 = vld [vmem:[%s2718] sm:$0xf]
        %v2720 = vld [vmem:[%s2718 + $0x4] sm:$0xf]
        %v2721 = vld [vmem:[%s2718 + $0x8] sm:$0xf]
        %v2722 = vld [vmem:[%s2718 + $0xc] sm:$0xf]
        %s2723 = scalar_lea.vmem %s11, 1
        %v2724 = vld [vmem:[%s2723] sm:$0x1]
        %v2725 = vpack.c.bf16 %v2708, %v2707
        %v2726 = vpack.c.bf16 %v2710, %v2709
        %v2728 = vperm.slane %v2717, 0
        %v2734 = vunpack.c.l.b16 %v2712
        %v2735 = vunpack.c.l.b16 %v2713
        %v2736 = vunpack.c.l.b16 %v2714
        %v2737 = vunpack.c.l.b16 %v2715
        %v2738 = vpack.c.b16 %v2735, %v2734
        %v2739 = vpack.c.b16 %v2737, %v2736
        %v2743 = vsel %vm1264, %v2725, 0
        %v2746 = vsel %vm1264, %v2726, 0
        %2748 = vmatpush.bf16.msra.mxu0 0
        %2749 = vmatpush.bf16.msra.mxu0 0
        %2750 = vmatpush.bf16.msra.mxu0 0
        %2751 = vmatpush.bf16.msra.mxu0 0
        %2752 = vmatpush.bf16.msra.mxu0 0
        %2753 = vmatpush.bf16.msra.mxu0 0
        %2754 = vmatpush.bf16.msra.mxu0 %v2739
        %2755 = vmatpush.bf16.msra.mxu0 %v2738
        %2756 = vmatmul.bf16.gmra.mxu0 %v2743
        %v2757 = vpop.f32.mrf.mxu0
        %v2758 = vadd.f32 %v2728, %v2757
        %v2759 = vpop.f32.mrf.mxu0
        %v2760 = vadd.f32 %v2728, %v2759
        %2761 = vmatmul.bf16.gmra.mxu0 %v2746
        %v2762 = vpop.f32.mrf.mxu0
        %v2763 = vadd.f32 %v2728, %v2762
        %v2764 = vpop.f32.mrf.mxu0
        %v2765 = vadd.f32 %v2728, %v2764
        %2766 = vdwg.mxu0
        %2771 = vrot.lane.b32.xlu0 %v2758, 96
        %v2772 = vpop.permute.xlu0 %2771
        %2773 = vrot.lane.b32.xlu0 %v2760, 96
        %v2774 = vpop.permute.xlu0 %2773
        %2775 = vrot.lane.b32.xlu0 %v2763, 96
        %v2776 = vpop.permute.xlu0 %2775
        %2777 = vrot.lane.b32.xlu0 %v2765, 96
        %v2778 = vpop.permute.xlu0 %2777
        %v2779 = vsel %vm1545, %v2758, 0
        %v2781 = vsel %vm1545, %v2760, 0
        %v2783 = vsel %vm1545, %v2763, 0
        %v2785 = vsel %vm1545, %v2765, 0
        %v2787 = vsel %vm1545, %v2772, 0
        %v2789 = vsel %vm1545, %v2774, 0
        %v2791 = vsel %vm1545, %v2776, 0
        %v2793 = vsel %vm1545, %v2778, 0
        %2795 = vmatpush.xpose.msra.mxu0 0.0
        %2796 = vmatpush.xpose.msra.mxu0 0.0
        %2797 = vmatpush.xpose.msra.mxu0 0.0
        %2798 = vmatpush.xpose.msra.mxu0 0.0
        %2799 = vmatpush.xpose.msra.mxu0 0.0
        %2800 = vmatpush.xpose.msra.mxu0 0.0
        %2801 = vmatpush.xpose.msra.mxu0 0.0
        %2802 = vmatpush.xpose.msra.mxu0 0.0
        %2803 = vmatpush.xpose.msra.mxu0 0.0
        %2804 = vmatpush.xpose.msra.mxu0 0.0
        %2805 = vmatpush.xpose.msra.mxu0 0.0
        %2806 = vmatpush.xpose.msra.mxu0 0.0
        %2807 = vmatpush.xpose.msra.mxu0 %v2793
        %2808 = vmatpush.xpose.msra.mxu0 %v2791
        %2809 = vmatpush.xpose.msra.mxu0 %v2789
        %2810 = vmatpush.xpose.msra.mxu0 %v2787
        %2811 = vmatmul.f32.gmra.mxu0 %v2779
        %v2812 = vpop.f32.mrf.mxu0
        %v2813 = vadd.f32 0.0, %v2812
        %2814 = vmatmul.f32.gmra.mxu0 %v2781
        %v2815 = vpop.f32.mrf.mxu0
        %v2816 = vadd.f32 0.0, %v2815
        %2817 = vmatmul.f32.gmra.mxu0 %v2783
        %v2818 = vpop.f32.mrf.mxu0
        %v2819 = vadd.f32 0.0, %v2818
        %2820 = vmatmul.f32.gmra.mxu0 %v2785
        %v2821 = vpop.f32.mrf.mxu0
        %v2822 = vadd.f32 0.0, %v2821
        %2823 = vdwg.mxu0
        %v2824 = vmul.f32 %v2813, 0.35355338
        %v2825 = vmul.f32 %v2816, 0.35355338
        %v2826 = vmul.f32 %v2819, 0.35355338
        %v2827 = vmul.f32 %v2822, 0.35355338
        %v2828 = vsel %vm1532, %v2824, -1e+30
        %v2829 = vsel %vm1532, %v2825, -1e+30
        %v2830 = vsel %vm1532, %v2826, -1e+30
        %v2831 = vsel %vm1532, %v2827, -1e+30
        %v2832 = vsel %vm1264, %v2828, -inf
        %2833 = vmax.xlane.f32.xlu0 %v2832
        %v2834 = vpop.xlane.xlu0 %2833
        %v2835 = vsel %vm1264, %v2829, -inf
        %2836 = vmax.xlane.f32.xlu0 %v2835
        %v2837 = vpop.xlane.xlu0 %2836
        %v2838 = vsel %vm1264, %v2830, -inf
        %2839 = vmax.xlane.f32.xlu0 %v2838
        %v2840 = vpop.xlane.xlu0 %2839
        %v2841 = vsel %vm1264, %v2831, -inf
        %2842 = vmax.xlane.f32.xlu0 %v2841
        %v2843 = vpop.xlane.xlu0 %2842
        %v2844 = vsub.f32 %v2828, %v2834
        %v2845 = vsub.f32 %v2829, %v2837
        %v2846 = vsub.f32 %v2830, %v2840
        %v2847 = vsub.f32 %v2831, %v2843
        %v2848 = vmul.f32 %v2844, 1.442695
        %v2849 = vpow.pop %v2848
        %v2850 = vmul.f32 %v2845, 1.442695
        %v2851 = vpow.pop %v2850
        %v2852 = vmul.f32 %v2846, 1.442695
        %v2853 = vpow.pop %v2852
        %v2854 = vmul.f32 %v2847, 1.442695
        %v2855 = vpow.pop %v2854
        %v2856 = vsel %vm1264, %v2849, 0.0
        %2857 = vadd.xlane.f32.xlu0 %v2856
        %v2858 = vpop.xlane.xlu0 %2857
        %v2859 = vsel %vm1264, %v2851, 0.0
        %2860 = vadd.xlane.f32.xlu0 %v2859
        %v2861 = vpop.xlane.xlu0 %2860
        %v2862 = vsel %vm1264, %v2853, 0.0
        %2863 = vadd.xlane.f32.xlu0 %v2862
        %v2864 = vpop.xlane.xlu0 %2863
        %v2865 = vsel %vm1264, %v2855, 0.0
        %2866 = vadd.xlane.f32.xlu0 %v2865
        %v2867 = vpop.xlane.xlu0 %2866
        %v2868 = vrcp.pop %v2858
        %v2869 = vrcp.pop %v2861
        %v2870 = vrcp.pop %v2864
        %v2871 = vrcp.pop %v2867
        %v2872 = vmul.f32 %v2849, %v2868
        %v2873 = vmul.f32 %v2851, %v2869
        %v2874 = vmul.f32 %v2853, %v2870
        %v2875 = vmul.f32 %v2855, %v2871
        %2876 = vrot.lane.b32.xlu0 %v2758, 64
        %v2877 = vpop.permute.xlu0 %2876
        %2878 = vrot.lane.b32.xlu0 %v2760, 64
        %v2879 = vpop.permute.xlu0 %2878
        %2880 = vrot.lane.b32.xlu0 %v2763, 64
        %v2881 = vpop.permute.xlu0 %2880
        %2882 = vrot.lane.b32.xlu0 %v2765, 64
        %v2883 = vpop.permute.xlu0 %2882
        %v2889 = vsel %vm1264, %v2872, 0
        %v2892 = vsel %vm1264, %v2873, 0
        %v2895 = vsel %vm1264, %v2874, 0
        %v2898 = vsel %vm1264, %v2875, 0
        %2900 = vmatpush.msra.mxu0 0.0
        %2901 = vmatpush.msra.mxu0 0.0
        %2902 = vmatpush.msra.mxu0 0.0
        %2903 = vmatpush.msra.mxu0 0.0
        %2904 = vmatpush.msra.mxu0 0.0
        %2905 = vmatpush.msra.mxu0 0.0
        %2906 = vmatpush.msra.mxu0 0.0
        %2907 = vmatpush.msra.mxu0 0.0
        %2908 = vmatpush.msra.mxu0 0.0
        %2909 = vmatpush.msra.mxu0 0.0
        %2910 = vmatpush.msra.mxu0 0.0
        %2911 = vmatpush.msra.mxu0 0.0
        %2912 = vmatpush.msra.mxu0 %v2883
        %2913 = vmatpush.msra.mxu0 %v2881
        %2914 = vmatpush.msra.mxu0 %v2879
        %2915 = vmatpush.msra.mxu0 %v2877
        %2916 = vmatmul.f32.gmra.mxu0 %v2889
        %v2917 = vpop.f32.mrf.mxu0
        %v2918 = vadd.f32 0.0, %v2917
        %2919 = vmatmul.f32.gmra.mxu0 %v2892
        %v2920 = vpop.f32.mrf.mxu0
        %v2921 = vadd.f32 0.0, %v2920
        %2922 = vmatmul.f32.gmra.mxu0 %v2895
        %v2923 = vpop.f32.mrf.mxu0
        %v2924 = vadd.f32 0.0, %v2923
        %2925 = vmatmul.f32.gmra.mxu0 %v2898
        %v2926 = vpop.f32.mrf.mxu0
        %v2927 = vadd.f32 0.0, %v2926
        %2928 = vdwg.mxu0
        %2929 = vrot.lane.b32.xlu0 %v2758, 120
        %v2930 = vpop.permute.xlu0 %2929
        %2931 = vrot.lane.b32.xlu0 %v2760, 120
        %v2932 = vpop.permute.xlu0 %2931
        %2933 = vrot.lane.b32.xlu0 %v2763, 120
        %v2934 = vpop.permute.xlu0 %2933
        %2935 = vrot.lane.b32.xlu0 %v2765, 120
        %v2936 = vpop.permute.xlu0 %2935
        %2937 = vrot.lane.b32.xlu0 %v2758, 88
        %v2938 = vpop.permute.xlu0 %2937
        %2939 = vrot.lane.b32.xlu0 %v2760, 88
        %v2940 = vpop.permute.xlu0 %2939
        %2941 = vrot.lane.b32.xlu0 %v2763, 88
        %v2942 = vpop.permute.xlu0 %2941
        %2943 = vrot.lane.b32.xlu0 %v2765, 88
        %v2944 = vpop.permute.xlu0 %2943
        %v2945 = vsel %vm1545, %v2930, 0
        %v2947 = vsel %vm1545, %v2932, 0
        %v2949 = vsel %vm1545, %v2934, 0
        %v2951 = vsel %vm1545, %v2936, 0
        %v2953 = vsel %vm1545, %v2938, 0
        %v2955 = vsel %vm1545, %v2940, 0
        %v2957 = vsel %vm1545, %v2942, 0
        %v2959 = vsel %vm1545, %v2944, 0
        %2961 = vmatpush.xpose.msra.mxu0 0.0
        %2962 = vmatpush.xpose.msra.mxu0 0.0
        %2963 = vmatpush.xpose.msra.mxu0 0.0
        %2964 = vmatpush.xpose.msra.mxu0 0.0
        %2965 = vmatpush.xpose.msra.mxu0 0.0
        %2966 = vmatpush.xpose.msra.mxu0 0.0
        %2967 = vmatpush.xpose.msra.mxu0 0.0
        %2968 = vmatpush.xpose.msra.mxu0 0.0
        %2969 = vmatpush.xpose.msra.mxu0 0.0
        %2970 = vmatpush.xpose.msra.mxu0 0.0
        %2971 = vmatpush.xpose.msra.mxu0 0.0
        %2972 = vmatpush.xpose.msra.mxu0 0.0
        %2973 = vmatpush.xpose.msra.mxu0 %v2959
        %2974 = vmatpush.xpose.msra.mxu0 %v2957
        %2975 = vmatpush.xpose.msra.mxu0 %v2955
        %2976 = vmatpush.xpose.msra.mxu0 %v2953
        %2977 = vmatmul.f32.gmra.mxu0 %v2945
        %v2978 = vpop.f32.mrf.mxu0
        %v2979 = vadd.f32 0.0, %v2978
        %2980 = vmatmul.f32.gmra.mxu0 %v2947
        %v2981 = vpop.f32.mrf.mxu0
        %v2982 = vadd.f32 0.0, %v2981
        %2983 = vmatmul.f32.gmra.mxu0 %v2949
        %v2984 = vpop.f32.mrf.mxu0
        %v2985 = vadd.f32 0.0, %v2984
        %2986 = vmatmul.f32.gmra.mxu0 %v2951
        %v2987 = vpop.f32.mrf.mxu0
        %v2988 = vadd.f32 0.0, %v2987
        %2989 = vdwg.mxu0
        %v2990 = vmul.f32 %v2979, 0.35355338
        %v2991 = vmul.f32 %v2982, 0.35355338
        %v2992 = vmul.f32 %v2985, 0.35355338
        %v2993 = vmul.f32 %v2988, 0.35355338
        %v2994 = vsel %vm1532, %v2990, -1e+30
        %v2995 = vsel %vm1532, %v2991, -1e+30
        %v2996 = vsel %vm1532, %v2992, -1e+30
        %v2997 = vsel %vm1532, %v2993, -1e+30
        %v2998 = vsel %vm1264, %v2994, -inf
        %2999 = vmax.xlane.f32.xlu0 %v2998
        %v3000 = vpop.xlane.xlu0 %2999
        %v3001 = vsel %vm1264, %v2995, -inf
        %3002 = vmax.xlane.f32.xlu0 %v3001
        %v3003 = vpop.xlane.xlu0 %3002
        %v3004 = vsel %vm1264, %v2996, -inf
        %3005 = vmax.xlane.f32.xlu0 %v3004
        %v3006 = vpop.xlane.xlu0 %3005
        %v3007 = vsel %vm1264, %v2997, -inf
        %3008 = vmax.xlane.f32.xlu0 %v3007
        %v3009 = vpop.xlane.xlu0 %3008
        %v3010 = vsub.f32 %v2994, %v3000
        %v3011 = vsub.f32 %v2995, %v3003
        %v3012 = vsub.f32 %v2996, %v3006
        %v3013 = vsub.f32 %v2997, %v3009
        %v3014 = vmul.f32 %v3010, 1.442695
        %v3015 = vpow.pop %v3014
        %v3016 = vmul.f32 %v3011, 1.442695
        %v3017 = vpow.pop %v3016
        %v3018 = vmul.f32 %v3012, 1.442695
        %v3019 = vpow.pop %v3018
        %v3020 = vmul.f32 %v3013, 1.442695
        %v3021 = vpow.pop %v3020
        %v3022 = vsel %vm1264, %v3015, 0.0
        %3023 = vadd.xlane.f32.xlu0 %v3022
        %v3024 = vpop.xlane.xlu0 %3023
        %v3025 = vsel %vm1264, %v3017, 0.0
        %3026 = vadd.xlane.f32.xlu0 %v3025
        %v3027 = vpop.xlane.xlu0 %3026
        %v3028 = vsel %vm1264, %v3019, 0.0
        %3029 = vadd.xlane.f32.xlu0 %v3028
        %v3030 = vpop.xlane.xlu0 %3029
        %v3031 = vsel %vm1264, %v3021, 0.0
        %3032 = vadd.xlane.f32.xlu0 %v3031
        %v3033 = vpop.xlane.xlu0 %3032
        %v3034 = vrcp.pop %v3024
        %v3035 = vrcp.pop %v3027
        %v3036 = vrcp.pop %v3030
        %v3037 = vrcp.pop %v3033
        %v3038 = vmul.f32 %v3015, %v3034
        %v3039 = vmul.f32 %v3017, %v3035
        %v3040 = vmul.f32 %v3019, %v3036
        %v3041 = vmul.f32 %v3021, %v3037
        %3042 = vrot.lane.b32.xlu0 %v2758, 56
        %v3043 = vpop.permute.xlu0 %3042
        %3044 = vrot.lane.b32.xlu0 %v2760, 56
        %v3045 = vpop.permute.xlu0 %3044
        %3046 = vrot.lane.b32.xlu0 %v2763, 56
        %v3047 = vpop.permute.xlu0 %3046
        %3048 = vrot.lane.b32.xlu0 %v2765, 56
        %v3049 = vpop.permute.xlu0 %3048
        %v3055 = vsel %vm1264, %v3038, 0
        %v3058 = vsel %vm1264, %v3039, 0
        %v3061 = vsel %vm1264, %v3040, 0
        %v3064 = vsel %vm1264, %v3041, 0
        %3066 = vmatpush.msra.mxu0 0.0
        %3067 = vmatpush.msra.mxu0 0.0
        %3068 = vmatpush.msra.mxu0 0.0
        %3069 = vmatpush.msra.mxu0 0.0
        %3070 = vmatpush.msra.mxu0 0.0
        %3071 = vmatpush.msra.mxu0 0.0
        %3072 = vmatpush.msra.mxu0 0.0
        %3073 = vmatpush.msra.mxu0 0.0
        %3074 = vmatpush.msra.mxu0 0.0
        %3075 = vmatpush.msra.mxu0 0.0
        %3076 = vmatpush.msra.mxu0 0.0
        %3077 = vmatpush.msra.mxu0 0.0
        %3078 = vmatpush.msra.mxu0 %v3049
        %3079 = vmatpush.msra.mxu0 %v3047
        %3080 = vmatpush.msra.mxu0 %v3045
        %3081 = vmatpush.msra.mxu0 %v3043
        %3082 = vmatmul.f32.gmra.mxu0 %v3055
        %v3083 = vpop.f32.mrf.mxu0
        %v3084 = vadd.f32 0.0, %v3083
        %3085 = vmatmul.f32.gmra.mxu0 %v3058
        %v3086 = vpop.f32.mrf.mxu0
        %v3087 = vadd.f32 0.0, %v3086
        %3088 = vmatmul.f32.gmra.mxu0 %v3061
        %v3089 = vpop.f32.mrf.mxu0
        %v3090 = vadd.f32 0.0, %v3089
        %3091 = vmatmul.f32.gmra.mxu0 %v3064
        %v3092 = vpop.f32.mrf.mxu0
        %v3093 = vadd.f32 0.0, %v3092
        %3094 = vdwg.mxu0
        %3095 = vrot.lane.b32.xlu0 %v2758, 112
        %v3096 = vpop.permute.xlu0 %3095
        %3097 = vrot.lane.b32.xlu0 %v2760, 112
        %v3098 = vpop.permute.xlu0 %3097
        %3099 = vrot.lane.b32.xlu0 %v2763, 112
        %v3100 = vpop.permute.xlu0 %3099
        %3101 = vrot.lane.b32.xlu0 %v2765, 112
        %v3102 = vpop.permute.xlu0 %3101
        %3103 = vrot.lane.b32.xlu0 %v2758, 80
        %v3104 = vpop.permute.xlu0 %3103
        %3105 = vrot.lane.b32.xlu0 %v2760, 80
        %v3106 = vpop.permute.xlu0 %3105
        %3107 = vrot.lane.b32.xlu0 %v2763, 80
        %v3108 = vpop.permute.xlu0 %3107
        %3109 = vrot.lane.b32.xlu0 %v2765, 80
        %v3110 = vpop.permute.xlu0 %3109
        %v3111 = vsel %vm1545, %v3096, 0
        %v3113 = vsel %vm1545, %v3098, 0
        %v3115 = vsel %vm1545, %v3100, 0
        %v3117 = vsel %vm1545, %v3102, 0
        %v3119 = vsel %vm1545, %v3104, 0
        %v3121 = vsel %vm1545, %v3106, 0
        %v3123 = vsel %vm1545, %v3108, 0
        %v3125 = vsel %vm1545, %v3110, 0
        %3127 = vmatpush.xpose.msra.mxu0 0.0
        %3128 = vmatpush.xpose.msra.mxu0 0.0
        %3129 = vmatpush.xpose.msra.mxu0 0.0
        %3130 = vmatpush.xpose.msra.mxu0 0.0
        %3131 = vmatpush.xpose.msra.mxu0 0.0
        %3132 = vmatpush.xpose.msra.mxu0 0.0
        %3133 = vmatpush.xpose.msra.mxu0 0.0
        %3134 = vmatpush.xpose.msra.mxu0 0.0
        %3135 = vmatpush.xpose.msra.mxu0 0.0
        %3136 = vmatpush.xpose.msra.mxu0 0.0
        %3137 = vmatpush.xpose.msra.mxu0 0.0
        %3138 = vmatpush.xpose.msra.mxu0 0.0
        %3139 = vmatpush.xpose.msra.mxu0 %v3125
        %3140 = vmatpush.xpose.msra.mxu0 %v3123
        %3141 = vmatpush.xpose.msra.mxu0 %v3121
        %3142 = vmatpush.xpose.msra.mxu0 %v3119
        %3143 = vmatmul.f32.gmra.mxu0 %v3111
        %v3144 = vpop.f32.mrf.mxu0
        %v3145 = vadd.f32 0.0, %v3144
        %3146 = vmatmul.f32.gmra.mxu0 %v3113
        %v3147 = vpop.f32.mrf.mxu0
        %v3148 = vadd.f32 0.0, %v3147
        %3149 = vmatmul.f32.gmra.mxu0 %v3115
        %v3150 = vpop.f32.mrf.mxu0
        %v3151 = vadd.f32 0.0, %v3150
        %3152 = vmatmul.f32.gmra.mxu0 %v3117
        %v3153 = vpop.f32.mrf.mxu0
        %v3154 = vadd.f32 0.0, %v3153
        %3155 = vdwg.mxu0
        %v3156 = vmul.f32 %v3145, 0.35355338
        %v3157 = vmul.f32 %v3148, 0.35355338
        %v3158 = vmul.f32 %v3151, 0.35355338
        %v3159 = vmul.f32 %v3154, 0.35355338
        %v3160 = vsel %vm1532, %v3156, -1e+30
        %v3161 = vsel %vm1532, %v3157, -1e+30
        %v3162 = vsel %vm1532, %v3158, -1e+30
        %v3163 = vsel %vm1532, %v3159, -1e+30
        %v3164 = vsel %vm1264, %v3160, -inf
        %3165 = vmax.xlane.f32.xlu0 %v3164
        %v3166 = vpop.xlane.xlu0 %3165
        %v3167 = vsel %vm1264, %v3161, -inf
        %3168 = vmax.xlane.f32.xlu0 %v3167
        %v3169 = vpop.xlane.xlu0 %3168
        %v3170 = vsel %vm1264, %v3162, -inf
        %3171 = vmax.xlane.f32.xlu0 %v3170
        %v3172 = vpop.xlane.xlu0 %3171
        %v3173 = vsel %vm1264, %v3163, -inf
        %3174 = vmax.xlane.f32.xlu0 %v3173
        %v3175 = vpop.xlane.xlu0 %3174
        %v3176 = vsub.f32 %v3160, %v3166
        %v3177 = vsub.f32 %v3161, %v3169
        %v3178 = vsub.f32 %v3162, %v3172
        %v3179 = vsub.f32 %v3163, %v3175
        %v3180 = vmul.f32 %v3176, 1.442695
        %v3181 = vpow.pop %v3180
        %v3182 = vmul.f32 %v3177, 1.442695
        %v3183 = vpow.pop %v3182
        %v3184 = vmul.f32 %v3178, 1.442695
        %v3185 = vpow.pop %v3184
        %v3186 = vmul.f32 %v3179, 1.442695
        %v3187 = vpow.pop %v3186
        %v3188 = vsel %vm1264, %v3181, 0.0
        %3189 = vadd.xlane.f32.xlu0 %v3188
        %v3190 = vpop.xlane.xlu0 %3189
        %v3191 = vsel %vm1264, %v3183, 0.0
        %3192 = vadd.xlane.f32.xlu0 %v3191
        %v3193 = vpop.xlane.xlu0 %3192
        %v3194 = vsel %vm1264, %v3185, 0.0
        %3195 = vadd.xlane.f32.xlu0 %v3194
        %v3196 = vpop.xlane.xlu0 %3195
        %v3197 = vsel %vm1264, %v3187, 0.0
        %3198 = vadd.xlane.f32.xlu0 %v3197
        %v3199 = vpop.xlane.xlu0 %3198
        %v3200 = vrcp.pop %v3190
        %v3201 = vrcp.pop %v3193
        %v3202 = vrcp.pop %v3196
        %v3203 = vrcp.pop %v3199
        %v3204 = vmul.f32 %v3181, %v3200
        %v3205 = vmul.f32 %v3183, %v3201
        %v3206 = vmul.f32 %v3185, %v3202
        %v3207 = vmul.f32 %v3187, %v3203
        %3208 = vrot.lane.b32.xlu0 %v2758, 48
        %v3209 = vpop.permute.xlu0 %3208
        %3210 = vrot.lane.b32.xlu0 %v2760, 48
        %v3211 = vpop.permute.xlu0 %3210
        %3212 = vrot.lane.b32.xlu0 %v2763, 48
        %v3213 = vpop.permute.xlu0 %3212
        %3214 = vrot.lane.b32.xlu0 %v2765, 48
        %v3215 = vpop.permute.xlu0 %3214
        %v3221 = vsel %vm1264, %v3204, 0
        %v3224 = vsel %vm1264, %v3205, 0
        %v3227 = vsel %vm1264, %v3206, 0
        %v3230 = vsel %vm1264, %v3207, 0
        %3232 = vmatpush.msra.mxu0 0.0
        %3233 = vmatpush.msra.mxu0 0.0
        %3234 = vmatpush.msra.mxu0 0.0
        %3235 = vmatpush.msra.mxu0 0.0
        %3236 = vmatpush.msra.mxu0 0.0
        %3237 = vmatpush.msra.mxu0 0.0
        %3238 = vmatpush.msra.mxu0 0.0
        %3239 = vmatpush.msra.mxu0 0.0
        %3240 = vmatpush.msra.mxu0 0.0
        %3241 = vmatpush.msra.mxu0 0.0
        %3242 = vmatpush.msra.mxu0 0.0
        %3243 = vmatpush.msra.mxu0 0.0
        %3244 = vmatpush.msra.mxu0 %v3215
        %3245 = vmatpush.msra.mxu0 %v3213
        %3246 = vmatpush.msra.mxu0 %v3211
        %3247 = vmatpush.msra.mxu0 %v3209
        %3248 = vmatmul.f32.gmra.mxu0 %v3221
        %v3249 = vpop.f32.mrf.mxu0
        %v3250 = vadd.f32 0.0, %v3249
        %3251 = vmatmul.f32.gmra.mxu0 %v3224
        %v3252 = vpop.f32.mrf.mxu0
        %v3253 = vadd.f32 0.0, %v3252
        %3254 = vmatmul.f32.gmra.mxu0 %v3227
        %v3255 = vpop.f32.mrf.mxu0
        %v3256 = vadd.f32 0.0, %v3255
        %3257 = vmatmul.f32.gmra.mxu0 %v3230
        %v3258 = vpop.f32.mrf.mxu0
        %v3259 = vadd.f32 0.0, %v3258
        %3260 = vdwg.mxu0
        %3261 = vrot.lane.b32.xlu0 %v2758, 104
        %v3262 = vpop.permute.xlu0 %3261
        %3263 = vrot.lane.b32.xlu0 %v2760, 104
        %v3264 = vpop.permute.xlu0 %3263
        %3265 = vrot.lane.b32.xlu0 %v2763, 104
        %v3266 = vpop.permute.xlu0 %3265
        %3267 = vrot.lane.b32.xlu0 %v2765, 104
        %v3268 = vpop.permute.xlu0 %3267
        %3269 = vrot.lane.b32.xlu0 %v2758, 72
        %v3270 = vpop.permute.xlu0 %3269
        %3271 = vrot.lane.b32.xlu0 %v2760, 72
        %v3272 = vpop.permute.xlu0 %3271
        %3273 = vrot.lane.b32.xlu0 %v2763, 72
        %v3274 = vpop.permute.xlu0 %3273
        %3275 = vrot.lane.b32.xlu0 %v2765, 72
        %v3276 = vpop.permute.xlu0 %3275
        %v3277 = vsel %vm1545, %v3262, 0
        %v3279 = vsel %vm1545, %v3264, 0
        %v3281 = vsel %vm1545, %v3266, 0
        %v3283 = vsel %vm1545, %v3268, 0
        %v3285 = vsel %vm1545, %v3270, 0
        %v3287 = vsel %vm1545, %v3272, 0
        %v3289 = vsel %vm1545, %v3274, 0
        %v3291 = vsel %vm1545, %v3276, 0
        %3293 = vmatpush.xpose.msra.mxu0 0.0
        %3294 = vmatpush.xpose.msra.mxu0 0.0
        %3295 = vmatpush.xpose.msra.mxu0 0.0
        %3296 = vmatpush.xpose.msra.mxu0 0.0
        %3297 = vmatpush.xpose.msra.mxu0 0.0
        %3298 = vmatpush.xpose.msra.mxu0 0.0
        %3299 = vmatpush.xpose.msra.mxu0 0.0
        %3300 = vmatpush.xpose.msra.mxu0 0.0
        %3301 = vmatpush.xpose.msra.mxu0 0.0
        %3302 = vmatpush.xpose.msra.mxu0 0.0
        %3303 = vmatpush.xpose.msra.mxu0 0.0
        %3304 = vmatpush.xpose.msra.mxu0 0.0
        %3305 = vmatpush.xpose.msra.mxu0 %v3291
        %3306 = vmatpush.xpose.msra.mxu0 %v3289
        %3307 = vmatpush.xpose.msra.mxu0 %v3287
        %3308 = vmatpush.xpose.msra.mxu0 %v3285
        %3309 = vmatmul.f32.gmra.mxu0 %v3277
        %v3310 = vpop.f32.mrf.mxu0
        %v3311 = vadd.f32 0.0, %v3310
        %3312 = vmatmul.f32.gmra.mxu0 %v3279
        %v3313 = vpop.f32.mrf.mxu0
        %v3314 = vadd.f32 0.0, %v3313
        %3315 = vmatmul.f32.gmra.mxu0 %v3281
        %v3316 = vpop.f32.mrf.mxu0
        %v3317 = vadd.f32 0.0, %v3316
        %3318 = vmatmul.f32.gmra.mxu0 %v3283
        %v3319 = vpop.f32.mrf.mxu0
        %v3320 = vadd.f32 0.0, %v3319
        %3321 = vdwg.mxu0
        %v3322 = vmul.f32 %v3311, 0.35355338
        %v3323 = vmul.f32 %v3314, 0.35355338
        %v3324 = vmul.f32 %v3317, 0.35355338
        %v3325 = vmul.f32 %v3320, 0.35355338
        %v3326 = vsel %vm1532, %v3322, -1e+30
        %v3327 = vsel %vm1532, %v3323, -1e+30
        %v3328 = vsel %vm1532, %v3324, -1e+30
        %v3329 = vsel %vm1532, %v3325, -1e+30
        %v3330 = vsel %vm1264, %v3326, -inf
        %3331 = vmax.xlane.f32.xlu0 %v3330
        %v3332 = vpop.xlane.xlu0 %3331
        %v3333 = vsel %vm1264, %v3327, -inf
        %3334 = vmax.xlane.f32.xlu0 %v3333
        %v3335 = vpop.xlane.xlu0 %3334
        %v3336 = vsel %vm1264, %v3328, -inf
        %3337 = vmax.xlane.f32.xlu0 %v3336
        %v3338 = vpop.xlane.xlu0 %3337
        %v3339 = vsel %vm1264, %v3329, -inf
        %3340 = vmax.xlane.f32.xlu0 %v3339
        %v3341 = vpop.xlane.xlu0 %3340
        %v3342 = vsub.f32 %v3326, %v3332
        %v3343 = vsub.f32 %v3327, %v3335
        %v3344 = vsub.f32 %v3328, %v3338
        %v3345 = vsub.f32 %v3329, %v3341
        %v3346 = vmul.f32 %v3342, 1.442695
        %v3347 = vpow.pop %v3346
        %v3348 = vmul.f32 %v3343, 1.442695
        %v3349 = vpow.pop %v3348
        %v3350 = vmul.f32 %v3344, 1.442695
        %v3351 = vpow.pop %v3350
        %v3352 = vmul.f32 %v3345, 1.442695
        %v3353 = vpow.pop %v3352
        %v3354 = vsel %vm1264, %v3347, 0.0
        %3355 = vadd.xlane.f32.xlu0 %v3354
        %v3356 = vpop.xlane.xlu0 %3355
        %v3357 = vsel %vm1264, %v3349, 0.0
        %3358 = vadd.xlane.f32.xlu0 %v3357
        %v3359 = vpop.xlane.xlu0 %3358
        %v3360 = vsel %vm1264, %v3351, 0.0
        %3361 = vadd.xlane.f32.xlu0 %v3360
        %v3362 = vpop.xlane.xlu0 %3361
        %v3363 = vsel %vm1264, %v3353, 0.0
        %3364 = vadd.xlane.f32.xlu0 %v3363
        %v3365 = vpop.xlane.xlu0 %3364
        %v3366 = vrcp.pop %v3356
        %v3367 = vrcp.pop %v3359
        %v3368 = vrcp.pop %v3362
        %v3369 = vrcp.pop %v3365
        %v3370 = vmul.f32 %v3347, %v3366
        %v3371 = vmul.f32 %v3349, %v3367
        %v3372 = vmul.f32 %v3351, %v3368
        %v3373 = vmul.f32 %v3353, %v3369
        %3374 = vrot.lane.b32.xlu0 %v2758, 40
        %v3375 = vpop.permute.xlu0 %3374
        %3376 = vrot.lane.b32.xlu0 %v2760, 40
        %v3377 = vpop.permute.xlu0 %3376
        %3378 = vrot.lane.b32.xlu0 %v2763, 40
        %v3379 = vpop.permute.xlu0 %3378
        %3380 = vrot.lane.b32.xlu0 %v2765, 40
        %v3381 = vpop.permute.xlu0 %3380
        %v3387 = vsel %vm1264, %v3370, 0
        %v3390 = vsel %vm1264, %v3371, 0
        %v3393 = vsel %vm1264, %v3372, 0
        %v3396 = vsel %vm1264, %v3373, 0
        %3398 = vmatpush.msra.mxu0 0.0
        %3399 = vmatpush.msra.mxu0 0.0
        %3400 = vmatpush.msra.mxu0 0.0
        %3401 = vmatpush.msra.mxu0 0.0
        %3402 = vmatpush.msra.mxu0 0.0
        %3403 = vmatpush.msra.mxu0 0.0
        %3404 = vmatpush.msra.mxu0 0.0
        %3405 = vmatpush.msra.mxu0 0.0
        %3406 = vmatpush.msra.mxu0 0.0
        %3407 = vmatpush.msra.mxu0 0.0
        %3408 = vmatpush.msra.mxu0 0.0
        %3409 = vmatpush.msra.mxu0 0.0
        %3410 = vmatpush.msra.mxu0 %v3381
        %3411 = vmatpush.msra.mxu0 %v3379
        %3412 = vmatpush.msra.mxu0 %v3377
        %3413 = vmatpush.msra.mxu0 %v3375
        %3414 = vmatmul.f32.gmra.mxu0 %v3387
        %v3415 = vpop.f32.mrf.mxu0
        %v3416 = vadd.f32 0.0, %v3415
        %3417 = vmatmul.f32.gmra.mxu0 %v3390
        %v3418 = vpop.f32.mrf.mxu0
        %v3419 = vadd.f32 0.0, %v3418
        %3420 = vmatmul.f32.gmra.mxu0 %v3393
        %v3421 = vpop.f32.mrf.mxu0
        %v3422 = vadd.f32 0.0, %v3421
        %3423 = vmatmul.f32.gmra.mxu0 %v3396
        %v3424 = vpop.f32.mrf.mxu0
        %v3425 = vadd.f32 0.0, %v3424
        %3426 = vdwg.mxu0
        %3431 = vrot.lane.b32.xlu0 %v3084, 8
        %v3432 = vpop.permute.xlu0 %3431
        %3433 = vrot.lane.b32.xlu0 %v3087, 8
        %v3434 = vpop.permute.xlu0 %3433
        %3435 = vrot.lane.b32.xlu0 %v3090, 8
        %v3436 = vpop.permute.xlu0 %3435
        %3437 = vrot.lane.b32.xlu0 %v3093, 8
        %v3438 = vpop.permute.xlu0 %3437
        %3447 = vrot.lane.b32.xlu0 %v3250, 16
        %v3448 = vpop.permute.xlu0 %3447
        %3449 = vrot.lane.b32.xlu0 %v3253, 16
        %v3450 = vpop.permute.xlu0 %3449
        %3451 = vrot.lane.b32.xlu0 %v3256, 16
        %v3452 = vpop.permute.xlu0 %3451
        %3453 = vrot.lane.b32.xlu0 %v3259, 16
        %v3454 = vpop.permute.xlu0 %3453
        %3463 = vrot.lane.b32.xlu0 %v3416, 24
        %v3464 = vpop.permute.xlu0 %3463
        %3465 = vrot.lane.b32.xlu0 %v3419, 24
        %v3466 = vpop.permute.xlu0 %3465
        %3467 = vrot.lane.b32.xlu0 %v3422, 24
        %v3468 = vpop.permute.xlu0 %3467
        %3469 = vrot.lane.b32.xlu0 %v3425, 24
        %v3470 = vpop.permute.xlu0 %3469
        %v3475 = vsel %vm1545, %v2918, %v3432
        %v3476 = vsel %vm1545, %v2921, %v3434
        %v3477 = vsel %vm1545, %v2924, %v3436
        %v3478 = vsel %vm1545, %v2927, %v3438
        %v3479 = vsel %vm2246, %v3475, %v3448
        %v3480 = vsel %vm2246, %v3476, %v3450
        %v3481 = vsel %vm2246, %v3477, %v3452
        %v3482 = vsel %vm2246, %v3478, %v3454
        %v3483 = vsel %vm2251, %v3479, %v3464
        %v3484 = vsel %vm2251, %v3480, %v3466
        %v3485 = vsel %vm2251, %v3481, %v3468
        %v3486 = vsel %vm2251, %v3482, %v3470
        %v3487 = vpack.c.bf16 %v3484, %v3483
        %v3488 = vpack.c.bf16 %v3486, %v3485
        %v3490 = vperm.slane %v2724, 0
        %v3496 = vunpack.c.l.b16 %v2719
        %v3497 = vunpack.c.l.b16 %v2720
        %v3498 = vunpack.c.l.b16 %v2721
        %v3499 = vunpack.c.l.b16 %v2722
        %v3500 = vpack.c.b16 %v3497, %v3496
        %v3501 = vpack.c.b16 %v3499, %v3498
        %v3505 = vsel %vm1264, %v3487, 0
        %v3508 = vsel %vm1264, %v3488, 0
        %3510 = vmatpush.bf16.msra.mxu0 0
        %3511 = vmatpush.bf16.msra.mxu0 0
        %3512 = vmatpush.bf16.msra.mxu0 0
        %3513 = vmatpush.bf16.msra.mxu0 0
        %3514 = vmatpush.bf16.msra.mxu0 0
        %3515 = vmatpush.bf16.msra.mxu0 0
        %3516 = vmatpush.bf16.msra.mxu0 %v3501
        %3517 = vmatpush.bf16.msra.mxu0 %v3500
        %3518 = vmatmul.bf16.gmra.mxu0 %v3505
        %v3519 = vpop.f32.mrf.mxu0
        %v3520 = vadd.f32 %v3490, %v3519
        %v3521 = vpop.f32.mrf.mxu0
        %v3522 = vadd.f32 %v3490, %v3521
        %3523 = vmatmul.bf16.gmra.mxu0 %v3508
        %v3524 = vpop.f32.mrf.mxu0
        %v3525 = vadd.f32 %v3490, %v3524
        %v3526 = vpop.f32.mrf.mxu0
        %v3527 = vadd.f32 %v3490, %v3526
        %3528 = vdwg.mxu0
        %v3529 = vadd.f32 %v2601, %v3520
        %v3530 = vadd.f32 %v2602, %v3522
        %v3531 = vadd.f32 %v2603, %v3525
        %v3532 = vadd.f32 %v2604, %v3527
        %s3533 = scalar_lea.vmem %s21, 1
        %v3534 = vld [vmem:[%s3533] sm:$0x1]
        %s3535 = scalar_lea.vmem %s19, 1
        %v3536 = vld [vmem:[%s3535] sm:$0x1]
        %v3537 = vsel %vm1264, %v3529, 0.0
        %3538 = vadd.xlane.f32.xlu0 %v3537
        %v3539 = vpop.xlane.xlu0 %3538
        %v3540 = vsel %vm1264, %v3530, 0.0
        %3541 = vadd.xlane.f32.xlu0 %v3540
        %v3542 = vpop.xlane.xlu0 %3541
        %v3543 = vsel %vm1264, %v3531, 0.0
        %3544 = vadd.xlane.f32.xlu0 %v3543
        %v3545 = vpop.xlane.xlu0 %3544
        %v3546 = vsel %vm1264, %v3532, 0.0
        %3547 = vadd.xlane.f32.xlu0 %v3546
        %v3548 = vpop.xlane.xlu0 %3547
        %v3549 = vmul.f32 %v3539, %v1283
        %v3550 = vmul.f32 %v3542, %v1283
        %v3551 = vmul.f32 %v3545, %v1283
        %v3552 = vmul.f32 %v3548, %v1283
        %v3553 = vsub.f32 %v3529, %v3549
        %v3554 = vsub.f32 %v3530, %v3550
        %v3555 = vsub.f32 %v3531, %v3551
        %v3556 = vsub.f32 %v3532, %v3552
        %v3557 = vmul.f32 %v3553, %v3553
        %v3558 = vmul.f32 %v3554, %v3554
        %v3559 = vmul.f32 %v3555, %v3555
        %v3560 = vmul.f32 %v3556, %v3556
        %v3561 = vsel %vm1264, %v3557, 0.0
        %3562 = vadd.xlane.f32.xlu0 %v3561
        %v3563 = vpop.xlane.xlu0 %3562
        %v3564 = vsel %vm1264, %v3558, 0.0
        %3565 = vadd.xlane.f32.xlu0 %v3564
        %v3566 = vpop.xlane.xlu0 %3565
        %v3567 = vsel %vm1264, %v3559, 0.0
        %3568 = vadd.xlane.f32.xlu0 %v3567
        %v3569 = vpop.xlane.xlu0 %3568
        %v3570 = vsel %vm1264, %v3560, 0.0
        %3571 = vadd.xlane.f32.xlu0 %v3570
        %v3572 = vpop.xlane.xlu0 %3571
        %v3573 = vmul.f32 %v3563, %v1283
        %v3574 = vmul.f32 %v3566, %v1283
        %v3575 = vmul.f32 %v3569, %v1283
        %v3576 = vmul.f32 %v3572, %v1283
        %v3577 = vadd.f32 %v3573, 1e-05
        %v3578 = vadd.f32 %v3574, 1e-05
        %v3579 = vadd.f32 %v3575, 1e-05
        %v3580 = vadd.f32 %v3576, 1e-05
        %v3581 = vrsqrt.pop %v3577
        %v3582 = vmul.f32 %v3581, %v3577
        %v3583 = vmul.f32 %v3582, %v3581
        %v3584 = vmul.f32 0.5, %v3583
        %v3585 = vsub.f32 1.5, %v3584
        %v3586 = vmul.f32 %v3581, %v3585
        %vm3587 = vweird.f32 %v3577
        %vm3588 = vweird.f32 %v3581
        %vm3589 = vmor %vm3587, %vm3588
        %v3590 = vsel %vm3589, %v3581, %v3586
        %v3591 = vrsqrt.pop %v3578
        %v3592 = vmul.f32 %v3591, %v3578
        %v3593 = vmul.f32 %v3592, %v3591
        %v3594 = vmul.f32 0.5, %v3593
        %v3595 = vsub.f32 1.5, %v3594
        %v3596 = vmul.f32 %v3591, %v3595
        %vm3597 = vweird.f32 %v3578
        %vm3598 = vweird.f32 %v3591
        %vm3599 = vmor %vm3597, %vm3598
        %v3600 = vsel %vm3599, %v3591, %v3596
        %v3601 = vrsqrt.pop %v3579
        %v3602 = vmul.f32 %v3601, %v3579
        %v3603 = vmul.f32 %v3602, %v3601
        %v3604 = vmul.f32 0.5, %v3603
        %v3605 = vsub.f32 1.5, %v3604
        %v3606 = vmul.f32 %v3601, %v3605
        %vm3607 = vweird.f32 %v3579
        %vm3608 = vweird.f32 %v3601
        %vm3609 = vmor %vm3607, %vm3608
        %v3610 = vsel %vm3609, %v3601, %v3606
        %v3611 = vrsqrt.pop %v3580
        %v3612 = vmul.f32 %v3611, %v3580
        %v3613 = vmul.f32 %v3612, %v3611
        %v3614 = vmul.f32 0.5, %v3613
        %v3615 = vsub.f32 1.5, %v3614
        %v3616 = vmul.f32 %v3611, %v3615
        %vm3617 = vweird.f32 %v3580
        %vm3618 = vweird.f32 %v3611
        %vm3619 = vmor %vm3617, %vm3618
        %v3620 = vsel %vm3619, %v3611, %v3616
        %v3621 = vmul.f32 %v3553, %v3590
        %v3622 = vmul.f32 %v3554, %v3600
        %v3623 = vmul.f32 %v3555, %v3610
        %v3624 = vmul.f32 %v3556, %v3620
        %v3626 = vperm.slane %v3534, 0
        %v3628 = vmul.f32 %v3621, %v3626
        %v3629 = vmul.f32 %v3622, %v3626
        %v3630 = vmul.f32 %v3623, %v3626
        %v3631 = vmul.f32 %v3624, %v3626
        %v3633 = vperm.slane %v3536, 0
        %v3635 = vadd.f32 %v3628, %v3633
        %v3636 = vadd.f32 %v3629, %v3633
        %v3637 = vadd.f32 %v3630, %v3633
        %v3638 = vadd.f32 %v3631, %v3633
        %s3639 = scalar_lea.vmem %s29, 16
        %v3640 = vld [vmem:[%s3639] sm:$0xf]
        %v3641 = vld [vmem:[%s3639 + $0x4] sm:$0xf]
        %v3642 = vld [vmem:[%s3639 + $0x8] sm:$0xf]
        %v3643 = vld [vmem:[%s3639 + $0xc] sm:$0xf]
        %s3644 = scalar_lea.vmem %s5, 1
        %v3645 = vld [vmem:[%s3644] sm:$0x1]
        %s3646 = scalar_lea.vmem %s31, 32
        %v3647 = vld [vmem:[%s3646] sm:$0xf]
        %v3648 = vld [vmem:[%s3646 + $0x4] sm:$0xf]
        %v3649 = vld [vmem:[%s3646 + $0x8] sm:$0xf]
        %v3650 = vld [vmem:[%s3646 + $0xc] sm:$0xf]
        %v3651 = vld [vmem:[%s3646 + $0x10] sm:$0xf]
        %v3652 = vld [vmem:[%s3646 + $0x14] sm:$0xf]
        %v3653 = vld [vmem:[%s3646 + $0x18] sm:$0xf]
        %v3654 = vld [vmem:[%s3646 + $0x1c] sm:$0xf]
        %s3655 = scalar_lea.vmem %s7, 1
        %v3656 = vld [vmem:[%s3655] sm:$0x1]
        %v3657 = vpack.c.bf16 %v3636, %v3635
        %v3658 = vpack.c.bf16 %v3638, %v3637
        %v3660 = vperm.slane %v3645, 0
        %v3666 = vunpack.c.l.b16 %v3640
        %v3667 = vunpack.c.l.b16 %v3641
        %v3668 = vunpack.c.l.b16 %v3642
        %v3669 = vunpack.c.l.b16 %v3643
        %v3670 = vpack.c.b16 %v3667, %v3666
        %v3671 = vpack.c.b16 %v3669, %v3668
        %v3675 = vsel %vm1264, %v3657, 0
        %v3678 = vsel %vm1264, %v3658, 0
        %3680 = vmatpush.bf16.msra.mxu0 0
        %3681 = vmatpush.bf16.msra.mxu0 0
        %3682 = vmatpush.bf16.msra.mxu0 0
        %3683 = vmatpush.bf16.msra.mxu0 0
        %3684 = vmatpush.bf16.msra.mxu0 0
        %3685 = vmatpush.bf16.msra.mxu0 0
        %3686 = vmatpush.bf16.msra.mxu0 %v3671
        %3687 = vmatpush.bf16.msra.mxu0 %v3670
        %3688 = vmatmul.bf16.gmra.mxu0 %v3675
        %v3689 = vpop.f32.mrf.mxu0
        %v3690 = vadd.f32 %v3660, %v3689
        %v3691 = vpop.f32.mrf.mxu0
        %v3692 = vadd.f32 %v3660, %v3691
        %3693 = vmatmul.bf16.gmra.mxu0 %v3678
        %v3694 = vpop.f32.mrf.mxu0
        %v3695 = vadd.f32 %v3660, %v3694
        %v3696 = vpop.f32.mrf.mxu0
        %v3697 = vadd.f32 %v3660, %v3696
        %3698 = vdwg.mxu0
        %v3699 = vmul.f32 %v3690, 1.702
        %v3700 = vmul.f32 %v3692, 1.702
        %v3701 = vmul.f32 %v3695, 1.702
        %v3702 = vmul.f32 %v3697, 1.702
        %v3703 = vxor.u32 %v3699, 2147483648
        %v3704 = vxor.u32 %v3700, 2147483648
        %v3705 = vxor.u32 %v3701, 2147483648
        %v3706 = vxor.u32 %v3702, 2147483648
        %v3707 = vmul.f32 %v3703, 1.442695
        %v3708 = vpow.pop %v3707
        %v3709 = vmul.f32 %v3704, 1.442695
        %v3710 = vpow.pop %v3709
        %v3711 = vmul.f32 %v3705, 1.442695
        %v3712 = vpow.pop %v3711
        %v3713 = vmul.f32 %v3706, 1.442695
        %v3714 = vpow.pop %v3713
        %v3715 = vadd.f32 %v3708, 1.0
        %v3716 = vadd.f32 %v3710, 1.0
        %v3717 = vadd.f32 %v3712, 1.0
        %v3718 = vadd.f32 %v3714, 1.0
        %v3719 = vrcp.pop %v3715
        %v3720 = vmul.f32 %v3715, %v3719
        %v3721 = vsub.f32 1.0, %v3720
        %v3722 = vmul.f32 %v3719, %v3721
        %v3723 = vadd.f32 %v3719, %v3722
        %vm3724 = vweird.f32 %v3715
        %vm3725 = vweird.f32 %v3719
        %vm3726 = vmor %vm3724, %vm3725
        %v3727 = vsel %vm3726, %v3719, %v3723
        %v3728 = vand.u32 2147483647, %v3715
        %vm3729 = vcmp.eq.f32.partialorder %v3728, 8.507059e+37
        %v3730 = vand.u32 %v3715, 2147483648
        %v3731 = vor.u32 1.1754944e-38, %v3730
        %v3732 = vsel %vm3729, %v3731, %v3727
        %v3733 = vmul.f32 1.0, %v3732
        %v3734 = vrcp.pop %v3716
        %v3735 = vmul.f32 %v3716, %v3734
        %v3736 = vsub.f32 1.0, %v3735
        %v3737 = vmul.f32 %v3734, %v3736
        %v3738 = vadd.f32 %v3734, %v3737
        %vm3739 = vweird.f32 %v3716
        %vm3740 = vweird.f32 %v3734
        %vm3741 = vmor %vm3739, %vm3740
        %v3742 = vsel %vm3741, %v3734, %v3738
        %v3743 = vand.u32 2147483647, %v3716
        %vm3744 = vcmp.eq.f32.partialorder %v3743, 8.507059e+37
        %v3745 = vand.u32 %v3716, 2147483648
        %v3746 = vor.u32 1.1754944e-38, %v3745
        %v3747 = vsel %vm3744, %v3746, %v3742
        %v3748 = vmul.f32 1.0, %v3747
        %v3749 = vrcp.pop %v3717
        %v3750 = vmul.f32 %v3717, %v3749
        %v3751 = vsub.f32 1.0, %v3750
        %v3752 = vmul.f32 %v3749, %v3751
        %v3753 = vadd.f32 %v3749, %v3752
        %vm3754 = vweird.f32 %v3717
        %vm3755 = vweird.f32 %v3749
        %vm3756 = vmor %vm3754, %vm3755
        %v3757 = vsel %vm3756, %v3749, %v3753
        %v3758 = vand.u32 2147483647, %v3717
        %vm3759 = vcmp.eq.f32.partialorder %v3758, 8.507059e+37
        %v3760 = vand.u32 %v3717, 2147483648
        %v3761 = vor.u32 1.1754944e-38, %v3760
        %v3762 = vsel %vm3759, %v3761, %v3757
        %v3763 = vmul.f32 1.0, %v3762
        %v3764 = vrcp.pop %v3718
        %v3765 = vmul.f32 %v3718, %v3764
        %v3766 = vsub.f32 1.0, %v3765
        %v3767 = vmul.f32 %v3764, %v3766
        %v3768 = vadd.f32 %v3764, %v3767
        %vm3769 = vweird.f32 %v3718
        %vm3770 = vweird.f32 %v3764
        %vm3771 = vmor %vm3769, %vm3770
        %v3772 = vsel %vm3771, %v3764, %v3768
        %v3773 = vand.u32 2147483647, %v3718
        %vm3774 = vcmp.eq.f32.partialorder %v3773, 8.507059e+37
        %v3775 = vand.u32 %v3718, 2147483648
        %v3776 = vor.u32 1.1754944e-38, %v3775
        %v3777 = vsel %vm3774, %v3776, %v3772
        %v3778 = vmul.f32 1.0, %v3777
        %v3779 = vmul.f32 %v3690, %v3733
        %v3780 = vmul.f32 %v3692, %v3748
        %v3781 = vmul.f32 %v3695, %v3763
        %v3782 = vmul.f32 %v3697, %v3778
        %v3783 = vpack.c.bf16 %v3780, %v3779
        %v3784 = vpack.c.bf16 %v3782, %v3781
        %v3786 = vperm.slane %v3656, 0
        %v3796 = vunpack.c.l.b16 %v3647
        %v3797 = vunpack.c.l.b16 %v3648
        %v3798 = vunpack.c.l.b16 %v3649
        %v3799 = vunpack.c.l.b16 %v3650
        %v3800 = vunpack.c.l.b16 %v3651
        %v3801 = vunpack.c.l.b16 %v3652
        %v3802 = vunpack.c.l.b16 %v3653
        %v3803 = vunpack.c.l.b16 %v3654
        %v3804 = vpack.c.b16 %v3797, %v3796
        %v3805 = vpack.c.b16 %v3799, %v3798
        %v3806 = vpack.c.b16 %v3801, %v3800
        %v3807 = vpack.c.b16 %v3803, %v3802
        %v3813 = vsel %vm2575, %v3783, 0
        %v3816 = vsel %vm2575, %v3784, 0
        %3818 = vmatpush.bf16.msra.mxu0 0
        %3819 = vmatpush.bf16.msra.mxu0 0
        %3820 = vmatpush.bf16.msra.mxu0 0
        %3821 = vmatpush.bf16.msra.mxu0 0
        %3822 = vmatpush.bf16.msra.mxu0 %v3807
        %3823 = vmatpush.bf16.msra.mxu0 %v3806
        %3824 = vmatpush.bf16.msra.mxu0 %v3805
        %3825 = vmatpush.bf16.msra.mxu0 %v3804
        %3826 = vmatmul.bf16.gmra.mxu0 %v3813
        %v3827 = vpop.f32.mrf.mxu0
        %v3828 = vadd.f32 %v3786, %v3827
        %v3829 = vpop.f32.mrf.mxu0
        %v3830 = vadd.f32 %v3786, %v3829
        %3831 = vmatmul.bf16.gmra.mxu0 %v3816
        %v3832 = vpop.f32.mrf.mxu0
        %v3833 = vpop.f32.mrf.mxu0
        %3834 = vdwg.mxu0
        %v3835 = vadd.f32 %v3529, %v3828
        %v3836 = vadd.f32 %v3530, %v3830
        %v3837 = vld [vmem:[%s1200] sm:$0xff]
        %v3838 = vld [vmem:[%s1200 + $0x8] sm:$0xff]
        %v3839 = vld [vmem:[%s1200 + $0x10] sm:$0xff]
        %v3840 = vld [vmem:[%s1200 + $0x18] sm:$0xff]
        %v3841 = vld [vmem:[%s1200 + $0x20] sm:$0xff]
        %v3842 = vld [vmem:[%s1200 + $0x28] sm:$0xff]
        %v3843 = vld [vmem:[%s1200 + $0x30] sm:$0xff]
        %v3844 = vld [vmem:[%s1200 + $0x38] sm:$0xff]
        %v3845 = vld [vmem:[%s69] sm:$0xf]
        %v3846 = vld [vmem:[%s69 + $0x4] sm:$0xf]
        %v3847 = vld [vmem:[%s69 + $0x8] sm:$0xf]
        %v3848 = vld [vmem:[%s69 + $0xc] sm:$0xf]
        %v3849 = vld [vmem:[%s69 + $0x10] sm:$0xf]
        %v3850 = vld [vmem:[%s69 + $0x14] sm:$0xf]
        %v3851 = vpack.c.bf16 %v3838, %v3837
        %v3852 = vpack.c.bf16 %v3840, %v3839
        %v3853 = vpack.c.bf16 %v3842, %v3841
        %v3854 = vpack.c.bf16 %v3844, %v3843
        %v3855 = vld [vmem:[%s41] sm:$0xff]
        %v3856 = vld [vmem:[%s41 + $0x8] sm:$0xff]
        %v3857 = vld [vmem:[%s41 + $0x10] sm:$0xff]
        %v3858 = vld [vmem:[%s41 + $0x18] sm:$0xff]
        %v3859 = vld [vmem:[%s41 + $0x20] sm:$0xff]
        %v3860 = vld [vmem:[%s41 + $0x28] sm:$0xff]
        %v3861 = vld [vmem:[%s41 + $0x30] sm:$0xff]
        %v3862 = vld [vmem:[%s41 + $0x38] sm:$0xff]
        %v3869 = vunpack.c.l.b16 %v3845
        %v3870 = vunpack.c.l.b16 %v3846
        %v3871 = vunpack.c.l.b16 %v3847
        %v3872 = vunpack.c.l.b16 %v3848
        %v3873 = vunpack.c.l.b16 %v3849
        %v3874 = vunpack.c.l.b16 %v3850
        %v3875 = vpack.c.b16 %v3870, %v3869
        %v3876 = vpack.c.b16 %v3872, %v3871
        %v3877 = vpack.c.b16 %v3874, %v3873
        %v3882 = vsel %vm1236, %v3851, 0
        %v3885 = vsel %vm1236, %v3852, 0
        %v3888 = vsel %vm1236, %v3853, 0
        %v3891 = vsel %vm1236, %v3854, 0
        %3893 = vmatpush.bf16.msra.mxu0 0
        %3894 = vmatpush.bf16.msra.mxu0 0
        %3895 = vmatpush.bf16.msra.mxu0 0
        %3896 = vmatpush.bf16.msra.mxu0 0
        %3897 = vmatpush.bf16.msra.mxu0 0
        %3898 = vmatpush.bf16.msra.mxu0 %v3877
        %3899 = vmatpush.bf16.msra.mxu0 %v3876
        %3900 = vmatpush.bf16.msra.mxu0 %v3875
        %3901 = vmatmul.bf16.gmra.mxu0 %v3882
        %v3902 = vpop.f32.mrf.mxu0
        %v3903 = vadd.f32 %v3855, %v3902
        %v3904 = vpop.f32.mrf.mxu0
        %v3905 = vadd.f32 %v3856, %v3904
        %3906 = vmatmul.bf16.gmra.mxu0 %v3885
        %v3907 = vpop.f32.mrf.mxu0
        %v3908 = vadd.f32 %v3857, %v3907
        %v3909 = vpop.f32.mrf.mxu0
        %v3910 = vadd.f32 %v3858, %v3909
        %3911 = vmatmul.bf16.gmra.mxu0 %v3888
        %v3912 = vpop.f32.mrf.mxu0
        %v3913 = vadd.f32 %v3859, %v3912
        %v3914 = vpop.f32.mrf.mxu0
        %v3915 = vadd.f32 %v3860, %v3914
        %3916 = vmatmul.bf16.gmra.mxu0 %v3891
        %v3917 = vpop.f32.mrf.mxu0
        %v3918 = vadd.f32 %v3861, %v3917
        %v3919 = vpop.f32.mrf.mxu0
        %v3920 = vadd.f32 %v3862, %v3919
        %3921 = vdwg.mxu0
        %v3922 = vld [vmem:[%s53] sm:$0x1]
        %v3923 = vld [vmem:[%s51] sm:$0x1]
        %v3924 = vsel %vm1264, %v3903, 0.0
        %3925 = vadd.xlane.f32.xlu0 %v3924
        %v3926 = vpop.xlane.xlu0 %3925
        %v3927 = vsel %vm1264, %v3905, 0.0
        %3928 = vadd.xlane.f32.xlu0 %v3927
        %v3929 = vpop.xlane.xlu0 %3928
        %v3930 = vsel %vm1264, %v3908, 0.0
        %3931 = vadd.xlane.f32.xlu0 %v3930
        %v3932 = vpop.xlane.xlu0 %3931
        %v3933 = vsel %vm1264, %v3910, 0.0
        %3934 = vadd.xlane.f32.xlu0 %v3933
        %v3935 = vpop.xlane.xlu0 %3934
        %v3936 = vsel %vm1264, %v3913, 0.0
        %3937 = vadd.xlane.f32.xlu0 %v3936
        %v3938 = vpop.xlane.xlu0 %3937
        %v3939 = vsel %vm1264, %v3915, 0.0
        %3940 = vadd.xlane.f32.xlu0 %v3939
        %v3941 = vpop.xlane.xlu0 %3940
        %v3942 = vsel %vm1264, %v3918, 0.0
        %3943 = vadd.xlane.f32.xlu0 %v3942
        %v3944 = vpop.xlane.xlu0 %3943
        %v3945 = vsel %vm1264, %v3920, 0.0
        %3946 = vadd.xlane.f32.xlu0 %v3945
        %v3947 = vpop.xlane.xlu0 %3946
        %v3948 = vmul.f32 %v3926, %v1283
        %v3949 = vmul.f32 %v3929, %v1283
        %v3950 = vmul.f32 %v3932, %v1283
        %v3951 = vmul.f32 %v3935, %v1283
        %v3952 = vmul.f32 %v3938, %v1283
        %v3953 = vmul.f32 %v3941, %v1283
        %v3954 = vmul.f32 %v3944, %v1283
        %v3955 = vmul.f32 %v3947, %v1283
        %v3956 = vsub.f32 %v3903, %v3948
        %v3957 = vsub.f32 %v3905, %v3949
        %v3958 = vsub.f32 %v3908, %v3950
        %v3959 = vsub.f32 %v3910, %v3951
        %v3960 = vsub.f32 %v3913, %v3952
        %v3961 = vsub.f32 %v3915, %v3953
        %v3962 = vsub.f32 %v3918, %v3954
        %v3963 = vsub.f32 %v3920, %v3955
        %v3964 = vmul.f32 %v3956, %v3956
        %v3965 = vmul.f32 %v3957, %v3957
        %v3966 = vmul.f32 %v3958, %v3958
        %v3967 = vmul.f32 %v3959, %v3959
        %v3968 = vmul.f32 %v3960, %v3960
        %v3969 = vmul.f32 %v3961, %v3961
        %v3970 = vmul.f32 %v3962, %v3962
        %v3971 = vmul.f32 %v3963, %v3963
        %v3972 = vsel %vm1264, %v3964, 0.0
        %3973 = vadd.xlane.f32.xlu0 %v3972
        %v3974 = vpop.xlane.xlu0 %3973
        %v3975 = vsel %vm1264, %v3965, 0.0
        %3976 = vadd.xlane.f32.xlu0 %v3975
        %v3977 = vpop.xlane.xlu0 %3976
        %v3978 = vsel %vm1264, %v3966, 0.0
        %3979 = vadd.xlane.f32.xlu0 %v3978
        %v3980 = vpop.xlane.xlu0 %3979
        %v3981 = vsel %vm1264, %v3967, 0.0
        %3982 = vadd.xlane.f32.xlu0 %v3981
        %v3983 = vpop.xlane.xlu0 %3982
        %v3984 = vsel %vm1264, %v3968, 0.0
        %3985 = vadd.xlane.f32.xlu0 %v3984
        %v3986 = vpop.xlane.xlu0 %3985
        %v3987 = vsel %vm1264, %v3969, 0.0
        %3988 = vadd.xlane.f32.xlu0 %v3987
        %v3989 = vpop.xlane.xlu0 %3988
        %v3990 = vsel %vm1264, %v3970, 0.0
        %3991 = vadd.xlane.f32.xlu0 %v3990
        %v3992 = vpop.xlane.xlu0 %3991
        %v3993 = vsel %vm1264, %v3971, 0.0
        %3994 = vadd.xlane.f32.xlu0 %v3993
        %v3995 = vpop.xlane.xlu0 %3994
        %v3996 = vmul.f32 %v3974, %v1283
        %v3997 = vmul.f32 %v3977, %v1283
        %v3998 = vmul.f32 %v3980, %v1283
        %v3999 = vmul.f32 %v3983, %v1283
        %v4000 = vmul.f32 %v3986, %v1283
        %v4001 = vmul.f32 %v3989, %v1283
        %v4002 = vmul.f32 %v3992, %v1283
        %v4003 = vmul.f32 %v3995, %v1283
        %v4004 = vadd.f32 %v3996, 1e-06
        %v4005 = vadd.f32 %v3997, 1e-06
        %v4006 = vadd.f32 %v3998, 1e-06
        %v4007 = vadd.f32 %v3999, 1e-06
        %v4008 = vadd.f32 %v4000, 1e-06
        %v4009 = vadd.f32 %v4001, 1e-06
        %v4010 = vadd.f32 %v4002, 1e-06
        %v4011 = vadd.f32 %v4003, 1e-06
        %v4012 = vrsqrt.pop %v4004
        %v4013 = vmul.f32 %v4012, %v4004
        %v4014 = vmul.f32 %v4013, %v4012
        %v4015 = vmul.f32 0.5, %v4014
        %v4016 = vsub.f32 1.5, %v4015
        %v4017 = vmul.f32 %v4012, %v4016
        %vm4018 = vweird.f32 %v4004
        %vm4019 = vweird.f32 %v4012
        %vm4020 = vmor %vm4018, %vm4019
        %v4021 = vsel %vm4020, %v4012, %v4017
        %v4022 = vrsqrt.pop %v4005
        %v4023 = vmul.f32 %v4022, %v4005
        %v4024 = vmul.f32 %v4023, %v4022
        %v4025 = vmul.f32 0.5, %v4024
        %v4026 = vsub.f32 1.5, %v4025
        %v4027 = vmul.f32 %v4022, %v4026
        %vm4028 = vweird.f32 %v4005
        %vm4029 = vweird.f32 %v4022
        %vm4030 = vmor %vm4028, %vm4029
        %v4031 = vsel %vm4030, %v4022, %v4027
        %v4032 = vrsqrt.pop %v4006
        %v4033 = vmul.f32 %v4032, %v4006
        %v4034 = vmul.f32 %v4033, %v4032
        %v4035 = vmul.f32 0.5, %v4034
        %v4036 = vsub.f32 1.5, %v4035
        %v4037 = vmul.f32 %v4032, %v4036
        %vm4038 = vweird.f32 %v4006
        %vm4039 = vweird.f32 %v4032
        %vm4040 = vmor %vm4038, %vm4039
        %v4041 = vsel %vm4040, %v4032, %v4037
        %v4042 = vrsqrt.pop %v4007
        %v4043 = vmul.f32 %v4042, %v4007
        %v4044 = vmul.f32 %v4043, %v4042
        %v4045 = vmul.f32 0.5, %v4044
        %v4046 = vsub.f32 1.5, %v4045
        %v4047 = vmul.f32 %v4042, %v4046
        %vm4048 = vweird.f32 %v4007
        %vm4049 = vweird.f32 %v4042
        %vm4050 = vmor %vm4048, %vm4049
        %v4051 = vsel %vm4050, %v4042, %v4047
        %v4052 = vrsqrt.pop %v4008
        %v4053 = vmul.f32 %v4052, %v4008
        %v4054 = vmul.f32 %v4053, %v4052
        %v4055 = vmul.f32 0.5, %v4054
        %v4056 = vsub.f32 1.5, %v4055
        %v4057 = vmul.f32 %v4052, %v4056
        %vm4058 = vweird.f32 %v4008
        %vm4059 = vweird.f32 %v4052
        %vm4060 = vmor %vm4058, %vm4059
        %v4061 = vsel %vm4060, %v4052, %v4057
        %v4062 = vrsqrt.pop %v4009
        %v4063 = vmul.f32 %v4062, %v4009
        %v4064 = vmul.f32 %v4063, %v4062
        %v4065 = vmul.f32 0.5, %v4064
        %v4066 = vsub.f32 1.5, %v4065
        %v4067 = vmul.f32 %v4062, %v4066
        %vm4068 = vweird.f32 %v4009
        %vm4069 = vweird.f32 %v4062
        %vm4070 = vmor %vm4068, %vm4069
        %v4071 = vsel %vm4070, %v4062, %v4067
        %v4072 = vrsqrt.pop %v4010
        %v4073 = vmul.f32 %v4072, %v4010
        %v4074 = vmul.f32 %v4073, %v4072
        %v4075 = vmul.f32 0.5, %v4074
        %v4076 = vsub.f32 1.5, %v4075
        %v4077 = vmul.f32 %v4072, %v4076
        %vm4078 = vweird.f32 %v4010
        %vm4079 = vweird.f32 %v4072
        %vm4080 = vmor %vm4078, %vm4079
        %v4081 = vsel %vm4080, %v4072, %v4077
        %v4082 = vrsqrt.pop %v4011
        %v4083 = vmul.f32 %v4082, %v4011
        %v4084 = vmul.f32 %v4083, %v4082
        %v4085 = vmul.f32 0.5, %v4084
        %v4086 = vsub.f32 1.5, %v4085
        %v4087 = vmul.f32 %v4082, %v4086
        %vm4088 = vweird.f32 %v4011
        %vm4089 = vweird.f32 %v4082
        %vm4090 = vmor %vm4088, %vm4089
        %v4091 = vsel %vm4090, %v4082, %v4087
        %v4092 = vmul.f32 %v3956, %v4021
        %v4093 = vmul.f32 %v3957, %v4031
        %v4094 = vmul.f32 %v3958, %v4041
        %v4095 = vmul.f32 %v3959, %v4051
        %v4096 = vmul.f32 %v3960, %v4061
        %v4097 = vmul.f32 %v3961, %v4071
        %v4098 = vmul.f32 %v3962, %v4081
        %v4099 = vmul.f32 %v3963, %v4091
        %v4101 = vperm.slane %v3922, 0
        %v4103 = vmul.f32 %v4092, %v4101
        %v4104 = vmul.f32 %v4093, %v4101
        %v4105 = vmul.f32 %v4094, %v4101
        %v4106 = vmul.f32 %v4095, %v4101
        %v4107 = vmul.f32 %v4096, %v4101
        %v4108 = vmul.f32 %v4097, %v4101
        %v4109 = vmul.f32 %v4098, %v4101
        %v4110 = vmul.f32 %v4099, %v4101
        %v4112 = vperm.slane %v3923, 0
        %v4114 = vadd.f32 %v4103, %v4112
        %v4115 = vadd.f32 %v4104, %v4112
        %v4116 = vadd.f32 %v4105, %v4112
        %v4117 = vadd.f32 %v4106, %v4112
        %v4118 = vadd.f32 %v4107, %v4112
        %v4119 = vadd.f32 %v4108, %v4112
        %v4120 = vadd.f32 %v4109, %v4112
        %v4121 = vadd.f32 %v4110, %v4112
        %v4122 = vld [vmem:[%s77] sm:$0xf]
        %v4123 = vld [vmem:[%s77 + $0x4] sm:$0xf]
        %v4124 = vld [vmem:[%s77 + $0x8] sm:$0xf]
        %v4125 = vld [vmem:[%s77 + $0xc] sm:$0xf]
        %v4126 = vld [vmem:[%s45] sm:$0x1]
        %v4127 = vld [vmem:[%s75] sm:$0xf]
        %v4128 = vld [vmem:[%s75 + $0x4] sm:$0xf]
        %v4129 = vld [vmem:[%s75 + $0x8] sm:$0xf]
        %v4130 = vld [vmem:[%s75 + $0xc] sm:$0xf]
        %v4131 = vld [vmem:[%s43] sm:$0x1]
        %v4132 = vpack.c.bf16 %v4115, %v4114
        %v4133 = vpack.c.bf16 %v4117, %v4116
        %v4134 = vpack.c.bf16 %v4119, %v4118
        %v4135 = vpack.c.bf16 %v4121, %v4120
        %v4137 = vperm.slane %v4126, 0
        %v4143 = vunpack.c.l.b16 %v4122
        %v4144 = vunpack.c.l.b16 %v4123
        %v4145 = vunpack.c.l.b16 %v4124
        %v4146 = vunpack.c.l.b16 %v4125
        %v4147 = vpack.c.b16 %v4144, %v4143
        %v4148 = vpack.c.b16 %v4146, %v4145
        %v4152 = vsel %vm1264, %v4132, 0
        %v4155 = vsel %vm1264, %v4133, 0
        %v4158 = vsel %vm1264, %v4134, 0
        %v4161 = vsel %vm1264, %v4135, 0
        %4163 = vmatpush.bf16.msra.mxu0 0
        %4164 = vmatpush.bf16.msra.mxu0 0
        %4165 = vmatpush.bf16.msra.mxu0 0
        %4166 = vmatpush.bf16.msra.mxu0 0
        %4167 = vmatpush.bf16.msra.mxu0 0
        %4168 = vmatpush.bf16.msra.mxu0 0
        %4169 = vmatpush.bf16.msra.mxu0 %v4148
        %4170 = vmatpush.bf16.msra.mxu0 %v4147
        %4171 = vmatmul.bf16.gmra.mxu0 %v4152
        %v4172 = vpop.f32.mrf.mxu0
        %v4173 = vadd.f32 %v4137, %v4172
        %v4174 = vpop.f32.mrf.mxu0
        %v4175 = vadd.f32 %v4137, %v4174
        %4176 = vmatmul.bf16.gmra.mxu0 %v4155
        %v4177 = vpop.f32.mrf.mxu0
        %v4178 = vadd.f32 %v4137, %v4177
        %v4179 = vpop.f32.mrf.mxu0
        %v4180 = vadd.f32 %v4137, %v4179
        %4181 = vmatmul.bf16.gmra.mxu0 %v4158
        %v4182 = vpop.f32.mrf.mxu0
        %v4183 = vadd.f32 %v4137, %v4182
        %v4184 = vpop.f32.mrf.mxu0
        %v4185 = vadd.f32 %v4137, %v4184
        %4186 = vmatmul.bf16.gmra.mxu0 %v4161
        %v4187 = vpop.f32.mrf.mxu0
        %v4188 = vadd.f32 %v4137, %v4187
        %v4189 = vpop.f32.mrf.mxu0
        %v4190 = vadd.f32 %v4137, %v4189
        %4191 = vdwg.mxu0
        %4200 = vrot.lane.b32.xlu0 %v4173, 96
        %v4201 = vpop.permute.xlu0 %4200
        %4202 = vrot.lane.b32.xlu0 %v4175, 96
        %v4203 = vpop.permute.xlu0 %4202
        %4204 = vrot.lane.b32.xlu0 %v4178, 96
        %v4205 = vpop.permute.xlu0 %4204
        %4206 = vrot.lane.b32.xlu0 %v4180, 96
        %v4207 = vpop.permute.xlu0 %4206
        %4208 = vrot.lane.b32.xlu0 %v4183, 96
        %v4209 = vpop.permute.xlu0 %4208
        %4210 = vrot.lane.b32.xlu0 %v4185, 96
        %v4211 = vpop.permute.xlu0 %4210
        %4212 = vrot.lane.b32.xlu0 %v4188, 96
        %v4213 = vpop.permute.xlu0 %4212
        %4214 = vrot.lane.b32.xlu0 %v4190, 96
        %v4215 = vpop.permute.xlu0 %4214
        %v4216 = vsel %vm1545, %v4173, 0
        %v4218 = vsel %vm1545, %v4175, 0
        %v4220 = vsel %vm1545, %v4178, 0
        %v4222 = vsel %vm1545, %v4180, 0
        %v4224 = vsel %vm1545, %v4183, 0
        %v4226 = vsel %vm1545, %v4185, 0
        %v4228 = vsel %vm1545, %v4188, 0
        %v4230 = vsel %vm1545, %v4190, 0
        %v4232 = vsel %vm1545, %v4201, 0
        %v4234 = vsel %vm1545, %v4203, 0
        %v4236 = vsel %vm1545, %v4205, 0
        %v4238 = vsel %vm1545, %v4207, 0
        %v4240 = vsel %vm1545, %v4209, 0
        %v4242 = vsel %vm1545, %v4211, 0
        %v4244 = vsel %vm1545, %v4213, 0
        %v4246 = vsel %vm1545, %v4215, 0
        %4248 = vmatpush.xpose.msra.mxu0 0.0
        %4249 = vmatpush.xpose.msra.mxu0 0.0
        %4250 = vmatpush.xpose.msra.mxu0 0.0
        %4251 = vmatpush.xpose.msra.mxu0 0.0
        %4252 = vmatpush.xpose.msra.mxu0 0.0
        %4253 = vmatpush.xpose.msra.mxu0 0.0
        %4254 = vmatpush.xpose.msra.mxu0 0.0
        %4255 = vmatpush.xpose.msra.mxu0 0.0
        %4256 = vmatpush.xpose.msra.mxu0 %v4246
        %4257 = vmatpush.xpose.msra.mxu0 %v4244
        %4258 = vmatpush.xpose.msra.mxu0 %v4242
        %4259 = vmatpush.xpose.msra.mxu0 %v4240
        %4260 = vmatpush.xpose.msra.mxu0 %v4238
        %4261 = vmatpush.xpose.msra.mxu0 %v4236
        %4262 = vmatpush.xpose.msra.mxu0 %v4234
        %4263 = vmatpush.xpose.msra.mxu0 %v4232
        %4264 = vmatmul.f32.gmra.mxu0 %v4216
        %v4265 = vpop.f32.mrf.mxu0
        %v4266 = vadd.f32 0.0, %v4265
        %4267 = vmatmul.f32.gmra.mxu0 %v4218
        %v4268 = vpop.f32.mrf.mxu0
        %v4269 = vadd.f32 0.0, %v4268
        %4270 = vmatmul.f32.gmra.mxu0 %v4220
        %v4271 = vpop.f32.mrf.mxu0
        %v4272 = vadd.f32 0.0, %v4271
        %4273 = vmatmul.f32.gmra.mxu0 %v4222
        %v4274 = vpop.f32.mrf.mxu0
        %v4275 = vadd.f32 0.0, %v4274
        %4276 = vmatmul.f32.gmra.mxu0 %v4224
        %v4277 = vpop.f32.mrf.mxu0
        %v4278 = vadd.f32 0.0, %v4277
        %4279 = vmatmul.f32.gmra.mxu0 %v4226
        %v4280 = vpop.f32.mrf.mxu0
        %v4281 = vadd.f32 0.0, %v4280
        %4282 = vmatmul.f32.gmra.mxu0 %v4228
        %v4283 = vpop.f32.mrf.mxu0
        %v4284 = vadd.f32 0.0, %v4283
        %4285 = vmatmul.f32.gmra.mxu0 %v4230
        %v4286 = vpop.f32.mrf.mxu0
        %v4287 = vadd.f32 0.0, %v4286
        %4288 = vdwg.mxu0
        %v4289 = vmul.f32 %v4266, 0.35355338
        %v4290 = vmul.f32 %v4269, 0.35355338
        %v4291 = vmul.f32 %v4272, 0.35355338
        %v4292 = vmul.f32 %v4275, 0.35355338
        %v4293 = vmul.f32 %v4278, 0.35355338
        %v4294 = vmul.f32 %v4281, 0.35355338
        %v4295 = vmul.f32 %v4284, 0.35355338
        %v4296 = vmul.f32 %v4287, 0.35355338
        %v4297 = vsel %vm2575, %v4289, -inf
        %4298 = vmax.xlane.f32.xlu0 %v4297
        %v4299 = vpop.xlane.xlu0 %4298
        %v4300 = vsel %vm2575, %v4290, -inf
        %4301 = vmax.xlane.f32.xlu0 %v4300
        %v4302 = vpop.xlane.xlu0 %4301
        %v4303 = vsel %vm2575, %v4291, -inf
        %4304 = vmax.xlane.f32.xlu0 %v4303
        %v4305 = vpop.xlane.xlu0 %4304
        %v4306 = vsel %vm2575, %v4292, -inf
        %4307 = vmax.xlane.f32.xlu0 %v4306
        %v4308 = vpop.xlane.xlu0 %4307
        %v4309 = vsel %vm2575, %v4293, -inf
        %4310 = vmax.xlane.f32.xlu0 %v4309
        %v4311 = vpop.xlane.xlu0 %4310
        %v4312 = vsel %vm2575, %v4294, -inf
        %4313 = vmax.xlane.f32.xlu0 %v4312
        %v4314 = vpop.xlane.xlu0 %4313
        %v4315 = vsel %vm2575, %v4295, -inf
        %4316 = vmax.xlane.f32.xlu0 %v4315
        %v4317 = vpop.xlane.xlu0 %4316
        %v4318 = vsel %vm2575, %v4296, -inf
        %4319 = vmax.xlane.f32.xlu0 %v4318
        %v4320 = vpop.xlane.xlu0 %4319
        %v4321 = vsub.f32 %v4289, %v4299
        %v4322 = vsub.f32 %v4290, %v4302
        %v4323 = vsub.f32 %v4291, %v4305
        %v4324 = vsub.f32 %v4292, %v4308
        %v4325 = vsub.f32 %v4293, %v4311
        %v4326 = vsub.f32 %v4294, %v4314
        %v4327 = vsub.f32 %v4295, %v4317
        %v4328 = vsub.f32 %v4296, %v4320
        %v4329 = vmul.f32 %v4321, 1.442695
        %v4330 = vpow.pop %v4329
        %v4331 = vmul.f32 %v4322, 1.442695
        %v4332 = vpow.pop %v4331
        %v4333 = vmul.f32 %v4323, 1.442695
        %v4334 = vpow.pop %v4333
        %v4335 = vmul.f32 %v4324, 1.442695
        %v4336 = vpow.pop %v4335
        %v4337 = vmul.f32 %v4325, 1.442695
        %v4338 = vpow.pop %v4337
        %v4339 = vmul.f32 %v4326, 1.442695
        %v4340 = vpow.pop %v4339
        %v4341 = vmul.f32 %v4327, 1.442695
        %v4342 = vpow.pop %v4341
        %v4343 = vmul.f32 %v4328, 1.442695
        %v4344 = vpow.pop %v4343
        %v4345 = vsel %vm2575, %v4330, 0.0
        %4346 = vadd.xlane.f32.xlu0 %v4345
        %v4347 = vpop.xlane.xlu0 %4346
        %v4348 = vsel %vm2575, %v4332, 0.0
        %4349 = vadd.xlane.f32.xlu0 %v4348
        %v4350 = vpop.xlane.xlu0 %4349
        %v4351 = vsel %vm2575, %v4334, 0.0
        %4352 = vadd.xlane.f32.xlu0 %v4351
        %v4353 = vpop.xlane.xlu0 %4352
        %v4354 = vsel %vm2575, %v4336, 0.0
        %4355 = vadd.xlane.f32.xlu0 %v4354
        %v4356 = vpop.xlane.xlu0 %4355
        %v4357 = vsel %vm2575, %v4338, 0.0
        %4358 = vadd.xlane.f32.xlu0 %v4357
        %v4359 = vpop.xlane.xlu0 %4358
        %v4360 = vsel %vm2575, %v4340, 0.0
        %4361 = vadd.xlane.f32.xlu0 %v4360
        %v4362 = vpop.xlane.xlu0 %4361
        %v4363 = vsel %vm2575, %v4342, 0.0
        %4364 = vadd.xlane.f32.xlu0 %v4363
        %v4365 = vpop.xlane.xlu0 %4364
        %v4366 = vsel %vm2575, %v4344, 0.0
        %4367 = vadd.xlane.f32.xlu0 %v4366
        %v4368 = vpop.xlane.xlu0 %4367
        %v4369 = vrcp.pop %v4347
        %v4370 = vrcp.pop %v4350
        %v4371 = vrcp.pop %v4353
        %v4372 = vrcp.pop %v4356
        %v4373 = vrcp.pop %v4359
        %v4374 = vrcp.pop %v4362
        %v4375 = vrcp.pop %v4365
        %v4376 = vrcp.pop %v4368
        %v4377 = vmul.f32 %v4330, %v4369
        %v4378 = vmul.f32 %v4332, %v4370
        %v4379 = vmul.f32 %v4334, %v4371
        %v4380 = vmul.f32 %v4336, %v4372
        %v4381 = vmul.f32 %v4338, %v4373
        %v4382 = vmul.f32 %v4340, %v4374
        %v4383 = vmul.f32 %v4342, %v4375
        %v4384 = vmul.f32 %v4344, %v4376
        %4385 = vrot.lane.b32.xlu0 %v4173, 64
        %v4386 = vpop.permute.xlu0 %4385
        %4387 = vrot.lane.b32.xlu0 %v4175, 64
        %v4388 = vpop.permute.xlu0 %4387
        %4389 = vrot.lane.b32.xlu0 %v4178, 64
        %v4390 = vpop.permute.xlu0 %4389
        %4391 = vrot.lane.b32.xlu0 %v4180, 64
        %v4392 = vpop.permute.xlu0 %4391
        %4393 = vrot.lane.b32.xlu0 %v4183, 64
        %v4394 = vpop.permute.xlu0 %4393
        %4395 = vrot.lane.b32.xlu0 %v4185, 64
        %v4396 = vpop.permute.xlu0 %4395
        %4397 = vrot.lane.b32.xlu0 %v4188, 64
        %v4398 = vpop.permute.xlu0 %4397
        %4399 = vrot.lane.b32.xlu0 %v4190, 64
        %v4400 = vpop.permute.xlu0 %4399
        %v4410 = vsel %vm2575, %v4377, 0
        %v4413 = vsel %vm2575, %v4378, 0
        %v4416 = vsel %vm2575, %v4379, 0
        %v4419 = vsel %vm2575, %v4380, 0
        %v4422 = vsel %vm2575, %v4381, 0
        %v4425 = vsel %vm2575, %v4382, 0
        %v4428 = vsel %vm2575, %v4383, 0
        %v4431 = vsel %vm2575, %v4384, 0
        %4433 = vmatpush.msra.mxu0 0.0
        %4434 = vmatpush.msra.mxu0 0.0
        %4435 = vmatpush.msra.mxu0 0.0
        %4436 = vmatpush.msra.mxu0 0.0
        %4437 = vmatpush.msra.mxu0 0.0
        %4438 = vmatpush.msra.mxu0 0.0
        %4439 = vmatpush.msra.mxu0 0.0
        %4440 = vmatpush.msra.mxu0 0.0
        %4441 = vmatpush.msra.mxu0 %v4400
        %4442 = vmatpush.msra.mxu0 %v4398
        %4443 = vmatpush.msra.mxu0 %v4396
        %4444 = vmatpush.msra.mxu0 %v4394
        %4445 = vmatpush.msra.mxu0 %v4392
        %4446 = vmatpush.msra.mxu0 %v4390
        %4447 = vmatpush.msra.mxu0 %v4388
        %4448 = vmatpush.msra.mxu0 %v4386
        %4449 = vmatmul.f32.gmra.mxu0 %v4410
        %v4450 = vpop.f32.mrf.mxu0
        %v4451 = vadd.f32 0.0, %v4450
        %4452 = vmatmul.f32.gmra.mxu0 %v4413
        %v4453 = vpop.f32.mrf.mxu0
        %v4454 = vadd.f32 0.0, %v4453
        %4455 = vmatmul.f32.gmra.mxu0 %v4416
        %v4456 = vpop.f32.mrf.mxu0
        %v4457 = vadd.f32 0.0, %v4456
        %4458 = vmatmul.f32.gmra.mxu0 %v4419
        %v4459 = vpop.f32.mrf.mxu0
        %v4460 = vadd.f32 0.0, %v4459
        %4461 = vmatmul.f32.gmra.mxu0 %v4422
        %v4462 = vpop.f32.mrf.mxu0
        %v4463 = vadd.f32 0.0, %v4462
        %4464 = vmatmul.f32.gmra.mxu0 %v4425
        %v4465 = vpop.f32.mrf.mxu0
        %v4466 = vadd.f32 0.0, %v4465
        %4467 = vmatmul.f32.gmra.mxu0 %v4428
        %v4468 = vpop.f32.mrf.mxu0
        %v4469 = vadd.f32 0.0, %v4468
        %4470 = vmatmul.f32.gmra.mxu0 %v4431
        %v4471 = vpop.f32.mrf.mxu0
        %v4472 = vadd.f32 0.0, %v4471
        %4473 = vdwg.mxu0
        %4474 = vrot.lane.b32.xlu0 %v4173, 120
        %v4475 = vpop.permute.xlu0 %4474
        %4476 = vrot.lane.b32.xlu0 %v4175, 120
        %v4477 = vpop.permute.xlu0 %4476
        %4478 = vrot.lane.b32.xlu0 %v4178, 120
        %v4479 = vpop.permute.xlu0 %4478
        %4480 = vrot.lane.b32.xlu0 %v4180, 120
        %v4481 = vpop.permute.xlu0 %4480
        %4482 = vrot.lane.b32.xlu0 %v4183, 120
        %v4483 = vpop.permute.xlu0 %4482
        %4484 = vrot.lane.b32.xlu0 %v4185, 120
        %v4485 = vpop.permute.xlu0 %4484
        %4486 = vrot.lane.b32.xlu0 %v4188, 120
        %v4487 = vpop.permute.xlu0 %4486
        %4488 = vrot.lane.b32.xlu0 %v4190, 120
        %v4489 = vpop.permute.xlu0 %4488
        %4490 = vrot.lane.b32.xlu0 %v4173, 88
        %v4491 = vpop.permute.xlu0 %4490
        %4492 = vrot.lane.b32.xlu0 %v4175, 88
        %v4493 = vpop.permute.xlu0 %4492
        %4494 = vrot.lane.b32.xlu0 %v4178, 88
        %v4495 = vpop.permute.xlu0 %4494
        %4496 = vrot.lane.b32.xlu0 %v4180, 88
        %v4497 = vpop.permute.xlu0 %4496
        %4498 = vrot.lane.b32.xlu0 %v4183, 88
        %v4499 = vpop.permute.xlu0 %4498
        %4500 = vrot.lane.b32.xlu0 %v4185, 88
        %v4501 = vpop.permute.xlu0 %4500
        %4502 = vrot.lane.b32.xlu0 %v4188, 88
        %v4503 = vpop.permute.xlu0 %4502
        %4504 = vrot.lane.b32.xlu0 %v4190, 88
        %v4505 = vpop.permute.xlu0 %4504
        %v4506 = vsel %vm1545, %v4475, 0
        %v4508 = vsel %vm1545, %v4477, 0
        %v4510 = vsel %vm1545, %v4479, 0
        %v4512 = vsel %vm1545, %v4481, 0
        %v4514 = vsel %vm1545, %v4483, 0
        %v4516 = vsel %vm1545, %v4485, 0
        %v4518 = vsel %vm1545, %v4487, 0
        %v4520 = vsel %vm1545, %v4489, 0
        %v4522 = vsel %vm1545, %v4491, 0
        %v4524 = vsel %vm1545, %v4493, 0
        %v4526 = vsel %vm1545, %v4495, 0
        %v4528 = vsel %vm1545, %v4497, 0
        %v4530 = vsel %vm1545, %v4499, 0
        %v4532 = vsel %vm1545, %v4501, 0
        %v4534 = vsel %vm1545, %v4503, 0
        %v4536 = vsel %vm1545, %v4505, 0
        %4538 = vmatpush.xpose.msra.mxu0 0.0
        %4539 = vmatpush.xpose.msra.mxu0 0.0
        %4540 = vmatpush.xpose.msra.mxu0 0.0
        %4541 = vmatpush.xpose.msra.mxu0 0.0
        %4542 = vmatpush.xpose.msra.mxu0 0.0
        %4543 = vmatpush.xpose.msra.mxu0 0.0
        %4544 = vmatpush.xpose.msra.mxu0 0.0
        %4545 = vmatpush.xpose.msra.mxu0 0.0
        %4546 = vmatpush.xpose.msra.mxu0 %v4536
        %4547 = vmatpush.xpose.msra.mxu0 %v4534
        %4548 = vmatpush.xpose.msra.mxu0 %v4532
        %4549 = vmatpush.xpose.msra.mxu0 %v4530
        %4550 = vmatpush.xpose.msra.mxu0 %v4528
        %4551 = vmatpush.xpose.msra.mxu0 %v4526
        %4552 = vmatpush.xpose.msra.mxu0 %v4524
        %4553 = vmatpush.xpose.msra.mxu0 %v4522
        %4554 = vmatmul.f32.gmra.mxu0 %v4506
        %v4555 = vpop.f32.mrf.mxu0
        %v4556 = vadd.f32 0.0, %v4555
        %4557 = vmatmul.f32.gmra.mxu0 %v4508
        %v4558 = vpop.f32.mrf.mxu0
        %v4559 = vadd.f32 0.0, %v4558
        %4560 = vmatmul.f32.gmra.mxu0 %v4510
        %v4561 = vpop.f32.mrf.mxu0
        %v4562 = vadd.f32 0.0, %v4561
        %4563 = vmatmul.f32.gmra.mxu0 %v4512
        %v4564 = vpop.f32.mrf.mxu0
        %v4565 = vadd.f32 0.0, %v4564
        %4566 = vmatmul.f32.gmra.mxu0 %v4514
        %v4567 = vpop.f32.mrf.mxu0
        %v4568 = vadd.f32 0.0, %v4567
        %4569 = vmatmul.f32.gmra.mxu0 %v4516
        %v4570 = vpop.f32.mrf.mxu0
        %v4571 = vadd.f32 0.0, %v4570
        %4572 = vmatmul.f32.gmra.mxu0 %v4518
        %v4573 = vpop.f32.mrf.mxu0
        %v4574 = vadd.f32 0.0, %v4573
        %4575 = vmatmul.f32.gmra.mxu0 %v4520
        %v4576 = vpop.f32.mrf.mxu0
        %v4577 = vadd.f32 0.0, %v4576
        %4578 = vdwg.mxu0
        %v4579 = vmul.f32 %v4556, 0.35355338
        %v4580 = vmul.f32 %v4559, 0.35355338
        %v4581 = vmul.f32 %v4562, 0.35355338
        %v4582 = vmul.f32 %v4565, 0.35355338
        %v4583 = vmul.f32 %v4568, 0.35355338
        %v4584 = vmul.f32 %v4571, 0.35355338
        %v4585 = vmul.f32 %v4574, 0.35355338
        %v4586 = vmul.f32 %v4577, 0.35355338
        %v4587 = vsel %vm2575, %v4579, -inf
        %4588 = vmax.xlane.f32.xlu0 %v4587
        %v4589 = vpop.xlane.xlu0 %4588
        %v4590 = vsel %vm2575, %v4580, -inf
        %4591 = vmax.xlane.f32.xlu0 %v4590
        %v4592 = vpop.xlane.xlu0 %4591
        %v4593 = vsel %vm2575, %v4581, -inf
        %4594 = vmax.xlane.f32.xlu0 %v4593
        %v4595 = vpop.xlane.xlu0 %4594
        %v4596 = vsel %vm2575, %v4582, -inf
        %4597 = vmax.xlane.f32.xlu0 %v4596
        %v4598 = vpop.xlane.xlu0 %4597
        %v4599 = vsel %vm2575, %v4583, -inf
        %4600 = vmax.xlane.f32.xlu0 %v4599
        %v4601 = vpop.xlane.xlu0 %4600
        %v4602 = vsel %vm2575, %v4584, -inf
        %4603 = vmax.xlane.f32.xlu0 %v4602
        %v4604 = vpop.xlane.xlu0 %4603
        %v4605 = vsel %vm2575, %v4585, -inf
        %4606 = vmax.xlane.f32.xlu0 %v4605
        %v4607 = vpop.xlane.xlu0 %4606
        %v4608 = vsel %vm2575, %v4586, -inf
        %4609 = vmax.xlane.f32.xlu0 %v4608
        %v4610 = vpop.xlane.xlu0 %4609
        %v4611 = vsub.f32 %v4579, %v4589
        %v4612 = vsub.f32 %v4580, %v4592
        %v4613 = vsub.f32 %v4581, %v4595
        %v4614 = vsub.f32 %v4582, %v4598
        %v4615 = vsub.f32 %v4583, %v4601
        %v4616 = vsub.f32 %v4584, %v4604
        %v4617 = vsub.f32 %v4585, %v4607
        %v4618 = vsub.f32 %v4586, %v4610
        %v4619 = vmul.f32 %v4611, 1.442695
        %v4620 = vpow.pop %v4619
        %v4621 = vmul.f32 %v4612, 1.442695
        %v4622 = vpow.pop %v4621
        %v4623 = vmul.f32 %v4613, 1.442695
        %v4624 = vpow.pop %v4623
        %v4625 = vmul.f32 %v4614, 1.442695
        %v4626 = vpow.pop %v4625
        %v4627 = vmul.f32 %v4615, 1.442695
        %v4628 = vpow.pop %v4627
        %v4629 = vmul.f32 %v4616, 1.442695
        %v4630 = vpow.pop %v4629
        %v4631 = vmul.f32 %v4617, 1.442695
        %v4632 = vpow.pop %v4631
        %v4633 = vmul.f32 %v4618, 1.442695
        %v4634 = vpow.pop %v4633
        %v4635 = vsel %vm2575, %v4620, 0.0
        %4636 = vadd.xlane.f32.xlu0 %v4635
        %v4637 = vpop.xlane.xlu0 %4636
        %v4638 = vsel %vm2575, %v4622, 0.0
        %4639 = vadd.xlane.f32.xlu0 %v4638
        %v4640 = vpop.xlane.xlu0 %4639
        %v4641 = vsel %vm2575, %v4624, 0.0
        %4642 = vadd.xlane.f32.xlu0 %v4641
        %v4643 = vpop.xlane.xlu0 %4642
        %v4644 = vsel %vm2575, %v4626, 0.0
        %4645 = vadd.xlane.f32.xlu0 %v4644
        %v4646 = vpop.xlane.xlu0 %4645
        %v4647 = vsel %vm2575, %v4628, 0.0
        %4648 = vadd.xlane.f32.xlu0 %v4647
        %v4649 = vpop.xlane.xlu0 %4648
        %v4650 = vsel %vm2575, %v4630, 0.0
        %4651 = vadd.xlane.f32.xlu0 %v4650
        %v4652 = vpop.xlane.xlu0 %4651
        %v4653 = vsel %vm2575, %v4632, 0.0
        %4654 = vadd.xlane.f32.xlu0 %v4653
        %v4655 = vpop.xlane.xlu0 %4654
        %v4656 = vsel %vm2575, %v4634, 0.0
        %4657 = vadd.xlane.f32.xlu0 %v4656
        %v4658 = vpop.xlane.xlu0 %4657
        %v4659 = vrcp.pop %v4637
        %v4660 = vrcp.pop %v4640
        %v4661 = vrcp.pop %v4643
        %v4662 = vrcp.pop %v4646
        %v4663 = vrcp.pop %v4649
        %v4664 = vrcp.pop %v4652
        %v4665 = vrcp.pop %v4655
        %v4666 = vrcp.pop %v4658
        %v4667 = vmul.f32 %v4620, %v4659
        %v4668 = vmul.f32 %v4622, %v4660
        %v4669 = vmul.f32 %v4624, %v4661
        %v4670 = vmul.f32 %v4626, %v4662
        %v4671 = vmul.f32 %v4628, %v4663
        %v4672 = vmul.f32 %v4630, %v4664
        %v4673 = vmul.f32 %v4632, %v4665
        %v4674 = vmul.f32 %v4634, %v4666
        %4675 = vrot.lane.b32.xlu0 %v4173, 56
        %v4676 = vpop.permute.xlu0 %4675
        %4677 = vrot.lane.b32.xlu0 %v4175, 56
        %v4678 = vpop.permute.xlu0 %4677
        %4679 = vrot.lane.b32.xlu0 %v4178, 56
        %v4680 = vpop.permute.xlu0 %4679
        %4681 = vrot.lane.b32.xlu0 %v4180, 56
        %v4682 = vpop.permute.xlu0 %4681
        %4683 = vrot.lane.b32.xlu0 %v4183, 56
        %v4684 = vpop.permute.xlu0 %4683
        %4685 = vrot.lane.b32.xlu0 %v4185, 56
        %v4686 = vpop.permute.xlu0 %4685
        %4687 = vrot.lane.b32.xlu0 %v4188, 56
        %v4688 = vpop.permute.xlu0 %4687
        %4689 = vrot.lane.b32.xlu0 %v4190, 56
        %v4690 = vpop.permute.xlu0 %4689
        %v4700 = vsel %vm2575, %v4667, 0
        %v4703 = vsel %vm2575, %v4668, 0
        %v4706 = vsel %vm2575, %v4669, 0
        %v4709 = vsel %vm2575, %v4670, 0
        %v4712 = vsel %vm2575, %v4671, 0
        %v4715 = vsel %vm2575, %v4672, 0
        %v4718 = vsel %vm2575, %v4673, 0
        %v4721 = vsel %vm2575, %v4674, 0
        %4723 = vmatpush.msra.mxu0 0.0
        %4724 = vmatpush.msra.mxu0 0.0
        %4725 = vmatpush.msra.mxu0 0.0
        %4726 = vmatpush.msra.mxu0 0.0
        %4727 = vmatpush.msra.mxu0 0.0
        %4728 = vmatpush.msra.mxu0 0.0
        %4729 = vmatpush.msra.mxu0 0.0
        %4730 = vmatpush.msra.mxu0 0.0
        %4731 = vmatpush.msra.mxu0 %v4690
        %4732 = vmatpush.msra.mxu0 %v4688
        %4733 = vmatpush.msra.mxu0 %v4686
        %4734 = vmatpush.msra.mxu0 %v4684
        %4735 = vmatpush.msra.mxu0 %v4682
        %4736 = vmatpush.msra.mxu0 %v4680
        %4737 = vmatpush.msra.mxu0 %v4678
        %4738 = vmatpush.msra.mxu0 %v4676
        %4739 = vmatmul.f32.gmra.mxu0 %v4700
        %v4740 = vpop.f32.mrf.mxu0
        %v4741 = vadd.f32 0.0, %v4740
        %4742 = vmatmul.f32.gmra.mxu0 %v4703
        %v4743 = vpop.f32.mrf.mxu0
        %v4744 = vadd.f32 0.0, %v4743
        %4745 = vmatmul.f32.gmra.mxu0 %v4706
        %v4746 = vpop.f32.mrf.mxu0
        %v4747 = vadd.f32 0.0, %v4746
        %4748 = vmatmul.f32.gmra.mxu0 %v4709
        %v4749 = vpop.f32.mrf.mxu0
        %v4750 = vadd.f32 0.0, %v4749
        %4751 = vmatmul.f32.gmra.mxu0 %v4712
        %v4752 = vpop.f32.mrf.mxu0
        %v4753 = vadd.f32 0.0, %v4752
        %4754 = vmatmul.f32.gmra.mxu0 %v4715
        %v4755 = vpop.f32.mrf.mxu0
        %v4756 = vadd.f32 0.0, %v4755
        %4757 = vmatmul.f32.gmra.mxu0 %v4718
        %v4758 = vpop.f32.mrf.mxu0
        %v4759 = vadd.f32 0.0, %v4758
        %4760 = vmatmul.f32.gmra.mxu0 %v4721
        %v4761 = vpop.f32.mrf.mxu0
        %v4762 = vadd.f32 0.0, %v4761
        %4763 = vdwg.mxu0
        %4764 = vrot.lane.b32.xlu0 %v4173, 112
        %v4765 = vpop.permute.xlu0 %4764
        %4766 = vrot.lane.b32.xlu0 %v4175, 112
        %v4767 = vpop.permute.xlu0 %4766
        %4768 = vrot.lane.b32.xlu0 %v4178, 112
        %v4769 = vpop.permute.xlu0 %4768
        %4770 = vrot.lane.b32.xlu0 %v4180, 112
        %v4771 = vpop.permute.xlu0 %4770
        %4772 = vrot.lane.b32.xlu0 %v4183, 112
        %v4773 = vpop.permute.xlu0 %4772
        %4774 = vrot.lane.b32.xlu0 %v4185, 112
        %v4775 = vpop.permute.xlu0 %4774
        %4776 = vrot.lane.b32.xlu0 %v4188, 112
        %v4777 = vpop.permute.xlu0 %4776
        %4778 = vrot.lane.b32.xlu0 %v4190, 112
        %v4779 = vpop.permute.xlu0 %4778
        %4780 = vrot.lane.b32.xlu0 %v4173, 80
        %v4781 = vpop.permute.xlu0 %4780
        %4782 = vrot.lane.b32.xlu0 %v4175, 80
        %v4783 = vpop.permute.xlu0 %4782
        %4784 = vrot.lane.b32.xlu0 %v4178, 80
        %v4785 = vpop.permute.xlu0 %4784
        %4786 = vrot.lane.b32.xlu0 %v4180, 80
        %v4787 = vpop.permute.xlu0 %4786
        %4788 = vrot.lane.b32.xlu0 %v4183, 80
        %v4789 = vpop.permute.xlu0 %4788
        %4790 = vrot.lane.b32.xlu0 %v4185, 80
        %v4791 = vpop.permute.xlu0 %4790
        %4792 = vrot.lane.b32.xlu0 %v4188, 80
        %v4793 = vpop.permute.xlu0 %4792
        %4794 = vrot.lane.b32.xlu0 %v4190, 80
        %v4795 = vpop.permute.xlu0 %4794
        %v4796 = vsel %vm1545, %v4765, 0
        %v4798 = vsel %vm1545, %v4767, 0
        %v4800 = vsel %vm1545, %v4769, 0
        %v4802 = vsel %vm1545, %v4771, 0
        %v4804 = vsel %vm1545, %v4773, 0
        %v4806 = vsel %vm1545, %v4775, 0
        %v4808 = vsel %vm1545, %v4777, 0
        %v4810 = vsel %vm1545, %v4779, 0
        %v4812 = vsel %vm1545, %v4781, 0
        %v4814 = vsel %vm1545, %v4783, 0
        %v4816 = vsel %vm1545, %v4785, 0
        %v4818 = vsel %vm1545, %v4787, 0
        %v4820 = vsel %vm1545, %v4789, 0
        %v4822 = vsel %vm1545, %v4791, 0
        %v4824 = vsel %vm1545, %v4793, 0
        %v4826 = vsel %vm1545, %v4795, 0
        %4828 = vmatpush.xpose.msra.mxu0 0.0
        %4829 = vmatpush.xpose.msra.mxu0 0.0
        %4830 = vmatpush.xpose.msra.mxu0 0.0
        %4831 = vmatpush.xpose.msra.mxu0 0.0
        %4832 = vmatpush.xpose.msra.mxu0 0.0
        %4833 = vmatpush.xpose.msra.mxu0 0.0
        %4834 = vmatpush.xpose.msra.mxu0 0.0
        %4835 = vmatpush.xpose.msra.mxu0 0.0
        %4836 = vmatpush.xpose.msra.mxu0 %v4826
        %4837 = vmatpush.xpose.msra.mxu0 %v4824
        %4838 = vmatpush.xpose.msra.mxu0 %v4822
        %4839 = vmatpush.xpose.msra.mxu0 %v4820
        %4840 = vmatpush.xpose.msra.mxu0 %v4818
        %4841 = vmatpush.xpose.msra.mxu0 %v4816
        %4842 = vmatpush.xpose.msra.mxu0 %v4814
        %4843 = vmatpush.xpose.msra.mxu0 %v4812
        %4844 = vmatmul.f32.gmra.mxu0 %v4796
        %v4845 = vpop.f32.mrf.mxu0
        %v4846 = vadd.f32 0.0, %v4845
        %4847 = vmatmul.f32.gmra.mxu0 %v4798
        %v4848 = vpop.f32.mrf.mxu0
        %v4849 = vadd.f32 0.0, %v4848
        %4850 = vmatmul.f32.gmra.mxu0 %v4800
        %v4851 = vpop.f32.mrf.mxu0
        %v4852 = vadd.f32 0.0, %v4851
        %4853 = vmatmul.f32.gmra.mxu0 %v4802
        %v4854 = vpop.f32.mrf.mxu0
        %v4855 = vadd.f32 0.0, %v4854
        %4856 = vmatmul.f32.gmra.mxu0 %v4804
        %v4857 = vpop.f32.mrf.mxu0
        %v4858 = vadd.f32 0.0, %v4857
        %4859 = vmatmul.f32.gmra.mxu0 %v4806
        %v4860 = vpop.f32.mrf.mxu0
        %v4861 = vadd.f32 0.0, %v4860
        %4862 = vmatmul.f32.gmra.mxu0 %v4808
        %v4863 = vpop.f32.mrf.mxu0
        %v4864 = vadd.f32 0.0, %v4863
        %4865 = vmatmul.f32.gmra.mxu0 %v4810
        %v4866 = vpop.f32.mrf.mxu0
        %v4867 = vadd.f32 0.0, %v4866
        %4868 = vdwg.mxu0
        %v4869 = vmul.f32 %v4846, 0.35355338
        %v4870 = vmul.f32 %v4849, 0.35355338
        %v4871 = vmul.f32 %v4852, 0.35355338
        %v4872 = vmul.f32 %v4855, 0.35355338
        %v4873 = vmul.f32 %v4858, 0.35355338
        %v4874 = vmul.f32 %v4861, 0.35355338
        %v4875 = vmul.f32 %v4864, 0.35355338
        %v4876 = vmul.f32 %v4867, 0.35355338
        %v4877 = vsel %vm2575, %v4869, -inf
        %4878 = vmax.xlane.f32.xlu0 %v4877
        %v4879 = vpop.xlane.xlu0 %4878
        %v4880 = vsel %vm2575, %v4870, -inf
        %4881 = vmax.xlane.f32.xlu0 %v4880
        %v4882 = vpop.xlane.xlu0 %4881
        %v4883 = vsel %vm2575, %v4871, -inf
        %4884 = vmax.xlane.f32.xlu0 %v4883
        %v4885 = vpop.xlane.xlu0 %4884
        %v4886 = vsel %vm2575, %v4872, -inf
        %4887 = vmax.xlane.f32.xlu0 %v4886
        %v4888 = vpop.xlane.xlu0 %4887
        %v4889 = vsel %vm2575, %v4873, -inf
        %4890 = vmax.xlane.f32.xlu0 %v4889
        %v4891 = vpop.xlane.xlu0 %4890
        %v4892 = vsel %vm2575, %v4874, -inf
        %4893 = vmax.xlane.f32.xlu0 %v4892
        %v4894 = vpop.xlane.xlu0 %4893
        %v4895 = vsel %vm2575, %v4875, -inf
        %4896 = vmax.xlane.f32.xlu0 %v4895
        %v4897 = vpop.xlane.xlu0 %4896
        %v4898 = vsel %vm2575, %v4876, -inf
        %4899 = vmax.xlane.f32.xlu0 %v4898
        %v4900 = vpop.xlane.xlu0 %4899
        %v4901 = vsub.f32 %v4869, %v4879
        %v4902 = vsub.f32 %v4870, %v4882
        %v4903 = vsub.f32 %v4871, %v4885
        %v4904 = vsub.f32 %v4872, %v4888
        %v4905 = vsub.f32 %v4873, %v4891
        %v4906 = vsub.f32 %v4874, %v4894
        %v4907 = vsub.f32 %v4875, %v4897
        %v4908 = vsub.f32 %v4876, %v4900
        %v4909 = vmul.f32 %v4901, 1.442695
        %v4910 = vpow.pop %v4909
        %v4911 = vmul.f32 %v4902, 1.442695
        %v4912 = vpow.pop %v4911
        %v4913 = vmul.f32 %v4903, 1.442695
        %v4914 = vpow.pop %v4913
        %v4915 = vmul.f32 %v4904, 1.442695
        %v4916 = vpow.pop %v4915
        %v4917 = vmul.f32 %v4905, 1.442695
        %v4918 = vpow.pop %v4917
        %v4919 = vmul.f32 %v4906, 1.442695
        %v4920 = vpow.pop %v4919
        %v4921 = vmul.f32 %v4907, 1.442695
        %v4922 = vpow.pop %v4921
        %v4923 = vmul.f32 %v4908, 1.442695
        %v4924 = vpow.pop %v4923
        %v4925 = vsel %vm2575, %v4910, 0.0
        %4926 = vadd.xlane.f32.xlu0 %v4925
        %v4927 = vpop.xlane.xlu0 %4926
        %v4928 = vsel %vm2575, %v4912, 0.0
        %4929 = vadd.xlane.f32.xlu0 %v4928
        %v4930 = vpop.xlane.xlu0 %4929
        %v4931 = vsel %vm2575, %v4914, 0.0
        %4932 = vadd.xlane.f32.xlu0 %v4931
        %v4933 = vpop.xlane.xlu0 %4932
        %v4934 = vsel %vm2575, %v4916, 0.0
        %4935 = vadd.xlane.f32.xlu0 %v4934
        %v4936 = vpop.xlane.xlu0 %4935
        %v4937 = vsel %vm2575, %v4918, 0.0
        %4938 = vadd.xlane.f32.xlu0 %v4937
        %v4939 = vpop.xlane.xlu0 %4938
        %v4940 = vsel %vm2575, %v4920, 0.0
        %4941 = vadd.xlane.f32.xlu0 %v4940
        %v4942 = vpop.xlane.xlu0 %4941
        %v4943 = vsel %vm2575, %v4922, 0.0
        %4944 = vadd.xlane.f32.xlu0 %v4943
        %v4945 = vpop.xlane.xlu0 %4944
        %v4946 = vsel %vm2575, %v4924, 0.0
        %4947 = vadd.xlane.f32.xlu0 %v4946
        %v4948 = vpop.xlane.xlu0 %4947
        %v4949 = vrcp.pop %v4927
        %v4950 = vrcp.pop %v4930
        %v4951 = vrcp.pop %v4933
        %v4952 = vrcp.pop %v4936
        %v4953 = vrcp.pop %v4939
        %v4954 = vrcp.pop %v4942
        %v4955 = vrcp.pop %v4945
        %v4956 = vrcp.pop %v4948
        %v4957 = vmul.f32 %v4910, %v4949
        %v4958 = vmul.f32 %v4912, %v4950
        %v4959 = vmul.f32 %v4914, %v4951
        %v4960 = vmul.f32 %v4916, %v4952
        %v4961 = vmul.f32 %v4918, %v4953
        %v4962 = vmul.f32 %v4920, %v4954
        %v4963 = vmul.f32 %v4922, %v4955
        %v4964 = vmul.f32 %v4924, %v4956
        %4965 = vrot.lane.b32.xlu0 %v4173, 48
        %v4966 = vpop.permute.xlu0 %4965
        %4967 = vrot.lane.b32.xlu0 %v4175, 48
        %v4968 = vpop.permute.xlu0 %4967
        %4969 = vrot.lane.b32.xlu0 %v4178, 48
        %v4970 = vpop.permute.xlu0 %4969
        %4971 = vrot.lane.b32.xlu0 %v4180, 48
        %v4972 = vpop.permute.xlu0 %4971
        %4973 = vrot.lane.b32.xlu0 %v4183, 48
        %v4974 = vpop.permute.xlu0 %4973
        %4975 = vrot.lane.b32.xlu0 %v4185, 48
        %v4976 = vpop.permute.xlu0 %4975
        %4977 = vrot.lane.b32.xlu0 %v4188, 48
        %v4978 = vpop.permute.xlu0 %4977
        %4979 = vrot.lane.b32.xlu0 %v4190, 48
        %v4980 = vpop.permute.xlu0 %4979
        %v4990 = vsel %vm2575, %v4957, 0
        %v4993 = vsel %vm2575, %v4958, 0
        %v4996 = vsel %vm2575, %v4959, 0
        %v4999 = vsel %vm2575, %v4960, 0
        %v5002 = vsel %vm2575, %v4961, 0
        %v5005 = vsel %vm2575, %v4962, 0
        %v5008 = vsel %vm2575, %v4963, 0
        %v5011 = vsel %vm2575, %v4964, 0
        %5013 = vmatpush.msra.mxu0 0.0
        %5014 = vmatpush.msra.mxu0 0.0
        %5015 = vmatpush.msra.mxu0 0.0
        %5016 = vmatpush.msra.mxu0 0.0
        %5017 = vmatpush.msra.mxu0 0.0
        %5018 = vmatpush.msra.mxu0 0.0
        %5019 = vmatpush.msra.mxu0 0.0
        %5020 = vmatpush.msra.mxu0 0.0
        %5021 = vmatpush.msra.mxu0 %v4980
        %5022 = vmatpush.msra.mxu0 %v4978
        %5023 = vmatpush.msra.mxu0 %v4976
        %5024 = vmatpush.msra.mxu0 %v4974
        %5025 = vmatpush.msra.mxu0 %v4972
        %5026 = vmatpush.msra.mxu0 %v4970
        %5027 = vmatpush.msra.mxu0 %v4968
        %5028 = vmatpush.msra.mxu0 %v4966
        %5029 = vmatmul.f32.gmra.mxu0 %v4990
        %v5030 = vpop.f32.mrf.mxu0
        %v5031 = vadd.f32 0.0, %v5030
        %5032 = vmatmul.f32.gmra.mxu0 %v4993
        %v5033 = vpop.f32.mrf.mxu0
        %v5034 = vadd.f32 0.0, %v5033
        %5035 = vmatmul.f32.gmra.mxu0 %v4996
        %v5036 = vpop.f32.mrf.mxu0
        %v5037 = vadd.f32 0.0, %v5036
        %5038 = vmatmul.f32.gmra.mxu0 %v4999
        %v5039 = vpop.f32.mrf.mxu0
        %v5040 = vadd.f32 0.0, %v5039
        %5041 = vmatmul.f32.gmra.mxu0 %v5002
        %v5042 = vpop.f32.mrf.mxu0
        %v5043 = vadd.f32 0.0, %v5042
        %5044 = vmatmul.f32.gmra.mxu0 %v5005
        %v5045 = vpop.f32.mrf.mxu0
        %v5046 = vadd.f32 0.0, %v5045
        %5047 = vmatmul.f32.gmra.mxu0 %v5008
        %v5048 = vpop.f32.mrf.mxu0
        %v5049 = vadd.f32 0.0, %v5048
        %5050 = vmatmul.f32.gmra.mxu0 %v5011
        %v5051 = vpop.f32.mrf.mxu0
        %v5052 = vadd.f32 0.0, %v5051
        %5053 = vdwg.mxu0
        %5054 = vrot.lane.b32.xlu0 %v4173, 104
        %v5055 = vpop.permute.xlu0 %5054
        %5056 = vrot.lane.b32.xlu0 %v4175, 104
        %v5057 = vpop.permute.xlu0 %5056
        %5058 = vrot.lane.b32.xlu0 %v4178, 104
        %v5059 = vpop.permute.xlu0 %5058
        %5060 = vrot.lane.b32.xlu0 %v4180, 104
        %v5061 = vpop.permute.xlu0 %5060
        %5062 = vrot.lane.b32.xlu0 %v4183, 104
        %v5063 = vpop.permute.xlu0 %5062
        %5064 = vrot.lane.b32.xlu0 %v4185, 104
        %v5065 = vpop.permute.xlu0 %5064
        %5066 = vrot.lane.b32.xlu0 %v4188, 104
        %v5067 = vpop.permute.xlu0 %5066
        %5068 = vrot.lane.b32.xlu0 %v4190, 104
        %v5069 = vpop.permute.xlu0 %5068
        %5070 = vrot.lane.b32.xlu0 %v4173, 72
        %v5071 = vpop.permute.xlu0 %5070
        %5072 = vrot.lane.b32.xlu0 %v4175, 72
        %v5073 = vpop.permute.xlu0 %5072
        %5074 = vrot.lane.b32.xlu0 %v4178, 72
        %v5075 = vpop.permute.xlu0 %5074
        %5076 = vrot.lane.b32.xlu0 %v4180, 72
        %v5077 = vpop.permute.xlu0 %5076
        %5078 = vrot.lane.b32.xlu0 %v4183, 72
        %v5079 = vpop.permute.xlu0 %5078
        %5080 = vrot.lane.b32.xlu0 %v4185, 72
        %v5081 = vpop.permute.xlu0 %5080
        %5082 = vrot.lane.b32.xlu0 %v4188, 72
        %v5083 = vpop.permute.xlu0 %5082
        %5084 = vrot.lane.b32.xlu0 %v4190, 72
        %v5085 = vpop.permute.xlu0 %5084
        %v5086 = vsel %vm1545, %v5055, 0
        %v5088 = vsel %vm1545, %v5057, 0
        %v5090 = vsel %vm1545, %v5059, 0
        %v5092 = vsel %vm1545, %v5061, 0
        %v5094 = vsel %vm1545, %v5063, 0
        %v5096 = vsel %vm1545, %v5065, 0
        %v5098 = vsel %vm1545, %v5067, 0
        %v5100 = vsel %vm1545, %v5069, 0
        %v5102 = vsel %vm1545, %v5071, 0
        %v5104 = vsel %vm1545, %v5073, 0
        %v5106 = vsel %vm1545, %v5075, 0
        %v5108 = vsel %vm1545, %v5077, 0
        %v5110 = vsel %vm1545, %v5079, 0
        %v5112 = vsel %vm1545, %v5081, 0
        %v5114 = vsel %vm1545, %v5083, 0
        %v5116 = vsel %vm1545, %v5085, 0
        %5118 = vmatpush.xpose.msra.mxu0 0.0
        %5119 = vmatpush.xpose.msra.mxu0 0.0
        %5120 = vmatpush.xpose.msra.mxu0 0.0
        %5121 = vmatpush.xpose.msra.mxu0 0.0
        %5122 = vmatpush.xpose.msra.mxu0 0.0
        %5123 = vmatpush.xpose.msra.mxu0 0.0
        %5124 = vmatpush.xpose.msra.mxu0 0.0
        %5125 = vmatpush.xpose.msra.mxu0 0.0
        %5126 = vmatpush.xpose.msra.mxu0 %v5116
        %5127 = vmatpush.xpose.msra.mxu0 %v5114
        %5128 = vmatpush.xpose.msra.mxu0 %v5112
        %5129 = vmatpush.xpose.msra.mxu0 %v5110
        %5130 = vmatpush.xpose.msra.mxu0 %v5108
        %5131 = vmatpush.xpose.msra.mxu0 %v5106
        %5132 = vmatpush.xpose.msra.mxu0 %v5104
        %5133 = vmatpush.xpose.msra.mxu0 %v5102
        %5134 = vmatmul.f32.gmra.mxu0 %v5086
        %v5135 = vpop.f32.mrf.mxu0
        %v5136 = vadd.f32 0.0, %v5135
        %5137 = vmatmul.f32.gmra.mxu0 %v5088
        %v5138 = vpop.f32.mrf.mxu0
        %v5139 = vadd.f32 0.0, %v5138
        %5140 = vmatmul.f32.gmra.mxu0 %v5090
        %v5141 = vpop.f32.mrf.mxu0
        %v5142 = vadd.f32 0.0, %v5141
        %5143 = vmatmul.f32.gmra.mxu0 %v5092
        %v5144 = vpop.f32.mrf.mxu0
        %v5145 = vadd.f32 0.0, %v5144
        %5146 = vmatmul.f32.gmra.mxu0 %v5094
        %v5147 = vpop.f32.mrf.mxu0
        %v5148 = vadd.f32 0.0, %v5147
        %5149 = vmatmul.f32.gmra.mxu0 %v5096
        %v5150 = vpop.f32.mrf.mxu0
        %v5151 = vadd.f32 0.0, %v5150
        %5152 = vmatmul.f32.gmra.mxu0 %v5098
        %v5153 = vpop.f32.mrf.mxu0
        %v5154 = vadd.f32 0.0, %v5153
        %5155 = vmatmul.f32.gmra.mxu0 %v5100
        %v5156 = vpop.f32.mrf.mxu0
        %v5157 = vadd.f32 0.0, %v5156
        %5158 = vdwg.mxu0
        %v5159 = vmul.f32 %v5136, 0.35355338
        %v5160 = vmul.f32 %v5139, 0.35355338
        %v5161 = vmul.f32 %v5142, 0.35355338
        %v5162 = vmul.f32 %v5145, 0.35355338
        %v5163 = vmul.f32 %v5148, 0.35355338
        %v5164 = vmul.f32 %v5151, 0.35355338
        %v5165 = vmul.f32 %v5154, 0.35355338
        %v5166 = vmul.f32 %v5157, 0.35355338
        %v5167 = vsel %vm2575, %v5159, -inf
        %5168 = vmax.xlane.f32.xlu0 %v5167
        %v5169 = vpop.xlane.xlu0 %5168
        %v5170 = vsel %vm2575, %v5160, -inf
        %5171 = vmax.xlane.f32.xlu0 %v5170
        %v5172 = vpop.xlane.xlu0 %5171
        %v5173 = vsel %vm2575, %v5161, -inf
        %5174 = vmax.xlane.f32.xlu0 %v5173
        %v5175 = vpop.xlane.xlu0 %5174
        %v5176 = vsel %vm2575, %v5162, -inf
        %5177 = vmax.xlane.f32.xlu0 %v5176
        %v5178 = vpop.xlane.xlu0 %5177
        %v5179 = vsel %vm2575, %v5163, -inf
        %5180 = vmax.xlane.f32.xlu0 %v5179
        %v5181 = vpop.xlane.xlu0 %5180
        %v5182 = vsel %vm2575, %v5164, -inf
        %5183 = vmax.xlane.f32.xlu0 %v5182
        %v5184 = vpop.xlane.xlu0 %5183
        %v5185 = vsel %vm2575, %v5165, -inf
        %5186 = vmax.xlane.f32.xlu0 %v5185
        %v5187 = vpop.xlane.xlu0 %5186
        %v5188 = vsel %vm2575, %v5166, -inf
        %5189 = vmax.xlane.f32.xlu0 %v5188
        %v5190 = vpop.xlane.xlu0 %5189
        %v5191 = vsub.f32 %v5159, %v5169
        %v5192 = vsub.f32 %v5160, %v5172
        %v5193 = vsub.f32 %v5161, %v5175
        %v5194 = vsub.f32 %v5162, %v5178
        %v5195 = vsub.f32 %v5163, %v5181
        %v5196 = vsub.f32 %v5164, %v5184
        %v5197 = vsub.f32 %v5165, %v5187
        %v5198 = vsub.f32 %v5166, %v5190
        %v5199 = vmul.f32 %v5191, 1.442695
        %v5200 = vpow.pop %v5199
        %v5201 = vmul.f32 %v5192, 1.442695
        %v5202 = vpow.pop %v5201
        %v5203 = vmul.f32 %v5193, 1.442695
        %v5204 = vpow.pop %v5203
        %v5205 = vmul.f32 %v5194, 1.442695
        %v5206 = vpow.pop %v5205
        %v5207 = vmul.f32 %v5195, 1.442695
        %v5208 = vpow.pop %v5207
        %v5209 = vmul.f32 %v5196, 1.442695
        %v5210 = vpow.pop %v5209
        %v5211 = vmul.f32 %v5197, 1.442695
        %v5212 = vpow.pop %v5211
        %v5213 = vmul.f32 %v5198, 1.442695
        %v5214 = vpow.pop %v5213
        %v5215 = vsel %vm2575, %v5200, 0.0
        %5216 = vadd.xlane.f32.xlu0 %v5215
        %v5217 = vpop.xlane.xlu0 %5216
        %v5218 = vsel %vm2575, %v5202, 0.0
        %5219 = vadd.xlane.f32.xlu0 %v5218
        %v5220 = vpop.xlane.xlu0 %5219
        %v5221 = vsel %vm2575, %v5204, 0.0
        %5222 = vadd.xlane.f32.xlu0 %v5221
        %v5223 = vpop.xlane.xlu0 %5222
        %v5224 = vsel %vm2575, %v5206, 0.0
        %5225 = vadd.xlane.f32.xlu0 %v5224
        %v5226 = vpop.xlane.xlu0 %5225
        %v5227 = vsel %vm2575, %v5208, 0.0
        %5228 = vadd.xlane.f32.xlu0 %v5227
        %v5229 = vpop.xlane.xlu0 %5228
        %v5230 = vsel %vm2575, %v5210, 0.0
        %5231 = vadd.xlane.f32.xlu0 %v5230
        %v5232 = vpop.xlane.xlu0 %5231
        %v5233 = vsel %vm2575, %v5212, 0.0
        %5234 = vadd.xlane.f32.xlu0 %v5233
        %v5235 = vpop.xlane.xlu0 %5234
        %v5236 = vsel %vm2575, %v5214, 0.0
        %5237 = vadd.xlane.f32.xlu0 %v5236
        %v5238 = vpop.xlane.xlu0 %5237
        %v5239 = vrcp.pop %v5217
        %v5240 = vrcp.pop %v5220
        %v5241 = vrcp.pop %v5223
        %v5242 = vrcp.pop %v5226
        %v5243 = vrcp.pop %v5229
        %v5244 = vrcp.pop %v5232
        %v5245 = vrcp.pop %v5235
        %v5246 = vrcp.pop %v5238
        %v5247 = vmul.f32 %v5200, %v5239
        %v5248 = vmul.f32 %v5202, %v5240
        %v5249 = vmul.f32 %v5204, %v5241
        %v5250 = vmul.f32 %v5206, %v5242
        %v5251 = vmul.f32 %v5208, %v5243
        %v5252 = vmul.f32 %v5210, %v5244
        %v5253 = vmul.f32 %v5212, %v5245
        %v5254 = vmul.f32 %v5214, %v5246
        %5255 = vrot.lane.b32.xlu0 %v4173, 40
        %v5256 = vpop.permute.xlu0 %5255
        %5257 = vrot.lane.b32.xlu0 %v4175, 40
        %v5258 = vpop.permute.xlu0 %5257
        %5259 = vrot.lane.b32.xlu0 %v4178, 40
        %v5260 = vpop.permute.xlu0 %5259
        %5261 = vrot.lane.b32.xlu0 %v4180, 40
        %v5262 = vpop.permute.xlu0 %5261
        %5263 = vrot.lane.b32.xlu0 %v4183, 40
        %v5264 = vpop.permute.xlu0 %5263
        %5265 = vrot.lane.b32.xlu0 %v4185, 40
        %v5266 = vpop.permute.xlu0 %5265
        %5267 = vrot.lane.b32.xlu0 %v4188, 40
        %v5268 = vpop.permute.xlu0 %5267
        %5269 = vrot.lane.b32.xlu0 %v4190, 40
        %v5270 = vpop.permute.xlu0 %5269
        %v5280 = vsel %vm2575, %v5247, 0
        %v5283 = vsel %vm2575, %v5248, 0
        %v5286 = vsel %vm2575, %v5249, 0
        %v5289 = vsel %vm2575, %v5250, 0
        %v5292 = vsel %vm2575, %v5251, 0
        %v5295 = vsel %vm2575, %v5252, 0
        %v5298 = vsel %vm2575, %v5253, 0
        %v5301 = vsel %vm2575, %v5254, 0
        %5303 = vmatpush.msra.mxu0 0.0
        %5304 = vmatpush.msra.mxu0 0.0
        %5305 = vmatpush.msra.mxu0 0.0
        %5306 = vmatpush.msra.mxu0 0.0
        %5307 = vmatpush.msra.mxu0 0.0
        %5308 = vmatpush.msra.mxu0 0.0
        %5309 = vmatpush.msra.mxu0 0.0
        %5310 = vmatpush.msra.mxu0 0.0
        %5311 = vmatpush.msra.mxu0 %v5270
        %5312 = vmatpush.msra.mxu0 %v5268
        %5313 = vmatpush.msra.mxu0 %v5266
        %5314 = vmatpush.msra.mxu0 %v5264
        %5315 = vmatpush.msra.mxu0 %v5262
        %5316 = vmatpush.msra.mxu0 %v5260
        %5317 = vmatpush.msra.mxu0 %v5258
        %5318 = vmatpush.msra.mxu0 %v5256
        %5319 = vmatmul.f32.gmra.mxu0 %v5280
        %v5320 = vpop.f32.mrf.mxu0
        %v5321 = vadd.f32 0.0, %v5320
        %5322 = vmatmul.f32.gmra.mxu0 %v5283
        %v5323 = vpop.f32.mrf.mxu0
        %v5324 = vadd.f32 0.0, %v5323
        %5325 = vmatmul.f32.gmra.mxu0 %v5286
        %v5326 = vpop.f32.mrf.mxu0
        %v5327 = vadd.f32 0.0, %v5326
        %5328 = vmatmul.f32.gmra.mxu0 %v5289
        %v5329 = vpop.f32.mrf.mxu0
        %v5330 = vadd.f32 0.0, %v5329
        %5331 = vmatmul.f32.gmra.mxu0 %v5292
        %v5332 = vpop.f32.mrf.mxu0
        %v5333 = vadd.f32 0.0, %v5332
        %5334 = vmatmul.f32.gmra.mxu0 %v5295
        %v5335 = vpop.f32.mrf.mxu0
        %v5336 = vadd.f32 0.0, %v5335
        %5337 = vmatmul.f32.gmra.mxu0 %v5298
        %v5338 = vpop.f32.mrf.mxu0
        %v5339 = vadd.f32 0.0, %v5338
        %5340 = vmatmul.f32.gmra.mxu0 %v5301
        %v5341 = vpop.f32.mrf.mxu0
        %v5342 = vadd.f32 0.0, %v5341
        %5343 = vdwg.mxu0
        %5352 = vrot.lane.b32.xlu0 %v4741, 8
        %v5353 = vpop.permute.xlu0 %5352
        %5354 = vrot.lane.b32.xlu0 %v4744, 8
        %v5355 = vpop.permute.xlu0 %5354
        %5356 = vrot.lane.b32.xlu0 %v4747, 8
        %v5357 = vpop.permute.xlu0 %5356
        %5358 = vrot.lane.b32.xlu0 %v4750, 8
        %v5359 = vpop.permute.xlu0 %5358
        %5360 = vrot.lane.b32.xlu0 %v4753, 8
        %v5361 = vpop.permute.xlu0 %5360
        %5362 = vrot.lane.b32.xlu0 %v4756, 8
        %v5363 = vpop.permute.xlu0 %5362
        %5364 = vrot.lane.b32.xlu0 %v4759, 8
        %v5365 = vpop.permute.xlu0 %5364
        %5366 = vrot.lane.b32.xlu0 %v4762, 8
        %v5367 = vpop.permute.xlu0 %5366
        %5384 = vrot.lane.b32.xlu0 %v5031, 16
        %v5385 = vpop.permute.xlu0 %5384
        %5386 = vrot.lane.b32.xlu0 %v5034, 16
        %v5387 = vpop.permute.xlu0 %5386
        %5388 = vrot.lane.b32.xlu0 %v5037, 16
        %v5389 = vpop.permute.xlu0 %5388
        %5390 = vrot.lane.b32.xlu0 %v5040, 16
        %v5391 = vpop.permute.xlu0 %5390
        %5392 = vrot.lane.b32.xlu0 %v5043, 16
        %v5393 = vpop.permute.xlu0 %5392
        %5394 = vrot.lane.b32.xlu0 %v5046, 16
        %v5395 = vpop.permute.xlu0 %5394
        %5396 = vrot.lane.b32.xlu0 %v5049, 16
        %v5397 = vpop.permute.xlu0 %5396
        %5398 = vrot.lane.b32.xlu0 %v5052, 16
        %v5399 = vpop.permute.xlu0 %5398
        %5416 = vrot.lane.b32.xlu0 %v5321, 24
        %v5417 = vpop.permute.xlu0 %5416
        %5418 = vrot.lane.b32.xlu0 %v5324, 24
        %v5419 = vpop.permute.xlu0 %5418
        %5420 = vrot.lane.b32.xlu0 %v5327, 24
        %v5421 = vpop.permute.xlu0 %5420
        %5422 = vrot.lane.b32.xlu0 %v5330, 24
        %v5423 = vpop.permute.xlu0 %5422
        %5424 = vrot.lane.b32.xlu0 %v5333, 24
        %v5425 = vpop.permute.xlu0 %5424
        %5426 = vrot.lane.b32.xlu0 %v5336, 24
        %v5427 = vpop.permute.xlu0 %5426
        %5428 = vrot.lane.b32.xlu0 %v5339, 24
        %v5429 = vpop.permute.xlu0 %5428
        %5430 = vrot.lane.b32.xlu0 %v5342, 24
        %v5431 = vpop.permute.xlu0 %5430
        %v5440 = vsel %vm1545, %v4451, %v5353
        %v5441 = vsel %vm1545, %v4454, %v5355
        %v5442 = vsel %vm1545, %v4457, %v5357
        %v5443 = vsel %vm1545, %v4460, %v5359
        %v5444 = vsel %vm1545, %v4463, %v5361
        %v5445 = vsel %vm1545, %v4466, %v5363
        %v5446 = vsel %vm1545, %v4469, %v5365
        %v5447 = vsel %vm1545, %v4472, %v5367
        %v5448 = vsel %vm2246, %v5440, %v5385
        %v5449 = vsel %vm2246, %v5441, %v5387
        %v5450 = vsel %vm2246, %v5442, %v5389
        %v5451 = vsel %vm2246, %v5443, %v5391
        %v5452 = vsel %vm2246, %v5444, %v5393
        %v5453 = vsel %vm2246, %v5445, %v5395
        %v5454 = vsel %vm2246, %v5446, %v5397
        %v5455 = vsel %vm2246, %v5447, %v5399
        %v5456 = vsel %vm2251, %v5448, %v5417
        %v5457 = vsel %vm2251, %v5449, %v5419
        %v5458 = vsel %vm2251, %v5450, %v5421
        %v5459 = vsel %vm2251, %v5451, %v5423
        %v5460 = vsel %vm2251, %v5452, %v5425
        %v5461 = vsel %vm2251, %v5453, %v5427
        %v5462 = vsel %vm2251, %v5454, %v5429
        %v5463 = vsel %vm2251, %v5455, %v5431
        %v5464 = vpack.c.bf16 %v5457, %v5456
        %v5465 = vpack.c.bf16 %v5459, %v5458
        %v5466 = vpack.c.bf16 %v5461, %v5460
        %v5467 = vpack.c.bf16 %v5463, %v5462
        %v5469 = vperm.slane %v4131, 0
        %v5475 = vunpack.c.l.b16 %v4127
        %v5476 = vunpack.c.l.b16 %v4128
        %v5477 = vunpack.c.l.b16 %v4129
        %v5478 = vunpack.c.l.b16 %v4130
        %v5479 = vpack.c.b16 %v5476, %v5475
        %v5480 = vpack.c.b16 %v5478, %v5477
        %v5484 = vsel %vm1264, %v5464, 0
        %v5487 = vsel %vm1264, %v5465, 0
        %v5490 = vsel %vm1264, %v5466, 0
        %v5493 = vsel %vm1264, %v5467, 0
        %5495 = vmatpush.bf16.msra.mxu0 0
        %5496 = vmatpush.bf16.msra.mxu0 0
        %5497 = vmatpush.bf16.msra.mxu0 0
        %5498 = vmatpush.bf16.msra.mxu0 0
        %5499 = vmatpush.bf16.msra.mxu0 0
        %5500 = vmatpush.bf16.msra.mxu0 0
        %5501 = vmatpush.bf16.msra.mxu0 %v5480
        %5502 = vmatpush.bf16.msra.mxu0 %v5479
        %5503 = vmatmul.bf16.gmra.mxu0 %v5484
        %v5504 = vpop.f32.mrf.mxu0
        %v5505 = vadd.f32 %v5469, %v5504
        %v5506 = vpop.f32.mrf.mxu0
        %v5507 = vadd.f32 %v5469, %v5506
        %5508 = vmatmul.bf16.gmra.mxu0 %v5487
        %v5509 = vpop.f32.mrf.mxu0
        %v5510 = vadd.f32 %v5469, %v5509
        %v5511 = vpop.f32.mrf.mxu0
        %v5512 = vadd.f32 %v5469, %v5511
        %5513 = vmatmul.bf16.gmra.mxu0 %v5490
        %v5514 = vpop.f32.mrf.mxu0
        %v5515 = vadd.f32 %v5469, %v5514
        %v5516 = vpop.f32.mrf.mxu0
        %v5517 = vadd.f32 %v5469, %v5516
        %5518 = vmatmul.bf16.gmra.mxu0 %v5493
        %v5519 = vpop.f32.mrf.mxu0
        %v5520 = vadd.f32 %v5469, %v5519
        %v5521 = vpop.f32.mrf.mxu0
        %v5522 = vadd.f32 %v5469, %v5521
        %5523 = vdwg.mxu0
        %v5524 = vadd.f32 %v3903, %v5505
        %v5525 = vadd.f32 %v3905, %v5507
        %v5526 = vadd.f32 %v3908, %v5510
        %v5527 = vadd.f32 %v3910, %v5512
        %v5528 = vadd.f32 %v3913, %v5515
        %v5529 = vadd.f32 %v3915, %v5517
        %v5530 = vadd.f32 %v3918, %v5520
        %v5531 = vadd.f32 %v3920, %v5522
        %v5532 = vld [vmem:[%s57] sm:$0x1]
        %v5533 = vld [vmem:[%s55] sm:$0x1]
        %v5534 = vsel %vm1264, %v5524, 0.0
        %5535 = vadd.xlane.f32.xlu0 %v5534
        %v5536 = vpop.xlane.xlu0 %5535
        %v5537 = vsel %vm1264, %v5525, 0.0
        %5538 = vadd.xlane.f32.xlu0 %v5537
        %v5539 = vpop.xlane.xlu0 %5538
        %v5540 = vsel %vm1264, %v5526, 0.0
        %5541 = vadd.xlane.f32.xlu0 %v5540
        %v5542 = vpop.xlane.xlu0 %5541
        %v5543 = vsel %vm1264, %v5527, 0.0
        %5544 = vadd.xlane.f32.xlu0 %v5543
        %v5545 = vpop.xlane.xlu0 %5544
        %v5546 = vsel %vm1264, %v5528, 0.0
        %5547 = vadd.xlane.f32.xlu0 %v5546
        %v5548 = vpop.xlane.xlu0 %5547
        %v5549 = vsel %vm1264, %v5529, 0.0
        %5550 = vadd.xlane.f32.xlu0 %v5549
        %v5551 = vpop.xlane.xlu0 %5550
        %v5552 = vsel %vm1264, %v5530, 0.0
        %5553 = vadd.xlane.f32.xlu0 %v5552
        %v5554 = vpop.xlane.xlu0 %5553
        %v5555 = vsel %vm1264, %v5531, 0.0
        %5556 = vadd.xlane.f32.xlu0 %v5555
        %v5557 = vpop.xlane.xlu0 %5556
        %v5558 = vmul.f32 %v5536, %v1283
        %v5559 = vmul.f32 %v5539, %v1283
        %v5560 = vmul.f32 %v5542, %v1283
        %v5561 = vmul.f32 %v5545, %v1283
        %v5562 = vmul.f32 %v5548, %v1283
        %v5563 = vmul.f32 %v5551, %v1283
        %v5564 = vmul.f32 %v5554, %v1283
        %v5565 = vmul.f32 %v5557, %v1283
        %v5566 = vsub.f32 %v5524, %v5558
        %v5567 = vsub.f32 %v5525, %v5559
        %v5568 = vsub.f32 %v5526, %v5560
        %v5569 = vsub.f32 %v5527, %v5561
        %v5570 = vsub.f32 %v5528, %v5562
        %v5571 = vsub.f32 %v5529, %v5563
        %v5572 = vsub.f32 %v5530, %v5564
        %v5573 = vsub.f32 %v5531, %v5565
        %v5574 = vmul.f32 %v5566, %v5566
        %v5575 = vmul.f32 %v5567, %v5567
        %v5576 = vmul.f32 %v5568, %v5568
        %v5577 = vmul.f32 %v5569, %v5569
        %v5578 = vmul.f32 %v5570, %v5570
        %v5579 = vmul.f32 %v5571, %v5571
        %v5580 = vmul.f32 %v5572, %v5572
        %v5581 = vmul.f32 %v5573, %v5573
        %v5582 = vsel %vm1264, %v5574, 0.0
        %5583 = vadd.xlane.f32.xlu0 %v5582
        %v5584 = vpop.xlane.xlu0 %5583
        %v5585 = vsel %vm1264, %v5575, 0.0
        %5586 = vadd.xlane.f32.xlu0 %v5585
        %v5587 = vpop.xlane.xlu0 %5586
        %v5588 = vsel %vm1264, %v5576, 0.0
        %5589 = vadd.xlane.f32.xlu0 %v5588
        %v5590 = vpop.xlane.xlu0 %5589
        %v5591 = vsel %vm1264, %v5577, 0.0
        %5592 = vadd.xlane.f32.xlu0 %v5591
        %v5593 = vpop.xlane.xlu0 %5592
        %v5594 = vsel %vm1264, %v5578, 0.0
        %5595 = vadd.xlane.f32.xlu0 %v5594
        %v5596 = vpop.xlane.xlu0 %5595
        %v5597 = vsel %vm1264, %v5579, 0.0
        %5598 = vadd.xlane.f32.xlu0 %v5597
        %v5599 = vpop.xlane.xlu0 %5598
        %v5600 = vsel %vm1264, %v5580, 0.0
        %5601 = vadd.xlane.f32.xlu0 %v5600
        %v5602 = vpop.xlane.xlu0 %5601
        %v5603 = vsel %vm1264, %v5581, 0.0
        %5604 = vadd.xlane.f32.xlu0 %v5603
        %v5605 = vpop.xlane.xlu0 %5604
        %v5606 = vmul.f32 %v5584, %v1283
        %v5607 = vmul.f32 %v5587, %v1283
        %v5608 = vmul.f32 %v5590, %v1283
        %v5609 = vmul.f32 %v5593, %v1283
        %v5610 = vmul.f32 %v5596, %v1283
        %v5611 = vmul.f32 %v5599, %v1283
        %v5612 = vmul.f32 %v5602, %v1283
        %v5613 = vmul.f32 %v5605, %v1283
        %v5614 = vadd.f32 %v5606, 1e-06
        %v5615 = vadd.f32 %v5607, 1e-06
        %v5616 = vadd.f32 %v5608, 1e-06
        %v5617 = vadd.f32 %v5609, 1e-06
        %v5618 = vadd.f32 %v5610, 1e-06
        %v5619 = vadd.f32 %v5611, 1e-06
        %v5620 = vadd.f32 %v5612, 1e-06
        %v5621 = vadd.f32 %v5613, 1e-06
        %v5622 = vrsqrt.pop %v5614
        %v5623 = vmul.f32 %v5622, %v5614
        %v5624 = vmul.f32 %v5623, %v5622
        %v5625 = vmul.f32 0.5, %v5624
        %v5626 = vsub.f32 1.5, %v5625
        %v5627 = vmul.f32 %v5622, %v5626
        %vm5628 = vweird.f32 %v5614
        %vm5629 = vweird.f32 %v5622
        %vm5630 = vmor %vm5628, %vm5629
        %v5631 = vsel %vm5630, %v5622, %v5627
        %v5632 = vrsqrt.pop %v5615
        %v5633 = vmul.f32 %v5632, %v5615
        %v5634 = vmul.f32 %v5633, %v5632
        %v5635 = vmul.f32 0.5, %v5634
        %v5636 = vsub.f32 1.5, %v5635
        %v5637 = vmul.f32 %v5632, %v5636
        %vm5638 = vweird.f32 %v5615
        %vm5639 = vweird.f32 %v5632
        %vm5640 = vmor %vm5638, %vm5639
        %v5641 = vsel %vm5640, %v5632, %v5637
        %v5642 = vrsqrt.pop %v5616
        %v5643 = vmul.f32 %v5642, %v5616
        %v5644 = vmul.f32 %v5643, %v5642
        %v5645 = vmul.f32 0.5, %v5644
        %v5646 = vsub.f32 1.5, %v5645
        %v5647 = vmul.f32 %v5642, %v5646
        %vm5648 = vweird.f32 %v5616
        %vm5649 = vweird.f32 %v5642
        %vm5650 = vmor %vm5648, %vm5649
        %v5651 = vsel %vm5650, %v5642, %v5647
        %v5652 = vrsqrt.pop %v5617
        %v5653 = vmul.f32 %v5652, %v5617
        %v5654 = vmul.f32 %v5653, %v5652
        %v5655 = vmul.f32 0.5, %v5654
        %v5656 = vsub.f32 1.5, %v5655
        %v5657 = vmul.f32 %v5652, %v5656
        %vm5658 = vweird.f32 %v5617
        %vm5659 = vweird.f32 %v5652
        %vm5660 = vmor %vm5658, %vm5659
        %v5661 = vsel %vm5660, %v5652, %v5657
        %v5662 = vrsqrt.pop %v5618
        %v5663 = vmul.f32 %v5662, %v5618
        %v5664 = vmul.f32 %v5663, %v5662
        %v5665 = vmul.f32 0.5, %v5664
        %v5666 = vsub.f32 1.5, %v5665
        %v5667 = vmul.f32 %v5662, %v5666
        %vm5668 = vweird.f32 %v5618
        %vm5669 = vweird.f32 %v5662
        %vm5670 = vmor %vm5668, %vm5669
        %v5671 = vsel %vm5670, %v5662, %v5667
        %v5672 = vrsqrt.pop %v5619
        %v5673 = vmul.f32 %v5672, %v5619
        %v5674 = vmul.f32 %v5673, %v5672
        %v5675 = vmul.f32 0.5, %v5674
        %v5676 = vsub.f32 1.5, %v5675
        %v5677 = vmul.f32 %v5672, %v5676
        %vm5678 = vweird.f32 %v5619
        %vm5679 = vweird.f32 %v5672
        %vm5680 = vmor %vm5678, %vm5679
        %v5681 = vsel %vm5680, %v5672, %v5677
        %v5682 = vrsqrt.pop %v5620
        %v5683 = vmul.f32 %v5682, %v5620
        %v5684 = vmul.f32 %v5683, %v5682
        %v5685 = vmul.f32 0.5, %v5684
        %v5686 = vsub.f32 1.5, %v5685
        %v5687 = vmul.f32 %v5682, %v5686
        %vm5688 = vweird.f32 %v5620
        %vm5689 = vweird.f32 %v5682
        %vm5690 = vmor %vm5688, %vm5689
        %v5691 = vsel %vm5690, %v5682, %v5687
        %v5692 = vrsqrt.pop %v5621
        %v5693 = vmul.f32 %v5692, %v5621
        %v5694 = vmul.f32 %v5693, %v5692
        %v5695 = vmul.f32 0.5, %v5694
        %v5696 = vsub.f32 1.5, %v5695
        %v5697 = vmul.f32 %v5692, %v5696
        %vm5698 = vweird.f32 %v5621
        %vm5699 = vweird.f32 %v5692
        %vm5700 = vmor %vm5698, %vm5699
        %v5701 = vsel %vm5700, %v5692, %v5697
        %v5702 = vmul.f32 %v5566, %v5631
        %v5703 = vmul.f32 %v5567, %v5641
        %v5704 = vmul.f32 %v5568, %v5651
        %v5705 = vmul.f32 %v5569, %v5661
        %v5706 = vmul.f32 %v5570, %v5671
        %v5707 = vmul.f32 %v5571, %v5681
        %v5708 = vmul.f32 %v5572, %v5691
        %v5709 = vmul.f32 %v5573, %v5701
        %v5711 = vperm.slane %v5532, 0
        %v5713 = vmul.f32 %v5702, %v5711
        %v5714 = vmul.f32 %v5703, %v5711
        %v5715 = vmul.f32 %v5704, %v5711
        %v5716 = vmul.f32 %v5705, %v5711
        %v5717 = vmul.f32 %v5706, %v5711
        %v5718 = vmul.f32 %v5707, %v5711
        %v5719 = vmul.f32 %v5708, %v5711
        %v5720 = vmul.f32 %v5709, %v5711
        %v5722 = vperm.slane %v5533, 0
        %v5724 = vadd.f32 %v5713, %v5722
        %v5725 = vadd.f32 %v5714, %v5722
        %v5726 = vadd.f32 %v5715, %v5722
        %v5727 = vadd.f32 %v5716, %v5722
        %v5728 = vadd.f32 %v5717, %v5722
        %v5729 = vadd.f32 %v5718, %v5722
        %v5730 = vadd.f32 %v5719, %v5722
        %v5731 = vadd.f32 %v5720, %v5722
        %v5732 = vld [vmem:[%s71] sm:$0xf]
        %v5733 = vld [vmem:[%s71 + $0x4] sm:$0xf]
        %v5734 = vld [vmem:[%s71 + $0x8] sm:$0xf]
        %v5735 = vld [vmem:[%s71 + $0xc] sm:$0xf]
        %v5736 = vld [vmem:[%s37] sm:$0x1]
        %v5737 = vld [vmem:[%s73] sm:$0xf]
        %v5738 = vld [vmem:[%s73 + $0x4] sm:$0xf]
        %v5739 = vld [vmem:[%s73 + $0x8] sm:$0xf]
        %v5740 = vld [vmem:[%s73 + $0xc] sm:$0xf]
        %v5741 = vld [vmem:[%s73 + $0x10] sm:$0xf]
        %v5742 = vld [vmem:[%s73 + $0x14] sm:$0xf]
        %v5743 = vld [vmem:[%s73 + $0x18] sm:$0xf]
        %v5744 = vld [vmem:[%s73 + $0x1c] sm:$0xf]
        %v5745 = vld [vmem:[%s39] sm:$0x1]
        %v5746 = vpack.c.bf16 %v5725, %v5724
        %v5747 = vpack.c.bf16 %v5727, %v5726
        %v5748 = vpack.c.bf16 %v5729, %v5728
        %v5749 = vpack.c.bf16 %v5731, %v5730
        %v5751 = vperm.slane %v5736, 0
        %v5757 = vunpack.c.l.b16 %v5732
        %v5758 = vunpack.c.l.b16 %v5733
        %v5759 = vunpack.c.l.b16 %v5734
        %v5760 = vunpack.c.l.b16 %v5735
        %v5761 = vpack.c.b16 %v5758, %v5757
        %v5762 = vpack.c.b16 %v5760, %v5759
        %v5766 = vsel %vm1264, %v5746, 0
        %v5769 = vsel %vm1264, %v5747, 0
        %v5772 = vsel %vm1264, %v5748, 0
        %v5775 = vsel %vm1264, %v5749, 0
        %5777 = vmatpush.bf16.msra.mxu0 0
        %5778 = vmatpush.bf16.msra.mxu0 0
        %5779 = vmatpush.bf16.msra.mxu0 0
        %5780 = vmatpush.bf16.msra.mxu0 0
        %5781 = vmatpush.bf16.msra.mxu0 0
        %5782 = vmatpush.bf16.msra.mxu0 0
        %5783 = vmatpush.bf16.msra.mxu0 %v5762
        %5784 = vmatpush.bf16.msra.mxu0 %v5761
        %5785 = vmatmul.bf16.gmra.mxu0 %v5766
        %v5786 = vpop.f32.mrf.mxu0
        %v5787 = vadd.f32 %v5751, %v5786
        %v5788 = vpop.f32.mrf.mxu0
        %v5789 = vadd.f32 %v5751, %v5788
        %5790 = vmatmul.bf16.gmra.mxu0 %v5769
        %v5791 = vpop.f32.mrf.mxu0
        %v5792 = vadd.f32 %v5751, %v5791
        %v5793 = vpop.f32.mrf.mxu0
        %v5794 = vadd.f32 %v5751, %v5793
        %5795 = vmatmul.bf16.gmra.mxu0 %v5772
        %v5796 = vpop.f32.mrf.mxu0
        %v5797 = vadd.f32 %v5751, %v5796
        %v5798 = vpop.f32.mrf.mxu0
        %v5799 = vadd.f32 %v5751, %v5798
        %5800 = vmatmul.bf16.gmra.mxu0 %v5775
        %v5801 = vpop.f32.mrf.mxu0
        %v5802 = vadd.f32 %v5751, %v5801
        %v5803 = vpop.f32.mrf.mxu0
        %v5804 = vadd.f32 %v5751, %v5803
        %5805 = vdwg.mxu0
        %v5806 = vmul.f32 %v5787, %v5787
        %v5807 = vmul.f32 %v5789, %v5789
        %v5808 = vmul.f32 %v5792, %v5792
        %v5809 = vmul.f32 %v5794, %v5794
        %v5810 = vmul.f32 %v5797, %v5797
        %v5811 = vmul.f32 %v5799, %v5799
        %v5812 = vmul.f32 %v5802, %v5802
        %v5813 = vmul.f32 %v5804, %v5804
        %v5814 = vmul.f32 %v5787, %v5806
        %v5815 = vmul.f32 %v5789, %v5807
        %v5816 = vmul.f32 %v5792, %v5808
        %v5817 = vmul.f32 %v5794, %v5809
        %v5818 = vmul.f32 %v5797, %v5810
        %v5819 = vmul.f32 %v5799, %v5811
        %v5820 = vmul.f32 %v5802, %v5812
        %v5821 = vmul.f32 %v5804, %v5813
        %v5822 = vmul.f32 %v5814, 0.044715
        %v5823 = vmul.f32 %v5815, 0.044715
        %v5824 = vmul.f32 %v5816, 0.044715
        %v5825 = vmul.f32 %v5817, 0.044715
        %v5826 = vmul.f32 %v5818, 0.044715
        %v5827 = vmul.f32 %v5819, 0.044715
        %v5828 = vmul.f32 %v5820, 0.044715
        %v5829 = vmul.f32 %v5821, 0.044715
        %v5830 = vadd.f32 %v5787, %v5822
        %v5831 = vadd.f32 %v5789, %v5823
        %v5832 = vadd.f32 %v5792, %v5824
        %v5833 = vadd.f32 %v5794, %v5825
        %v5834 = vadd.f32 %v5797, %v5826
        %v5835 = vadd.f32 %v5799, %v5827
        %v5836 = vadd.f32 %v5802, %v5828
        %v5837 = vadd.f32 %v5804, %v5829
        %v5838 = vmul.f32 %v5830, 0.7978846
        %v5839 = vmul.f32 %v5831, 0.7978846
        %v5840 = vmul.f32 %v5832, 0.7978846
        %v5841 = vmul.f32 %v5833, 0.7978846
        %v5842 = vmul.f32 %v5834, 0.7978846
        %v5843 = vmul.f32 %v5835, 0.7978846
        %v5844 = vmul.f32 %v5836, 0.7978846
        %v5845 = vmul.f32 %v5837, 0.7978846
        %v5846 = vtanh.pop %v5838
        %v5847 = vtanh.pop %v5839
        %v5848 = vtanh.pop %v5840
        %v5849 = vtanh.pop %v5841
        %v5850 = vtanh.pop %v5842
        %v5851 = vtanh.pop %v5843
        %v5852 = vtanh.pop %v5844
        %v5853 = vtanh.pop %v5845
        %v5854 = vadd.f32 %v5846, 1.0
        %v5855 = vadd.f32 %v5847, 1.0
        %v5856 = vadd.f32 %v5848, 1.0
        %v5857 = vadd.f32 %v5849, 1.0
        %v5858 = vadd.f32 %v5850, 1.0
        %v5859 = vadd.f32 %v5851, 1.0
        %v5860 = vadd.f32 %v5852, 1.0
        %v5861 = vadd.f32 %v5853, 1.0
        %v5862 = vmul.f32 %v5854, 0.5
        %v5863 = vmul.f32 %v5855, 0.5
        %v5864 = vmul.f32 %v5856, 0.5
        %v5865 = vmul.f32 %v5857, 0.5
        %v5866 = vmul.f32 %v5858, 0.5
        %v5867 = vmul.f32 %v5859, 0.5
        %v5868 = vmul.f32 %v5860, 0.5
        %v5869 = vmul.f32 %v5861, 0.5
        %v5870 = vmul.f32 %v5787, %v5862
        %v5871 = vmul.f32 %v5789, %v5863
        %v5872 = vmul.f32 %v5792, %v5864
        %v5873 = vmul.f32 %v5794, %v5865
        %v5874 = vmul.f32 %v5797, %v5866
        %v5875 = vmul.f32 %v5799, %v5867
        %v5876 = vmul.f32 %v5802, %v5868
        %v5877 = vmul.f32 %v5804, %v5869
        %v5878 = vpack.c.bf16 %v5871, %v5870
        %v5879 = vpack.c.bf16 %v5873, %v5872
        %v5880 = vpack.c.bf16 %v5875, %v5874
        %v5881 = vpack.c.bf16 %v5877, %v5876
        %v5883 = vperm.slane %v5745, 0
        %v5893 = vunpack.c.l.b16 %v5737
        %v5894 = vunpack.c.l.b16 %v5738
        %v5895 = vunpack.c.l.b16 %v5739
        %v5896 = vunpack.c.l.b16 %v5740
        %v5897 = vunpack.c.l.b16 %v5741
        %v5898 = vunpack.c.l.b16 %v5742
        %v5899 = vunpack.c.l.b16 %v5743
        %v5900 = vunpack.c.l.b16 %v5744
        %v5901 = vpack.c.b16 %v5894, %v5893
        %v5902 = vpack.c.b16 %v5896, %v5895
        %v5903 = vpack.c.b16 %v5898, %v5897
        %v5904 = vpack.c.b16 %v5900, %v5899
        %v5910 = vsel %vm2575, %v5878, 0
        %v5913 = vsel %vm2575, %v5879, 0
        %v5916 = vsel %vm2575, %v5880, 0
        %v5919 = vsel %vm2575, %v5881, 0
        %5921 = vmatpush.bf16.msra.mxu0 0
        %5922 = vmatpush.bf16.msra.mxu0 0
        %5923 = vmatpush.bf16.msra.mxu0 0
        %5924 = vmatpush.bf16.msra.mxu0 0
        %5925 = vmatpush.bf16.msra.mxu0 %v5904
        %5926 = vmatpush.bf16.msra.mxu0 %v5903
        %5927 = vmatpush.bf16.msra.mxu0 %v5902
        %5928 = vmatpush.bf16.msra.mxu0 %v5901
        %5929 = vmatmul.bf16.gmra.mxu0 %v5910
        %v5930 = vpop.f32.mrf.mxu0
        %v5931 = vadd.f32 %v5883, %v5930
        %v5932 = vpop.f32.mrf.mxu0
        %v5933 = vadd.f32 %v5883, %v5932
        %5934 = vmatmul.bf16.gmra.mxu0 %v5913
        %v5935 = vpop.f32.mrf.mxu0
        %v5936 = vadd.f32 %v5883, %v5935
        %v5937 = vpop.f32.mrf.mxu0
        %v5938 = vadd.f32 %v5883, %v5937
        %5939 = vmatmul.bf16.gmra.mxu0 %v5916
        %v5940 = vpop.f32.mrf.mxu0
        %v5941 = vadd.f32 %v5883, %v5940
        %v5942 = vpop.f32.mrf.mxu0
        %v5943 = vadd.f32 %v5883, %v5942
        %5944 = vmatmul.bf16.gmra.mxu0 %v5919
        %v5945 = vpop.f32.mrf.mxu0
        %v5946 = vadd.f32 %v5883, %v5945
        %v5947 = vpop.f32.mrf.mxu0
        %v5948 = vadd.f32 %v5883, %v5947
        %5949 = vdwg.mxu0
        %v5950 = vadd.f32 %v5524, %v5931
        %v5951 = vadd.f32 %v5525, %v5933
        %v5952 = vadd.f32 %v5526, %v5936
        %v5953 = vadd.f32 %v5527, %v5938
        %v5954 = vadd.f32 %v5528, %v5941
        %v5955 = vadd.f32 %v5529, %v5943
        %v5956 = vadd.f32 %v5530, %v5946
        %v5957 = vadd.f32 %v5531, %v5948
        %s5958 = scalar_lea.vmem %s53, 1
        %v5959 = vld [vmem:[%s5958] sm:$0x1]
        %s5960 = scalar_lea.vmem %s51, 1
        %v5961 = vld [vmem:[%s5960] sm:$0x1]
        %v5962 = vsel %vm1264, %v5950, 0.0
        %5963 = vadd.xlane.f32.xlu0 %v5962
        %v5964 = vpop.xlane.xlu0 %5963
        %v5965 = vsel %vm1264, %v5951, 0.0
        %5966 = vadd.xlane.f32.xlu0 %v5965
        %v5967 = vpop.xlane.xlu0 %5966
        %v5968 = vsel %vm1264, %v5952, 0.0
        %5969 = vadd.xlane.f32.xlu0 %v5968
        %v5970 = vpop.xlane.xlu0 %5969
        %v5971 = vsel %vm1264, %v5953, 0.0
        %5972 = vadd.xlane.f32.xlu0 %v5971
        %v5973 = vpop.xlane.xlu0 %5972
        %v5974 = vsel %vm1264, %v5954, 0.0
        %5975 = vadd.xlane.f32.xlu0 %v5974
        %v5976 = vpop.xlane.xlu0 %5975
        %v5977 = vsel %vm1264, %v5955, 0.0
        %5978 = vadd.xlane.f32.xlu0 %v5977
        %v5979 = vpop.xlane.xlu0 %5978
        %v5980 = vsel %vm1264, %v5956, 0.0
        %5981 = vadd.xlane.f32.xlu0 %v5980
        %v5982 = vpop.xlane.xlu0 %5981
        %v5983 = vsel %vm1264, %v5957, 0.0
        %5984 = vadd.xlane.f32.xlu0 %v5983
        %v5985 = vpop.xlane.xlu0 %5984
        %v5986 = vmul.f32 %v5964, %v1283
        %v5987 = vmul.f32 %v5967, %v1283
        %v5988 = vmul.f32 %v5970, %v1283
        %v5989 = vmul.f32 %v5973, %v1283
        %v5990 = vmul.f32 %v5976, %v1283
        %v5991 = vmul.f32 %v5979, %v1283
        %v5992 = vmul.f32 %v5982, %v1283
        %v5993 = vmul.f32 %v5985, %v1283
        %v5994 = vsub.f32 %v5950, %v5986
        %v5995 = vsub.f32 %v5951, %v5987
        %v5996 = vsub.f32 %v5952, %v5988
        %v5997 = vsub.f32 %v5953, %v5989
        %v5998 = vsub.f32 %v5954, %v5990
        %v5999 = vsub.f32 %v5955, %v5991
        %v6000 = vsub.f32 %v5956, %v5992
        %v6001 = vsub.f32 %v5957, %v5993
        %v6002 = vmul.f32 %v5994, %v5994
        %v6003 = vmul.f32 %v5995, %v5995
        %v6004 = vmul.f32 %v5996, %v5996
        %v6005 = vmul.f32 %v5997, %v5997
        %v6006 = vmul.f32 %v5998, %v5998
        %v6007 = vmul.f32 %v5999, %v5999
        %v6008 = vmul.f32 %v6000, %v6000
        %v6009 = vmul.f32 %v6001, %v6001
        %v6010 = vsel %vm1264, %v6002, 0.0
        %6011 = vadd.xlane.f32.xlu0 %v6010
        %v6012 = vpop.xlane.xlu0 %6011
        %v6013 = vsel %vm1264, %v6003, 0.0
        %6014 = vadd.xlane.f32.xlu0 %v6013
        %v6015 = vpop.xlane.xlu0 %6014
        %v6016 = vsel %vm1264, %v6004, 0.0
        %6017 = vadd.xlane.f32.xlu0 %v6016
        %v6018 = vpop.xlane.xlu0 %6017
        %v6019 = vsel %vm1264, %v6005, 0.0
        %6020 = vadd.xlane.f32.xlu0 %v6019
        %v6021 = vpop.xlane.xlu0 %6020
        %v6022 = vsel %vm1264, %v6006, 0.0
        %6023 = vadd.xlane.f32.xlu0 %v6022
        %v6024 = vpop.xlane.xlu0 %6023
        %v6025 = vsel %vm1264, %v6007, 0.0
        %6026 = vadd.xlane.f32.xlu0 %v6025
        %v6027 = vpop.xlane.xlu0 %6026
        %v6028 = vsel %vm1264, %v6008, 0.0
        %6029 = vadd.xlane.f32.xlu0 %v6028
        %v6030 = vpop.xlane.xlu0 %6029
        %v6031 = vsel %vm1264, %v6009, 0.0
        %6032 = vadd.xlane.f32.xlu0 %v6031
        %v6033 = vpop.xlane.xlu0 %6032
        %v6034 = vmul.f32 %v6012, %v1283
        %v6035 = vmul.f32 %v6015, %v1283
        %v6036 = vmul.f32 %v6018, %v1283
        %v6037 = vmul.f32 %v6021, %v1283
        %v6038 = vmul.f32 %v6024, %v1283
        %v6039 = vmul.f32 %v6027, %v1283
        %v6040 = vmul.f32 %v6030, %v1283
        %v6041 = vmul.f32 %v6033, %v1283
        %v6042 = vadd.f32 %v6034, 1e-06
        %v6043 = vadd.f32 %v6035, 1e-06
        %v6044 = vadd.f32 %v6036, 1e-06
        %v6045 = vadd.f32 %v6037, 1e-06
        %v6046 = vadd.f32 %v6038, 1e-06
        %v6047 = vadd.f32 %v6039, 1e-06
        %v6048 = vadd.f32 %v6040, 1e-06
        %v6049 = vadd.f32 %v6041, 1e-06
        %v6050 = vrsqrt.pop %v6042
        %v6051 = vmul.f32 %v6050, %v6042
        %v6052 = vmul.f32 %v6051, %v6050
        %v6053 = vmul.f32 0.5, %v6052
        %v6054 = vsub.f32 1.5, %v6053
        %v6055 = vmul.f32 %v6050, %v6054
        %vm6056 = vweird.f32 %v6042
        %vm6057 = vweird.f32 %v6050
        %vm6058 = vmor %vm6056, %vm6057
        %v6059 = vsel %vm6058, %v6050, %v6055
        %v6060 = vrsqrt.pop %v6043
        %v6061 = vmul.f32 %v6060, %v6043
        %v6062 = vmul.f32 %v6061, %v6060
        %v6063 = vmul.f32 0.5, %v6062
        %v6064 = vsub.f32 1.5, %v6063
        %v6065 = vmul.f32 %v6060, %v6064
        %vm6066 = vweird.f32 %v6043
        %vm6067 = vweird.f32 %v6060
        %vm6068 = vmor %vm6066, %vm6067
        %v6069 = vsel %vm6068, %v6060, %v6065
        %v6070 = vrsqrt.pop %v6044
        %v6071 = vmul.f32 %v6070, %v6044
        %v6072 = vmul.f32 %v6071, %v6070
        %v6073 = vmul.f32 0.5, %v6072
        %v6074 = vsub.f32 1.5, %v6073
        %v6075 = vmul.f32 %v6070, %v6074
        %vm6076 = vweird.f32 %v6044
        %vm6077 = vweird.f32 %v6070
        %vm6078 = vmor %vm6076, %vm6077
        %v6079 = vsel %vm6078, %v6070, %v6075
        %v6080 = vrsqrt.pop %v6045
        %v6081 = vmul.f32 %v6080, %v6045
        %v6082 = vmul.f32 %v6081, %v6080
        %v6083 = vmul.f32 0.5, %v6082
        %v6084 = vsub.f32 1.5, %v6083
        %v6085 = vmul.f32 %v6080, %v6084
        %vm6086 = vweird.f32 %v6045
        %vm6087 = vweird.f32 %v6080
        %vm6088 = vmor %vm6086, %vm6087
        %v6089 = vsel %vm6088, %v6080, %v6085
        %v6090 = vrsqrt.pop %v6046
        %v6091 = vmul.f32 %v6090, %v6046
        %v6092 = vmul.f32 %v6091, %v6090
        %v6093 = vmul.f32 0.5, %v6092
        %v6094 = vsub.f32 1.5, %v6093
        %v6095 = vmul.f32 %v6090, %v6094
        %vm6096 = vweird.f32 %v6046
        %vm6097 = vweird.f32 %v6090
        %vm6098 = vmor %vm6096, %vm6097
        %v6099 = vsel %vm6098, %v6090, %v6095
        %v6100 = vrsqrt.pop %v6047
        %v6101 = vmul.f32 %v6100, %v6047
        %v6102 = vmul.f32 %v6101, %v6100
        %v6103 = vmul.f32 0.5, %v6102
        %v6104 = vsub.f32 1.5, %v6103
        %v6105 = vmul.f32 %v6100, %v6104
        %vm6106 = vweird.f32 %v6047
        %vm6107 = vweird.f32 %v6100
        %vm6108 = vmor %vm6106, %vm6107
        %v6109 = vsel %vm6108, %v6100, %v6105
        %v6110 = vrsqrt.pop %v6048
        %v6111 = vmul.f32 %v6110, %v6048
        %v6112 = vmul.f32 %v6111, %v6110
        %v6113 = vmul.f32 0.5, %v6112
        %v6114 = vsub.f32 1.5, %v6113
        %v6115 = vmul.f32 %v6110, %v6114
        %vm6116 = vweird.f32 %v6048
        %vm6117 = vweird.f32 %v6110
        %vm6118 = vmor %vm6116, %vm6117
        %v6119 = vsel %vm6118, %v6110, %v6115
        %v6120 = vrsqrt.pop %v6049
        %v6121 = vmul.f32 %v6120, %v6049
        %v6122 = vmul.f32 %v6121, %v6120
        %v6123 = vmul.f32 0.5, %v6122
        %v6124 = vsub.f32 1.5, %v6123
        %v6125 = vmul.f32 %v6120, %v6124
        %vm6126 = vweird.f32 %v6049
        %vm6127 = vweird.f32 %v6120
        %vm6128 = vmor %vm6126, %vm6127
        %v6129 = vsel %vm6128, %v6120, %v6125
        %v6130 = vmul.f32 %v5994, %v6059
        %v6131 = vmul.f32 %v5995, %v6069
        %v6132 = vmul.f32 %v5996, %v6079
        %v6133 = vmul.f32 %v5997, %v6089
        %v6134 = vmul.f32 %v5998, %v6099
        %v6135 = vmul.f32 %v5999, %v6109
        %v6136 = vmul.f32 %v6000, %v6119
        %v6137 = vmul.f32 %v6001, %v6129
        %v6139 = vperm.slane %v5959, 0
        %v6141 = vmul.f32 %v6130, %v6139
        %v6142 = vmul.f32 %v6131, %v6139
        %v6143 = vmul.f32 %v6132, %v6139
        %v6144 = vmul.f32 %v6133, %v6139
        %v6145 = vmul.f32 %v6134, %v6139
        %v6146 = vmul.f32 %v6135, %v6139
        %v6147 = vmul.f32 %v6136, %v6139
        %v6148 = vmul.f32 %v6137, %v6139
        %v6150 = vperm.slane %v5961, 0
        %v6152 = vadd.f32 %v6141, %v6150
        %v6153 = vadd.f32 %v6142, %v6150
        %v6154 = vadd.f32 %v6143, %v6150
        %v6155 = vadd.f32 %v6144, %v6150
        %v6156 = vadd.f32 %v6145, %v6150
        %v6157 = vadd.f32 %v6146, %v6150
        %v6158 = vadd.f32 %v6147, %v6150
        %v6159 = vadd.f32 %v6148, %v6150
        %s6160 = scalar_lea.vmem %s77, 16
        %v6161 = vld [vmem:[%s6160] sm:$0xf]
        %v6162 = vld [vmem:[%s6160 + $0x4] sm:$0xf]
        %v6163 = vld [vmem:[%s6160 + $0x8] sm:$0xf]
        %v6164 = vld [vmem:[%s6160 + $0xc] sm:$0xf]
        %s6165 = scalar_lea.vmem %s45, 1
        %v6166 = vld [vmem:[%s6165] sm:$0x1]
        %s6167 = scalar_lea.vmem %s75, 16
        %v6168 = vld [vmem:[%s6167] sm:$0xf]
        %v6169 = vld [vmem:[%s6167 + $0x4] sm:$0xf]
        %v6170 = vld [vmem:[%s6167 + $0x8] sm:$0xf]
        %v6171 = vld [vmem:[%s6167 + $0xc] sm:$0xf]
        %s6172 = scalar_lea.vmem %s43, 1
        %v6173 = vld [vmem:[%s6172] sm:$0x1]
        %v6174 = vpack.c.bf16 %v6153, %v6152
        %v6175 = vpack.c.bf16 %v6155, %v6154
        %v6176 = vpack.c.bf16 %v6157, %v6156
        %v6177 = vpack.c.bf16 %v6159, %v6158
        %v6179 = vperm.slane %v6166, 0
        %v6185 = vunpack.c.l.b16 %v6161
        %v6186 = vunpack.c.l.b16 %v6162
        %v6187 = vunpack.c.l.b16 %v6163
        %v6188 = vunpack.c.l.b16 %v6164
        %v6189 = vpack.c.b16 %v6186, %v6185
        %v6190 = vpack.c.b16 %v6188, %v6187
        %v6194 = vsel %vm1264, %v6174, 0
        %v6197 = vsel %vm1264, %v6175, 0
        %v6200 = vsel %vm1264, %v6176, 0
        %v6203 = vsel %vm1264, %v6177, 0
        %6205 = vmatpush.bf16.msra.mxu0 0
        %6206 = vmatpush.bf16.msra.mxu0 0
        %6207 = vmatpush.bf16.msra.mxu0 0
        %6208 = vmatpush.bf16.msra.mxu0 0
        %6209 = vmatpush.bf16.msra.mxu0 0
        %6210 = vmatpush.bf16.msra.mxu0 0
        %6211 = vmatpush.bf16.msra.mxu0 %v6190
        %6212 = vmatpush.bf16.msra.mxu0 %v6189
        %6213 = vmatmul.bf16.gmra.mxu0 %v6194
        %v6214 = vpop.f32.mrf.mxu0
        %v6215 = vadd.f32 %v6179, %v6214
        %v6216 = vpop.f32.mrf.mxu0
        %v6217 = vadd.f32 %v6179, %v6216
        %6218 = vmatmul.bf16.gmra.mxu0 %v6197
        %v6219 = vpop.f32.mrf.mxu0
        %v6220 = vadd.f32 %v6179, %v6219
        %v6221 = vpop.f32.mrf.mxu0
        %v6222 = vadd.f32 %v6179, %v6221
        %6223 = vmatmul.bf16.gmra.mxu0 %v6200
        %v6224 = vpop.f32.mrf.mxu0
        %v6225 = vadd.f32 %v6179, %v6224
        %v6226 = vpop.f32.mrf.mxu0
        %v6227 = vadd.f32 %v6179, %v6226
        %6228 = vmatmul.bf16.gmra.mxu0 %v6203
        %v6229 = vpop.f32.mrf.mxu0
        %v6230 = vadd.f32 %v6179, %v6229
        %v6231 = vpop.f32.mrf.mxu0
        %v6232 = vadd.f32 %v6179, %v6231
        %6233 = vdwg.mxu0
        %6242 = vrot.lane.b32.xlu0 %v6215, 96
        %v6243 = vpop.permute.xlu0 %6242
        %6244 = vrot.lane.b32.xlu0 %v6217, 96
        %v6245 = vpop.permute.xlu0 %6244
        %6246 = vrot.lane.b32.xlu0 %v6220, 96
        %v6247 = vpop.permute.xlu0 %6246
        %6248 = vrot.lane.b32.xlu0 %v6222, 96
        %v6249 = vpop.permute.xlu0 %6248
        %6250 = vrot.lane.b32.xlu0 %v6225, 96
        %v6251 = vpop.permute.xlu0 %6250
        %6252 = vrot.lane.b32.xlu0 %v6227, 96
        %v6253 = vpop.permute.xlu0 %6252
        %6254 = vrot.lane.b32.xlu0 %v6230, 96
        %v6255 = vpop.permute.xlu0 %6254
        %6256 = vrot.lane.b32.xlu0 %v6232, 96
        %v6257 = vpop.permute.xlu0 %6256
        %v6258 = vsel %vm1545, %v6215, 0
        %v6260 = vsel %vm1545, %v6217, 0
        %v6262 = vsel %vm1545, %v6220, 0
        %v6264 = vsel %vm1545, %v6222, 0
        %v6266 = vsel %vm1545, %v6225, 0
        %v6268 = vsel %vm1545, %v6227, 0
        %v6270 = vsel %vm1545, %v6230, 0
        %v6272 = vsel %vm1545, %v6232, 0
        %v6274 = vsel %vm1545, %v6243, 0
        %v6276 = vsel %vm1545, %v6245, 0
        %v6278 = vsel %vm1545, %v6247, 0
        %v6280 = vsel %vm1545, %v6249, 0
        %v6282 = vsel %vm1545, %v6251, 0
        %v6284 = vsel %vm1545, %v6253, 0
        %v6286 = vsel %vm1545, %v6255, 0
        %v6288 = vsel %vm1545, %v6257, 0
        %6290 = vmatpush.xpose.msra.mxu0 0.0
        %6291 = vmatpush.xpose.msra.mxu0 0.0
        %6292 = vmatpush.xpose.msra.mxu0 0.0
        %6293 = vmatpush.xpose.msra.mxu0 0.0
        %6294 = vmatpush.xpose.msra.mxu0 0.0
        %6295 = vmatpush.xpose.msra.mxu0 0.0
        %6296 = vmatpush.xpose.msra.mxu0 0.0
        %6297 = vmatpush.xpose.msra.mxu0 0.0
        %6298 = vmatpush.xpose.msra.mxu0 %v6288
        %6299 = vmatpush.xpose.msra.mxu0 %v6286
        %6300 = vmatpush.xpose.msra.mxu0 %v6284
        %6301 = vmatpush.xpose.msra.mxu0 %v6282
        %6302 = vmatpush.xpose.msra.mxu0 %v6280
        %6303 = vmatpush.xpose.msra.mxu0 %v6278
        %6304 = vmatpush.xpose.msra.mxu0 %v6276
        %6305 = vmatpush.xpose.msra.mxu0 %v6274
        %6306 = vmatmul.f32.gmra.mxu0 %v6258
        %v6307 = vpop.f32.mrf.mxu0
        %v6308 = vadd.f32 0.0, %v6307
        %6309 = vmatmul.f32.gmra.mxu0 %v6260
        %v6310 = vpop.f32.mrf.mxu0
        %v6311 = vadd.f32 0.0, %v6310
        %6312 = vmatmul.f32.gmra.mxu0 %v6262
        %v6313 = vpop.f32.mrf.mxu0
        %v6314 = vadd.f32 0.0, %v6313
        %6315 = vmatmul.f32.gmra.mxu0 %v6264
        %v6316 = vpop.f32.mrf.mxu0
        %v6317 = vadd.f32 0.0, %v6316
        %6318 = vmatmul.f32.gmra.mxu0 %v6266
        %v6319 = vpop.f32.mrf.mxu0
        %v6320 = vadd.f32 0.0, %v6319
        %6321 = vmatmul.f32.gmra.mxu0 %v6268
        %v6322 = vpop.f32.mrf.mxu0
        %v6323 = vadd.f32 0.0, %v6322
        %6324 = vmatmul.f32.gmra.mxu0 %v6270
        %v6325 = vpop.f32.mrf.mxu0
        %v6326 = vadd.f32 0.0, %v6325
        %6327 = vmatmul.f32.gmra.mxu0 %v6272
        %v6328 = vpop.f32.mrf.mxu0
        %v6329 = vadd.f32 0.0, %v6328
        %6330 = vdwg.mxu0
        %v6331 = vmul.f32 %v6308, 0.35355338
        %v6332 = vmul.f32 %v6311, 0.35355338
        %v6333 = vmul.f32 %v6314, 0.35355338
        %v6334 = vmul.f32 %v6317, 0.35355338
        %v6335 = vmul.f32 %v6320, 0.35355338
        %v6336 = vmul.f32 %v6323, 0.35355338
        %v6337 = vmul.f32 %v6326, 0.35355338
        %v6338 = vmul.f32 %v6329, 0.35355338
        %v6339 = vsel %vm2575, %v6331, -inf
        %6340 = vmax.xlane.f32.xlu0 %v6339
        %v6341 = vpop.xlane.xlu0 %6340
        %v6342 = vsel %vm2575, %v6332, -inf
        %6343 = vmax.xlane.f32.xlu0 %v6342
        %v6344 = vpop.xlane.xlu0 %6343
        %v6345 = vsel %vm2575, %v6333, -inf
        %6346 = vmax.xlane.f32.xlu0 %v6345
        %v6347 = vpop.xlane.xlu0 %6346
        %v6348 = vsel %vm2575, %v6334, -inf
        %6349 = vmax.xlane.f32.xlu0 %v6348
        %v6350 = vpop.xlane.xlu0 %6349
        %v6351 = vsel %vm2575, %v6335, -inf
        %6352 = vmax.xlane.f32.xlu0 %v6351
        %v6353 = vpop.xlane.xlu0 %6352
        %v6354 = vsel %vm2575, %v6336, -inf
        %6355 = vmax.xlane.f32.xlu0 %v6354
        %v6356 = vpop.xlane.xlu0 %6355
        %v6357 = vsel %vm2575, %v6337, -inf
        %6358 = vmax.xlane.f32.xlu0 %v6357
        %v6359 = vpop.xlane.xlu0 %6358
        %v6360 = vsel %vm2575, %v6338, -inf
        %6361 = vmax.xlane.f32.xlu0 %v6360
        %v6362 = vpop.xlane.xlu0 %6361
        %v6363 = vsub.f32 %v6331, %v6341
        %v6364 = vsub.f32 %v6332, %v6344
        %v6365 = vsub.f32 %v6333, %v6347
        %v6366 = vsub.f32 %v6334, %v6350
        %v6367 = vsub.f32 %v6335, %v6353
        %v6368 = vsub.f32 %v6336, %v6356
        %v6369 = vsub.f32 %v6337, %v6359
        %v6370 = vsub.f32 %v6338, %v6362
        %v6371 = vmul.f32 %v6363, 1.442695
        %v6372 = vpow.pop %v6371
        %v6373 = vmul.f32 %v6364, 1.442695
        %v6374 = vpow.pop %v6373
        %v6375 = vmul.f32 %v6365, 1.442695
        %v6376 = vpow.pop %v6375
        %v6377 = vmul.f32 %v6366, 1.442695
        %v6378 = vpow.pop %v6377
        %v6379 = vmul.f32 %v6367, 1.442695
        %v6380 = vpow.pop %v6379
        %v6381 = vmul.f32 %v6368, 1.442695
        %v6382 = vpow.pop %v6381
        %v6383 = vmul.f32 %v6369, 1.442695
        %v6384 = vpow.pop %v6383
        %v6385 = vmul.f32 %v6370, 1.442695
        %v6386 = vpow.pop %v6385
        %v6387 = vsel %vm2575, %v6372, 0.0
        %6388 = vadd.xlane.f32.xlu0 %v6387
        %v6389 = vpop.xlane.xlu0 %6388
        %v6390 = vsel %vm2575, %v6374, 0.0
        %6391 = vadd.xlane.f32.xlu0 %v6390
        %v6392 = vpop.xlane.xlu0 %6391
        %v6393 = vsel %vm2575, %v6376, 0.0
        %6394 = vadd.xlane.f32.xlu0 %v6393
        %v6395 = vpop.xlane.xlu0 %6394
        %v6396 = vsel %vm2575, %v6378, 0.0
        %6397 = vadd.xlane.f32.xlu0 %v6396
        %v6398 = vpop.xlane.xlu0 %6397
        %v6399 = vsel %vm2575, %v6380, 0.0
        %6400 = vadd.xlane.f32.xlu0 %v6399
        %v6401 = vpop.xlane.xlu0 %6400
        %v6402 = vsel %vm2575, %v6382, 0.0
        %6403 = vadd.xlane.f32.xlu0 %v6402
        %v6404 = vpop.xlane.xlu0 %6403
        %v6405 = vsel %vm2575, %v6384, 0.0
        %6406 = vadd.xlane.f32.xlu0 %v6405
        %v6407 = vpop.xlane.xlu0 %6406
        %v6408 = vsel %vm2575, %v6386, 0.0
        %6409 = vadd.xlane.f32.xlu0 %v6408
        %v6410 = vpop.xlane.xlu0 %6409
        %v6411 = vrcp.pop %v6389
        %v6412 = vrcp.pop %v6392
        %v6413 = vrcp.pop %v6395
        %v6414 = vrcp.pop %v6398
        %v6415 = vrcp.pop %v6401
        %v6416 = vrcp.pop %v6404
        %v6417 = vrcp.pop %v6407
        %v6418 = vrcp.pop %v6410
        %v6419 = vmul.f32 %v6372, %v6411
        %v6420 = vmul.f32 %v6374, %v6412
        %v6421 = vmul.f32 %v6376, %v6413
        %v6422 = vmul.f32 %v6378, %v6414
        %v6423 = vmul.f32 %v6380, %v6415
        %v6424 = vmul.f32 %v6382, %v6416
        %v6425 = vmul.f32 %v6384, %v6417
        %v6426 = vmul.f32 %v6386, %v6418
        %6427 = vrot.lane.b32.xlu0 %v6215, 64
        %v6428 = vpop.permute.xlu0 %6427
        %6429 = vrot.lane.b32.xlu0 %v6217, 64
        %v6430 = vpop.permute.xlu0 %6429
        %6431 = vrot.lane.b32.xlu0 %v6220, 64
        %v6432 = vpop.permute.xlu0 %6431
        %6433 = vrot.lane.b32.xlu0 %v6222, 64
        %v6434 = vpop.permute.xlu0 %6433
        %6435 = vrot.lane.b32.xlu0 %v6225, 64
        %v6436 = vpop.permute.xlu0 %6435
        %6437 = vrot.lane.b32.xlu0 %v6227, 64
        %v6438 = vpop.permute.xlu0 %6437
        %6439 = vrot.lane.b32.xlu0 %v6230, 64
        %v6440 = vpop.permute.xlu0 %6439
        %6441 = vrot.lane.b32.xlu0 %v6232, 64
        %v6442 = vpop.permute.xlu0 %6441
        %v6452 = vsel %vm2575, %v6419, 0
        %v6455 = vsel %vm2575, %v6420, 0
        %v6458 = vsel %vm2575, %v6421, 0
        %v6461 = vsel %vm2575, %v6422, 0
        %v6464 = vsel %vm2575, %v6423, 0
        %v6467 = vsel %vm2575, %v6424, 0
        %v6470 = vsel %vm2575, %v6425, 0
        %v6473 = vsel %vm2575, %v6426, 0
        %6475 = vmatpush.msra.mxu0 0.0
        %6476 = vmatpush.msra.mxu0 0.0
        %6477 = vmatpush.msra.mxu0 0.0
        %6478 = vmatpush.msra.mxu0 0.0
        %6479 = vmatpush.msra.mxu0 0.0
        %6480 = vmatpush.msra.mxu0 0.0
        %6481 = vmatpush.msra.mxu0 0.0
        %6482 = vmatpush.msra.mxu0 0.0
        %6483 = vmatpush.msra.mxu0 %v6442
        %6484 = vmatpush.msra.mxu0 %v6440
        %6485 = vmatpush.msra.mxu0 %v6438
        %6486 = vmatpush.msra.mxu0 %v6436
        %6487 = vmatpush.msra.mxu0 %v6434
        %6488 = vmatpush.msra.mxu0 %v6432
        %6489 = vmatpush.msra.mxu0 %v6430
        %6490 = vmatpush.msra.mxu0 %v6428
        %6491 = vmatmul.f32.gmra.mxu0 %v6452
        %v6492 = vpop.f32.mrf.mxu0
        %v6493 = vadd.f32 0.0, %v6492
        %6494 = vmatmul.f32.gmra.mxu0 %v6455
        %v6495 = vpop.f32.mrf.mxu0
        %v6496 = vadd.f32 0.0, %v6495
        %6497 = vmatmul.f32.gmra.mxu0 %v6458
        %v6498 = vpop.f32.mrf.mxu0
        %v6499 = vadd.f32 0.0, %v6498
        %6500 = vmatmul.f32.gmra.mxu0 %v6461
        %v6501 = vpop.f32.mrf.mxu0
        %v6502 = vadd.f32 0.0, %v6501
        %6503 = vmatmul.f32.gmra.mxu0 %v6464
        %v6504 = vpop.f32.mrf.mxu0
        %v6505 = vadd.f32 0.0, %v6504
        %6506 = vmatmul.f32.gmra.mxu0 %v6467
        %v6507 = vpop.f32.mrf.mxu0
        %v6508 = vadd.f32 0.0, %v6507
        %6509 = vmatmul.f32.gmra.mxu0 %v6470
        %v6510 = vpop.f32.mrf.mxu0
        %v6511 = vadd.f32 0.0, %v6510
        %6512 = vmatmul.f32.gmra.mxu0 %v6473
        %v6513 = vpop.f32.mrf.mxu0
        %v6514 = vadd.f32 0.0, %v6513
        %6515 = vdwg.mxu0
        %6516 = vrot.lane.b32.xlu0 %v6215, 120
        %v6517 = vpop.permute.xlu0 %6516
        %6518 = vrot.lane.b32.xlu0 %v6217, 120
        %v6519 = vpop.permute.xlu0 %6518
        %6520 = vrot.lane.b32.xlu0 %v6220, 120
        %v6521 = vpop.permute.xlu0 %6520
        %6522 = vrot.lane.b32.xlu0 %v6222, 120
        %v6523 = vpop.permute.xlu0 %6522
        %6524 = vrot.lane.b32.xlu0 %v6225, 120
        %v6525 = vpop.permute.xlu0 %6524
        %6526 = vrot.lane.b32.xlu0 %v6227, 120
        %v6527 = vpop.permute.xlu0 %6526
        %6528 = vrot.lane.b32.xlu0 %v6230, 120
        %v6529 = vpop.permute.xlu0 %6528
        %6530 = vrot.lane.b32.xlu0 %v6232, 120
        %v6531 = vpop.permute.xlu0 %6530
        %6532 = vrot.lane.b32.xlu0 %v6215, 88
        %v6533 = vpop.permute.xlu0 %6532
        %6534 = vrot.lane.b32.xlu0 %v6217, 88
        %v6535 = vpop.permute.xlu0 %6534
        %6536 = vrot.lane.b32.xlu0 %v6220, 88
        %v6537 = vpop.permute.xlu0 %6536
        %6538 = vrot.lane.b32.xlu0 %v6222, 88
        %v6539 = vpop.permute.xlu0 %6538
        %6540 = vrot.lane.b32.xlu0 %v6225, 88
        %v6541 = vpop.permute.xlu0 %6540
        %6542 = vrot.lane.b32.xlu0 %v6227, 88
        %v6543 = vpop.permute.xlu0 %6542
        %6544 = vrot.lane.b32.xlu0 %v6230, 88
        %v6545 = vpop.permute.xlu0 %6544
        %6546 = vrot.lane.b32.xlu0 %v6232, 88
        %v6547 = vpop.permute.xlu0 %6546
        %v6548 = vsel %vm1545, %v6517, 0
        %v6550 = vsel %vm1545, %v6519, 0
        %v6552 = vsel %vm1545, %v6521, 0
        %v6554 = vsel %vm1545, %v6523, 0
        %v6556 = vsel %vm1545, %v6525, 0
        %v6558 = vsel %vm1545, %v6527, 0
        %v6560 = vsel %vm1545, %v6529, 0
        %v6562 = vsel %vm1545, %v6531, 0
        %v6564 = vsel %vm1545, %v6533, 0
        %v6566 = vsel %vm1545, %v6535, 0
        %v6568 = vsel %vm1545, %v6537, 0
        %v6570 = vsel %vm1545, %v6539, 0
        %v6572 = vsel %vm1545, %v6541, 0
        %v6574 = vsel %vm1545, %v6543, 0
        %v6576 = vsel %vm1545, %v6545, 0
        %v6578 = vsel %vm1545, %v6547, 0
        %6580 = vmatpush.xpose.msra.mxu0 0.0
        %6581 = vmatpush.xpose.msra.mxu0 0.0
        %6582 = vmatpush.xpose.msra.mxu0 0.0
        %6583 = vmatpush.xpose.msra.mxu0 0.0
        %6584 = vmatpush.xpose.msra.mxu0 0.0
        %6585 = vmatpush.xpose.msra.mxu0 0.0
        %6586 = vmatpush.xpose.msra.mxu0 0.0
        %6587 = vmatpush.xpose.msra.mxu0 0.0
        %6588 = vmatpush.xpose.msra.mxu0 %v6578
        %6589 = vmatpush.xpose.msra.mxu0 %v6576
        %6590 = vmatpush.xpose.msra.mxu0 %v6574
        %6591 = vmatpush.xpose.msra.mxu0 %v6572
        %6592 = vmatpush.xpose.msra.mxu0 %v6570
        %6593 = vmatpush.xpose.msra.mxu0 %v6568
        %6594 = vmatpush.xpose.msra.mxu0 %v6566
        %6595 = vmatpush.xpose.msra.mxu0 %v6564
        %6596 = vmatmul.f32.gmra.mxu0 %v6548
        %v6597 = vpop.f32.mrf.mxu0
        %v6598 = vadd.f32 0.0, %v6597
        %6599 = vmatmul.f32.gmra.mxu0 %v6550
        %v6600 = vpop.f32.mrf.mxu0
        %v6601 = vadd.f32 0.0, %v6600
        %6602 = vmatmul.f32.gmra.mxu0 %v6552
        %v6603 = vpop.f32.mrf.mxu0
        %v6604 = vadd.f32 0.0, %v6603
        %6605 = vmatmul.f32.gmra.mxu0 %v6554
        %v6606 = vpop.f32.mrf.mxu0
        %v6607 = vadd.f32 0.0, %v6606
        %6608 = vmatmul.f32.gmra.mxu0 %v6556
        %v6609 = vpop.f32.mrf.mxu0
        %v6610 = vadd.f32 0.0, %v6609
        %6611 = vmatmul.f32.gmra.mxu0 %v6558
        %v6612 = vpop.f32.mrf.mxu0
        %v6613 = vadd.f32 0.0, %v6612
        %6614 = vmatmul.f32.gmra.mxu0 %v6560
        %v6615 = vpop.f32.mrf.mxu0
        %v6616 = vadd.f32 0.0, %v6615
        %6617 = vmatmul.f32.gmra.mxu0 %v6562
        %v6618 = vpop.f32.mrf.mxu0
        %v6619 = vadd.f32 0.0, %v6618
        %6620 = vdwg.mxu0
        %v6621 = vmul.f32 %v6598, 0.35355338
        %v6622 = vmul.f32 %v6601, 0.35355338
        %v6623 = vmul.f32 %v6604, 0.35355338
        %v6624 = vmul.f32 %v6607, 0.35355338
        %v6625 = vmul.f32 %v6610, 0.35355338
        %v6626 = vmul.f32 %v6613, 0.35355338
        %v6627 = vmul.f32 %v6616, 0.35355338
        %v6628 = vmul.f32 %v6619, 0.35355338
        %v6629 = vsel %vm2575, %v6621, -inf
        %6630 = vmax.xlane.f32.xlu0 %v6629
        %v6631 = vpop.xlane.xlu0 %6630
        %v6632 = vsel %vm2575, %v6622, -inf
        %6633 = vmax.xlane.f32.xlu0 %v6632
        %v6634 = vpop.xlane.xlu0 %6633
        %v6635 = vsel %vm2575, %v6623, -inf
        %6636 = vmax.xlane.f32.xlu0 %v6635
        %v6637 = vpop.xlane.xlu0 %6636
        %v6638 = vsel %vm2575, %v6624, -inf
        %6639 = vmax.xlane.f32.xlu0 %v6638
        %v6640 = vpop.xlane.xlu0 %6639
        %v6641 = vsel %vm2575, %v6625, -inf
        %6642 = vmax.xlane.f32.xlu0 %v6641
        %v6643 = vpop.xlane.xlu0 %6642
        %v6644 = vsel %vm2575, %v6626, -inf
        %6645 = vmax.xlane.f32.xlu0 %v6644
        %v6646 = vpop.xlane.xlu0 %6645
        %v6647 = vsel %vm2575, %v6627, -inf
        %6648 = vmax.xlane.f32.xlu0 %v6647
        %v6649 = vpop.xlane.xlu0 %6648
        %v6650 = vsel %vm2575, %v6628, -inf
        %6651 = vmax.xlane.f32.xlu0 %v6650
        %v6652 = vpop.xlane.xlu0 %6651
        %v6653 = vsub.f32 %v6621, %v6631
        %v6654 = vsub.f32 %v6622, %v6634
        %v6655 = vsub.f32 %v6623, %v6637
        %v6656 = vsub.f32 %v6624, %v6640
        %v6657 = vsub.f32 %v6625, %v6643
        %v6658 = vsub.f32 %v6626, %v6646
        %v6659 = vsub.f32 %v6627, %v6649
        %v6660 = vsub.f32 %v6628, %v6652
        %v6661 = vmul.f32 %v6653, 1.442695
        %v6662 = vpow.pop %v6661
        %v6663 = vmul.f32 %v6654, 1.442695
        %v6664 = vpow.pop %v6663
        %v6665 = vmul.f32 %v6655, 1.442695
        %v6666 = vpow.pop %v6665
        %v6667 = vmul.f32 %v6656, 1.442695
        %v6668 = vpow.pop %v6667
        %v6669 = vmul.f32 %v6657, 1.442695
        %v6670 = vpow.pop %v6669
        %v6671 = vmul.f32 %v6658, 1.442695
        %v6672 = vpow.pop %v6671
        %v6673 = vmul.f32 %v6659, 1.442695
        %v6674 = vpow.pop %v6673
        %v6675 = vmul.f32 %v6660, 1.442695
        %v6676 = vpow.pop %v6675
        %v6677 = vsel %vm2575, %v6662, 0.0
        %6678 = vadd.xlane.f32.xlu0 %v6677
        %v6679 = vpop.xlane.xlu0 %6678
        %v6680 = vsel %vm2575, %v6664, 0.0
        %6681 = vadd.xlane.f32.xlu0 %v6680
        %v6682 = vpop.xlane.xlu0 %6681
        %v6683 = vsel %vm2575, %v6666, 0.0
        %6684 = vadd.xlane.f32.xlu0 %v6683
        %v6685 = vpop.xlane.xlu0 %6684
        %v6686 = vsel %vm2575, %v6668, 0.0
        %6687 = vadd.xlane.f32.xlu0 %v6686
        %v6688 = vpop.xlane.xlu0 %6687
        %v6689 = vsel %vm2575, %v6670, 0.0
        %6690 = vadd.xlane.f32.xlu0 %v6689
        %v6691 = vpop.xlane.xlu0 %6690
        %v6692 = vsel %vm2575, %v6672, 0.0
        %6693 = vadd.xlane.f32.xlu0 %v6692
        %v6694 = vpop.xlane.xlu0 %6693
        %v6695 = vsel %vm2575, %v6674, 0.0
        %6696 = vadd.xlane.f32.xlu0 %v6695
        %v6697 = vpop.xlane.xlu0 %6696
        %v6698 = vsel %vm2575, %v6676, 0.0
        %6699 = vadd.xlane.f32.xlu0 %v6698
        %v6700 = vpop.xlane.xlu0 %6699
        %v6701 = vrcp.pop %v6679
        %v6702 = vrcp.pop %v6682
        %v6703 = vrcp.pop %v6685
        %v6704 = vrcp.pop %v6688
        %v6705 = vrcp.pop %v6691
        %v6706 = vrcp.pop %v6694
        %v6707 = vrcp.pop %v6697
        %v6708 = vrcp.pop %v6700
        %v6709 = vmul.f32 %v6662, %v6701
        %v6710 = vmul.f32 %v6664, %v6702
        %v6711 = vmul.f32 %v6666, %v6703
        %v6712 = vmul.f32 %v6668, %v6704
        %v6713 = vmul.f32 %v6670, %v6705
        %v6714 = vmul.f32 %v6672, %v6706
        %v6715 = vmul.f32 %v6674, %v6707
        %v6716 = vmul.f32 %v6676, %v6708
        %6717 = vrot.lane.b32.xlu0 %v6215, 56
        %v6718 = vpop.permute.xlu0 %6717
        %6719 = vrot.lane.b32.xlu0 %v6217, 56
        %v6720 = vpop.permute.xlu0 %6719
        %6721 = vrot.lane.b32.xlu0 %v6220, 56
        %v6722 = vpop.permute.xlu0 %6721
        %6723 = vrot.lane.b32.xlu0 %v6222, 56
        %v6724 = vpop.permute.xlu0 %6723
        %6725 = vrot.lane.b32.xlu0 %v6225, 56
        %v6726 = vpop.permute.xlu0 %6725
        %6727 = vrot.lane.b32.xlu0 %v6227, 56
        %v6728 = vpop.permute.xlu0 %6727
        %6729 = vrot.lane.b32.xlu0 %v6230, 56
        %v6730 = vpop.permute.xlu0 %6729
        %6731 = vrot.lane.b32.xlu0 %v6232, 56
        %v6732 = vpop.permute.xlu0 %6731
        %v6742 = vsel %vm2575, %v6709, 0
        %v6745 = vsel %vm2575, %v6710, 0
        %v6748 = vsel %vm2575, %v6711, 0
        %v6751 = vsel %vm2575, %v6712, 0
        %v6754 = vsel %vm2575, %v6713, 0
        %v6757 = vsel %vm2575, %v6714, 0
        %v6760 = vsel %vm2575, %v6715, 0
        %v6763 = vsel %vm2575, %v6716, 0
        %6765 = vmatpush.msra.mxu0 0.0
        %6766 = vmatpush.msra.mxu0 0.0
        %6767 = vmatpush.msra.mxu0 0.0
        %6768 = vmatpush.msra.mxu0 0.0
        %6769 = vmatpush.msra.mxu0 0.0
        %6770 = vmatpush.msra.mxu0 0.0
        %6771 = vmatpush.msra.mxu0 0.0
        %6772 = vmatpush.msra.mxu0 0.0
        %6773 = vmatpush.msra.mxu0 %v6732
        %6774 = vmatpush.msra.mxu0 %v6730
        %6775 = vmatpush.msra.mxu0 %v6728
        %6776 = vmatpush.msra.mxu0 %v6726
        %6777 = vmatpush.msra.mxu0 %v6724
        %6778 = vmatpush.msra.mxu0 %v6722
        %6779 = vmatpush.msra.mxu0 %v6720
        %6780 = vmatpush.msra.mxu0 %v6718
        %6781 = vmatmul.f32.gmra.mxu0 %v6742
        %v6782 = vpop.f32.mrf.mxu0
        %v6783 = vadd.f32 0.0, %v6782
        %6784 = vmatmul.f32.gmra.mxu0 %v6745
        %v6785 = vpop.f32.mrf.mxu0
        %v6786 = vadd.f32 0.0, %v6785
        %6787 = vmatmul.f32.gmra.mxu0 %v6748
        %v6788 = vpop.f32.mrf.mxu0
        %v6789 = vadd.f32 0.0, %v6788
        %6790 = vmatmul.f32.gmra.mxu0 %v6751
        %v6791 = vpop.f32.mrf.mxu0
        %v6792 = vadd.f32 0.0, %v6791
        %6793 = vmatmul.f32.gmra.mxu0 %v6754
        %v6794 = vpop.f32.mrf.mxu0
        %v6795 = vadd.f32 0.0, %v6794
        %6796 = vmatmul.f32.gmra.mxu0 %v6757
        %v6797 = vpop.f32.mrf.mxu0
        %v6798 = vadd.f32 0.0, %v6797
        %6799 = vmatmul.f32.gmra.mxu0 %v6760
        %v6800 = vpop.f32.mrf.mxu0
        %v6801 = vadd.f32 0.0, %v6800
        %6802 = vmatmul.f32.gmra.mxu0 %v6763
        %v6803 = vpop.f32.mrf.mxu0
        %v6804 = vadd.f32 0.0, %v6803
        %6805 = vdwg.mxu0
        %6806 = vrot.lane.b32.xlu0 %v6215, 112
        %v6807 = vpop.permute.xlu0 %6806
        %6808 = vrot.lane.b32.xlu0 %v6217, 112
        %v6809 = vpop.permute.xlu0 %6808
        %6810 = vrot.lane.b32.xlu0 %v6220, 112
        %v6811 = vpop.permute.xlu0 %6810
        %6812 = vrot.lane.b32.xlu0 %v6222, 112
        %v6813 = vpop.permute.xlu0 %6812
        %6814 = vrot.lane.b32.xlu0 %v6225, 112
        %v6815 = vpop.permute.xlu0 %6814
        %6816 = vrot.lane.b32.xlu0 %v6227, 112
        %v6817 = vpop.permute.xlu0 %6816
        %6818 = vrot.lane.b32.xlu0 %v6230, 112
        %v6819 = vpop.permute.xlu0 %6818
        %6820 = vrot.lane.b32.xlu0 %v6232, 112
        %v6821 = vpop.permute.xlu0 %6820
        %6822 = vrot.lane.b32.xlu0 %v6215, 80
        %v6823 = vpop.permute.xlu0 %6822
        %6824 = vrot.lane.b32.xlu0 %v6217, 80
        %v6825 = vpop.permute.xlu0 %6824
        %6826 = vrot.lane.b32.xlu0 %v6220, 80
        %v6827 = vpop.permute.xlu0 %6826
        %6828 = vrot.lane.b32.xlu0 %v6222, 80
        %v6829 = vpop.permute.xlu0 %6828
        %6830 = vrot.lane.b32.xlu0 %v6225, 80
        %v6831 = vpop.permute.xlu0 %6830
        %6832 = vrot.lane.b32.xlu0 %v6227, 80
        %v6833 = vpop.permute.xlu0 %6832
        %6834 = vrot.lane.b32.xlu0 %v6230, 80
        %v6835 = vpop.permute.xlu0 %6834
        %6836 = vrot.lane.b32.xlu0 %v6232, 80
        %v6837 = vpop.permute.xlu0 %6836
        %v6838 = vsel %vm1545, %v6807, 0
        %v6840 = vsel %vm1545, %v6809, 0
        %v6842 = vsel %vm1545, %v6811, 0
        %v6844 = vsel %vm1545, %v6813, 0
        %v6846 = vsel %vm1545, %v6815, 0
        %v6848 = vsel %vm1545, %v6817, 0
        %v6850 = vsel %vm1545, %v6819, 0
        %v6852 = vsel %vm1545, %v6821, 0
        %v6854 = vsel %vm1545, %v6823, 0
        %v6856 = vsel %vm1545, %v6825, 0
        %v6858 = vsel %vm1545, %v6827, 0
        %v6860 = vsel %vm1545, %v6829, 0
        %v6862 = vsel %vm1545, %v6831, 0
        %v6864 = vsel %vm1545, %v6833, 0
        %v6866 = vsel %vm1545, %v6835, 0
        %v6868 = vsel %vm1545, %v6837, 0
        %6870 = vmatpush.xpose.msra.mxu0 0.0
        %6871 = vmatpush.xpose.msra.mxu0 0.0
        %6872 = vmatpush.xpose.msra.mxu0 0.0
        %6873 = vmatpush.xpose.msra.mxu0 0.0
        %6874 = vmatpush.xpose.msra.mxu0 0.0
        %6875 = vmatpush.xpose.msra.mxu0 0.0
        %6876 = vmatpush.xpose.msra.mxu0 0.0
        %6877 = vmatpush.xpose.msra.mxu0 0.0
        %6878 = vmatpush.xpose.msra.mxu0 %v6868
        %6879 = vmatpush.xpose.msra.mxu0 %v6866
        %6880 = vmatpush.xpose.msra.mxu0 %v6864
        %6881 = vmatpush.xpose.msra.mxu0 %v6862
        %6882 = vmatpush.xpose.msra.mxu0 %v6860
        %6883 = vmatpush.xpose.msra.mxu0 %v6858
        %6884 = vmatpush.xpose.msra.mxu0 %v6856
        %6885 = vmatpush.xpose.msra.mxu0 %v6854
        %6886 = vmatmul.f32.gmra.mxu0 %v6838
        %v6887 = vpop.f32.mrf.mxu0
        %v6888 = vadd.f32 0.0, %v6887
        %6889 = vmatmul.f32.gmra.mxu0 %v6840
        %v6890 = vpop.f32.mrf.mxu0
        %v6891 = vadd.f32 0.0, %v6890
        %6892 = vmatmul.f32.gmra.mxu0 %v6842
        %v6893 = vpop.f32.mrf.mxu0
        %v6894 = vadd.f32 0.0, %v6893
        %6895 = vmatmul.f32.gmra.mxu0 %v6844
        %v6896 = vpop.f32.mrf.mxu0
        %v6897 = vadd.f32 0.0, %v6896
        %6898 = vmatmul.f32.gmra.mxu0 %v6846
        %v6899 = vpop.f32.mrf.mxu0
        %v6900 = vadd.f32 0.0, %v6899
        %6901 = vmatmul.f32.gmra.mxu0 %v6848
        %v6902 = vpop.f32.mrf.mxu0
        %v6903 = vadd.f32 0.0, %v6902
        %6904 = vmatmul.f32.gmra.mxu0 %v6850
        %v6905 = vpop.f32.mrf.mxu0
        %v6906 = vadd.f32 0.0, %v6905
        %6907 = vmatmul.f32.gmra.mxu0 %v6852
        %v6908 = vpop.f32.mrf.mxu0
        %v6909 = vadd.f32 0.0, %v6908
        %6910 = vdwg.mxu0
        %v6911 = vmul.f32 %v6888, 0.35355338
        %v6912 = vmul.f32 %v6891, 0.35355338
        %v6913 = vmul.f32 %v6894, 0.35355338
        %v6914 = vmul.f32 %v6897, 0.35355338
        %v6915 = vmul.f32 %v6900, 0.35355338
        %v6916 = vmul.f32 %v6903, 0.35355338
        %v6917 = vmul.f32 %v6906, 0.35355338
        %v6918 = vmul.f32 %v6909, 0.35355338
        %v6919 = vsel %vm2575, %v6911, -inf
        %6920 = vmax.xlane.f32.xlu0 %v6919
        %v6921 = vpop.xlane.xlu0 %6920
        %v6922 = vsel %vm2575, %v6912, -inf
        %6923 = vmax.xlane.f32.xlu0 %v6922
        %v6924 = vpop.xlane.xlu0 %6923
        %v6925 = vsel %vm2575, %v6913, -inf
        %6926 = vmax.xlane.f32.xlu0 %v6925
        %v6927 = vpop.xlane.xlu0 %6926
        %v6928 = vsel %vm2575, %v6914, -inf
        %6929 = vmax.xlane.f32.xlu0 %v6928
        %v6930 = vpop.xlane.xlu0 %6929
        %v6931 = vsel %vm2575, %v6915, -inf
        %6932 = vmax.xlane.f32.xlu0 %v6931
        %v6933 = vpop.xlane.xlu0 %6932
        %v6934 = vsel %vm2575, %v6916, -inf
        %6935 = vmax.xlane.f32.xlu0 %v6934
        %v6936 = vpop.xlane.xlu0 %6935
        %v6937 = vsel %vm2575, %v6917, -inf
        %6938 = vmax.xlane.f32.xlu0 %v6937
        %v6939 = vpop.xlane.xlu0 %6938
        %v6940 = vsel %vm2575, %v6918, -inf
        %6941 = vmax.xlane.f32.xlu0 %v6940
        %v6942 = vpop.xlane.xlu0 %6941
        %v6943 = vsub.f32 %v6911, %v6921
        %v6944 = vsub.f32 %v6912, %v6924
        %v6945 = vsub.f32 %v6913, %v6927
        %v6946 = vsub.f32 %v6914, %v6930
        %v6947 = vsub.f32 %v6915, %v6933
        %v6948 = vsub.f32 %v6916, %v6936
        %v6949 = vsub.f32 %v6917, %v6939
        %v6950 = vsub.f32 %v6918, %v6942
        %v6951 = vmul.f32 %v6943, 1.442695
        %v6952 = vpow.pop %v6951
        %v6953 = vmul.f32 %v6944, 1.442695
        %v6954 = vpow.pop %v6953
        %v6955 = vmul.f32 %v6945, 1.442695
        %v6956 = vpow.pop %v6955
        %v6957 = vmul.f32 %v6946, 1.442695
        %v6958 = vpow.pop %v6957
        %v6959 = vmul.f32 %v6947, 1.442695
        %v6960 = vpow.pop %v6959
        %v6961 = vmul.f32 %v6948, 1.442695
        %v6962 = vpow.pop %v6961
        %v6963 = vmul.f32 %v6949, 1.442695
        %v6964 = vpow.pop %v6963
        %v6965 = vmul.f32 %v6950, 1.442695
        %v6966 = vpow.pop %v6965
        %v6967 = vsel %vm2575, %v6952, 0.0
        %6968 = vadd.xlane.f32.xlu0 %v6967
        %v6969 = vpop.xlane.xlu0 %6968
        %v6970 = vsel %vm2575, %v6954, 0.0
        %6971 = vadd.xlane.f32.xlu0 %v6970
        %v6972 = vpop.xlane.xlu0 %6971
        %v6973 = vsel %vm2575, %v6956, 0.0
        %6974 = vadd.xlane.f32.xlu0 %v6973
        %v6975 = vpop.xlane.xlu0 %6974
        %v6976 = vsel %vm2575, %v6958, 0.0
        %6977 = vadd.xlane.f32.xlu0 %v6976
        %v6978 = vpop.xlane.xlu0 %6977
        %v6979 = vsel %vm2575, %v6960, 0.0
        %6980 = vadd.xlane.f32.xlu0 %v6979
        %v6981 = vpop.xlane.xlu0 %6980
        %v6982 = vsel %vm2575, %v6962, 0.0
        %6983 = vadd.xlane.f32.xlu0 %v6982
        %v6984 = vpop.xlane.xlu0 %6983
        %v6985 = vsel %vm2575, %v6964, 0.0
        %6986 = vadd.xlane.f32.xlu0 %v6985
        %v6987 = vpop.xlane.xlu0 %6986
        %v6988 = vsel %vm2575, %v6966, 0.0
        %6989 = vadd.xlane.f32.xlu0 %v6988
        %v6990 = vpop.xlane.xlu0 %6989
        %v6991 = vrcp.pop %v6969
        %v6992 = vrcp.pop %v6972
        %v6993 = vrcp.pop %v6975
        %v6994 = vrcp.pop %v6978
        %v6995 = vrcp.pop %v6981
        %v6996 = vrcp.pop %v6984
        %v6997 = vrcp.pop %v6987
        %v6998 = vrcp.pop %v6990
        %v6999 = vmul.f32 %v6952, %v6991
        %v7000 = vmul.f32 %v6954, %v6992
        %v7001 = vmul.f32 %v6956, %v6993
        %v7002 = vmul.f32 %v6958, %v6994
        %v7003 = vmul.f32 %v6960, %v6995
        %v7004 = vmul.f32 %v6962, %v6996
        %v7005 = vmul.f32 %v6964, %v6997
        %v7006 = vmul.f32 %v6966, %v6998
        %7007 = vrot.lane.b32.xlu0 %v6215, 48
        %v7008 = vpop.permute.xlu0 %7007
        %7009 = vrot.lane.b32.xlu0 %v6217, 48
        %v7010 = vpop.permute.xlu0 %7009
        %7011 = vrot.lane.b32.xlu0 %v6220, 48
        %v7012 = vpop.permute.xlu0 %7011
        %7013 = vrot.lane.b32.xlu0 %v6222, 48
        %v7014 = vpop.permute.xlu0 %7013
        %7015 = vrot.lane.b32.xlu0 %v6225, 48
        %v7016 = vpop.permute.xlu0 %7015
        %7017 = vrot.lane.b32.xlu0 %v6227, 48
        %v7018 = vpop.permute.xlu0 %7017
        %7019 = vrot.lane.b32.xlu0 %v6230, 48
        %v7020 = vpop.permute.xlu0 %7019
        %7021 = vrot.lane.b32.xlu0 %v6232, 48
        %v7022 = vpop.permute.xlu0 %7021
        %v7032 = vsel %vm2575, %v6999, 0
        %v7035 = vsel %vm2575, %v7000, 0
        %v7038 = vsel %vm2575, %v7001, 0
        %v7041 = vsel %vm2575, %v7002, 0
        %v7044 = vsel %vm2575, %v7003, 0
        %v7047 = vsel %vm2575, %v7004, 0
        %v7050 = vsel %vm2575, %v7005, 0
        %v7053 = vsel %vm2575, %v7006, 0
        %7055 = vmatpush.msra.mxu0 0.0
        %7056 = vmatpush.msra.mxu0 0.0
        %7057 = vmatpush.msra.mxu0 0.0
        %7058 = vmatpush.msra.mxu0 0.0
        %7059 = vmatpush.msra.mxu0 0.0
        %7060 = vmatpush.msra.mxu0 0.0
        %7061 = vmatpush.msra.mxu0 0.0
        %7062 = vmatpush.msra.mxu0 0.0
        %7063 = vmatpush.msra.mxu0 %v7022
        %7064 = vmatpush.msra.mxu0 %v7020
        %7065 = vmatpush.msra.mxu0 %v7018
        %7066 = vmatpush.msra.mxu0 %v7016
        %7067 = vmatpush.msra.mxu0 %v7014
        %7068 = vmatpush.msra.mxu0 %v7012
        %7069 = vmatpush.msra.mxu0 %v7010
        %7070 = vmatpush.msra.mxu0 %v7008
        %7071 = vmatmul.f32.gmra.mxu0 %v7032
        %v7072 = vpop.f32.mrf.mxu0
        %v7073 = vadd.f32 0.0, %v7072
        %7074 = vmatmul.f32.gmra.mxu0 %v7035
        %v7075 = vpop.f32.mrf.mxu0
        %v7076 = vadd.f32 0.0, %v7075
        %7077 = vmatmul.f32.gmra.mxu0 %v7038
        %v7078 = vpop.f32.mrf.mxu0
        %v7079 = vadd.f32 0.0, %v7078
        %7080 = vmatmul.f32.gmra.mxu0 %v7041
        %v7081 = vpop.f32.mrf.mxu0
        %v7082 = vadd.f32 0.0, %v7081
        %7083 = vmatmul.f32.gmra.mxu0 %v7044
        %v7084 = vpop.f32.mrf.mxu0
        %v7085 = vadd.f32 0.0, %v7084
        %7086 = vmatmul.f32.gmra.mxu0 %v7047
        %v7087 = vpop.f32.mrf.mxu0
        %v7088 = vadd.f32 0.0, %v7087
        %7089 = vmatmul.f32.gmra.mxu0 %v7050
        %v7090 = vpop.f32.mrf.mxu0
        %v7091 = vadd.f32 0.0, %v7090
        %7092 = vmatmul.f32.gmra.mxu0 %v7053
        %v7093 = vpop.f32.mrf.mxu0
        %v7094 = vadd.f32 0.0, %v7093
        %7095 = vdwg.mxu0
        %7096 = vrot.lane.b32.xlu0 %v6215, 104
        %v7097 = vpop.permute.xlu0 %7096
        %7098 = vrot.lane.b32.xlu0 %v6217, 104
        %v7099 = vpop.permute.xlu0 %7098
        %7100 = vrot.lane.b32.xlu0 %v6220, 104
        %v7101 = vpop.permute.xlu0 %7100
        %7102 = vrot.lane.b32.xlu0 %v6222, 104
        %v7103 = vpop.permute.xlu0 %7102
        %7104 = vrot.lane.b32.xlu0 %v6225, 104
        %v7105 = vpop.permute.xlu0 %7104
        %7106 = vrot.lane.b32.xlu0 %v6227, 104
        %v7107 = vpop.permute.xlu0 %7106
        %7108 = vrot.lane.b32.xlu0 %v6230, 104
        %v7109 = vpop.permute.xlu0 %7108
        %7110 = vrot.lane.b32.xlu0 %v6232, 104
        %v7111 = vpop.permute.xlu0 %7110
        %7112 = vrot.lane.b32.xlu0 %v6215, 72
        %v7113 = vpop.permute.xlu0 %7112
        %7114 = vrot.lane.b32.xlu0 %v6217, 72
        %v7115 = vpop.permute.xlu0 %7114
        %7116 = vrot.lane.b32.xlu0 %v6220, 72
        %v7117 = vpop.permute.xlu0 %7116
        %7118 = vrot.lane.b32.xlu0 %v6222, 72
        %v7119 = vpop.permute.xlu0 %7118
        %7120 = vrot.lane.b32.xlu0 %v6225, 72
        %v7121 = vpop.permute.xlu0 %7120
        %7122 = vrot.lane.b32.xlu0 %v6227, 72
        %v7123 = vpop.permute.xlu0 %7122
        %7124 = vrot.lane.b32.xlu0 %v6230, 72
        %v7125 = vpop.permute.xlu0 %7124
        %7126 = vrot.lane.b32.xlu0 %v6232, 72
        %v7127 = vpop.permute.xlu0 %7126
        %v7128 = vsel %vm1545, %v7097, 0
        %v7130 = vsel %vm1545, %v7099, 0
        %v7132 = vsel %vm1545, %v7101, 0
        %v7134 = vsel %vm1545, %v7103, 0
        %v7136 = vsel %vm1545, %v7105, 0
        %v7138 = vsel %vm1545, %v7107, 0
        %v7140 = vsel %vm1545, %v7109, 0
        %v7142 = vsel %vm1545, %v7111, 0
        %v7144 = vsel %vm1545, %v7113, 0
        %v7146 = vsel %vm1545, %v7115, 0
        %v7148 = vsel %vm1545, %v7117, 0
        %v7150 = vsel %vm1545, %v7119, 0
        %v7152 = vsel %vm1545, %v7121, 0
        %v7154 = vsel %vm1545, %v7123, 0
        %v7156 = vsel %vm1545, %v7125, 0
        %v7158 = vsel %vm1545, %v7127, 0
        %7160 = vmatpush.xpose.msra.mxu0 0.0
        %7161 = vmatpush.xpose.msra.mxu0 0.0
        %7162 = vmatpush.xpose.msra.mxu0 0.0
        %7163 = vmatpush.xpose.msra.mxu0 0.0
        %7164 = vmatpush.xpose.msra.mxu0 0.0
        %7165 = vmatpush.xpose.msra.mxu0 0.0
        %7166 = vmatpush.xpose.msra.mxu0 0.0
        %7167 = vmatpush.xpose.msra.mxu0 0.0
        %7168 = vmatpush.xpose.msra.mxu0 %v7158
        %7169 = vmatpush.xpose.msra.mxu0 %v7156
        %7170 = vmatpush.xpose.msra.mxu0 %v7154
        %7171 = vmatpush.xpose.msra.mxu0 %v7152
        %7172 = vmatpush.xpose.msra.mxu0 %v7150
        %7173 = vmatpush.xpose.msra.mxu0 %v7148
        %7174 = vmatpush.xpose.msra.mxu0 %v7146
        %7175 = vmatpush.xpose.msra.mxu0 %v7144
        %7176 = vmatmul.f32.gmra.mxu0 %v7128
        %v7177 = vpop.f32.mrf.mxu0
        %v7178 = vadd.f32 0.0, %v7177
        %7179 = vmatmul.f32.gmra.mxu0 %v7130
        %v7180 = vpop.f32.mrf.mxu0
        %v7181 = vadd.f32 0.0, %v7180
        %7182 = vmatmul.f32.gmra.mxu0 %v7132
        %v7183 = vpop.f32.mrf.mxu0
        %v7184 = vadd.f32 0.0, %v7183
        %7185 = vmatmul.f32.gmra.mxu0 %v7134
        %v7186 = vpop.f32.mrf.mxu0
        %v7187 = vadd.f32 0.0, %v7186
        %7188 = vmatmul.f32.gmra.mxu0 %v7136
        %v7189 = vpop.f32.mrf.mxu0
        %v7190 = vadd.f32 0.0, %v7189
        %7191 = vmatmul.f32.gmra.mxu0 %v7138
        %v7192 = vpop.f32.mrf.mxu0
        %v7193 = vadd.f32 0.0, %v7192
        %7194 = vmatmul.f32.gmra.mxu0 %v7140
        %v7195 = vpop.f32.mrf.mxu0
        %v7196 = vadd.f32 0.0, %v7195
        %7197 = vmatmul.f32.gmra.mxu0 %v7142
        %v7198 = vpop.f32.mrf.mxu0
        %v7199 = vadd.f32 0.0, %v7198
        %7200 = vdwg.mxu0
        %v7201 = vmul.f32 %v7178, 0.35355338
        %v7202 = vmul.f32 %v7181, 0.35355338
        %v7203 = vmul.f32 %v7184, 0.35355338
        %v7204 = vmul.f32 %v7187, 0.35355338
        %v7205 = vmul.f32 %v7190, 0.35355338
        %v7206 = vmul.f32 %v7193, 0.35355338
        %v7207 = vmul.f32 %v7196, 0.35355338
        %v7208 = vmul.f32 %v7199, 0.35355338
        %v7209 = vsel %vm2575, %v7201, -inf
        %7210 = vmax.xlane.f32.xlu0 %v7209
        %v7211 = vpop.xlane.xlu0 %7210
        %v7212 = vsel %vm2575, %v7202, -inf
        %7213 = vmax.xlane.f32.xlu0 %v7212
        %v7214 = vpop.xlane.xlu0 %7213
        %v7215 = vsel %vm2575, %v7203, -inf
        %7216 = vmax.xlane.f32.xlu0 %v7215
        %v7217 = vpop.xlane.xlu0 %7216
        %v7218 = vsel %vm2575, %v7204, -inf
        %7219 = vmax.xlane.f32.xlu0 %v7218
        %v7220 = vpop.xlane.xlu0 %7219
        %v7221 = vsel %vm2575, %v7205, -inf
        %7222 = vmax.xlane.f32.xlu0 %v7221
        %v7223 = vpop.xlane.xlu0 %7222
        %v7224 = vsel %vm2575, %v7206, -inf
        %7225 = vmax.xlane.f32.xlu0 %v7224
        %v7226 = vpop.xlane.xlu0 %7225
        %v7227 = vsel %vm2575, %v7207, -inf
        %7228 = vmax.xlane.f32.xlu0 %v7227
        %v7229 = vpop.xlane.xlu0 %7228
        %v7230 = vsel %vm2575, %v7208, -inf
        %7231 = vmax.xlane.f32.xlu0 %v7230
        %v7232 = vpop.xlane.xlu0 %7231
        %v7233 = vsub.f32 %v7201, %v7211
        %v7234 = vsub.f32 %v7202, %v7214
        %v7235 = vsub.f32 %v7203, %v7217
        %v7236 = vsub.f32 %v7204, %v7220
        %v7237 = vsub.f32 %v7205, %v7223
        %v7238 = vsub.f32 %v7206, %v7226
        %v7239 = vsub.f32 %v7207, %v7229
        %v7240 = vsub.f32 %v7208, %v7232
        %v7241 = vmul.f32 %v7233, 1.442695
        %v7242 = vpow.pop %v7241
        %v7243 = vmul.f32 %v7234, 1.442695
        %v7244 = vpow.pop %v7243
        %v7245 = vmul.f32 %v7235, 1.442695
        %v7246 = vpow.pop %v7245
        %v7247 = vmul.f32 %v7236, 1.442695
        %v7248 = vpow.pop %v7247
        %v7249 = vmul.f32 %v7237, 1.442695
        %v7250 = vpow.pop %v7249
        %v7251 = vmul.f32 %v7238, 1.442695
        %v7252 = vpow.pop %v7251
        %v7253 = vmul.f32 %v7239, 1.442695
        %v7254 = vpow.pop %v7253
        %v7255 = vmul.f32 %v7240, 1.442695
        %v7256 = vpow.pop %v7255
        %v7257 = vsel %vm2575, %v7242, 0.0
        %7258 = vadd.xlane.f32.xlu0 %v7257
        %v7259 = vpop.xlane.xlu0 %7258
        %v7260 = vsel %vm2575, %v7244, 0.0
        %7261 = vadd.xlane.f32.xlu0 %v7260
        %v7262 = vpop.xlane.xlu0 %7261
        %v7263 = vsel %vm2575, %v7246, 0.0
        %7264 = vadd.xlane.f32.xlu0 %v7263
        %v7265 = vpop.xlane.xlu0 %7264
        %v7266 = vsel %vm2575, %v7248, 0.0
        %7267 = vadd.xlane.f32.xlu0 %v7266
        %v7268 = vpop.xlane.xlu0 %7267
        %v7269 = vsel %vm2575, %v7250, 0.0
        %7270 = vadd.xlane.f32.xlu0 %v7269
        %v7271 = vpop.xlane.xlu0 %7270
        %v7272 = vsel %vm2575, %v7252, 0.0
        %7273 = vadd.xlane.f32.xlu0 %v7272
        %v7274 = vpop.xlane.xlu0 %7273
        %v7275 = vsel %vm2575, %v7254, 0.0
        %7276 = vadd.xlane.f32.xlu0 %v7275
        %v7277 = vpop.xlane.xlu0 %7276
        %v7278 = vsel %vm2575, %v7256, 0.0
        %7279 = vadd.xlane.f32.xlu0 %v7278
        %v7280 = vpop.xlane.xlu0 %7279
        %v7281 = vrcp.pop %v7259
        %v7282 = vrcp.pop %v7262
        %v7283 = vrcp.pop %v7265
        %v7284 = vrcp.pop %v7268
        %v7285 = vrcp.pop %v7271
        %v7286 = vrcp.pop %v7274
        %v7287 = vrcp.pop %v7277
        %v7288 = vrcp.pop %v7280
        %v7289 = vmul.f32 %v7242, %v7281
        %v7290 = vmul.f32 %v7244, %v7282
        %v7291 = vmul.f32 %v7246, %v7283
        %v7292 = vmul.f32 %v7248, %v7284
        %v7293 = vmul.f32 %v7250, %v7285
        %v7294 = vmul.f32 %v7252, %v7286
        %v7295 = vmul.f32 %v7254, %v7287
        %v7296 = vmul.f32 %v7256, %v7288
        %7297 = vrot.lane.b32.xlu0 %v6215, 40
        %v7298 = vpop.permute.xlu0 %7297
        %7299 = vrot.lane.b32.xlu0 %v6217, 40
        %v7300 = vpop.permute.xlu0 %7299
        %7301 = vrot.lane.b32.xlu0 %v6220, 40
        %v7302 = vpop.permute.xlu0 %7301
        %7303 = vrot.lane.b32.xlu0 %v6222, 40
        %v7304 = vpop.permute.xlu0 %7303
        %7305 = vrot.lane.b32.xlu0 %v6225, 40
        %v7306 = vpop.permute.xlu0 %7305
        %7307 = vrot.lane.b32.xlu0 %v6227, 40
        %v7308 = vpop.permute.xlu0 %7307
        %7309 = vrot.lane.b32.xlu0 %v6230, 40
        %v7310 = vpop.permute.xlu0 %7309
        %7311 = vrot.lane.b32.xlu0 %v6232, 40
        %v7312 = vpop.permute.xlu0 %7311
        %v7322 = vsel %vm2575, %v7289, 0
        %v7325 = vsel %vm2575, %v7290, 0
        %v7328 = vsel %vm2575, %v7291, 0
        %v7331 = vsel %vm2575, %v7292, 0
        %v7334 = vsel %vm2575, %v7293, 0
        %v7337 = vsel %vm2575, %v7294, 0
        %v7340 = vsel %vm2575, %v7295, 0
        %v7343 = vsel %vm2575, %v7296, 0
        %7345 = vmatpush.msra.mxu0 0.0
        %7346 = vmatpush.msra.mxu0 0.0
        %7347 = vmatpush.msra.mxu0 0.0
        %7348 = vmatpush.msra.mxu0 0.0
        %7349 = vmatpush.msra.mxu0 0.0
        %7350 = vmatpush.msra.mxu0 0.0
        %7351 = vmatpush.msra.mxu0 0.0
        %7352 = vmatpush.msra.mxu0 0.0
        %7353 = vmatpush.msra.mxu0 %v7312
        %7354 = vmatpush.msra.mxu0 %v7310
        %7355 = vmatpush.msra.mxu0 %v7308
        %7356 = vmatpush.msra.mxu0 %v7306
        %7357 = vmatpush.msra.mxu0 %v7304
        %7358 = vmatpush.msra.mxu0 %v7302
        %7359 = vmatpush.msra.mxu0 %v7300
        %7360 = vmatpush.msra.mxu0 %v7298
        %7361 = vmatmul.f32.gmra.mxu0 %v7322
        %v7362 = vpop.f32.mrf.mxu0
        %v7363 = vadd.f32 0.0, %v7362
        %7364 = vmatmul.f32.gmra.mxu0 %v7325
        %v7365 = vpop.f32.mrf.mxu0
        %v7366 = vadd.f32 0.0, %v7365
        %7367 = vmatmul.f32.gmra.mxu0 %v7328
        %v7368 = vpop.f32.mrf.mxu0
        %v7369 = vadd.f32 0.0, %v7368
        %7370 = vmatmul.f32.gmra.mxu0 %v7331
        %v7371 = vpop.f32.mrf.mxu0
        %v7372 = vadd.f32 0.0, %v7371
        %7373 = vmatmul.f32.gmra.mxu0 %v7334
        %v7374 = vpop.f32.mrf.mxu0
        %v7375 = vadd.f32 0.0, %v7374
        %7376 = vmatmul.f32.gmra.mxu0 %v7337
        %v7377 = vpop.f32.mrf.mxu0
        %v7378 = vadd.f32 0.0, %v7377
        %7379 = vmatmul.f32.gmra.mxu0 %v7340
        %v7380 = vpop.f32.mrf.mxu0
        %v7381 = vadd.f32 0.0, %v7380
        %7382 = vmatmul.f32.gmra.mxu0 %v7343
        %v7383 = vpop.f32.mrf.mxu0
        %v7384 = vadd.f32 0.0, %v7383
        %7385 = vdwg.mxu0
        %7394 = vrot.lane.b32.xlu0 %v6783, 8
        %v7395 = vpop.permute.xlu0 %7394
        %7396 = vrot.lane.b32.xlu0 %v6786, 8
        %v7397 = vpop.permute.xlu0 %7396
        %7398 = vrot.lane.b32.xlu0 %v6789, 8
        %v7399 = vpop.permute.xlu0 %7398
        %7400 = vrot.lane.b32.xlu0 %v6792, 8
        %v7401 = vpop.permute.xlu0 %7400
        %7402 = vrot.lane.b32.xlu0 %v6795, 8
        %v7403 = vpop.permute.xlu0 %7402
        %7404 = vrot.lane.b32.xlu0 %v6798, 8
        %v7405 = vpop.permute.xlu0 %7404
        %7406 = vrot.lane.b32.xlu0 %v6801, 8
        %v7407 = vpop.permute.xlu0 %7406
        %7408 = vrot.lane.b32.xlu0 %v6804, 8
        %v7409 = vpop.permute.xlu0 %7408
        %7426 = vrot.lane.b32.xlu0 %v7073, 16
        %v7427 = vpop.permute.xlu0 %7426
        %7428 = vrot.lane.b32.xlu0 %v7076, 16
        %v7429 = vpop.permute.xlu0 %7428
        %7430 = vrot.lane.b32.xlu0 %v7079, 16
        %v7431 = vpop.permute.xlu0 %7430
        %7432 = vrot.lane.b32.xlu0 %v7082, 16
        %v7433 = vpop.permute.xlu0 %7432
        %7434 = vrot.lane.b32.xlu0 %v7085, 16
        %v7435 = vpop.permute.xlu0 %7434
        %7436 = vrot.lane.b32.xlu0 %v7088, 16
        %v7437 = vpop.permute.xlu0 %7436
        %7438 = vrot.lane.b32.xlu0 %v7091, 16
        %v7439 = vpop.permute.xlu0 %7438
        %7440 = vrot.lane.b32.xlu0 %v7094, 16
        %v7441 = vpop.permute.xlu0 %7440
        %7458 = vrot.lane.b32.xlu0 %v7363, 24
        %v7459 = vpop.permute.xlu0 %7458
        %7460 = vrot.lane.b32.xlu0 %v7366, 24
        %v7461 = vpop.permute.xlu0 %7460
        %7462 = vrot.lane.b32.xlu0 %v7369, 24
        %v7463 = vpop.permute.xlu0 %7462
        %7464 = vrot.lane.b32.xlu0 %v7372, 24
        %v7465 = vpop.permute.xlu0 %7464
        %7466 = vrot.lane.b32.xlu0 %v7375, 24
        %v7467 = vpop.permute.xlu0 %7466
        %7468 = vrot.lane.b32.xlu0 %v7378, 24
        %v7469 = vpop.permute.xlu0 %7468
        %7470 = vrot.lane.b32.xlu0 %v7381, 24
        %v7471 = vpop.permute.xlu0 %7470
        %7472 = vrot.lane.b32.xlu0 %v7384, 24
        %v7473 = vpop.permute.xlu0 %7472
        %v7482 = vsel %vm1545, %v6493, %v7395
        %v7483 = vsel %vm1545, %v6496, %v7397
        %v7484 = vsel %vm1545, %v6499, %v7399
        %v7485 = vsel %vm1545, %v6502, %v7401
        %v7486 = vsel %vm1545, %v6505, %v7403
        %v7487 = vsel %vm1545, %v6508, %v7405
        %v7488 = vsel %vm1545, %v6511, %v7407
        %v7489 = vsel %vm1545, %v6514, %v7409
        %v7490 = vsel %vm2246, %v7482, %v7427
        %v7491 = vsel %vm2246, %v7483, %v7429
        %v7492 = vsel %vm2246, %v7484, %v7431
        %v7493 = vsel %vm2246, %v7485, %v7433
        %v7494 = vsel %vm2246, %v7486, %v7435
        %v7495 = vsel %vm2246, %v7487, %v7437
        %v7496 = vsel %vm2246, %v7488, %v7439
        %v7497 = vsel %vm2246, %v7489, %v7441
        %v7498 = vsel %vm2251, %v7490, %v7459
        %v7499 = vsel %vm2251, %v7491, %v7461
        %v7500 = vsel %vm2251, %v7492, %v7463
        %v7501 = vsel %vm2251, %v7493, %v7465
        %v7502 = vsel %vm2251, %v7494, %v7467
        %v7503 = vsel %vm2251, %v7495, %v7469
        %v7504 = vsel %vm2251, %v7496, %v7471
        %v7505 = vsel %vm2251, %v7497, %v7473
        %v7506 = vpack.c.bf16 %v7499, %v7498
        %v7507 = vpack.c.bf16 %v7501, %v7500
        %v7508 = vpack.c.bf16 %v7503, %v7502
        %v7509 = vpack.c.bf16 %v7505, %v7504
        %v7511 = vperm.slane %v6173, 0
        %v7517 = vunpack.c.l.b16 %v6168
        %v7518 = vunpack.c.l.b16 %v6169
        %v7519 = vunpack.c.l.b16 %v6170
        %v7520 = vunpack.c.l.b16 %v6171
        %v7521 = vpack.c.b16 %v7518, %v7517
        %v7522 = vpack.c.b16 %v7520, %v7519
        %v7526 = vsel %vm1264, %v7506, 0
        %v7529 = vsel %vm1264, %v7507, 0
        %v7532 = vsel %vm1264, %v7508, 0
        %v7535 = vsel %vm1264, %v7509, 0
        %7537 = vmatpush.bf16.msra.mxu0 0
        %7538 = vmatpush.bf16.msra.mxu0 0
        %7539 = vmatpush.bf16.msra.mxu0 0
        %7540 = vmatpush.bf16.msra.mxu0 0
        %7541 = vmatpush.bf16.msra.mxu0 0
        %7542 = vmatpush.bf16.msra.mxu0 0
        %7543 = vmatpush.bf16.msra.mxu0 %v7522
        %7544 = vmatpush.bf16.msra.mxu0 %v7521
        %7545 = vmatmul.bf16.gmra.mxu0 %v7526
        %v7546 = vpop.f32.mrf.mxu0
        %v7547 = vadd.f32 %v7511, %v7546
        %v7548 = vpop.f32.mrf.mxu0
        %v7549 = vadd.f32 %v7511, %v7548
        %7550 = vmatmul.bf16.gmra.mxu0 %v7529
        %v7551 = vpop.f32.mrf.mxu0
        %v7552 = vadd.f32 %v7511, %v7551
        %v7553 = vpop.f32.mrf.mxu0
        %v7554 = vadd.f32 %v7511, %v7553
        %7555 = vmatmul.bf16.gmra.mxu0 %v7532
        %v7556 = vpop.f32.mrf.mxu0
        %v7557 = vadd.f32 %v7511, %v7556
        %v7558 = vpop.f32.mrf.mxu0
        %v7559 = vadd.f32 %v7511, %v7558
        %7560 = vmatmul.bf16.gmra.mxu0 %v7535
        %v7561 = vpop.f32.mrf.mxu0
        %v7562 = vadd.f32 %v7511, %v7561
        %v7563 = vpop.f32.mrf.mxu0
        %v7564 = vadd.f32 %v7511, %v7563
        %7565 = vdwg.mxu0
        %v7566 = vadd.f32 %v5950, %v7547
        %v7567 = vadd.f32 %v5951, %v7549
        %v7568 = vadd.f32 %v5952, %v7552
        %v7569 = vadd.f32 %v5953, %v7554
        %v7570 = vadd.f32 %v5954, %v7557
        %v7571 = vadd.f32 %v5955, %v7559
        %v7572 = vadd.f32 %v5956, %v7562
        %v7573 = vadd.f32 %v5957, %v7564
        %s7574 = scalar_lea.vmem %s57, 1
        %v7575 = vld [vmem:[%s7574] sm:$0x1]
        %s7576 = scalar_lea.vmem %s55, 1
        %v7577 = vld [vmem:[%s7576] sm:$0x1]
        %v7578 = vsel %vm1264, %v7566, 0.0
        %7579 = vadd.xlane.f32.xlu0 %v7578
        %v7580 = vpop.xlane.xlu0 %7579
        %v7581 = vsel %vm1264, %v7567, 0.0
        %7582 = vadd.xlane.f32.xlu0 %v7581
        %v7583 = vpop.xlane.xlu0 %7582
        %v7584 = vsel %vm1264, %v7568, 0.0
        %7585 = vadd.xlane.f32.xlu0 %v7584
        %v7586 = vpop.xlane.xlu0 %7585
        %v7587 = vsel %vm1264, %v7569, 0.0
        %7588 = vadd.xlane.f32.xlu0 %v7587
        %v7589 = vpop.xlane.xlu0 %7588
        %v7590 = vsel %vm1264, %v7570, 0.0
        %7591 = vadd.xlane.f32.xlu0 %v7590
        %v7592 = vpop.xlane.xlu0 %7591
        %v7593 = vsel %vm1264, %v7571, 0.0
        %7594 = vadd.xlane.f32.xlu0 %v7593
        %v7595 = vpop.xlane.xlu0 %7594
        %v7596 = vsel %vm1264, %v7572, 0.0
        %7597 = vadd.xlane.f32.xlu0 %v7596
        %v7598 = vpop.xlane.xlu0 %7597
        %v7599 = vsel %vm1264, %v7573, 0.0
        %7600 = vadd.xlane.f32.xlu0 %v7599
        %v7601 = vpop.xlane.xlu0 %7600
        %v7602 = vmul.f32 %v7580, %v1283
        %v7603 = vmul.f32 %v7583, %v1283
        %v7604 = vmul.f32 %v7586, %v1283
        %v7605 = vmul.f32 %v7589, %v1283
        %v7606 = vmul.f32 %v7592, %v1283
        %v7607 = vmul.f32 %v7595, %v1283
        %v7608 = vmul.f32 %v7598, %v1283
        %v7609 = vmul.f32 %v7601, %v1283
        %v7610 = vsub.f32 %v7566, %v7602
        %v7611 = vsub.f32 %v7567, %v7603
        %v7612 = vsub.f32 %v7568, %v7604
        %v7613 = vsub.f32 %v7569, %v7605
        %v7614 = vsub.f32 %v7570, %v7606
        %v7615 = vsub.f32 %v7571, %v7607
        %v7616 = vsub.f32 %v7572, %v7608
        %v7617 = vsub.f32 %v7573, %v7609
        %v7618 = vmul.f32 %v7610, %v7610
        %v7619 = vmul.f32 %v7611, %v7611
        %v7620 = vmul.f32 %v7612, %v7612
        %v7621 = vmul.f32 %v7613, %v7613
        %v7622 = vmul.f32 %v7614, %v7614
        %v7623 = vmul.f32 %v7615, %v7615
        %v7624 = vmul.f32 %v7616, %v7616
        %v7625 = vmul.f32 %v7617, %v7617
        %v7626 = vsel %vm1264, %v7618, 0.0
        %7627 = vadd.xlane.f32.xlu0 %v7626
        %v7628 = vpop.xlane.xlu0 %7627
        %v7629 = vsel %vm1264, %v7619, 0.0
        %7630 = vadd.xlane.f32.xlu0 %v7629
        %v7631 = vpop.xlane.xlu0 %7630
        %v7632 = vsel %vm1264, %v7620, 0.0
        %7633 = vadd.xlane.f32.xlu0 %v7632
        %v7634 = vpop.xlane.xlu0 %7633
        %v7635 = vsel %vm1264, %v7621, 0.0
        %7636 = vadd.xlane.f32.xlu0 %v7635
        %v7637 = vpop.xlane.xlu0 %7636
        %v7638 = vsel %vm1264, %v7622, 0.0
        %7639 = vadd.xlane.f32.xlu0 %v7638
        %v7640 = vpop.xlane.xlu0 %7639
        %v7641 = vsel %vm1264, %v7623, 0.0
        %7642 = vadd.xlane.f32.xlu0 %v7641
        %v7643 = vpop.xlane.xlu0 %7642
        %v7644 = vsel %vm1264, %v7624, 0.0
        %7645 = vadd.xlane.f32.xlu0 %v7644
        %v7646 = vpop.xlane.xlu0 %7645
        %v7647 = vsel %vm1264, %v7625, 0.0
        %7648 = vadd.xlane.f32.xlu0 %v7647
        %v7649 = vpop.xlane.xlu0 %7648
        %v7650 = vmul.f32 %v7628, %v1283
        %v7651 = vmul.f32 %v7631, %v1283
        %v7652 = vmul.f32 %v7634, %v1283
        %v7653 = vmul.f32 %v7637, %v1283
        %v7654 = vmul.f32 %v7640, %v1283
        %v7655 = vmul.f32 %v7643, %v1283
        %v7656 = vmul.f32 %v7646, %v1283
        %v7657 = vmul.f32 %v7649, %v1283
        %v7658 = vadd.f32 %v7650, 1e-06
        %v7659 = vadd.f32 %v7651, 1e-06
        %v7660 = vadd.f32 %v7652, 1e-06
        %v7661 = vadd.f32 %v7653, 1e-06
        %v7662 = vadd.f32 %v7654, 1e-06
        %v7663 = vadd.f32 %v7655, 1e-06
        %v7664 = vadd.f32 %v7656, 1e-06
        %v7665 = vadd.f32 %v7657, 1e-06
        %v7666 = vrsqrt.pop %v7658
        %v7667 = vmul.f32 %v7666, %v7658
        %v7668 = vmul.f32 %v7667, %v7666
        %v7669 = vmul.f32 0.5, %v7668
        %v7670 = vsub.f32 1.5, %v7669
        %v7671 = vmul.f32 %v7666, %v7670
        %vm7672 = vweird.f32 %v7658
        %vm7673 = vweird.f32 %v7666
        %vm7674 = vmor %vm7672, %vm7673
        %v7675 = vsel %vm7674, %v7666, %v7671
        %v7676 = vrsqrt.pop %v7659
        %v7677 = vmul.f32 %v7676, %v7659
        %v7678 = vmul.f32 %v7677, %v7676
        %v7679 = vmul.f32 0.5, %v7678
        %v7680 = vsub.f32 1.5, %v7679
        %v7681 = vmul.f32 %v7676, %v7680
        %vm7682 = vweird.f32 %v7659
        %vm7683 = vweird.f32 %v7676
        %vm7684 = vmor %vm7682, %vm7683
        %v7685 = vsel %vm7684, %v7676, %v7681
        %v7686 = vrsqrt.pop %v7660
        %v7687 = vmul.f32 %v7686, %v7660
        %v7688 = vmul.f32 %v7687, %v7686
        %v7689 = vmul.f32 0.5, %v7688
        %v7690 = vsub.f32 1.5, %v7689
        %v7691 = vmul.f32 %v7686, %v7690
        %vm7692 = vweird.f32 %v7660
        %vm7693 = vweird.f32 %v7686
        %vm7694 = vmor %vm7692, %vm7693
        %v7695 = vsel %vm7694, %v7686, %v7691
        %v7696 = vrsqrt.pop %v7661
        %v7697 = vmul.f32 %v7696, %v7661
        %v7698 = vmul.f32 %v7697, %v7696
        %v7699 = vmul.f32 0.5, %v7698
        %v7700 = vsub.f32 1.5, %v7699
        %v7701 = vmul.f32 %v7696, %v7700
        %vm7702 = vweird.f32 %v7661
        %vm7703 = vweird.f32 %v7696
        %vm7704 = vmor %vm7702, %vm7703
        %v7705 = vsel %vm7704, %v7696, %v7701
        %v7706 = vrsqrt.pop %v7662
        %v7707 = vmul.f32 %v7706, %v7662
        %v7708 = vmul.f32 %v7707, %v7706
        %v7709 = vmul.f32 0.5, %v7708
        %v7710 = vsub.f32 1.5, %v7709
        %v7711 = vmul.f32 %v7706, %v7710
        %vm7712 = vweird.f32 %v7662
        %vm7713 = vweird.f32 %v7706
        %vm7714 = vmor %vm7712, %vm7713
        %v7715 = vsel %vm7714, %v7706, %v7711
        %v7716 = vrsqrt.pop %v7663
        %v7717 = vmul.f32 %v7716, %v7663
        %v7718 = vmul.f32 %v7717, %v7716
        %v7719 = vmul.f32 0.5, %v7718
        %v7720 = vsub.f32 1.5, %v7719
        %v7721 = vmul.f32 %v7716, %v7720
        %vm7722 = vweird.f32 %v7663
        %vm7723 = vweird.f32 %v7716
        %vm7724 = vmor %vm7722, %vm7723
        %v7725 = vsel %vm7724, %v7716, %v7721
        %v7726 = vrsqrt.pop %v7664
        %v7727 = vmul.f32 %v7726, %v7664
        %v7728 = vmul.f32 %v7727, %v7726
        %v7729 = vmul.f32 0.5, %v7728
        %v7730 = vsub.f32 1.5, %v7729
        %v7731 = vmul.f32 %v7726, %v7730
        %vm7732 = vweird.f32 %v7664
        %vm7733 = vweird.f32 %v7726
        %vm7734 = vmor %vm7732, %vm7733
        %v7735 = vsel %vm7734, %v7726, %v7731
        %v7736 = vrsqrt.pop %v7665
        %v7737 = vmul.f32 %v7736, %v7665
        %v7738 = vmul.f32 %v7737, %v7736
        %v7739 = vmul.f32 0.5, %v7738
        %v7740 = vsub.f32 1.5, %v7739
        %v7741 = vmul.f32 %v7736, %v7740
        %vm7742 = vweird.f32 %v7665
        %vm7743 = vweird.f32 %v7736
        %vm7744 = vmor %vm7742, %vm7743
        %v7745 = vsel %vm7744, %v7736, %v7741
        %v7746 = vmul.f32 %v7610, %v7675
        %v7747 = vmul.f32 %v7611, %v7685
        %v7748 = vmul.f32 %v7612, %v7695
        %v7749 = vmul.f32 %v7613, %v7705
        %v7750 = vmul.f32 %v7614, %v7715
        %v7751 = vmul.f32 %v7615, %v7725
        %v7752 = vmul.f32 %v7616, %v7735
        %v7753 = vmul.f32 %v7617, %v7745
        %v7755 = vperm.slane %v7575, 0
        %v7757 = vmul.f32 %v7746, %v7755
        %v7758 = vmul.f32 %v7747, %v7755
        %v7759 = vmul.f32 %v7748, %v7755
        %v7760 = vmul.f32 %v7749, %v7755
        %v7761 = vmul.f32 %v7750, %v7755
        %v7762 = vmul.f32 %v7751, %v7755
        %v7763 = vmul.f32 %v7752, %v7755
        %v7764 = vmul.f32 %v7753, %v7755
        %v7766 = vperm.slane %v7577, 0
        %v7768 = vadd.f32 %v7757, %v7766
        %v7769 = vadd.f32 %v7758, %v7766
        %v7770 = vadd.f32 %v7759, %v7766
        %v7771 = vadd.f32 %v7760, %v7766
        %v7772 = vadd.f32 %v7761, %v7766
        %v7773 = vadd.f32 %v7762, %v7766
        %v7774 = vadd.f32 %v7763, %v7766
        %v7775 = vadd.f32 %v7764, %v7766
        %s7776 = scalar_lea.vmem %s71, 16
        %v7777 = vld [vmem:[%s7776] sm:$0xf]
        %v7778 = vld [vmem:[%s7776 + $0x4] sm:$0xf]
        %v7779 = vld [vmem:[%s7776 + $0x8] sm:$0xf]
        %v7780 = vld [vmem:[%s7776 + $0xc] sm:$0xf]
        %s7781 = scalar_lea.vmem %s37, 1
        %v7782 = vld [vmem:[%s7781] sm:$0x1]
        %s7783 = scalar_lea.vmem %s73, 32
        %v7784 = vld [vmem:[%s7783] sm:$0xf]
        %v7785 = vld [vmem:[%s7783 + $0x4] sm:$0xf]
        %v7786 = vld [vmem:[%s7783 + $0x8] sm:$0xf]
        %v7787 = vld [vmem:[%s7783 + $0xc] sm:$0xf]
        %v7788 = vld [vmem:[%s7783 + $0x10] sm:$0xf]
        %v7789 = vld [vmem:[%s7783 + $0x14] sm:$0xf]
        %v7790 = vld [vmem:[%s7783 + $0x18] sm:$0xf]
        %v7791 = vld [vmem:[%s7783 + $0x1c] sm:$0xf]
        %s7792 = scalar_lea.vmem %s39, 1
        %v7793 = vld [vmem:[%s7792] sm:$0x1]
        %v7794 = vpack.c.bf16 %v7769, %v7768
        %v7795 = vpack.c.bf16 %v7771, %v7770
        %v7796 = vpack.c.bf16 %v7773, %v7772
        %v7797 = vpack.c.bf16 %v7775, %v7774
        %v7799 = vperm.slane %v7782, 0
        %v7805 = vunpack.c.l.b16 %v7777
        %v7806 = vunpack.c.l.b16 %v7778
        %v7807 = vunpack.c.l.b16 %v7779
        %v7808 = vunpack.c.l.b16 %v7780
        %v7809 = vpack.c.b16 %v7806, %v7805
        %v7810 = vpack.c.b16 %v7808, %v7807
        %v7814 = vsel %vm1264, %v7794, 0
        %v7817 = vsel %vm1264, %v7795, 0
        %v7820 = vsel %vm1264, %v7796, 0
        %v7823 = vsel %vm1264, %v7797, 0
        %7825 = vmatpush.bf16.msra.mxu0 0
        %7826 = vmatpush.bf16.msra.mxu0 0
        %7827 = vmatpush.bf16.msra.mxu0 0
        %7828 = vmatpush.bf16.msra.mxu0 0
        %7829 = vmatpush.bf16.msra.mxu0 0
        %7830 = vmatpush.bf16.msra.mxu0 0
        %7831 = vmatpush.bf16.msra.mxu0 %v7810
        %7832 = vmatpush.bf16.msra.mxu0 %v7809
        %7833 = vmatmul.bf16.gmra.mxu0 %v7814
        %v7834 = vpop.f32.mrf.mxu0
        %v7835 = vadd.f32 %v7799, %v7834
        %v7836 = vpop.f32.mrf.mxu0
        %v7837 = vadd.f32 %v7799, %v7836
        %7838 = vmatmul.bf16.gmra.mxu0 %v7817
        %v7839 = vpop.f32.mrf.mxu0
        %v7840 = vadd.f32 %v7799, %v7839
        %v7841 = vpop.f32.mrf.mxu0
        %v7842 = vadd.f32 %v7799, %v7841
        %7843 = vmatmul.bf16.gmra.mxu0 %v7820
        %v7844 = vpop.f32.mrf.mxu0
        %v7845 = vadd.f32 %v7799, %v7844
        %v7846 = vpop.f32.mrf.mxu0
        %v7847 = vadd.f32 %v7799, %v7846
        %7848 = vmatmul.bf16.gmra.mxu0 %v7823
        %v7849 = vpop.f32.mrf.mxu0
        %v7850 = vadd.f32 %v7799, %v7849
        %v7851 = vpop.f32.mrf.mxu0
        %v7852 = vadd.f32 %v7799, %v7851
        %7853 = vdwg.mxu0
        %v7854 = vmul.f32 %v7835, %v7835
        %v7855 = vmul.f32 %v7837, %v7837
        %v7856 = vmul.f32 %v7840, %v7840
        %v7857 = vmul.f32 %v7842, %v7842
        %v7858 = vmul.f32 %v7845, %v7845
        %v7859 = vmul.f32 %v7847, %v7847
        %v7860 = vmul.f32 %v7850, %v7850
        %v7861 = vmul.f32 %v7852, %v7852
        %v7862 = vmul.f32 %v7835, %v7854
        %v7863 = vmul.f32 %v7837, %v7855
        %v7864 = vmul.f32 %v7840, %v7856
        %v7865 = vmul.f32 %v7842, %v7857
        %v7866 = vmul.f32 %v7845, %v7858
        %v7867 = vmul.f32 %v7847, %v7859
        %v7868 = vmul.f32 %v7850, %v7860
        %v7869 = vmul.f32 %v7852, %v7861
        %v7870 = vmul.f32 %v7862, 0.044715
        %v7871 = vmul.f32 %v7863, 0.044715
        %v7872 = vmul.f32 %v7864, 0.044715
        %v7873 = vmul.f32 %v7865, 0.044715
        %v7874 = vmul.f32 %v7866, 0.044715
        %v7875 = vmul.f32 %v7867, 0.044715
        %v7876 = vmul.f32 %v7868, 0.044715
        %v7877 = vmul.f32 %v7869, 0.044715
        %v7878 = vadd.f32 %v7835, %v7870
        %v7879 = vadd.f32 %v7837, %v7871
        %v7880 = vadd.f32 %v7840, %v7872
        %v7881 = vadd.f32 %v7842, %v7873
        %v7882 = vadd.f32 %v7845, %v7874
        %v7883 = vadd.f32 %v7847, %v7875
        %v7884 = vadd.f32 %v7850, %v7876
        %v7885 = vadd.f32 %v7852, %v7877
        %v7886 = vmul.f32 %v7878, 0.7978846
        %v7887 = vmul.f32 %v7879, 0.7978846
        %v7888 = vmul.f32 %v7880, 0.7978846
        %v7889 = vmul.f32 %v7881, 0.7978846
        %v7890 = vmul.f32 %v7882, 0.7978846
        %v7891 = vmul.f32 %v7883, 0.7978846
        %v7892 = vmul.f32 %v7884, 0.7978846
        %v7893 = vmul.f32 %v7885, 0.7978846
        %v7894 = vtanh.pop %v7886
        %v7895 = vtanh.pop %v7887
        %v7896 = vtanh.pop %v7888
        %v7897 = vtanh.pop %v7889
        %v7898 = vtanh.pop %v7890
        %v7899 = vtanh.pop %v7891
        %v7900 = vtanh.pop %v7892
        %v7901 = vtanh.pop %v7893
        %v7902 = vadd.f32 %v7894, 1.0
        %v7903 = vadd.f32 %v7895, 1.0
        %v7904 = vadd.f32 %v7896, 1.0
        %v7905 = vadd.f32 %v7897, 1.0
        %v7906 = vadd.f32 %v7898, 1.0
        %v7907 = vadd.f32 %v7899, 1.0
        %v7908 = vadd.f32 %v7900, 1.0
        %v7909 = vadd.f32 %v7901, 1.0
        %v7910 = vmul.f32 %v7902, 0.5
        %v7911 = vmul.f32 %v7903, 0.5
        %v7912 = vmul.f32 %v7904, 0.5
        %v7913 = vmul.f32 %v7905, 0.5
        %v7914 = vmul.f32 %v7906, 0.5
        %v7915 = vmul.f32 %v7907, 0.5
        %v7916 = vmul.f32 %v7908, 0.5
        %v7917 = vmul.f32 %v7909, 0.5
        %v7918 = vmul.f32 %v7835, %v7910
        %v7919 = vmul.f32 %v7837, %v7911
        %v7920 = vmul.f32 %v7840, %v7912
        %v7921 = vmul.f32 %v7842, %v7913
        %v7922 = vmul.f32 %v7845, %v7914
        %v7923 = vmul.f32 %v7847, %v7915
        %v7924 = vmul.f32 %v7850, %v7916
        %v7925 = vmul.f32 %v7852, %v7917
        %v7926 = vpack.c.bf16 %v7919, %v7918
        %v7927 = vpack.c.bf16 %v7921, %v7920
        %v7928 = vpack.c.bf16 %v7923, %v7922
        %v7929 = vpack.c.bf16 %v7925, %v7924
        %v7931 = vperm.slane %v7793, 0
        %v7941 = vunpack.c.l.b16 %v7784
        %v7942 = vunpack.c.l.b16 %v7785
        %v7943 = vunpack.c.l.b16 %v7786
        %v7944 = vunpack.c.l.b16 %v7787
        %v7945 = vunpack.c.l.b16 %v7788
        %v7946 = vunpack.c.l.b16 %v7789
        %v7947 = vunpack.c.l.b16 %v7790
        %v7948 = vunpack.c.l.b16 %v7791
        %v7949 = vpack.c.b16 %v7942, %v7941
        %v7950 = vpack.c.b16 %v7944, %v7943
        %v7951 = vpack.c.b16 %v7946, %v7945
        %v7952 = vpack.c.b16 %v7948, %v7947
        %v7958 = vsel %vm2575, %v7926, 0
        %v7961 = vsel %vm2575, %v7927, 0
        %v7964 = vsel %vm2575, %v7928, 0
        %v7967 = vsel %vm2575, %v7929, 0
        %7969 = vmatpush.bf16.msra.mxu0 0
        %7970 = vmatpush.bf16.msra.mxu0 0
        %7971 = vmatpush.bf16.msra.mxu0 0
        %7972 = vmatpush.bf16.msra.mxu0 0
        %7973 = vmatpush.bf16.msra.mxu0 %v7952
        %7974 = vmatpush.bf16.msra.mxu0 %v7951
        %7975 = vmatpush.bf16.msra.mxu0 %v7950
        %7976 = vmatpush.bf16.msra.mxu0 %v7949
        %7977 = vmatmul.bf16.gmra.mxu0 %v7958
        %v7978 = vpop.f32.mrf.mxu0
        %v7979 = vadd.f32 %v7931, %v7978
        %v7980 = vpop.f32.mrf.mxu0
        %v7981 = vadd.f32 %v7931, %v7980
        %7982 = vmatmul.bf16.gmra.mxu0 %v7961
        %v7983 = vpop.f32.mrf.mxu0
        %v7984 = vadd.f32 %v7931, %v7983
        %v7985 = vpop.f32.mrf.mxu0
        %v7986 = vadd.f32 %v7931, %v7985
        %7987 = vmatmul.bf16.gmra.mxu0 %v7964
        %v7988 = vpop.f32.mrf.mxu0
        %v7989 = vadd.f32 %v7931, %v7988
        %v7990 = vpop.f32.mrf.mxu0
        %v7991 = vadd.f32 %v7931, %v7990
        %7992 = vmatmul.bf16.gmra.mxu0 %v7967
        %v7993 = vpop.f32.mrf.mxu0
        %v7994 = vadd.f32 %v7931, %v7993
        %v7995 = vpop.f32.mrf.mxu0
        %v7996 = vadd.f32 %v7931, %v7995
        %7997 = vdwg.mxu0
        %v7998 = vadd.f32 %v7566, %v7979
        %v7999 = vadd.f32 %v7567, %v7981
        %v8000 = vadd.f32 %v7568, %v7984
        %v8001 = vadd.f32 %v7569, %v7986
        %v8002 = vadd.f32 %v7570, %v7989
        %v8003 = vadd.f32 %v7571, %v7991
        %v8004 = vadd.f32 %v7572, %v7994
        %v8005 = vadd.f32 %v7573, %v7996
        %v8006 = vld [vmem:[%s59] sm:$0xf]
        %v8007 = vld [vmem:[%s59 + $0x4] sm:$0xf]
        %v8008 = vld [vmem:[%s59 + $0x8] sm:$0xf]
        %v8009 = vld [vmem:[%s59 + $0xc] sm:$0xf]
        %v8010 = vpack.c.bf16 %v7999, %v7998
        %v8011 = vpack.c.bf16 %v8001, %v8000
        %v8012 = vpack.c.bf16 %v8003, %v8002
        %v8013 = vpack.c.bf16 %v8005, %v8004
        %v8018 = vunpack.c.l.b16 %v8006
        %v8019 = vunpack.c.l.b16 %v8007
        %v8020 = vunpack.c.l.b16 %v8008
        %v8021 = vunpack.c.l.b16 %v8009
        %v8022 = vpack.c.b16 %v8019, %v8018
        %v8023 = vpack.c.b16 %v8021, %v8020
        %v8027 = vsel %vm1264, %v8010, 0
        %v8030 = vsel %vm1264, %v8011, 0
        %v8033 = vsel %vm1264, %v8012, 0
        %v8036 = vsel %vm1264, %v8013, 0
        %8038 = vmatpush.bf16.msra.mxu0 0
        %8039 = vmatpush.bf16.msra.mxu0 0
        %8040 = vmatpush.bf16.msra.mxu0 0
        %8041 = vmatpush.bf16.msra.mxu0 0
        %8042 = vmatpush.bf16.msra.mxu0 0
        %8043 = vmatpush.bf16.msra.mxu0 0
        %8044 = vmatpush.bf16.msra.mxu0 %v8023
        %8045 = vmatpush.bf16.msra.mxu0 %v8022
        %8046 = vmatmul.bf16.gmra.mxu0 %v8027
        %v8047 = vpop.f32.mrf.mxu0
        %v8048 = vadd.f32 0.0, %v8047
        %v8049 = vpop.f32.mrf.mxu0
        %v8050 = vadd.f32 0.0, %v8049
        %8051 = vmatmul.bf16.gmra.mxu0 %v8030
        %v8052 = vpop.f32.mrf.mxu0
        %v8053 = vadd.f32 0.0, %v8052
        %v8054 = vpop.f32.mrf.mxu0
        %v8055 = vadd.f32 0.0, %v8054
        %8056 = vmatmul.bf16.gmra.mxu0 %v8033
        %v8057 = vpop.f32.mrf.mxu0
        %v8058 = vadd.f32 0.0, %v8057
        %v8059 = vpop.f32.mrf.mxu0
        %v8060 = vadd.f32 0.0, %v8059
        %8061 = vmatmul.bf16.gmra.mxu0 %v8036
        %v8062 = vpop.f32.mrf.mxu0
        %v8063 = vadd.f32 0.0, %v8062
        %v8064 = vpop.f32.mrf.mxu0
        %v8065 = vadd.f32 0.0, %v8064
        %8066 = vdwg.mxu0
        %v8067 = vld [vmem:[%s63] sm:$0x1]
        %v8068 = vld [vmem:[%s61] sm:$0x1]
        %v8069 = vsel %vm2246, %v8048, 0.0
        %8070 = vadd.xlane.f32.xlu0 %v8069
        %v8071 = vpop.xlane.xlu0 %8070
        %v8072 = vsel %vm2246, %v8050, 0.0
        %8073 = vadd.xlane.f32.xlu0 %v8072
        %v8074 = vpop.xlane.xlu0 %8073
        %v8075 = vsel %vm2246, %v8053, 0.0
        %8076 = vadd.xlane.f32.xlu0 %v8075
        %v8077 = vpop.xlane.xlu0 %8076
        %v8078 = vsel %vm2246, %v8055, 0.0
        %8079 = vadd.xlane.f32.xlu0 %v8078
        %v8080 = vpop.xlane.xlu0 %8079
        %v8081 = vsel %vm2246, %v8058, 0.0
        %8082 = vadd.xlane.f32.xlu0 %v8081
        %v8083 = vpop.xlane.xlu0 %8082
        %v8084 = vsel %vm2246, %v8060, 0.0
        %8085 = vadd.xlane.f32.xlu0 %v8084
        %v8086 = vpop.xlane.xlu0 %8085
        %v8087 = vsel %vm2246, %v8063, 0.0
        %8088 = vadd.xlane.f32.xlu0 %v8087
        %v8089 = vpop.xlane.xlu0 %8088
        %v8090 = vsel %vm2246, %v8065, 0.0
        %8091 = vadd.xlane.f32.xlu0 %v8090
        %v8092 = vpop.xlane.xlu0 %8091
        %v8093 = vrcp.pop 16.0
        %v8094 = vmul.f32 16.0, %v8093
        %v8095 = vsub.f32 1.0, %v8094
        %v8096 = vmul.f32 %v8093, %v8095
        %v8097 = vadd.f32 %v8093, %v8096
        %vm8098 = vweird.f32 %v8093
        %v8099 = vsel %vm8098, %v8093, %v8097
        %v8100 = vmul.f32 %v8071, %v8099
        %v8101 = vmul.f32 %v8074, %v8099
        %v8102 = vmul.f32 %v8077, %v8099
        %v8103 = vmul.f32 %v8080, %v8099
        %v8104 = vmul.f32 %v8083, %v8099
        %v8105 = vmul.f32 %v8086, %v8099
        %v8106 = vmul.f32 %v8089, %v8099
        %v8107 = vmul.f32 %v8092, %v8099
        %v8108 = vsub.f32 %v8048, %v8100
        %v8109 = vsub.f32 %v8050, %v8101
        %v8110 = vsub.f32 %v8053, %v8102
        %v8111 = vsub.f32 %v8055, %v8103
        %v8112 = vsub.f32 %v8058, %v8104
        %v8113 = vsub.f32 %v8060, %v8105
        %v8114 = vsub.f32 %v8063, %v8106
        %v8115 = vsub.f32 %v8065, %v8107
        %v8116 = vmul.f32 %v8108, %v8108
        %v8117 = vmul.f32 %v8109, %v8109
        %v8118 = vmul.f32 %v8110, %v8110
        %v8119 = vmul.f32 %v8111, %v8111
        %v8120 = vmul.f32 %v8112, %v8112
        %v8121 = vmul.f32 %v8113, %v8113
        %v8122 = vmul.f32 %v8114, %v8114
        %v8123 = vmul.f32 %v8115, %v8115
        %v8124 = vsel %vm2246, %v8116, 0.0
        %8125 = vadd.xlane.f32.xlu0 %v8124
        %v8126 = vpop.xlane.xlu0 %8125
        %v8127 = vsel %vm2246, %v8117, 0.0
        %8128 = vadd.xlane.f32.xlu0 %v8127
        %v8129 = vpop.xlane.xlu0 %8128
        %v8130 = vsel %vm2246, %v8118, 0.0
        %8131 = vadd.xlane.f32.xlu0 %v8130
        %v8132 = vpop.xlane.xlu0 %8131
        %v8133 = vsel %vm2246, %v8119, 0.0
        %8134 = vadd.xlane.f32.xlu0 %v8133
        %v8135 = vpop.xlane.xlu0 %8134
        %v8136 = vsel %vm2246, %v8120, 0.0
        %8137 = vadd.xlane.f32.xlu0 %v8136
        %v8138 = vpop.xlane.xlu0 %8137
        %v8139 = vsel %vm2246, %v8121, 0.0
        %8140 = vadd.xlane.f32.xlu0 %v8139
        %v8141 = vpop.xlane.xlu0 %8140
        %v8142 = vsel %vm2246, %v8122, 0.0
        %8143 = vadd.xlane.f32.xlu0 %v8142
        %v8144 = vpop.xlane.xlu0 %8143
        %v8145 = vsel %vm2246, %v8123, 0.0
        %8146 = vadd.xlane.f32.xlu0 %v8145
        %v8147 = vpop.xlane.xlu0 %8146
        %v8148 = vmul.f32 %v8126, %v8099
        %v8149 = vmul.f32 %v8129, %v8099
        %v8150 = vmul.f32 %v8132, %v8099
        %v8151 = vmul.f32 %v8135, %v8099
        %v8152 = vmul.f32 %v8138, %v8099
        %v8153 = vmul.f32 %v8141, %v8099
        %v8154 = vmul.f32 %v8144, %v8099
        %v8155 = vmul.f32 %v8147, %v8099
        %v8156 = vadd.f32 %v8148, 1e-06
        %v8157 = vadd.f32 %v8149, 1e-06
        %v8158 = vadd.f32 %v8150, 1e-06
        %v8159 = vadd.f32 %v8151, 1e-06
        %v8160 = vadd.f32 %v8152, 1e-06
        %v8161 = vadd.f32 %v8153, 1e-06
        %v8162 = vadd.f32 %v8154, 1e-06
        %v8163 = vadd.f32 %v8155, 1e-06
        %v8164 = vrsqrt.pop %v8156
        %v8165 = vmul.f32 %v8164, %v8156
        %v8166 = vmul.f32 %v8165, %v8164
        %v8167 = vmul.f32 0.5, %v8166
        %v8168 = vsub.f32 1.5, %v8167
        %v8169 = vmul.f32 %v8164, %v8168
        %vm8170 = vweird.f32 %v8156
        %vm8171 = vweird.f32 %v8164
        %vm8172 = vmor %vm8170, %vm8171
        %v8173 = vsel %vm8172, %v8164, %v8169
        %v8174 = vrsqrt.pop %v8157
        %v8175 = vmul.f32 %v8174, %v8157
        %v8176 = vmul.f32 %v8175, %v8174
        %v8177 = vmul.f32 0.5, %v8176
        %v8178 = vsub.f32 1.5, %v8177
        %v8179 = vmul.f32 %v8174, %v8178
        %vm8180 = vweird.f32 %v8157
        %vm8181 = vweird.f32 %v8174
        %vm8182 = vmor %vm8180, %vm8181
        %v8183 = vsel %vm8182, %v8174, %v8179
        %v8184 = vrsqrt.pop %v8158
        %v8185 = vmul.f32 %v8184, %v8158
        %v8186 = vmul.f32 %v8185, %v8184
        %v8187 = vmul.f32 0.5, %v8186
        %v8188 = vsub.f32 1.5, %v8187
        %v8189 = vmul.f32 %v8184, %v8188
        %vm8190 = vweird.f32 %v8158
        %vm8191 = vweird.f32 %v8184
        %vm8192 = vmor %vm8190, %vm8191
        %v8193 = vsel %vm8192, %v8184, %v8189
        %v8194 = vrsqrt.pop %v8159
        %v8195 = vmul.f32 %v8194, %v8159
        %v8196 = vmul.f32 %v8195, %v8194
        %v8197 = vmul.f32 0.5, %v8196
        %v8198 = vsub.f32 1.5, %v8197
        %v8199 = vmul.f32 %v8194, %v8198
        %vm8200 = vweird.f32 %v8159
        %vm8201 = vweird.f32 %v8194
        %vm8202 = vmor %vm8200, %vm8201
        %v8203 = vsel %vm8202, %v8194, %v8199
        %v8204 = vrsqrt.pop %v8160
        %v8205 = vmul.f32 %v8204, %v8160
        %v8206 = vmul.f32 %v8205, %v8204
        %v8207 = vmul.f32 0.5, %v8206
        %v8208 = vsub.f32 1.5, %v8207
        %v8209 = vmul.f32 %v8204, %v8208
        %vm8210 = vweird.f32 %v8160
        %vm8211 = vweird.f32 %v8204
        %vm8212 = vmor %vm8210, %vm8211
        %v8213 = vsel %vm8212, %v8204, %v8209
        %v8214 = vrsqrt.pop %v8161
        %v8215 = vmul.f32 %v8214, %v8161
        %v8216 = vmul.f32 %v8215, %v8214
        %v8217 = vmul.f32 0.5, %v8216
        %v8218 = vsub.f32 1.5, %v8217
        %v8219 = vmul.f32 %v8214, %v8218
        %vm8220 = vweird.f32 %v8161
        %vm8221 = vweird.f32 %v8214
        %vm8222 = vmor %vm8220, %vm8221
        %v8223 = vsel %vm8222, %v8214, %v8219
        %v8224 = vrsqrt.pop %v8162
        %v8225 = vmul.f32 %v8224, %v8162
        %v8226 = vmul.f32 %v8225, %v8224
        %v8227 = vmul.f32 0.5, %v8226
        %v8228 = vsub.f32 1.5, %v8227
        %v8229 = vmul.f32 %v8224, %v8228
        %vm8230 = vweird.f32 %v8162
        %vm8231 = vweird.f32 %v8224
        %vm8232 = vmor %vm8230, %vm8231
        %v8233 = vsel %vm8232, %v8224, %v8229
        %v8234 = vrsqrt.pop %v8163
        %v8235 = vmul.f32 %v8234, %v8163
        %v8236 = vmul.f32 %v8235, %v8234
        %v8237 = vmul.f32 0.5, %v8236
        %v8238 = vsub.f32 1.5, %v8237
        %v8239 = vmul.f32 %v8234, %v8238
        %vm8240 = vweird.f32 %v8163
        %vm8241 = vweird.f32 %v8234
        %vm8242 = vmor %vm8240, %vm8241
        %v8243 = vsel %vm8242, %v8234, %v8239
        %v8244 = vmul.f32 %v8108, %v8173
        %v8245 = vmul.f32 %v8109, %v8183
        %v8246 = vmul.f32 %v8110, %v8193
        %v8247 = vmul.f32 %v8111, %v8203
        %v8248 = vmul.f32 %v8112, %v8213
        %v8249 = vmul.f32 %v8113, %v8223
        %v8250 = vmul.f32 %v8114, %v8233
        %v8251 = vmul.f32 %v8115, %v8243
        %v8253 = vperm.slane %v8067, 0
        %v8255 = vmul.f32 %v8244, %v8253
        %v8256 = vmul.f32 %v8245, %v8253
        %v8257 = vmul.f32 %v8246, %v8253
        %v8258 = vmul.f32 %v8247, %v8253
        %v8259 = vmul.f32 %v8248, %v8253
        %v8260 = vmul.f32 %v8249, %v8253
        %v8261 = vmul.f32 %v8250, %v8253
        %v8262 = vmul.f32 %v8251, %v8253
        %v8264 = vperm.slane %v8068, 0
        %v8266 = vadd.f32 %v8255, %v8264
        %v8267 = vadd.f32 %v8256, %v8264
        %v8268 = vadd.f32 %v8257, %v8264
        %v8269 = vadd.f32 %v8258, %v8264
        %v8270 = vadd.f32 %v8259, %v8264
        %v8271 = vadd.f32 %v8260, %v8264
        %v8272 = vadd.f32 %v8261, %v8264
        %v8273 = vadd.f32 %v8262, %v8264
        %v8274 = vld [vmem:[%s47] sm:$0xff]
        %v8275 = vld [vmem:[%s47 + $0x8] sm:$0xff]
        %v8277 = vsel %vm2575, %v8274, 0
        %v8280 = vsel %vm2575, %v8275, 0
        %8282 = vmatpush.msra.mxu0 0.0
        %8283 = vmatpush.msra.mxu0 0.0
        %8284 = vmatpush.msra.mxu0 0.0
        %8285 = vmatpush.msra.mxu0 0.0
        %8286 = vmatpush.msra.mxu0 0.0
        %8287 = vmatpush.msra.mxu0 0.0
        %8288 = vmatpush.msra.mxu0 0.0
        %8289 = vmatpush.msra.mxu0 0.0
        %8290 = vmatpush.msra.mxu0 %v8273
        %8291 = vmatpush.msra.mxu0 %v8272
        %8292 = vmatpush.msra.mxu0 %v8271
        %8293 = vmatpush.msra.mxu0 %v8270
        %8294 = vmatpush.msra.mxu0 %v8269
        %8295 = vmatpush.msra.mxu0 %v8268
        %8296 = vmatpush.msra.mxu0 %v8267
        %8297 = vmatpush.msra.mxu0 %v8266
        %8298 = vmatmul.f32.gmra.mxu0 %v8277
        %v8299 = vpop.f32.mrf.mxu0
        %v8300 = vadd.f32 0.0, %v8299
        %8301 = vmatmul.f32.gmra.mxu0 %v8280
        %v8302 = vpop.f32.mrf.mxu0
        %v8303 = vadd.f32 0.0, %v8302
        %8304 = vdwg.mxu0
        %v8305 = vld [vmem:[%s49] sm:$0xf]
        %v8306 = vld [vmem:[%s49 + $0x4] sm:$0xf]
        %v8307 = vpack.c.bf16 %v8303, %v8300
        %s8308 = scalar_lea.vmem %s47, 16
        %v8309 = vld [vmem:[%s8308] sm:$0xff]
        %v8310 = vld [vmem:[%s8308 + $0x8] sm:$0xff]
        %v8312 = vsel %vm2575, %v8309, 0
        %v8315 = vsel %vm2575, %v8310, 0
        %8317 = vmatpush.msra.mxu0 0.0
        %8318 = vmatpush.msra.mxu0 0.0
        %8319 = vmatpush.msra.mxu0 0.0
        %8320 = vmatpush.msra.mxu0 0.0
        %8321 = vmatpush.msra.mxu0 0.0
        %8322 = vmatpush.msra.mxu0 0.0
        %8323 = vmatpush.msra.mxu0 0.0
        %8324 = vmatpush.msra.mxu0 0.0
        %8325 = vmatpush.msra.mxu0 %v8273
        %8326 = vmatpush.msra.mxu0 %v8272
        %8327 = vmatpush.msra.mxu0 %v8271
        %8328 = vmatpush.msra.mxu0 %v8270
        %8329 = vmatpush.msra.mxu0 %v8269
        %8330 = vmatpush.msra.mxu0 %v8268
        %8331 = vmatpush.msra.mxu0 %v8267
        %8332 = vmatpush.msra.mxu0 %v8266
        %8333 = vmatmul.f32.gmra.mxu0 %v8312
        %v8334 = vpop.f32.mrf.mxu0
        %v8335 = vadd.f32 0.0, %v8334
        %8336 = vmatmul.f32.gmra.mxu0 %v8315
        %v8337 = vpop.f32.mrf.mxu0
        %v8338 = vadd.f32 0.0, %v8337
        %8339 = vdwg.mxu0
        %s8340 = scalar_lea.vmem %s49, 8
        %v8341 = vld [vmem:[%s8340] sm:$0xf]
        %v8342 = vld [vmem:[%s8340 + $0x4] sm:$0xf]
        %v8343 = vpack.c.bf16 %v8338, %v8335
        %v8346 = vunpack.c.l.b16 %v8341
        %v8347 = vunpack.c.l.b16 %v8342
        %v8348 = vpack.c.b16 %v8347, %v8346
        %v8351 = vsel %vm2246, %v8343, 0
        %8353 = vmatpush.bf16.msra.mxu0 0
        %8354 = vmatpush.bf16.msra.mxu0 0
        %8355 = vmatpush.bf16.msra.mxu0 0
        %8356 = vmatpush.bf16.msra.mxu0 0
        %8357 = vmatpush.bf16.msra.mxu0 0
        %8358 = vmatpush.bf16.msra.mxu0 0
        %8359 = vmatpush.bf16.msra.mxu0 0
        %8360 = vmatpush.bf16.msra.mxu0 %v8348
        %8361 = vmatmul.bf16.gmra.mxu0 %v8351
        %v8362 = vpop.f32.mrf.mxu0
        %v8363 = vadd.f32 0.0, %v8362
        %v8364 = vpop.f32.mrf.mxu0
        %v8365 = vadd.f32 0.0, %v8364
        %8366 = vdwg.mxu0
        %v8369 = vunpack.c.l.b16 %v8305
        %v8370 = vunpack.c.l.b16 %v8306
        %v8371 = vpack.c.b16 %v8370, %v8369
        %v8374 = vsel %vm2246, %v8307, 0
        %8376 = vmatpush.bf16.msra.mxu0 0
        %8377 = vmatpush.bf16.msra.mxu0 0
        %8378 = vmatpush.bf16.msra.mxu0 0
        %8379 = vmatpush.bf16.msra.mxu0 0
        %8380 = vmatpush.bf16.msra.mxu0 0
        %8381 = vmatpush.bf16.msra.mxu0 0
        %8382 = vmatpush.bf16.msra.mxu0 0
        %8383 = vmatpush.bf16.msra.mxu0 %v8371
        %8384 = vmatmul.bf16.gmra.mxu0 %v8374
        %v8385 = vpop.f32.mrf.mxu0
        %v8386 = vadd.f32 %v8363, %v8385
        %v8387 = vpop.f32.mrf.mxu0
        %v8388 = vadd.f32 %v8365, %v8387
        %8389 = vdwg.mxu0
        %s8390 = scalar_lea.vmem %s47, 32
        %v8391 = vld [vmem:[%s8390] sm:$0xff]
        %v8392 = vld [vmem:[%s8390 + $0x8] sm:$0xff]
        %v8394 = vsel %vm2575, %v8391, 0
        %v8397 = vsel %vm2575, %v8392, 0
        %8399 = vmatpush.msra.mxu0 0.0
        %8400 = vmatpush.msra.mxu0 0.0
        %8401 = vmatpush.msra.mxu0 0.0
        %8402 = vmatpush.msra.mxu0 0.0
        %8403 = vmatpush.msra.mxu0 0.0
        %8404 = vmatpush.msra.mxu0 0.0
        %8405 = vmatpush.msra.mxu0 0.0
        %8406 = vmatpush.msra.mxu0 0.0
        %8407 = vmatpush.msra.mxu0 %v8273
        %8408 = vmatpush.msra.mxu0 %v8272
        %8409 = vmatpush.msra.mxu0 %v8271
        %8410 = vmatpush.msra.mxu0 %v8270
        %8411 = vmatpush.msra.mxu0 %v8269
        %8412 = vmatpush.msra.mxu0 %v8268
        %8413 = vmatpush.msra.mxu0 %v8267
        %8414 = vmatpush.msra.mxu0 %v8266
        %8415 = vmatmul.f32.gmra.mxu0 %v8394
        %v8416 = vpop.f32.mrf.mxu0
        %v8417 = vadd.f32 0.0, %v8416
        %8418 = vmatmul.f32.gmra.mxu0 %v8397
        %v8419 = vpop.f32.mrf.mxu0
        %v8420 = vadd.f32 0.0, %v8419
        %8421 = vdwg.mxu0
        %s8422 = scalar_lea.vmem %s49, 16
        %v8423 = vld [vmem:[%s8422] sm:$0xf]
        %v8424 = vld [vmem:[%s8422 + $0x4] sm:$0xf]
        %v8425 = vpack.c.bf16 %v8420, %v8417
        %v8428 = vunpack.c.l.b16 %v8423
        %v8429 = vunpack.c.l.b16 %v8424
        %v8430 = vpack.c.b16 %v8429, %v8428
        %v8433 = vsel %vm2246, %v8425, 0
        %8435 = vmatpush.bf16.msra.mxu0 0
        %8436 = vmatpush.bf16.msra.mxu0 0
        %8437 = vmatpush.bf16.msra.mxu0 0
        %8438 = vmatpush.bf16.msra.mxu0 0
        %8439 = vmatpush.bf16.msra.mxu0 0
        %8440 = vmatpush.bf16.msra.mxu0 0
        %8441 = vmatpush.bf16.msra.mxu0 0
        %8442 = vmatpush.bf16.msra.mxu0 %v8430
        %8443 = vmatmul.bf16.gmra.mxu0 %v8433
        %v8444 = vpop.f32.mrf.mxu0
        %v8445 = vadd.f32 0.0, %v8444
        %v8446 = vpop.f32.mrf.mxu0
        %v8447 = vadd.f32 0.0, %v8446
        %8448 = vdwg.mxu0
        %v8449 = vadd.f32 %v8386, %v8445
        %v8450 = vadd.f32 %v8388, %v8447
        %s8451 = scalar_lea.vmem %s47, 48
        %v8452 = vld [vmem:[%s8451] sm:$0xff]
        %v8453 = vld [vmem:[%s8451 + $0x8] sm:$0xff]
        %v8455 = vsel %vm2575, %v8452, 0
        %v8458 = vsel %vm2575, %v8453, 0
        %8460 = vmatpush.msra.mxu0 0.0
        %8461 = vmatpush.msra.mxu0 0.0
        %8462 = vmatpush.msra.mxu0 0.0
        %8463 = vmatpush.msra.mxu0 0.0
        %8464 = vmatpush.msra.mxu0 0.0
        %8465 = vmatpush.msra.mxu0 0.0
        %8466 = vmatpush.msra.mxu0 0.0
        %8467 = vmatpush.msra.mxu0 0.0
        %8468 = vmatpush.msra.mxu0 %v8273
        %8469 = vmatpush.msra.mxu0 %v8272
        %8470 = vmatpush.msra.mxu0 %v8271
        %8471 = vmatpush.msra.mxu0 %v8270
        %8472 = vmatpush.msra.mxu0 %v8269
        %8473 = vmatpush.msra.mxu0 %v8268
        %8474 = vmatpush.msra.mxu0 %v8267
        %8475 = vmatpush.msra.mxu0 %v8266
        %8476 = vmatmul.f32.gmra.mxu0 %v8455
        %v8477 = vpop.f32.mrf.mxu0
        %v8478 = vadd.f32 0.0, %v8477
        %8479 = vmatmul.f32.gmra.mxu0 %v8458
        %v8480 = vpop.f32.mrf.mxu0
        %v8481 = vadd.f32 0.0, %v8480
        %8482 = vdwg.mxu0
        %s8483 = scalar_lea.vmem %s49, 24
        %v8484 = vld [vmem:[%s8483] sm:$0xf]
        %v8485 = vld [vmem:[%s8483 + $0x4] sm:$0xf]
        %v8486 = vpack.c.bf16 %v8481, %v8478
        %v8489 = vunpack.c.l.b16 %v8484
        %v8490 = vunpack.c.l.b16 %v8485
        %v8491 = vpack.c.b16 %v8490, %v8489
        %v8494 = vsel %vm2246, %v8486, 0
        %8496 = vmatpush.bf16.msra.mxu0 0
        %8497 = vmatpush.bf16.msra.mxu0 0
        %8498 = vmatpush.bf16.msra.mxu0 0
        %8499 = vmatpush.bf16.msra.mxu0 0
        %8500 = vmatpush.bf16.msra.mxu0 0
        %8501 = vmatpush.bf16.msra.mxu0 0
        %8502 = vmatpush.bf16.msra.mxu0 0
        %8503 = vmatpush.bf16.msra.mxu0 %v8491
        %8504 = vmatmul.bf16.gmra.mxu0 %v8494
        %v8505 = vpop.f32.mrf.mxu0
        %v8506 = vadd.f32 0.0, %v8505
        %v8507 = vpop.f32.mrf.mxu0
        %v8508 = vadd.f32 0.0, %v8507
        %8509 = vdwg.mxu0
        %v8510 = vadd.f32 %v8449, %v8506
        %v8511 = vadd.f32 %v8450, %v8508
        %v8512 = vld [vmem:[%s67] sm:$0x1]
        %v8513 = vld [vmem:[%s65] sm:$0x1]
        %v8514 = vsel %vm1264, %v8510, 0.0
        %8515 = vadd.xlane.f32.xlu0 %v8514
        %v8516 = vpop.xlane.xlu0 %8515
        %v8517 = vsel %vm1264, %v8511, 0.0
        %8518 = vadd.xlane.f32.xlu0 %v8517
        %v8519 = vpop.xlane.xlu0 %8518
        %v8520 = vmul.f32 %v8516, %v1283
        %v8521 = vmul.f32 %v8519, %v1283
        %v8522 = vsub.f32 %v8510, %v8520
        %v8523 = vsub.f32 %v8511, %v8521
        %v8524 = vmul.f32 %v8522, %v8522
        %v8525 = vmul.f32 %v8523, %v8523
        %v8526 = vsel %vm1264, %v8524, 0.0
        %8527 = vadd.xlane.f32.xlu0 %v8526
        %v8528 = vpop.xlane.xlu0 %8527
        %v8529 = vsel %vm1264, %v8525, 0.0
        %8530 = vadd.xlane.f32.xlu0 %v8529
        %v8531 = vpop.xlane.xlu0 %8530
        %v8532 = vmul.f32 %v8528, %v1283
        %v8533 = vmul.f32 %v8531, %v1283
        %v8534 = vadd.f32 %v8532, 1e-06
        %v8535 = vadd.f32 %v8533, 1e-06
        %v8536 = vrsqrt.pop %v8534
        %v8537 = vmul.f32 %v8536, %v8534
        %v8538 = vmul.f32 %v8537, %v8536
        %v8539 = vmul.f32 0.5, %v8538
        %v8540 = vsub.f32 1.5, %v8539
        %v8541 = vmul.f32 %v8536, %v8540
        %vm8542 = vweird.f32 %v8534
        %vm8543 = vweird.f32 %v8536
        %vm8544 = vmor %vm8542, %vm8543
        %v8545 = vsel %vm8544, %v8536, %v8541
        %v8546 = vrsqrt.pop %v8535
        %v8547 = vmul.f32 %v8546, %v8535
        %v8548 = vmul.f32 %v8547, %v8546
        %v8549 = vmul.f32 0.5, %v8548
        %v8550 = vsub.f32 1.5, %v8549
        %v8551 = vmul.f32 %v8546, %v8550
        %vm8552 = vweird.f32 %v8535
        %vm8553 = vweird.f32 %v8546
        %vm8554 = vmor %vm8552, %vm8553
        %v8555 = vsel %vm8554, %v8546, %v8551
        %v8556 = vmul.f32 %v8522, %v8545
        %v8557 = vmul.f32 %v8523, %v8555
        %v8559 = vperm.slane %v8512, 0
        %v8561 = vmul.f32 %v8556, %v8559
        %v8562 = vmul.f32 %v8557, %v8559
        %v8564 = vperm.slane %v8513, 0
        %v8566 = vadd.f32 %v8561, %v8564
        %v8567 = vadd.f32 %v8562, %v8564
        %8570 = vrot.lane.b32.xlu0 %v8566, 32
        %v8571 = vpop.permute.xlu0 %8570
        %8572 = vrot.lane.b32.xlu0 %v8567, 32
        %v8573 = vpop.permute.xlu0 %8572
        %v8576 = vsel %vm1264, %v3835, %v8571
        %v8577 = vsel %vm1264, %v3836, %v8573
        %8578 = vst.msk [vmem:[%s1190] sm:$0xff] %vm2575, %v8576
        %8579 = vst.msk [vmem:[%s1190 + $0x8] sm:$0xff] %vm2575, %v8577
        %s8580 = sand.u32 %s930, 1
        %s8581 = scalar_lea.sflag [#allocation3], %s8580
        %s8582 = sand.u32 %s930, 1
        %s8583 = smul.addr %s8582, 16
        %s8584 = scalar_lea.vmem [#allocation2], %s8583
        // Predicated region
        $region177: #{clip_sam_forward_batched.1} parent=175 // pred_check
          %p8585 = pneg %p940
        $region178: #{clip_sam_forward_batched.1} parent=175 // pred_check_branch
          %8587 = sbr.rel (%p8585) target = $region180
        $region179: #{clip_sam_forward_batched.1} parent=175 // pred_region
          %8589 = vsyncadd %s8581, 0
          %s8590 = smul.addr %s93, 2
          %s8591 = smul.addr %s8590, 8
          %s8592 = scalar_lea.hbm %s79, %s8591
          %s8593 = sshll.u32 %s8584, 4
          %s8594 = int_to_ptr.vmem [resolvable:$true] %s8593
          %s8595 = sshll.u32 %s8592, 4
          %s8596 = int_to_ptr.hbm [resolvable:$true] %s8595
          %8601 = dma.vmem_to_hbm [thread:$0]  %s8594, 256, %s8596, %s8581, 128, 128, 8
        $region180: #{clip_sam_forward_batched.1} parent=175 // pred_fallthru
          _
      $region176: #{clip_sam_forward_batched.1} parent=5 // pred_fallthru
        _
      %p8602 = scmp.le.s32.totalorder 2, %s88
      // Predicated region
      $region181: #{clip_sam_forward_batched.1} parent=5 // pred_check
        %p8603 = pneg %p8602
      $region182: #{clip_sam_forward_batched.1} parent=5 // pred_check_branch
        %8605 = sbr.rel (%p8603) target = $region184
      $region183: #{clip_sam_forward_batched.1} parent=5 // pred_region
        %s8606 = ssub.s32 %s88, 2
        // Predicated region
        $region185: #{clip_sam_forward_batched.1} parent=183 // pred_check
          %p8607 = pneg %p946
        $region186: #{clip_sam_forward_batched.1} parent=183 // pred_check_branch
          %8609 = sbr.rel (%p8607) target = $region188
        $region187: #{clip_sam_forward_batched.1} parent=183 // pred_region
          %s8610 = sand.u32 %s931, 1
          %s8611 = scalar_lea.sflag [#allocation3], %s8610
          %s8612 = sand.u32 %s931, 1
          %s8613 = smul.addr %s8612, 16
          %s8614 = scalar_lea.vmem [#allocation2], %s8613
          %8616 = dma.done %s8611, 256
        $region188: #{clip_sam_forward_batched.1} parent=183 // pred_fallthru
          _
      $region184: #{clip_sam_forward_batched.1} parent=5 // pred_fallthru
        _
    $region6: #{clip_sam_forward_batched.1} parent=1 // loop_footer
      %s92 = sadd.s32 1, %s88
    $region7: #{clip_sam_forward_batched.1} parent=1 // loop_footer_branch
      %87 = sbr.rel target = $region3
    $region8: #{clip_sam_forward_batched.1} parent=1 // loop_exit
      _
    %8617 = vsyncpa [#allocation3], 1
    %s8618 = scalar_lea.sflag [#allocation3], 1
    %8619 = vsyncpa %s8618, 1

</llo_original>
